<compile_context>
chip_gen: v6e
topology: v6e:2x2x1
jax: 0.10.0
libtpu: 0.0.40
codegen_flags: <defaults>
</compile_context>

<pallas_src>
import functools

import numpy as np
import jax
import jax.numpy as jnp
from jax.experimental import pallas as pl
from jax.experimental.pallas import tpu as pltpu


def _round_up(x, m):
    return (x + m - 1) // m * m


def _cdiv(a, b):
    return -(-a // b)


# ----------------------------------------------------------------------------
# Model definition (matches ShallowCNN(hidden_features=H) conv stack)
# ----------------------------------------------------------------------------
def make_layer_cfg(hidden_features):
    c1, c2, c3 = hidden_features, hidden_features * 2, hidden_features * 4
    # (cin, cout, kernel, stride, pad)
    return (
        (1,  c1, 5, 2, 4),
        (c1, c2, 3, 2, 1),
        (c2, c3, 3, 2, 1),
        (c3, c3, 3, 2, 1),
        (c3, c3, 3, 2, 1),
    )


def init_params(key, layer_cfg):
    params = []
    for (cin, cout, k, _, _) in layer_cfg:
        key, kw, kb = jax.random.split(key, 3)
        fan_in = cin * k * k
        w = jax.random.normal(kw, (cout, cin, k, k), jnp.float32) / jnp.sqrt(float(fan_in))
        b = jax.random.normal(kb, (cout,), jnp.float32) * 0.01
        params.append((w, b))
    return params


# ----------------------------------------------------------------------------
# Parameter preprocessing: bake each conv into a dense, lane-padded matrix.
# A[(hi*Wi+wi)*Cin + ci, (ho*Wo+wo)*Cout + co] = W[co, ci, di, dj]
#   with hi = ho*s - p + di, wi = wo*s - p + dj (out-of-bounds taps omitted,
#   which folds the spatial zero-padding into the matrix).
# Both dims are zero-padded to multiples of 128 so every MXU operand and the
# final output store are lane-dense.  Done once per weight set (not per call).
# ----------------------------------------------------------------------------
_MAX_DENSE_BYTES = 48 * 1024 * 1024   # keep well under v7x's 64 MiB VMEM


def build_dense_operators(params, layer_cfg, H, W):
    ops = []
    Hi, Wi = H, W
    cin0 = layer_cfg[0][0]
    d_prev_pad = _round_up(Hi * Wi * cin0, 128)
    dims = [(Hi, Wi, cin0, d_prev_pad)]
    dense_bytes = 0
    for (w, b), (cin, cout, k, s, p) in zip(params, layer_cfg):
        w = np.asarray(w, np.float32)       # (Cout, Cin, k, k)
        b = np.asarray(b, np.float32)
        Ho = (Hi + 2 * p - k) // s + 1
        Wo = (Wi + 2 * p - k) // s + 1
        d_out = Ho * Wo * cout
        d_out_pad = _round_up(d_out, 128)
        A = np.zeros((d_prev_pad, d_out_pad), np.float32)
        for ho in range(Ho):
            for wo in range(Wo):
                c0 = (ho * Wo + wo) * cout
                for di in range(k):
                    hi = ho * s - p + di
                    if not (0 <= hi < Hi):
                        continue
                    for dj in range(k):
                        wi = wo * s - p + dj
                        if not (0 <= wi < Wi):
                            continue
                        r0 = (hi * Wi + wi) * cin
                        A[r0:r0 + cin, c0:c0 + cout] = w[:, :, di, dj].T
        bfull = np.zeros((1, d_out_pad), np.float32)
        bfull[0, :d_out] = np.tile(b, Ho * Wo)
        dense_bytes += A.size * 2 + bfull.size * 4
        ops.append((jnp.asarray(A, jnp.bfloat16), jnp.asarray(bfull, jnp.float32)))
        Hi, Wi, d_prev_pad = Ho, Wo, d_out_pad
        dims.append((Hi, Wi, cout, d_prev_pad))

    if dense_bytes > _MAX_DENSE_BYTES:
        # TODO(synk): for larger H/W/hidden_features, replace the fully-dense
        # bake with k*k per-tap matmuls (or a block-banded layout) -- the baked
        # matrices are 80-95% structural zeros and scale as (HWC_in)x(HWC_out),
        # which hits v7x's 64 MiB VMEM (and MXU FLOPs) first.
        raise NotImplementedError(
            f"dense-baked conv operators need ~{dense_bytes / 2**20:.1f} MiB of "
            "VMEM-resident weights; use a per-tap / block-banded formulation "
            "for this problem size")
    return tuple(ops), tuple(dims)


# ----------------------------------------------------------------------------
# Fused Pallas kernel: 5x (matmul + bias + Swish), activations stay on chip.
# ----------------------------------------------------------------------------
def _make_fused_cnn_kernel(n_layers):
    def kernel(*refs):
        x_ref = refs[0]
        a_refs = refs[1:1 + n_layers]
        b_refs = refs[1 + n_layers:1 + 2 * n_layers]
        o_ref = refs[-1]

        h = x_ref[...]                                        # bf16 (bm, D0)
        for l in range(n_layers):                             # statically unrolled
            acc = jnp.dot(h, a_refs[l][...],
                          preferred_element_type=jnp.float32)  # MXU, f32 acc
            acc = acc + b_refs[l][...]                          # (bm,D)+(1,D) VPU add
            # Swish with a SINGLE EUP transcendental per element:
            #   x * sigmoid(x) == x * 0.5 * (tanh(x/2) + 1)
            # (no exp(-x) overflow path, no approx-reciprocal error).
            act = acc * (0.5 * jnp.tanh(0.5 * acc) + 0.5)
            if l + 1 < n_layers:
                h = act.astype(jnp.bfloat16)                    # bf16 MXU input
            else:
                o_ref[...] = act.astype(o_ref.dtype)            # lane-dense bf16 store
    return kernel


def _const_block_spec(shape, single_buffered):
    # Constant index_map: the block never changes across the grid.  With
    # Buffered(1) it is fetched exactly once and reserves no double buffer.
    if single_buffered:
        return pl.BlockSpec(shape, lambda i: (0, 0), pipeline_mode=pl.Buffered(1))
    return pl.BlockSpec(shape, lambda i: (0, 0))


@functools.partial(jax.jit,
                   static_argnames=("dims", "bm", "single_buffer_weights"))
def _fused_forward(x_nchw, ops, *, dims, bm, single_buffer_weights):
    B = x_nchw.shape[0]
    H0, W0, C0, d0_pad = dims[0]
    Hf, Wf, Cf, d_last_pad = dims[-1]
    n_layers = len(ops)

    # NCHW -> channel-minor (NHWC) flattened rows, padded lane-dense + bf16.
    x = jnp.transpose(x_nchw, (0, 2, 3, 1)).reshape(B, H0 * W0 * C0)
    Mp = _round_up(B, bm)
    x = jnp.pad(x, ((0, Mp - B), (0, d0_pad - H0 * W0 * C0))).astype(jnp.bfloat16)

    a_list = [a for a, _ in ops]
    b_list = [b for _, b in ops]

    in_specs = [pl.BlockSpec((bm, d0_pad), lambda i: (i, 0))]
    for a in a_list:   # weights resident across the M grid
        in_specs.append(_const_block_spec(a.shape, single_buffer_weights))
    for b in b_list:
        in_specs.append(_const_block_spec(b.shape, single_buffer_weights))
    out_spec = pl.BlockSpec((bm, d_last_pad), lambda i: (i, 0))

    flops = 2 * Mp * sum(a.shape[0] * a.shape[1] for a in a_list)
    transcendentals = Mp * sum(a.shape[1] for a in a_list)     # one tanh / element
    bytes_accessed = (x.size * 2
                      + sum(a.size * 2 for a in a_list)
                      + sum(b.size * 4 for b in b_list)
                      + Mp * d_last_pad * 2)                   # bf16 writeback

    out = pl.pallas_call(
        _make_fused_cnn_kernel(n_layers),
        out_shape=jax.ShapeDtypeStruct((Mp, d_last_pad), jnp.bfloat16),
        grid=(Mp // bm,),
        in_specs=in_specs,
        out_specs=out_spec,
        compiler_params=pltpu.CompilerParams(
            dimension_semantics=("parallel",),
            vmem_limit_bytes=32 * 1024 * 1024),
        cost_estimate=pl.CostEstimate(
            flops=flops,
            transcendentals=transcendentals,
            bytes_accessed=bytes_accessed),
    )(x, *a_list, *b_list)

    out = out[:B, :Hf * Wf * Cf]
    # channel-minor -> PyTorch NCHW flatten order (identity when Hf == Wf == 1).
    out = out.reshape(B, Hf, Wf, Cf).transpose(0, 3, 1, 2).reshape(B, -1)
    return out.astype(jnp.float32)   # module's output dtype


def _pick_block_rows(B):
    """Generation-aware, padding-waste-minimizing M tile."""
    try:
        kind = jax.devices()[0].device_kind.lower()
    except Exception:
        kind = ""
    # v5e MXU rows = 128 (already tile-aligned); v6e/v7x MXU is 2x256^2.
    target = 128 if "v5" in kind else 256
    n_blocks = max(1, _cdiv(B, target))
    # v7x has 2 TensorCores: the "parallel" grid axis only helps with >=2 steps.
    if "7" in kind and B >= 16:
        n_blocks = max(n_blocks, 2)
    # Keep padded rows small; use 16-row alignment (bf16 sublane packing) when
    # the batch is actually split into multiple grid steps.
    sub = 8 if n_blocks == 1 else 16
    return _round_up(_cdiv(B, n_blocks), sub)


def shallow_cnn_forward(x_nchw, ops, *, dims):
    """Pallas-backed ShallowCNN.forward: (B, 1, H, W) -> (B, Cf*Hf*Wf)."""
    bm = _pick_block_rows(x_nchw.shape[0])
    try:
        return _fused_forward(x_nchw, ops, dims=dims, bm=bm,
                              single_buffer_weights=True)
    except Exception:
        # pl.Buffered(1) not accepted by this jax/Mosaic version: fall back to
        # default (double-buffered) weight specs; everything else unchanged.
        return _fused_forward(x_nchw, ops, dims=dims, bm=bm,
                              single_buffer_weights=False)


# ----------------------------------------------------------------------------
# Pure-JAX reference (f32 lax conv) for a correctness check
# ----------------------------------------------------------------------------
def reference_forward(x_nchw, params, layer_cfg):
    x = x_nchw
    for (w, b), (_, _, _, s, p) in zip(params, layer_cfg):
        x = jax.lax.conv_general_dilated(
            x, w, window_strides=(s, s), padding=[(p, p), (p, p)],
            dimension_numbers=("NCHW", "OIHW", "NCHW"))
        x = x + b.reshape(1, -1, 1, 1)
        x = x * jax.nn.sigmoid(x)
    return x.reshape(x.shape[0], -1)


if __name__ == "__main__":
    hidden_features = 8          # c_hid1=8, c_hid2=16, c_hid3=32
    layer_cfg = make_layer_cfg(hidden_features)

    key = jax.random.PRNGKey(0)
    key, kx, kp = jax.random.split(key, 3)
    x = jax.random.normal(kx, (2, 1, 16, 16), jnp.float32)   # (B=2, C=1, 16, 16)
    params = init_params(kp, layer_cfg)

    ops, dims = build_dense_operators(params, layer_cfg, 16, 16)

    out = shallow_cnn_forward(x, ops, dims=dims)
    out = jax.block_until_ready(out)

    ref = jax.block_until_ready(reference_forward(x, params, layer_cfg))
    assert out.shape == ref.shape == (2, 4 * hidden_features), (out.shape, ref.shape)
    # bf16 matmul inputs / bf16 output through 5 layers (f32 accumulation and
    # activation): compare against the f32 reference with bf16 tolerance.
    max_err = float(jnp.max(jnp.abs(out - ref)))
    assert jnp.allclose(out, ref, rtol=5e-2, atol=5e-2), max_err

    print("KERNEL_OK")
</pallas_src>

<mosaic_0001>
module attributes {stable_mosaic.version = 11 : i64} {
  func.func @kernel(%arg0: i32, %arg1: memref<8x256xbf16, #tpu.memory_space<vmem>>, %arg2: memref<256x896xbf16, #tpu.memory_space<vmem>>, %arg3: memref<896x512xbf16, #tpu.memory_space<vmem>>, %arg4: memref<512x384xbf16, #tpu.memory_space<vmem>>, %arg5: memref<384x128xbf16, #tpu.memory_space<vmem>>, %arg6: memref<128x128xbf16, #tpu.memory_space<vmem>>, %arg7: memref<1x896xf32, #tpu.memory_space<vmem>>, %arg8: memref<1x512xf32, #tpu.memory_space<vmem>>, %arg9: memref<1x384xf32, #tpu.memory_space<vmem>>, %arg10: memref<1x128xf32, #tpu.memory_space<vmem>>, %arg11: memref<1x128xf32, #tpu.memory_space<vmem>>, %arg12: memref<8x128xbf16, #tpu.memory_space<vmem>>) attributes {dimension_semantics = [#tpu.dimension_semantics<parallel>], iteration_bounds = array<i64: 1>, scalar_prefetch = 0 : i64, scratch_operands = 0 : i64, tpu.core_type = #tpu.core_type<tc>, window_params = [{transform_indices = @transform_0, window_bounds = array<i64: 8, 256>}, {pipeline_mode = #tpu.pipeline_mode<synchronous>, transform_indices = @transform_1, window_bounds = array<i64: 256, 896>}, {pipeline_mode = #tpu.pipeline_mode<synchronous>, transform_indices = @transform_2, window_bounds = array<i64: 896, 512>}, {pipeline_mode = #tpu.pipeline_mode<synchronous>, transform_indices = @transform_3, window_bounds = array<i64: 512, 384>}, {pipeline_mode = #tpu.pipeline_mode<synchronous>, transform_indices = @transform_4, window_bounds = array<i64: 384, 128>}, {pipeline_mode = #tpu.pipeline_mode<synchronous>, transform_indices = @transform_5, window_bounds = array<i64: 128, 128>}, {pipeline_mode = #tpu.pipeline_mode<synchronous>, transform_indices = @transform_6, window_bounds = array<i64: 1, 896>}, {pipeline_mode = #tpu.pipeline_mode<synchronous>, transform_indices = @transform_7, window_bounds = array<i64: 1, 512>}, {pipeline_mode = #tpu.pipeline_mode<synchronous>, transform_indices = @transform_8, window_bounds = array<i64: 1, 384>}, {pipeline_mode = #tpu.pipeline_mode<synchronous>, transform_indices = @transform_9, window_bounds = array<i64: 1, 128>}, {pipeline_mode = #tpu.pipeline_mode<synchronous>, transform_indices = @transform_10, window_bounds = array<i64: 1, 128>}, {transform_indices = @transform_11, window_bounds = array<i64: 8, 128>}]} {
    %c0 = arith.constant 0 : index
    %c0_0 = arith.constant 0 : index
    %0 = vector.load %arg1[%c0, %c0_0] : memref<8x256xbf16, #tpu.memory_space<vmem>>, vector<8x256xbf16>
    %c0_1 = arith.constant 0 : index
    %c0_2 = arith.constant 0 : index
    %1 = vector.load %arg2[%c0_1, %c0_2] : memref<256x896xbf16, #tpu.memory_space<vmem>>, vector<256x896xbf16>
    %cst = arith.constant dense<0.000000e+00> : vector<8x896xf32>
    %2 = tpu.matmul %0, %1, %cst {dimension_numbers = #tpu.dot_dimension_numbers<[1], [0], [0], [1], [0, 0, 1, 1], [], []>} : vector<8x256xbf16>, vector<256x896xbf16>, vector<8x896xf32> -> vector<8x896xf32>
    %c0_3 = arith.constant 0 : index
    %c0_4 = arith.constant 0 : index
    %3 = vector.load %arg7[%c0_3, %c0_4] : memref<1x896xf32, #tpu.memory_space<vmem>>, vector<1x896xf32>
    %4 = vector.broadcast %3 : vector<1x896xf32> to vector<8x896xf32>
    %5 = arith.addf %2, %4 : vector<8x896xf32>
    %cst_5 = arith.constant 5.000000e-01 : f32
    %6 = vector.broadcast %cst_5 : f32 to vector<8x896xf32>
    %7 = arith.mulf %6, %5 : vector<8x896xf32>
    %8 = math.tanh %7 : vector<8x896xf32>
    %cst_6 = arith.constant 5.000000e-01 : f32
    %9 = vector.broadcast %cst_6 : f32 to vector<8x896xf32>
    %10 = arith.mulf %9, %8 : vector<8x896xf32>
    %cst_7 = arith.constant 5.000000e-01 : f32
    %11 = vector.broadcast %cst_7 : f32 to vector<8x896xf32>
    %12 = arith.addf %10, %11 : vector<8x896xf32>
    %13 = arith.mulf %5, %12 : vector<8x896xf32>
    %14 = arith.truncf %13 : vector<8x896xf32> to vector<8x896xbf16>
    %c0_8 = arith.constant 0 : index
    %c0_9 = arith.constant 0 : index
    %15 = vector.load %arg3[%c0_8, %c0_9] : memref<896x512xbf16, #tpu.memory_space<vmem>>, vector<896x512xbf16>
    %cst_10 = arith.constant dense<0.000000e+00> : vector<8x512xf32>
    %16 = tpu.matmul %14, %15, %cst_10 {dimension_numbers = #tpu.dot_dimension_numbers<[1], [0], [0], [1], [0, 0, 1, 1], [], []>} : vector<8x896xbf16>, vector<896x512xbf16>, vector<8x512xf32> -> vector<8x512xf32>
    %c0_11 = arith.constant 0 : index
    %c0_12 = arith.constant 0 : index
    %17 = vector.load %arg8[%c0_11, %c0_12] : memref<1x512xf32, #tpu.memory_space<vmem>>, vector<1x512xf32>
    %18 = vector.broadcast %17 : vector<1x512xf32> to vector<8x512xf32>
    %19 = arith.addf %16, %18 : vector<8x512xf32>
    %cst_13 = arith.constant 5.000000e-01 : f32
    %20 = vector.broadcast %cst_13 : f32 to vector<8x512xf32>
    %21 = arith.mulf %20, %19 : vector<8x512xf32>
    %22 = math.tanh %21 : vector<8x512xf32>
    %cst_14 = arith.constant 5.000000e-01 : f32
    %23 = vector.broadcast %cst_14 : f32 to vector<8x512xf32>
    %24 = arith.mulf %23, %22 : vector<8x512xf32>
    %cst_15 = arith.constant 5.000000e-01 : f32
    %25 = vector.broadcast %cst_15 : f32 to vector<8x512xf32>
    %26 = arith.addf %24, %25 : vector<8x512xf32>
    %27 = arith.mulf %19, %26 : vector<8x512xf32>
    %28 = arith.truncf %27 : vector<8x512xf32> to vector<8x512xbf16>
    %c0_16 = arith.constant 0 : index
    %c0_17 = arith.constant 0 : index
    %29 = vector.load %arg4[%c0_16, %c0_17] : memref<512x384xbf16, #tpu.memory_space<vmem>>, vector<512x384xbf16>
    %cst_18 = arith.constant dense<0.000000e+00> : vector<8x384xf32>
    %30 = tpu.matmul %28, %29, %cst_18 {dimension_numbers = #tpu.dot_dimension_numbers<[1], [0], [0], [1], [0, 0, 1, 1], [], []>} : vector<8x512xbf16>, vector<512x384xbf16>, vector<8x384xf32> -> vector<8x384xf32>
    %c0_19 = arith.constant 0 : index
    %c0_20 = arith.constant 0 : index
    %31 = vector.load %arg9[%c0_19, %c0_20] : memref<1x384xf32, #tpu.memory_space<vmem>>, vector<1x384xf32>
    %32 = vector.broadcast %31 : vector<1x384xf32> to vector<8x384xf32>
    %33 = arith.addf %30, %32 : vector<8x384xf32>
    %cst_21 = arith.constant 5.000000e-01 : f32
    %34 = vector.broadcast %cst_21 : f32 to vector<8x384xf32>
    %35 = arith.mulf %34, %33 : vector<8x384xf32>
    %36 = math.tanh %35 : vector<8x384xf32>
    %cst_22 = arith.constant 5.000000e-01 : f32
    %37 = vector.broadcast %cst_22 : f32 to vector<8x384xf32>
    %38 = arith.mulf %37, %36 : vector<8x384xf32>
    %cst_23 = arith.constant 5.000000e-01 : f32
    %39 = vector.broadcast %cst_23 : f32 to vector<8x384xf32>
    %40 = arith.addf %38, %39 : vector<8x384xf32>
    %41 = arith.mulf %33, %40 : vector<8x384xf32>
    %42 = arith.truncf %41 : vector<8x384xf32> to vector<8x384xbf16>
    %c0_24 = arith.constant 0 : index
    %c0_25 = arith.constant 0 : index
    %43 = vector.load %arg5[%c0_24, %c0_25] : memref<384x128xbf16, #tpu.memory_space<vmem>>, vector<384x128xbf16>
    %cst_26 = arith.constant dense<0.000000e+00> : vector<8x128xf32>
    %44 = tpu.matmul %42, %43, %cst_26 {dimension_numbers = #tpu.dot_dimension_numbers<[1], [0], [0], [1], [0, 0, 1, 1], [], []>} : vector<8x384xbf16>, vector<384x128xbf16>, vector<8x128xf32> -> vector<8x128xf32>
    %c0_27 = arith.constant 0 : index
    %c0_28 = arith.constant 0 : index
    %45 = vector.load %arg10[%c0_27, %c0_28] : memref<1x128xf32, #tpu.memory_space<vmem>>, vector<1x128xf32>
    %46 = vector.broadcast %45 : vector<1x128xf32> to vector<8x128xf32>
    %47 = arith.addf %44, %46 : vector<8x128xf32>
    %cst_29 = arith.constant 5.000000e-01 : f32
    %48 = vector.broadcast %cst_29 : f32 to vector<8x128xf32>
    %49 = arith.mulf %48, %47 : vector<8x128xf32>
    %50 = math.tanh %49 : vector<8x128xf32>
    %cst_30 = arith.constant 5.000000e-01 : f32
    %51 = vector.broadcast %cst_30 : f32 to vector<8x128xf32>
    %52 = arith.mulf %51, %50 : vector<8x128xf32>
    %cst_31 = arith.constant 5.000000e-01 : f32
    %53 = vector.broadcast %cst_31 : f32 to vector<8x128xf32>
    %54 = arith.addf %52, %53 : vector<8x128xf32>
    %55 = arith.mulf %47, %54 : vector<8x128xf32>
    %56 = arith.truncf %55 : vector<8x128xf32> to vector<8x128xbf16>
    %c0_32 = arith.constant 0 : index
    %c0_33 = arith.constant 0 : index
    %57 = vector.load %arg6[%c0_32, %c0_33] : memref<128x128xbf16, #tpu.memory_space<vmem>>, vector<128x128xbf16>
    %cst_34 = arith.constant dense<0.000000e+00> : vector<8x128xf32>
    %58 = tpu.matmul %56, %57, %cst_34 {dimension_numbers = #tpu.dot_dimension_numbers<[1], [0], [0], [1], [0, 0, 1, 1], [], []>} : vector<8x128xbf16>, vector<128x128xbf16>, vector<8x128xf32> -> vector<8x128xf32>
    %c0_35 = arith.constant 0 : index
    %c0_36 = arith.constant 0 : index
    %59 = vector.load %arg11[%c0_35, %c0_36] : memref<1x128xf32, #tpu.memory_space<vmem>>, vector<1x128xf32>
    %60 = vector.broadcast %59 : vector<1x128xf32> to vector<8x128xf32>
    %61 = arith.addf %58, %60 : vector<8x128xf32>
    %cst_37 = arith.constant 5.000000e-01 : f32
    %62 = vector.broadcast %cst_37 : f32 to vector<8x128xf32>
    %63 = arith.mulf %62, %61 : vector<8x128xf32>
    %64 = math.tanh %63 : vector<8x128xf32>
    %cst_38 = arith.constant 5.000000e-01 : f32
    %65 = vector.broadcast %cst_38 : f32 to vector<8x128xf32>
    %66 = arith.mulf %65, %64 : vector<8x128xf32>
    %cst_39 = arith.constant 5.000000e-01 : f32
    %67 = vector.broadcast %cst_39 : f32 to vector<8x128xf32>
    %68 = arith.addf %66, %67 : vector<8x128xf32>
    %69 = arith.mulf %61, %68 : vector<8x128xf32>
    %70 = arith.truncf %69 : vector<8x128xf32> to vector<8x128xbf16>
    %c0_40 = arith.constant 0 : index
    %c0_41 = arith.constant 0 : index
    %71 = vector.load %arg12[%c0_40, %c0_41] : memref<8x128xbf16, #tpu.memory_space<vmem>>, vector<8x128xbf16>
    tpu.vector_store %arg12[%c0_40, %c0_41], %70 {strides = array<i32>} : memref<8x128xbf16, #tpu.memory_space<vmem>>, vector<8x128xbf16>,
    return
  }
  func.func @transform_0(%arg0: i32) -> (i32, i32) {
    %c0_i32 = arith.constant 0 : i32
    %c0_i32_0 = arith.constant 0 : i32
    return %arg0, %c0_i32 : i32, i32
  }
  func.func @transform_1(%arg0: i32) -> (i32, i32) {
    %c0_i32 = arith.constant 0 : i32
    %c0_i32_0 = arith.constant 0 : i32
    %c0_i32_1 = arith.constant 0 : i32
    return %c0_i32, %c0_i32_0 : i32, i32
  }
  func.func @transform_2(%arg0: i32) -> (i32, i32) {
    %c0_i32 = arith.constant 0 : i32
    %c0_i32_0 = arith.constant 0 : i32
    %c0_i32_1 = arith.constant 0 : i32
    return %c0_i32, %c0_i32_0 : i32, i32
  }
  func.func @transform_3(%arg0: i32) -> (i32, i32) {
    %c0_i32 = arith.constant 0 : i32
    %c0_i32_0 = arith.constant 0 : i32
    %c0_i32_1 = arith.constant 0 : i32
    return %c0_i32, %c0_i32_0 : i32, i32
  }
  func.func @transform_4(%arg0: i32) -> (i32, i32) {
    %c0_i32 = arith.constant 0 : i32
    %c0_i32_0 = arith.constant 0 : i32
    %c0_i32_1 = arith.constant 0 : i32
    return %c0_i32, %c0_i32_0 : i32, i32
  }
  func.func @transform_5(%arg0: i32) -> (i32, i32) {
    %c0_i32 = arith.constant 0 : i32
    %c0_i32_0 = arith.constant 0 : i32
    %c0_i32_1 = arith.constant 0 : i32
    return %c0_i32, %c0_i32_0 : i32, i32
  }
  func.func @transform_6(%arg0: i32) -> (i32, i32) {
    %c0_i32 = arith.constant 0 : i32
    %c0_i32_0 = arith.constant 0 : i32
    %c0_i32_1 = arith.constant 0 : i32
    return %c0_i32, %c0_i32_0 : i32, i32
  }
  func.func @transform_7(%arg0: i32) -> (i32, i32) {
    %c0_i32 = arith.constant 0 : i32
    %c0_i32_0 = arith.constant 0 : i32
    %c0_i32_1 = arith.constant 0 : i32
    return %c0_i32, %c0_i32_0 : i32, i32
  }
  func.func @transform_8(%arg0: i32) -> (i32, i32) {
    %c0_i32 = arith.constant 0 : i32
    %c0_i32_0 = arith.constant 0 : i32
    %c0_i32_1 = arith.constant 0 : i32
    return %c0_i32, %c0_i32_0 : i32, i32
  }
  func.func @transform_9(%arg0: i32) -> (i32, i32) {
    %c0_i32 = arith.constant 0 : i32
    %c0_i32_0 = arith.constant 0 : i32
    %c0_i32_1 = arith.constant 0 : i32
    return %c0_i32, %c0_i32_0 : i32, i32
  }
  func.func @transform_10(%arg0: i32) -> (i32, i32) {
    %c0_i32 = arith.constant 0 : i32
    %c0_i32_0 = arith.constant 0 : i32
    %c0_i32_1 = arith.constant 0 : i32
    return %c0_i32, %c0_i32_0 : i32, i32
  }
  func.func @transform_11(%arg0: i32) -> (i32, i32) {
    %c0_i32 = arith.constant 0 : i32
    %c0_i32_0 = arith.constant 0 : i32
    return %arg0, %c0_i32 : i32, i32
  }
}

module attributes {stable_mosaic.version = 11 : i64} {
  func.func @kernel(%arg0: i32, %arg1: memref<8x256xbf16, #tpu.memory_space<vmem>>, %arg2: memref<256x896xbf16, #tpu.memory_space<vmem>>, %arg3: memref<896x512xbf16, #tpu.memory_space<vmem>>, %arg4: memref<512x384xbf16, #tpu.memory_space<vmem>>, %arg5: memref<384x128xbf16, #tpu.memory_space<vmem>>, %arg6: memref<128x128xbf16, #tpu.memory_space<vmem>>, %arg7: memref<1x896xf32, #tpu.memory_space<vmem>>, %arg8: memref<1x512xf32, #tpu.memory_space<vmem>>, %arg9: memref<1x384xf32, #tpu.memory_space<vmem>>, %arg10: memref<1x128xf32, #tpu.memory_space<vmem>>, %arg11: memref<1x128xf32, #tpu.memory_space<vmem>>, %arg12: memref<8x128xbf16, #tpu.memory_space<vmem>>) attributes {dimension_semantics = [#tpu.dimension_semantics<parallel>], iteration_bounds = array<i64: 1>, scalar_prefetch = 0 : i64, scratch_operands = 0 : i64, tpu.core_type = #tpu.core_type<tc>, window_params = [{transform_indices = @transform_0, window_bounds = array<i64: 8, 256>}, {pipeline_mode = #tpu.pipeline_mode<synchronous>, transform_indices = @transform_1, window_bounds = array<i64: 256, 896>}, {pipeline_mode = #tpu.pipeline_mode<synchronous>, transform_indices = @transform_2, window_bounds = array<i64: 896, 512>}, {pipeline_mode = #tpu.pipeline_mode<synchronous>, transform_indices = @transform_3, window_bounds = array<i64: 512, 384>}, {pipeline_mode = #tpu.pipeline_mode<synchronous>, transform_indices = @transform_4, window_bounds = array<i64: 384, 128>}, {pipeline_mode = #tpu.pipeline_mode<synchronous>, transform_indices = @transform_5, window_bounds = array<i64: 128, 128>}, {pipeline_mode = #tpu.pipeline_mode<synchronous>, transform_indices = @transform_6, window_bounds = array<i64: 1, 896>}, {pipeline_mode = #tpu.pipeline_mode<synchronous>, transform_indices = @transform_7, window_bounds = array<i64: 1, 512>}, {pipeline_mode = #tpu.pipeline_mode<synchronous>, transform_indices = @transform_8, window_bounds = array<i64: 1, 384>}, {pipeline_mode = #tpu.pipeline_mode<synchronous>, transform_indices = @transform_9, window_bounds = array<i64: 1, 128>}, {pipeline_mode = #tpu.pipeline_mode<synchronous>, transform_indices = @transform_10, window_bounds = array<i64: 1, 128>}, {transform_indices = @transform_11, window_bounds = array<i64: 8, 128>}]} {
    %c0 = arith.constant 0 : index
    %c0_0 = arith.constant 0 : index
    %0 = vector.load %arg1[%c0, %c0_0] : memref<8x256xbf16, #tpu.memory_space<vmem>>, vector<8x256xbf16>
    %c0_1 = arith.constant 0 : index
    %c0_2 = arith.constant 0 : index
    %1 = vector.load %arg2[%c0_1, %c0_2] : memref<256x896xbf16, #tpu.memory_space<vmem>>, vector<256x896xbf16>
    %cst = arith.constant dense<0.000000e+00> : vector<8x896xf32>
    %2 = tpu.matmul %0, %1, %cst {dimension_numbers = #tpu.dot_dimension_numbers<[1], [0], [0], [1], [0, 0, 1, 1], [], []>} : vector<8x256xbf16>, vector<256x896xbf16>, vector<8x896xf32> -> vector<8x896xf32>
    %c0_3 = arith.constant 0 : index
    %c0_4 = arith.constant 0 : index
    %3 = vector.load %arg7[%c0_3, %c0_4] : memref<1x896xf32, #tpu.memory_space<vmem>>, vector<1x896xf32>
    %4 = vector.broadcast %3 : vector<1x896xf32> to vector<8x896xf32>
    %5 = arith.addf %2, %4 : vector<8x896xf32>
    %cst_5 = arith.constant 5.000000e-01 : f32
    %6 = vector.broadcast %cst_5 : f32 to vector<8x896xf32>
    %7 = arith.mulf %6, %5 : vector<8x896xf32>
    %8 = math.tanh %7 : vector<8x896xf32>
    %cst_6 = arith.constant 5.000000e-01 : f32
    %9 = vector.broadcast %cst_6 : f32 to vector<8x896xf32>
    %10 = arith.mulf %9, %8 : vector<8x896xf32>
    %cst_7 = arith.constant 5.000000e-01 : f32
    %11 = vector.broadcast %cst_7 : f32 to vector<8x896xf32>
    %12 = arith.addf %10, %11 : vector<8x896xf32>
    %13 = arith.mulf %5, %12 : vector<8x896xf32>
    %14 = arith.truncf %13 : vector<8x896xf32> to vector<8x896xbf16>
    %c0_8 = arith.constant 0 : index
    %c0_9 = arith.constant 0 : index
    %15 = vector.load %arg3[%c0_8, %c0_9] : memref<896x512xbf16, #tpu.memory_space<vmem>>, vector<896x512xbf16>
    %cst_10 = arith.constant dense<0.000000e+00> : vector<8x512xf32>
    %16 = tpu.matmul %14, %15, %cst_10 {dimension_numbers = #tpu.dot_dimension_numbers<[1], [0], [0], [1], [0, 0, 1, 1], [], []>} : vector<8x896xbf16>, vector<896x512xbf16>, vector<8x512xf32> -> vector<8x512xf32>
    %c0_11 = arith.constant 0 : index
    %c0_12 = arith.constant 0 : index
    %17 = vector.load %arg8[%c0_11, %c0_12] : memref<1x512xf32, #tpu.memory_space<vmem>>, vector<1x512xf32>
    %18 = vector.broadcast %17 : vector<1x512xf32> to vector<8x512xf32>
    %19 = arith.addf %16, %18 : vector<8x512xf32>
    %cst_13 = arith.constant 5.000000e-01 : f32
    %20 = vector.broadcast %cst_13 : f32 to vector<8x512xf32>
    %21 = arith.mulf %20, %19 : vector<8x512xf32>
    %22 = math.tanh %21 : vector<8x512xf32>
    %cst_14 = arith.constant 5.000000e-01 : f32
    %23 = vector.broadcast %cst_14 : f32 to vector<8x512xf32>
    %24 = arith.mulf %23, %22 : vector<8x512xf32>
    %cst_15 = arith.constant 5.000000e-01 : f32
    %25 = vector.broadcast %cst_15 : f32 to vector<8x512xf32>
    %26 = arith.addf %24, %25 : vector<8x512xf32>
    %27 = arith.mulf %19, %26 : vector<8x512xf32>
    %28 = arith.truncf %27 : vector<8x512xf32> to vector<8x512xbf16>
    %c0_16 = arith.constant 0 : index
    %c0_17 = arith.constant 0 : index
    %29 = vector.load %arg4[%c0_16, %c0_17] : memref<512x384xbf16, #tpu.memory_space<vmem>>, vector<512x384xbf16>
    %cst_18 = arith.constant dense<0.000000e+00> : vector<8x384xf32>
    %30 = tpu.matmul %28, %29, %cst_18 {dimension_numbers = #tpu.dot_dimension_numbers<[1], [0], [0], [1], [0, 0, 1, 1], [], []>} : vector<8x512xbf16>, vector<512x384xbf16>, vector<8x384xf32> -> vector<8x384xf32>
    %c0_19 = arith.constant 0 : index
    %c0_20 = arith.constant 0 : index
    %31 = vector.load %arg9[%c0_19, %c0_20] : memref<1x384xf32, #tpu.memory_space<vmem>>, vector<1x384xf32>
    %32 = vector.broadcast %31 : vector<1x384xf32> to vector<8x384xf32>
    %33 = arith.addf %30, %32 : vector<8x384xf32>
    %cst_21 = arith.constant 5.000000e-01 : f32
    %34 = vector.broadcast %cst_21 : f32 to vector<8x384xf32>
    %35 = arith.mulf %34, %33 : vector<8x384xf32>
    %36 = math.tanh %35 : vector<8x384xf32>
    %cst_22 = arith.constant 5.000000e-01 : f32
    %37 = vector.broadcast %cst_22 : f32 to vector<8x384xf32>
    %38 = arith.mulf %37, %36 : vector<8x384xf32>
    %cst_23 = arith.constant 5.000000e-01 : f32
    %39 = vector.broadcast %cst_23 : f32 to vector<8x384xf32>
    %40 = arith.addf %38, %39 : vector<8x384xf32>
    %41 = arith.mulf %33, %40 : vector<8x384xf32>
    %42 = arith.truncf %41 : vector<8x384xf32> to vector<8x384xbf16>
    %c0_24 = arith.constant 0 : index
    %c0_25 = arith.constant 0 : index
    %43 = vector.load %arg5[%c0_24, %c0_25] : memref<384x128xbf16, #tpu.memory_space<vmem>>, vector<384x128xbf16>
    %cst_26 = arith.constant dense<0.000000e+00> : vector<8x128xf32>
    %44 = tpu.matmul %42, %43, %cst_26 {dimension_numbers = #tpu.dot_dimension_numbers<[1], [0], [0], [1], [0, 0, 1, 1], [], []>} : vector<8x384xbf16>, vector<384x128xbf16>, vector<8x128xf32> -> vector<8x128xf32>
    %c0_27 = arith.constant 0 : index
    %c0_28 = arith.constant 0 : index
    %45 = vector.load %arg10[%c0_27, %c0_28] : memref<1x128xf32, #tpu.memory_space<vmem>>, vector<1x128xf32>
    %46 = vector.broadcast %45 : vector<1x128xf32> to vector<8x128xf32>
    %47 = arith.addf %44, %46 : vector<8x128xf32>
    %cst_29 = arith.constant 5.000000e-01 : f32
    %48 = vector.broadcast %cst_29 : f32 to vector<8x128xf32>
    %49 = arith.mulf %48, %47 : vector<8x128xf32>
    %50 = math.tanh %49 : vector<8x128xf32>
    %cst_30 = arith.constant 5.000000e-01 : f32
    %51 = vector.broadcast %cst_30 : f32 to vector<8x128xf32>
    %52 = arith.mulf %51, %50 : vector<8x128xf32>
    %cst_31 = arith.constant 5.000000e-01 : f32
    %53 = vector.broadcast %cst_31 : f32 to vector<8x128xf32>
    %54 = arith.addf %52, %53 : vector<8x128xf32>
    %55 = arith.mulf %47, %54 : vector<8x128xf32>
    %56 = arith.truncf %55 : vector<8x128xf32> to vector<8x128xbf16>
    %c0_32 = arith.constant 0 : index
    %c0_33 = arith.constant 0 : index
    %57 = vector.load %arg6[%c0_32, %c0_33] : memref<128x128xbf16, #tpu.memory_space<vmem>>, vector<128x128xbf16>
    %cst_34 = arith.constant dense<0.000000e+00> : vector<8x128xf32>
    %58 = tpu.matmul %56, %57, %cst_34 {dimension_numbers = #tpu.dot_dimension_numbers<[1], [0], [0], [1], [0, 0, 1, 1], [], []>} : vector<8x128xbf16>, vector<128x128xbf16>, vector<8x128xf32> -> vector<8x128xf32>
    %c0_35 = arith.constant 0 : index
    %c0_36 = arith.constant 0 : index
    %59 = vector.load %arg11[%c0_35, %c0_36] : memref<1x128xf32, #tpu.memory_space<vmem>>, vector<1x128xf32>
    %60 = vector.broadcast %59 : vector<1x128xf32> to vector<8x128xf32>
    %61 = arith.addf %58, %60 : vector<8x128xf32>
    %cst_37 = arith.constant 5.000000e-01 : f32
    %62 = vector.broadcast %cst_37 : f32 to vector<8x128xf32>
    %63 = arith.mulf %62, %61 : vector<8x128xf32>
    %64 = math.tanh %63 : vector<8x128xf32>
    %cst_38 = arith.constant 5.000000e-01 : f32
    %65 = vector.broadcast %cst_38 : f32 to vector<8x128xf32>
    %66 = arith.mulf %65, %64 : vector<8x128xf32>
    %cst_39 = arith.constant 5.000000e-01 : f32
    %67 = vector.broadcast %cst_39 : f32 to vector<8x128xf32>
    %68 = arith.addf %66, %67 : vector<8x128xf32>
    %69 = arith.mulf %61, %68 : vector<8x128xf32>
    %70 = arith.truncf %69 : vector<8x128xf32> to vector<8x128xbf16>
    %c0_40 = arith.constant 0 : index
    %c0_41 = arith.constant 0 : index
    %71 = vector.load %arg12[%c0_40, %c0_41] : memref<8x128xbf16, #tpu.memory_space<vmem>>, vector<8x128xbf16>
    tpu.vector_store %arg12[%c0_40, %c0_41], %70 {strides = array<i32>} : memref<8x128xbf16, #tpu.memory_space<vmem>>, vector<8x128xbf16>,
    return
  }
  func.func @transform_0(%arg0: i32) -> (i32, i32) {
    %c0_i32 = arith.constant 0 : i32
    %c0_i32_0 = arith.constant 0 : i32
    return %arg0, %c0_i32 : i32, i32
  }
  func.func @transform_1(%arg0: i32) -> (i32, i32) {
    %c0_i32 = arith.constant 0 : i32
    %c0_i32_0 = arith.constant 0 : i32
    %c0_i32_1 = arith.constant 0 : i32
    return %c0_i32, %c0_i32_0 : i32, i32
  }
  func.func @transform_2(%arg0: i32) -> (i32, i32) {
    %c0_i32 = arith.constant 0 : i32
    %c0_i32_0 = arith.constant 0 : i32
    %c0_i32_1 = arith.constant 0 : i32
    return %c0_i32, %c0_i32_0 : i32, i32
  }
  func.func @transform_3(%arg0: i32) -> (i32, i32) {
    %c0_i32 = arith.constant 0 : i32
    %c0_i32_0 = arith.constant 0 : i32
    %c0_i32_1 = arith.constant 0 : i32
    return %c0_i32, %c0_i32_0 : i32, i32
  }
  func.func @transform_4(%arg0: i32) -> (i32, i32) {
    %c0_i32 = arith.constant 0 : i32
    %c0_i32_0 = arith.constant 0 : i32
    %c0_i32_1 = arith.constant 0 : i32
    return %c0_i32, %c0_i32_0 : i32, i32
  }
  func.func @transform_5(%arg0: i32) -> (i32, i32) {
    %c0_i32 = arith.constant 0 : i32
    %c0_i32_0 = arith.constant 0 : i32
    %c0_i32_1 = arith.constant 0 : i32
    return %c0_i32, %c0_i32_0 : i32, i32
  }
  func.func @transform_6(%arg0: i32) -> (i32, i32) {
    %c0_i32 = arith.constant 0 : i32
    %c0_i32_0 = arith.constant 0 : i32
    %c0_i32_1 = arith.constant 0 : i32
    return %c0_i32, %c0_i32_0 : i32, i32
  }
  func.func @transform_7(%arg0: i32) -> (i32, i32) {
    %c0_i32 = arith.constant 0 : i32
    %c0_i32_0 = arith.constant 0 : i32
    %c0_i32_1 = arith.constant 0 : i32
    return %c0_i32, %c0_i32_0 : i32, i32
  }
  func.func @transform_8(%arg0: i32) -> (i32, i32) {
    %c0_i32 = arith.constant 0 : i32
    %c0_i32_0 = arith.constant 0 : i32
    %c0_i32_1 = arith.constant 0 : i32
    return %c0_i32, %c0_i32_0 : i32, i32
  }
  func.func @transform_9(%arg0: i32) -> (i32, i32) {
    %c0_i32 = arith.constant 0 : i32
    %c0_i32_0 = arith.constant 0 : i32
    %c0_i32_1 = arith.constant 0 : i32
    return %c0_i32, %c0_i32_0 : i32, i32
  }
  func.func @transform_10(%arg0: i32) -> (i32, i32) {
    %c0_i32 = arith.constant 0 : i32
    %c0_i32_0 = arith.constant 0 : i32
    %c0_i32_1 = arith.constant 0 : i32
    return %c0_i32, %c0_i32_0 : i32, i32
  }
  func.func @transform_11(%arg0: i32) -> (i32, i32) {
    %c0_i32 = arith.constant 0 : i32
    %c0_i32_0 = arith.constant 0 : i32
    return %arg0, %c0_i32 : i32, i32
  }
}

</mosaic_0001>

<llo_original>
// kernel: _fused_forward.1
$region0: #{_fused_forward.1}
  #allocation0 [shape = 'u32[]', space=smem, size = 0x4, offset = 0x4, fixed_abs, tag = 'smem constant byte address 0x4 - core index']
  #allocation1 [shape = 'u32[144,128]{1,0:T(1,128)}', space=vmem, size = 0x12000, scoped, tag = 'internal scratch']
  %s0 = inlined_call_operand.vmem [shape: bf16[8,256], index: 0, kind: input, shape index: {}]
  %s1 = inlined_call_operand.hbm [shape: bf16[256,896], index: 1, kind: input, shape index: {}]
  %s2 = inlined_call_operand.hbm [shape: bf16[896,512], index: 2, kind: input, shape index: {}]
  %s3 = inlined_call_operand.hbm [shape: bf16[512,384], index: 3, kind: input, shape index: {}]
  %s4 = inlined_call_operand.hbm [shape: bf16[384,128], index: 4, kind: input, shape index: {}]
  %s5 = inlined_call_operand.vmem [shape: bf16[128,128], index: 5, kind: input, shape index: {}]
  %s6 = inlined_call_operand.vmem [shape: f32[1,896], index: 6, kind: input, shape index: {}]
  %s7 = inlined_call_operand.vmem [shape: f32[1,512], index: 7, kind: input, shape index: {}]
  %s8 = inlined_call_operand.vmem [shape: f32[1,384], index: 8, kind: input, shape index: {}]
  %s9 = inlined_call_operand.vmem [shape: f32[1,128], index: 9, kind: input, shape index: {}]
  %s10 = inlined_call_operand.vmem [shape: f32[1,128], index: 10, kind: input, shape index: {}]
  %s11 = inlined_call_operand.vmem [shape: bf16[8,128], index: 11, kind: output, shape index: {}]
  %s12 = sld [smem:[#allocation0]]
  $region70: #{_fused_forward.1} parent=0
    _
  %s14 = ssub.s32 1, %s12
  %s15 = scalar_select 0, %s14, %s12
  $region1: #{_fused_forward.1} parent=0
    #allocation2 [shape = 'u8[458752]{0}', space=vmem, size = 0x70000, scoped, tag = 'input window, operand 1, single buffered']
    #allocation3 [shape = 's32[1]{0}', space=sflag, size = 0x4, scoped, tag = 'scoped memory for _fused_forward.1']
    #allocation4 [shape = 'u8[917504]{0}', space=vmem, size = 0xe0000, scoped, tag = 'input window, operand 2, single buffered']
    #allocation5 [shape = 's32[1]{0}', space=sflag, size = 0x4, scoped, tag = 'scoped memory for _fused_forward.1']
    #allocation6 [shape = 'u8[393216]{0}', space=vmem, size = 0x60000, scoped, tag = 'input window, operand 3, single buffered']
    #allocation7 [shape = 'u8[98304]{0}', space=vmem, size = 0x18000, scoped, tag = 'input window, operand 4, single buffered']
    #allocation8 [shape = 's32[1]{0}', space=sflag, size = 0x4, scoped, tag = 'scoped memory for _fused_forward.1']
    %16 = vsyncpa [#allocation3], 0
    %17 = vsyncpa [#allocation5], 0
    %18 = vsyncpa [#allocation8], 0
    // Predicated region
    $region2: #{_fused_forward.1} parent=1 // pred_check
      _
    $region3: #{_fused_forward.1} parent=1 // pred_check_branch
      %20 = sbr.rel (0) target = $region5
    $region4: #{_fused_forward.1} parent=1 // pred_region
      _
    $region5: #{_fused_forward.1} parent=1 // pred_fallthru
      _
    // Predicated region
    $region6: #{_fused_forward.1} parent=1 // pred_check
      _
    $region7: #{_fused_forward.1} parent=1 // pred_check_branch
      %22 = sbr.rel (0) target = $region9
    $region8: #{_fused_forward.1} parent=1 // pred_region
      %s24 = ssub.s32 14336, 14336
      %25 = vsyncadd [#allocation3], %s24
      %s26 = sshll.u32 [#allocation2], 4
      %s27 = int_to_ptr.vmem [resolvable:$true] %s26
      %32 = dma.hbm_to_vmem [thread:$0]  %s1, 14336, %s27, [#allocation3], 448, 448, 28
    $region9: #{_fused_forward.1} parent=1 // pred_fallthru
      _
    // Predicated region
    $region10: #{_fused_forward.1} parent=1 // pred_check
      _
    $region11: #{_fused_forward.1} parent=1 // pred_check_branch
      %34 = sbr.rel (0) target = $region13
    $region12: #{_fused_forward.1} parent=1 // pred_region
      %s36 = ssub.s32 28672, 28672
      %37 = vsyncadd [#allocation5], %s36
      %s38 = sshll.u32 [#allocation4], 4
      %s39 = int_to_ptr.vmem [resolvable:$true] %s38
      %44 = dma.hbm_to_vmem [thread:$0]  %s2, 28672, %s39, [#allocation5], 256, 256, 16
    $region13: #{_fused_forward.1} parent=1 // pred_fallthru
      _
    // Predicated region
    $region14: #{_fused_forward.1} parent=1 // pred_check
      _
    $region15: #{_fused_forward.1} parent=1 // pred_check_branch
      %46 = sbr.rel (0) target = $region17
    $region16: #{_fused_forward.1} parent=1 // pred_region
      %s48 = ssub.s32 12288, 12288
      %49 = vsyncadd [#allocation5], %s48
      %s50 = sshll.u32 [#allocation6], 4
      %s51 = int_to_ptr.vmem [resolvable:$true] %s50
      %56 = dma.hbm_to_vmem [thread:$0]  %s3, 12288, %s51, [#allocation5], 192, 192, 12
    $region17: #{_fused_forward.1} parent=1 // pred_fallthru
      _
    // Predicated region
    $region18: #{_fused_forward.1} parent=1 // pred_check
      _
    $region19: #{_fused_forward.1} parent=1 // pred_check_branch
      %58 = sbr.rel (0) target = $region21
    $region20: #{_fused_forward.1} parent=1 // pred_region
      %s60 = ssub.s32 3072, 3072
      %61 = vsyncadd [#allocation8], %s60
      %s62 = sshll.u32 [#allocation7], 4
      %s63 = int_to_ptr.vmem [resolvable:$true] %s62
      %68 = dma.hbm_to_vmem [thread:$0]  %s4, 3072, %s63, [#allocation8], 64, 64, 4
    $region21: #{_fused_forward.1} parent=1 // pred_fallthru
      _
    // Predicated region
    $region22: #{_fused_forward.1} parent=1 // pred_check
      _
    $region23: #{_fused_forward.1} parent=1 // pred_check_branch
      %70 = sbr.rel (0) target = $region25
    $region24: #{_fused_forward.1} parent=1 // pred_region
      _
    $region25: #{_fused_forward.1} parent=1 // pred_fallthru
      _
    // Predicated region
    $region26: #{_fused_forward.1} parent=1 // pred_check
      _
    $region27: #{_fused_forward.1} parent=1 // pred_check_branch
      %72 = sbr.rel (0) target = $region29
    $region28: #{_fused_forward.1} parent=1 // pred_region
      _
    $region29: #{_fused_forward.1} parent=1 // pred_fallthru
      _
    // Predicated region
    $region30: #{_fused_forward.1} parent=1 // pred_check
      _
    $region31: #{_fused_forward.1} parent=1 // pred_check_branch
      %74 = sbr.rel (0) target = $region33
    $region32: #{_fused_forward.1} parent=1 // pred_region
      _
    $region33: #{_fused_forward.1} parent=1 // pred_fallthru
      _
    // Predicated region
    $region34: #{_fused_forward.1} parent=1 // pred_check
      _
    $region35: #{_fused_forward.1} parent=1 // pred_check_branch
      %76 = sbr.rel (0) target = $region37
    $region36: #{_fused_forward.1} parent=1 // pred_region
      _
    $region37: #{_fused_forward.1} parent=1 // pred_fallthru
      _
    // Predicated region
    $region38: #{_fused_forward.1} parent=1 // pred_check
      _
    $region39: #{_fused_forward.1} parent=1 // pred_check_branch
      %78 = sbr.rel (0) target = $region41
    $region40: #{_fused_forward.1} parent=1 // pred_region
      _
    $region41: #{_fused_forward.1} parent=1 // pred_fallthru
      _
    // Predicated region
    $region42: #{_fused_forward.1} parent=1 // pred_check
      _
    $region43: #{_fused_forward.1} parent=1 // pred_check_branch
      %80 = sbr.rel (0) target = $region45
    $region44: #{_fused_forward.1} parent=1 // pred_region
      _
    $region45: #{_fused_forward.1} parent=1 // pred_fallthru
      _
    // Predicated region
    $region46: #{_fused_forward.1} parent=1 // pred_check
      _
    $region47: #{_fused_forward.1} parent=1 // pred_check_branch
      %82 = sbr.rel (0) target = $region49
    $region48: #{_fused_forward.1} parent=1 // pred_region
      %83 = dma.done [#allocation3], 14336
    $region49: #{_fused_forward.1} parent=1 // pred_fallthru
      _
    // Predicated region
    $region50: #{_fused_forward.1} parent=1 // pred_check
      _
    $region51: #{_fused_forward.1} parent=1 // pred_check_branch
      %85 = sbr.rel (0) target = $region53
    $region52: #{_fused_forward.1} parent=1 // pred_region
      %86 = dma.done [#allocation5], 28672
    $region53: #{_fused_forward.1} parent=1 // pred_fallthru
      _
    // Predicated region
    $region54: #{_fused_forward.1} parent=1 // pred_check
      _
    $region55: #{_fused_forward.1} parent=1 // pred_check_branch
      %88 = sbr.rel (0) target = $region57
    $region56: #{_fused_forward.1} parent=1 // pred_region
      %89 = dma.done [#allocation5], 12288
    $region57: #{_fused_forward.1} parent=1 // pred_fallthru
      _
    // Predicated region
    $region58: #{_fused_forward.1} parent=1 // pred_check
      _
    $region59: #{_fused_forward.1} parent=1 // pred_check_branch
      %91 = sbr.rel (0) target = $region61
    $region60: #{_fused_forward.1} parent=1 // pred_region
      %92 = dma.done [#allocation8], 3072
    $region61: #{_fused_forward.1} parent=1 // pred_fallthru
      _
    %v94 = vld [vmem:[%s0] sm:$0xff]
    %v95 = vld [vmem:[#allocation2] sm:$0xff]
    %v96 = vld [vmem:[#allocation2 + $0x8] sm:$0xff]
    %v97 = vld [vmem:[#allocation2 + $0x10] sm:$0xff]
    %v98 = vld [vmem:[#allocation2 + $0x18] sm:$0xf]
    %v99 = vld [vmem:[#allocation2 + $0x1c] sm:$0xff]
    %v100 = vld [vmem:[#allocation2 + $0x24] sm:$0xff]
    %v101 = vld [vmem:[#allocation2 + $0x2c] sm:$0xff]
    %v102 = vld [vmem:[#allocation2 + $0x34] sm:$0xf]
    %v103 = vld [vmem:[#allocation2 + $0x38] sm:$0xff]
    %v104 = vld [vmem:[#allocation2 + $0x40] sm:$0xff]
    %v105 = vld [vmem:[#allocation2 + $0x48] sm:$0xff]
    %v106 = vld [vmem:[#allocation2 + $0x50] sm:$0xf]
    %v107 = vld [vmem:[#allocation2 + $0x54] sm:$0xff]
    %v108 = vld [vmem:[#allocation2 + $0x5c] sm:$0xff]
    %v109 = vld [vmem:[#allocation2 + $0x64] sm:$0xff]
    %v110 = vld [vmem:[#allocation2 + $0x6c] sm:$0xf]
    %v111 = vld [vmem:[#allocation2 + $0x70] sm:$0xff]
    %v112 = vld [vmem:[#allocation2 + $0x78] sm:$0xff]
    %v113 = vld [vmem:[#allocation2 + $0x80] sm:$0xff]
    %v114 = vld [vmem:[#allocation2 + $0x88] sm:$0xf]
    %v115 = vld [vmem:[#allocation2 + $0x8c] sm:$0xff]
    %v116 = vld [vmem:[#allocation2 + $0x94] sm:$0xff]
    %v117 = vld [vmem:[#allocation2 + $0x9c] sm:$0xff]
    %v118 = vld [vmem:[#allocation2 + $0xa4] sm:$0xf]
    %v119 = vld [vmem:[#allocation2 + $0xa8] sm:$0xff]
    %v120 = vld [vmem:[#allocation2 + $0xb0] sm:$0xff]
    %v121 = vld [vmem:[#allocation2 + $0xb8] sm:$0xff]
    %v122 = vld [vmem:[#allocation2 + $0xc0] sm:$0xf]
    %v123 = vld [vmem:[#allocation2 + $0xc4] sm:$0xff]
    %v124 = vld [vmem:[#allocation2 + $0xcc] sm:$0xff]
    %v125 = vld [vmem:[#allocation2 + $0xd4] sm:$0xff]
    %v126 = vld [vmem:[#allocation2 + $0xdc] sm:$0xf]
    %v127 = vld [vmem:[#allocation2 + $0xe0] sm:$0xff]
    %v128 = vld [vmem:[#allocation2 + $0xe8] sm:$0xff]
    %v129 = vld [vmem:[#allocation2 + $0xf0] sm:$0xff]
    %v130 = vld [vmem:[#allocation2 + $0xf8] sm:$0xf]
    %v131 = vld [vmem:[#allocation2 + $0xfc] sm:$0xff]
    %v132 = vld [vmem:[#allocation2 + $0x104] sm:$0xff]
    %v133 = vld [vmem:[#allocation2 + $0x10c] sm:$0xff]
    %v134 = vld [vmem:[#allocation2 + $0x114] sm:$0xf]
    %v135 = vld [vmem:[#allocation2 + $0x118] sm:$0xff]
    %v136 = vld [vmem:[#allocation2 + $0x120] sm:$0xff]
    %v137 = vld [vmem:[#allocation2 + $0x128] sm:$0xff]
    %v138 = vld [vmem:[#allocation2 + $0x130] sm:$0xf]
    %v139 = vld [vmem:[#allocation2 + $0x134] sm:$0xff]
    %v140 = vld [vmem:[#allocation2 + $0x13c] sm:$0xff]
    %v141 = vld [vmem:[#allocation2 + $0x144] sm:$0xff]
    %v142 = vld [vmem:[#allocation2 + $0x14c] sm:$0xf]
    %v143 = vld [vmem:[#allocation2 + $0x150] sm:$0xff]
    %v144 = vld [vmem:[#allocation2 + $0x158] sm:$0xff]
    %v145 = vld [vmem:[#allocation2 + $0x160] sm:$0xff]
    %v146 = vld [vmem:[#allocation2 + $0x168] sm:$0xf]
    %v147 = vld [vmem:[#allocation2 + $0x16c] sm:$0xff]
    %v148 = vld [vmem:[#allocation2 + $0x174] sm:$0xff]
    %v149 = vld [vmem:[#allocation2 + $0x17c] sm:$0xff]
    %v150 = vld [vmem:[#allocation2 + $0x184] sm:$0xf]
    %v151 = vld [vmem:[#allocation2 + $0x188] sm:$0xff]
    %v152 = vld [vmem:[#allocation2 + $0x190] sm:$0xff]
    %v153 = vld [vmem:[#allocation2 + $0x198] sm:$0xff]
    %v154 = vld [vmem:[#allocation2 + $0x1a0] sm:$0xf]
    %v155 = vld [vmem:[#allocation2 + $0x1a4] sm:$0xff]
    %v156 = vld [vmem:[#allocation2 + $0x1ac] sm:$0xff]
    %v157 = vld [vmem:[#allocation2 + $0x1b4] sm:$0xff]
    %v158 = vld [vmem:[#allocation2 + $0x1bc] sm:$0xf]
    %v159 = vld [vmem:[#allocation2 + $0x1c0] sm:$0xff]
    %v160 = vld [vmem:[#allocation2 + $0x1c8] sm:$0xff]
    %v161 = vld [vmem:[#allocation2 + $0x1d0] sm:$0xff]
    %v162 = vld [vmem:[#allocation2 + $0x1d8] sm:$0xf]
    %v163 = vld [vmem:[#allocation2 + $0x1dc] sm:$0xff]
    %v164 = vld [vmem:[#allocation2 + $0x1e4] sm:$0xff]
    %v165 = vld [vmem:[#allocation2 + $0x1ec] sm:$0xff]
    %v166 = vld [vmem:[#allocation2 + $0x1f4] sm:$0xf]
    %v167 = vld [vmem:[#allocation2 + $0x1f8] sm:$0xff]
    %v168 = vld [vmem:[#allocation2 + $0x200] sm:$0xff]
    %v169 = vld [vmem:[#allocation2 + $0x208] sm:$0xff]
    %v170 = vld [vmem:[#allocation2 + $0x210] sm:$0xf]
    %v171 = vld [vmem:[#allocation2 + $0x214] sm:$0xff]
    %v172 = vld [vmem:[#allocation2 + $0x21c] sm:$0xff]
    %v173 = vld [vmem:[#allocation2 + $0x224] sm:$0xff]
    %v174 = vld [vmem:[#allocation2 + $0x22c] sm:$0xf]
    %v175 = vld [vmem:[#allocation2 + $0x230] sm:$0xff]
    %v176 = vld [vmem:[#allocation2 + $0x238] sm:$0xff]
    %v177 = vld [vmem:[#allocation2 + $0x240] sm:$0xff]
    %v178 = vld [vmem:[#allocation2 + $0x248] sm:$0xf]
    %v179 = vld [vmem:[#allocation2 + $0x24c] sm:$0xff]
    %v180 = vld [vmem:[#allocation2 + $0x254] sm:$0xff]
    %v181 = vld [vmem:[#allocation2 + $0x25c] sm:$0xff]
    %v182 = vld [vmem:[#allocation2 + $0x264] sm:$0xf]
    %v183 = vld [vmem:[#allocation2 + $0x268] sm:$0xff]
    %v184 = vld [vmem:[#allocation2 + $0x270] sm:$0xff]
    %v185 = vld [vmem:[#allocation2 + $0x278] sm:$0xff]
    %v186 = vld [vmem:[#allocation2 + $0x280] sm:$0xf]
    %v187 = vld [vmem:[#allocation2 + $0x284] sm:$0xff]
    %v188 = vld [vmem:[#allocation2 + $0x28c] sm:$0xff]
    %v189 = vld [vmem:[#allocation2 + $0x294] sm:$0xff]
    %v190 = vld [vmem:[#allocation2 + $0x29c] sm:$0xf]
    %v191 = vld [vmem:[#allocation2 + $0x2a0] sm:$0xff]
    %v192 = vld [vmem:[#allocation2 + $0x2a8] sm:$0xff]
    %v193 = vld [vmem:[#allocation2 + $0x2b0] sm:$0xff]
    %v194 = vld [vmem:[#allocation2 + $0x2b8] sm:$0xf]
    %v195 = vld [vmem:[#allocation2 + $0x2bc] sm:$0xff]
    %v196 = vld [vmem:[#allocation2 + $0x2c4] sm:$0xff]
    %v197 = vld [vmem:[#allocation2 + $0x2cc] sm:$0xff]
    %v198 = vld [vmem:[#allocation2 + $0x2d4] sm:$0xf]
    %v199 = vld [vmem:[#allocation2 + $0x2d8] sm:$0xff]
    %v200 = vld [vmem:[#allocation2 + $0x2e0] sm:$0xff]
    %v201 = vld [vmem:[#allocation2 + $0x2e8] sm:$0xff]
    %v202 = vld [vmem:[#allocation2 + $0x2f0] sm:$0xf]
    %v203 = vld [vmem:[#allocation2 + $0x2f4] sm:$0xff]
    %v204 = vld [vmem:[#allocation2 + $0x2fc] sm:$0xff]
    %v205 = vld [vmem:[#allocation2 + $0x304] sm:$0xff]
    %v206 = vld [vmem:[#allocation2 + $0x30c] sm:$0xf]
    %v207 = vld [vmem:[#allocation2 + $0x310] sm:$0xff]
    %v208 = vld [vmem:[#allocation2 + $0x318] sm:$0xff]
    %v209 = vld [vmem:[#allocation2 + $0x320] sm:$0xff]
    %v210 = vld [vmem:[#allocation2 + $0x328] sm:$0xf]
    %v211 = vld [vmem:[#allocation2 + $0x32c] sm:$0xff]
    %v212 = vld [vmem:[#allocation2 + $0x334] sm:$0xff]
    %v213 = vld [vmem:[#allocation2 + $0x33c] sm:$0xff]
    %v214 = vld [vmem:[#allocation2 + $0x344] sm:$0xf]
    %v215 = vld [vmem:[#allocation2 + $0x348] sm:$0xff]
    %v216 = vld [vmem:[#allocation2 + $0x350] sm:$0xff]
    %v217 = vld [vmem:[#allocation2 + $0x358] sm:$0xff]
    %v218 = vld [vmem:[#allocation2 + $0x360] sm:$0xf]
    %v219 = vld [vmem:[#allocation2 + $0x364] sm:$0xff]
    %v220 = vld [vmem:[#allocation2 + $0x36c] sm:$0xff]
    %v221 = vld [vmem:[#allocation2 + $0x374] sm:$0xff]
    %v222 = vld [vmem:[#allocation2 + $0x37c] sm:$0xf]
    %v223 = vld [vmem:[%s6] sm:$0xff]
    %v225 = vlaneseq
    %v226 = vshrl.u32 %v225, 7
    %v227 = vsub.s32 0, %v226
    %v228 = vrot.slane %v223, %v227
    %v229 = vlaneseq
    %v230 = vshrl.u32 %v229, 7
    %v231 = vsub.s32 1, %v230
    %v232 = vrot.slane %v223, %v231
    %v233 = vlaneseq
    %v234 = vshrl.u32 %v233, 7
    %v235 = vsub.s32 2, %v234
    %v236 = vrot.slane %v223, %v235
    %v237 = vlaneseq
    %v238 = vshrl.u32 %v237, 7
    %v239 = vsub.s32 3, %v238
    %v240 = vrot.slane %v223, %v239
    %v241 = vlaneseq
    %v242 = vshrl.u32 %v241, 7
    %v243 = vsub.s32 4, %v242
    %v244 = vrot.slane %v223, %v243
    %v245 = vlaneseq
    %v246 = vshrl.u32 %v245, 7
    %v247 = vsub.s32 5, %v246
    %v248 = vrot.slane %v223, %v247
    %v249 = vlaneseq
    %v250 = vshrl.u32 %v249, 7
    %v251 = vsub.s32 6, %v250
    %v252 = vrot.slane %v223, %v251
    %v261 = vunpack.c.l.b16 %v94
    %v262 = vunpack.c.h.b16 %v94
    %v263 = vpack.c.b16 %v261, %v261
    %v264 = vpack.c.b16 %v262, %v262
    %v395 = vunpack.c.l.b16 %v95
    %v396 = vunpack.c.h.b16 %v95
    %v397 = vunpack.c.l.b16 %v96
    %v398 = vunpack.c.h.b16 %v96
    %v399 = vunpack.c.l.b16 %v97
    %v400 = vunpack.c.h.b16 %v97
    %v401 = vunpack.c.l.b16 %v98
    %v402 = vunpack.c.l.b16 %v99
    %v403 = vunpack.c.h.b16 %v99
    %v404 = vunpack.c.l.b16 %v100
    %v405 = vunpack.c.h.b16 %v100
    %v406 = vunpack.c.l.b16 %v101
    %v407 = vunpack.c.h.b16 %v101
    %v408 = vunpack.c.l.b16 %v102
    %v409 = vunpack.c.l.b16 %v103
    %v410 = vunpack.c.h.b16 %v103
    %v411 = vunpack.c.l.b16 %v104
    %v412 = vunpack.c.h.b16 %v104
    %v413 = vunpack.c.l.b16 %v105
    %v414 = vunpack.c.h.b16 %v105
    %v415 = vunpack.c.l.b16 %v106
    %v416 = vunpack.c.l.b16 %v107
    %v417 = vunpack.c.h.b16 %v107
    %v418 = vunpack.c.l.b16 %v108
    %v419 = vunpack.c.h.b16 %v108
    %v420 = vunpack.c.l.b16 %v109
    %v421 = vunpack.c.h.b16 %v109
    %v422 = vunpack.c.l.b16 %v110
    %v423 = vunpack.c.l.b16 %v111
    %v424 = vunpack.c.h.b16 %v111
    %v425 = vunpack.c.l.b16 %v112
    %v426 = vunpack.c.h.b16 %v112
    %v427 = vunpack.c.l.b16 %v113
    %v428 = vunpack.c.h.b16 %v113
    %v429 = vunpack.c.l.b16 %v114
    %v430 = vunpack.c.l.b16 %v115
    %v431 = vunpack.c.h.b16 %v115
    %v432 = vunpack.c.l.b16 %v116
    %v433 = vunpack.c.h.b16 %v116
    %v434 = vunpack.c.l.b16 %v117
    %v435 = vunpack.c.h.b16 %v117
    %v436 = vunpack.c.l.b16 %v118
    %v437 = vunpack.c.l.b16 %v119
    %v438 = vunpack.c.h.b16 %v119
    %v439 = vunpack.c.l.b16 %v120
    %v440 = vunpack.c.h.b16 %v120
    %v441 = vunpack.c.l.b16 %v121
    %v442 = vunpack.c.h.b16 %v121
    %v443 = vunpack.c.l.b16 %v122
    %v444 = vunpack.c.l.b16 %v123
    %v445 = vunpack.c.h.b16 %v123
    %v446 = vunpack.c.l.b16 %v124
    %v447 = vunpack.c.h.b16 %v124
    %v448 = vunpack.c.l.b16 %v125
    %v449 = vunpack.c.h.b16 %v125
    %v450 = vunpack.c.l.b16 %v126
    %v451 = vunpack.c.l.b16 %v127
    %v452 = vunpack.c.h.b16 %v127
    %v453 = vunpack.c.l.b16 %v128
    %v454 = vunpack.c.h.b16 %v128
    %v455 = vunpack.c.l.b16 %v129
    %v456 = vunpack.c.h.b16 %v129
    %v457 = vunpack.c.l.b16 %v130
    %v458 = vunpack.c.l.b16 %v131
    %v459 = vunpack.c.h.b16 %v131
    %v460 = vunpack.c.l.b16 %v132
    %v461 = vunpack.c.h.b16 %v132
    %v462 = vunpack.c.l.b16 %v133
    %v463 = vunpack.c.h.b16 %v133
    %v464 = vunpack.c.l.b16 %v134
    %v465 = vunpack.c.l.b16 %v135
    %v466 = vunpack.c.h.b16 %v135
    %v467 = vunpack.c.l.b16 %v136
    %v468 = vunpack.c.h.b16 %v136
    %v469 = vunpack.c.l.b16 %v137
    %v470 = vunpack.c.h.b16 %v137
    %v471 = vunpack.c.l.b16 %v138
    %v472 = vunpack.c.l.b16 %v139
    %v473 = vunpack.c.h.b16 %v139
    %v474 = vunpack.c.l.b16 %v140
    %v475 = vunpack.c.h.b16 %v140
    %v476 = vunpack.c.l.b16 %v141
    %v477 = vunpack.c.h.b16 %v141
    %v478 = vunpack.c.l.b16 %v142
    %v479 = vunpack.c.l.b16 %v143
    %v480 = vunpack.c.h.b16 %v143
    %v481 = vunpack.c.l.b16 %v144
    %v482 = vunpack.c.h.b16 %v144
    %v483 = vunpack.c.l.b16 %v145
    %v484 = vunpack.c.h.b16 %v145
    %v485 = vunpack.c.l.b16 %v146
    %v486 = vunpack.c.l.b16 %v147
    %v487 = vunpack.c.h.b16 %v147
    %v488 = vunpack.c.l.b16 %v148
    %v489 = vunpack.c.h.b16 %v148
    %v490 = vunpack.c.l.b16 %v149
    %v491 = vunpack.c.h.b16 %v149
    %v492 = vunpack.c.l.b16 %v150
    %v493 = vunpack.c.l.b16 %v151
    %v494 = vunpack.c.h.b16 %v151
    %v495 = vunpack.c.l.b16 %v152
    %v496 = vunpack.c.h.b16 %v152
    %v497 = vunpack.c.l.b16 %v153
    %v498 = vunpack.c.h.b16 %v153
    %v499 = vunpack.c.l.b16 %v154
    %v500 = vunpack.c.l.b16 %v155
    %v501 = vunpack.c.h.b16 %v155
    %v502 = vunpack.c.l.b16 %v156
    %v503 = vunpack.c.h.b16 %v156
    %v504 = vunpack.c.l.b16 %v157
    %v505 = vunpack.c.h.b16 %v157
    %v506 = vunpack.c.l.b16 %v158
    %v507 = vunpack.c.l.b16 %v159
    %v508 = vunpack.c.h.b16 %v159
    %v509 = vunpack.c.l.b16 %v160
    %v510 = vunpack.c.h.b16 %v160
    %v511 = vunpack.c.l.b16 %v161
    %v512 = vunpack.c.h.b16 %v161
    %v513 = vunpack.c.l.b16 %v162
    %v514 = vunpack.c.l.b16 %v163
    %v515 = vunpack.c.h.b16 %v163
    %v516 = vunpack.c.l.b16 %v164
    %v517 = vunpack.c.h.b16 %v164
    %v518 = vunpack.c.l.b16 %v165
    %v519 = vunpack.c.h.b16 %v165
    %v520 = vunpack.c.l.b16 %v166
    %v521 = vunpack.c.l.b16 %v167
    %v522 = vunpack.c.h.b16 %v167
    %v523 = vunpack.c.l.b16 %v168
    %v524 = vunpack.c.h.b16 %v168
    %v525 = vunpack.c.l.b16 %v169
    %v526 = vunpack.c.h.b16 %v169
    %v527 = vunpack.c.l.b16 %v170
    %v528 = vunpack.c.l.b16 %v171
    %v529 = vunpack.c.h.b16 %v171
    %v530 = vunpack.c.l.b16 %v172
    %v531 = vunpack.c.h.b16 %v172
    %v532 = vunpack.c.l.b16 %v173
    %v533 = vunpack.c.h.b16 %v173
    %v534 = vunpack.c.l.b16 %v174
    %v535 = vunpack.c.l.b16 %v175
    %v536 = vunpack.c.h.b16 %v175
    %v537 = vunpack.c.l.b16 %v176
    %v538 = vunpack.c.h.b16 %v176
    %v539 = vunpack.c.l.b16 %v177
    %v540 = vunpack.c.h.b16 %v177
    %v541 = vunpack.c.l.b16 %v178
    %v542 = vunpack.c.l.b16 %v179
    %v543 = vunpack.c.h.b16 %v179
    %v544 = vunpack.c.l.b16 %v180
    %v545 = vunpack.c.h.b16 %v180
    %v546 = vunpack.c.l.b16 %v181
    %v547 = vunpack.c.h.b16 %v181
    %v548 = vunpack.c.l.b16 %v182
    %v549 = vunpack.c.l.b16 %v183
    %v550 = vunpack.c.h.b16 %v183
    %v551 = vunpack.c.l.b16 %v184
    %v552 = vunpack.c.h.b16 %v184
    %v553 = vunpack.c.l.b16 %v185
    %v554 = vunpack.c.h.b16 %v185
    %v555 = vunpack.c.l.b16 %v186
    %v556 = vunpack.c.l.b16 %v187
    %v557 = vunpack.c.h.b16 %v187
    %v558 = vunpack.c.l.b16 %v188
    %v559 = vunpack.c.h.b16 %v188
    %v560 = vunpack.c.l.b16 %v189
    %v561 = vunpack.c.h.b16 %v189
    %v562 = vunpack.c.l.b16 %v190
    %v563 = vunpack.c.l.b16 %v191
    %v564 = vunpack.c.h.b16 %v191
    %v565 = vunpack.c.l.b16 %v192
    %v566 = vunpack.c.h.b16 %v192
    %v567 = vunpack.c.l.b16 %v193
    %v568 = vunpack.c.h.b16 %v193
    %v569 = vunpack.c.l.b16 %v194
    %v570 = vunpack.c.l.b16 %v195
    %v571 = vunpack.c.h.b16 %v195
    %v572 = vunpack.c.l.b16 %v196
    %v573 = vunpack.c.h.b16 %v196
    %v574 = vunpack.c.l.b16 %v197
    %v575 = vunpack.c.h.b16 %v197
    %v576 = vunpack.c.l.b16 %v198
    %v577 = vunpack.c.l.b16 %v199
    %v578 = vunpack.c.h.b16 %v199
    %v579 = vunpack.c.l.b16 %v200
    %v580 = vunpack.c.h.b16 %v200
    %v581 = vunpack.c.l.b16 %v201
    %v582 = vunpack.c.h.b16 %v201
    %v583 = vunpack.c.l.b16 %v202
    %v584 = vunpack.c.l.b16 %v203
    %v585 = vunpack.c.h.b16 %v203
    %v586 = vunpack.c.l.b16 %v204
    %v587 = vunpack.c.h.b16 %v204
    %v588 = vunpack.c.l.b16 %v205
    %v589 = vunpack.c.h.b16 %v205
    %v590 = vunpack.c.l.b16 %v206
    %v591 = vunpack.c.l.b16 %v207
    %v592 = vunpack.c.h.b16 %v207
    %v593 = vunpack.c.l.b16 %v208
    %v594 = vunpack.c.h.b16 %v208
    %v595 = vunpack.c.l.b16 %v209
    %v596 = vunpack.c.h.b16 %v209
    %v597 = vunpack.c.l.b16 %v210
    %v598 = vunpack.c.l.b16 %v211
    %v599 = vunpack.c.h.b16 %v211
    %v600 = vunpack.c.l.b16 %v212
    %v601 = vunpack.c.h.b16 %v212
    %v602 = vunpack.c.l.b16 %v213
    %v603 = vunpack.c.h.b16 %v213
    %v604 = vunpack.c.l.b16 %v214
    %v605 = vunpack.c.l.b16 %v215
    %v606 = vunpack.c.h.b16 %v215
    %v607 = vunpack.c.l.b16 %v216
    %v608 = vunpack.c.h.b16 %v216
    %v609 = vunpack.c.l.b16 %v217
    %v610 = vunpack.c.h.b16 %v217
    %v611 = vunpack.c.l.b16 %v218
    %v612 = vunpack.c.l.b16 %v219
    %v613 = vunpack.c.h.b16 %v219
    %v614 = vunpack.c.l.b16 %v220
    %v615 = vunpack.c.h.b16 %v220
    %v616 = vunpack.c.l.b16 %v221
    %v617 = vunpack.c.h.b16 %v221
    %v618 = vunpack.c.l.b16 %v222
    %v619 = vpack.c.b16 %v402, %v395
    %v620 = vpack.c.b16 %v403, %v396
    %v621 = vpack.c.b16 %v404, %v397
    %v622 = vpack.c.b16 %v405, %v398
    %v623 = vpack.c.b16 %v406, %v399
    %v624 = vpack.c.b16 %v407, %v400
    %v625 = vpack.c.b16 %v408, %v401
    %v626 = vpack.c.b16 %v416, %v409
    %v627 = vpack.c.b16 %v417, %v410
    %v628 = vpack.c.b16 %v418, %v411
    %v629 = vpack.c.b16 %v419, %v412
    %v630 = vpack.c.b16 %v420, %v413
    %v631 = vpack.c.b16 %v421, %v414
    %v632 = vpack.c.b16 %v422, %v415
    %v633 = vpack.c.b16 %v430, %v423
    %v634 = vpack.c.b16 %v431, %v424
    %v635 = vpack.c.b16 %v432, %v425
    %v636 = vpack.c.b16 %v433, %v426
    %v637 = vpack.c.b16 %v434, %v427
    %v638 = vpack.c.b16 %v435, %v428
    %v639 = vpack.c.b16 %v436, %v429
    %v640 = vpack.c.b16 %v444, %v437
    %v641 = vpack.c.b16 %v445, %v438
    %v642 = vpack.c.b16 %v446, %v439
    %v643 = vpack.c.b16 %v447, %v440
    %v644 = vpack.c.b16 %v448, %v441
    %v645 = vpack.c.b16 %v449, %v442
    %v646 = vpack.c.b16 %v450, %v443
    %v647 = vpack.c.b16 %v458, %v451
    %v648 = vpack.c.b16 %v459, %v452
    %v649 = vpack.c.b16 %v460, %v453
    %v650 = vpack.c.b16 %v461, %v454
    %v651 = vpack.c.b16 %v462, %v455
    %v652 = vpack.c.b16 %v463, %v456
    %v653 = vpack.c.b16 %v464, %v457
    %v654 = vpack.c.b16 %v472, %v465
    %v655 = vpack.c.b16 %v473, %v466
    %v656 = vpack.c.b16 %v474, %v467
    %v657 = vpack.c.b16 %v475, %v468
    %v658 = vpack.c.b16 %v476, %v469
    %v659 = vpack.c.b16 %v477, %v470
    %v660 = vpack.c.b16 %v478, %v471
    %v661 = vpack.c.b16 %v486, %v479
    %v662 = vpack.c.b16 %v487, %v480
    %v663 = vpack.c.b16 %v488, %v481
    %v664 = vpack.c.b16 %v489, %v482
    %v665 = vpack.c.b16 %v490, %v483
    %v666 = vpack.c.b16 %v491, %v484
    %v667 = vpack.c.b16 %v492, %v485
    %v668 = vpack.c.b16 %v500, %v493
    %v669 = vpack.c.b16 %v501, %v494
    %v670 = vpack.c.b16 %v502, %v495
    %v671 = vpack.c.b16 %v503, %v496
    %v672 = vpack.c.b16 %v504, %v497
    %v673 = vpack.c.b16 %v505, %v498
    %v674 = vpack.c.b16 %v506, %v499
    %v675 = vpack.c.b16 %v514, %v507
    %v676 = vpack.c.b16 %v515, %v508
    %v677 = vpack.c.b16 %v516, %v509
    %v678 = vpack.c.b16 %v517, %v510
    %v679 = vpack.c.b16 %v518, %v511
    %v680 = vpack.c.b16 %v519, %v512
    %v681 = vpack.c.b16 %v520, %v513
    %v682 = vpack.c.b16 %v528, %v521
    %v683 = vpack.c.b16 %v529, %v522
    %v684 = vpack.c.b16 %v530, %v523
    %v685 = vpack.c.b16 %v531, %v524
    %v686 = vpack.c.b16 %v532, %v525
    %v687 = vpack.c.b16 %v533, %v526
    %v688 = vpack.c.b16 %v534, %v527
    %v689 = vpack.c.b16 %v542, %v535
    %v690 = vpack.c.b16 %v543, %v536
    %v691 = vpack.c.b16 %v544, %v537
    %v692 = vpack.c.b16 %v545, %v538
    %v693 = vpack.c.b16 %v546, %v539
    %v694 = vpack.c.b16 %v547, %v540
    %v695 = vpack.c.b16 %v548, %v541
    %v696 = vpack.c.b16 %v556, %v549
    %v697 = vpack.c.b16 %v557, %v550
    %v698 = vpack.c.b16 %v558, %v551
    %v699 = vpack.c.b16 %v559, %v552
    %v700 = vpack.c.b16 %v560, %v553
    %v701 = vpack.c.b16 %v561, %v554
    %v702 = vpack.c.b16 %v562, %v555
    %v703 = vpack.c.b16 %v570, %v563
    %v704 = vpack.c.b16 %v571, %v564
    %v705 = vpack.c.b16 %v572, %v565
    %v706 = vpack.c.b16 %v573, %v566
    %v707 = vpack.c.b16 %v574, %v567
    %v708 = vpack.c.b16 %v575, %v568
    %v709 = vpack.c.b16 %v576, %v569
    %v710 = vpack.c.b16 %v584, %v577
    %v711 = vpack.c.b16 %v585, %v578
    %v712 = vpack.c.b16 %v586, %v579
    %v713 = vpack.c.b16 %v587, %v580
    %v714 = vpack.c.b16 %v588, %v581
    %v715 = vpack.c.b16 %v589, %v582
    %v716 = vpack.c.b16 %v590, %v583
    %v717 = vpack.c.b16 %v598, %v591
    %v718 = vpack.c.b16 %v599, %v592
    %v719 = vpack.c.b16 %v600, %v593
    %v720 = vpack.c.b16 %v601, %v594
    %v721 = vpack.c.b16 %v602, %v595
    %v722 = vpack.c.b16 %v603, %v596
    %v723 = vpack.c.b16 %v604, %v597
    %v724 = vpack.c.b16 %v612, %v605
    %v725 = vpack.c.b16 %v613, %v606
    %v726 = vpack.c.b16 %v614, %v607
    %v727 = vpack.c.b16 %v615, %v608
    %v728 = vpack.c.b16 %v616, %v609
    %v729 = vpack.c.b16 %v617, %v610
    %v730 = vpack.c.b16 %v618, %v611
    %843 = vmatprep.subr.bf16.mxu0 %v669
    %844 = vmatpush1.bf16.msra.mxu0 %v668
    %845 = vmatprep.subr.bf16.mxu0 %v662
    %846 = vmatpush1.bf16.msra.mxu0 %v661
    %847 = vmatprep.subr.bf16.mxu0 %v655
    %848 = vmatpush1.bf16.msra.mxu0 %v654
    %849 = vmatprep.subr.bf16.mxu0 %v648
    %850 = vmatpush1.bf16.msra.mxu0 %v647
    %851 = vmatprep.subr.bf16.mxu0 %v641
    %852 = vmatpush1.bf16.msra.mxu0 %v640
    %853 = vmatprep.subr.bf16.mxu0 %v634
    %854 = vmatpush1.bf16.msra.mxu0 %v633
    %855 = vmatprep.subr.bf16.mxu0 %v627
    %856 = vmatpush1.bf16.msra.mxu0 %v626
    %857 = vmatprep.subr.bf16.mxu0 %v620
    %858 = vmatpush1.bf16.msra.mxu0 %v619
    %859 = vmatprep.subr.bf16.mxu0 %v725
    %860 = vmatpush2.bf16.msra.mxu0 %v724
    %861 = vmatprep.subr.bf16.mxu0 %v718
    %862 = vmatpush2.bf16.msra.mxu0 %v717
    %863 = vmatprep.subr.bf16.mxu0 %v711
    %864 = vmatpush2.bf16.msra.mxu0 %v710
    %865 = vmatprep.subr.bf16.mxu0 %v704
    %866 = vmatpush2.bf16.msra.mxu0 %v703
    %867 = vmatprep.subr.bf16.mxu0 %v697
    %868 = vmatpush2.bf16.msra.mxu0 %v696
    %869 = vmatprep.subr.bf16.mxu0 %v690
    %870 = vmatpush2.bf16.msra.mxu0 %v689
    %871 = vmatprep.subr.bf16.mxu0 %v683
    %872 = vmatpush2.bf16.msra.mxu0 %v682
    %873 = vmatprep.subr.bf16.mxu0 %v676
    %874 = vmatpush2.bf16.msra.mxu0 %v675
    %875 = vmatprep.mubr.bf16.mxu0 %v264
    %876 = vmatmul.mubr.bf16.gmra.mxu0 %v263
    %v877 = vpop.f32.mrf.mxu0
    %v878 = vadd.f32 %v228, %v877
    %v879 = vpop.f32.mrf.mxu0
    %v880 = vadd.f32 %v232, %v879
    %v881 = vpop.f32.mrf.mxu0
    %v882 = vpop.f32.mrf.mxu0
    %883 = vdwg.mxu0
    %884 = vmatprep.subr.bf16.mxu0 %v671
    %885 = vmatpush1.bf16.msra.mxu0 %v670
    %886 = vmatprep.subr.bf16.mxu0 %v664
    %887 = vmatpush1.bf16.msra.mxu0 %v663
    %888 = vmatprep.subr.bf16.mxu0 %v657
    %889 = vmatpush1.bf16.msra.mxu0 %v656
    %890 = vmatprep.subr.bf16.mxu0 %v650
    %891 = vmatpush1.bf16.msra.mxu0 %v649
    %892 = vmatprep.subr.bf16.mxu0 %v643
    %893 = vmatpush1.bf16.msra.mxu0 %v642
    %894 = vmatprep.subr.bf16.mxu0 %v636
    %895 = vmatpush1.bf16.msra.mxu0 %v635
    %896 = vmatprep.subr.bf16.mxu0 %v629
    %897 = vmatpush1.bf16.msra.mxu0 %v628
    %898 = vmatprep.subr.bf16.mxu0 %v622
    %899 = vmatpush1.bf16.msra.mxu0 %v621
    %900 = vmatprep.subr.bf16.mxu0 %v727
    %901 = vmatpush2.bf16.msra.mxu0 %v726
    %902 = vmatprep.subr.bf16.mxu0 %v720
    %903 = vmatpush2.bf16.msra.mxu0 %v719
    %904 = vmatprep.subr.bf16.mxu0 %v713
    %905 = vmatpush2.bf16.msra.mxu0 %v712
    %906 = vmatprep.subr.bf16.mxu0 %v706
    %907 = vmatpush2.bf16.msra.mxu0 %v705
    %908 = vmatprep.subr.bf16.mxu0 %v699
    %909 = vmatpush2.bf16.msra.mxu0 %v698
    %910 = vmatprep.subr.bf16.mxu0 %v692
    %911 = vmatpush2.bf16.msra.mxu0 %v691
    %912 = vmatprep.subr.bf16.mxu0 %v685
    %913 = vmatpush2.bf16.msra.mxu0 %v684
    %914 = vmatprep.subr.bf16.mxu0 %v678
    %915 = vmatpush2.bf16.msra.mxu0 %v677
    %916 = vmatprep.mubr.bf16.mxu0 %v264
    %917 = vmatmul.mubr.bf16.gmra.mxu0 %v263
    %v918 = vpop.f32.mrf.mxu0
    %v919 = vadd.f32 %v236, %v918
    %v920 = vpop.f32.mrf.mxu0
    %v921 = vadd.f32 %v240, %v920
    %v922 = vpop.f32.mrf.mxu0
    %v923 = vpop.f32.mrf.mxu0
    %924 = vdwg.mxu0
    %925 = vmatprep.subr.bf16.mxu0 %v673
    %926 = vmatpush1.bf16.msra.mxu0 %v672
    %927 = vmatprep.subr.bf16.mxu0 %v666
    %928 = vmatpush1.bf16.msra.mxu0 %v665
    %929 = vmatprep.subr.bf16.mxu0 %v659
    %930 = vmatpush1.bf16.msra.mxu0 %v658
    %931 = vmatprep.subr.bf16.mxu0 %v652
    %932 = vmatpush1.bf16.msra.mxu0 %v651
    %933 = vmatprep.subr.bf16.mxu0 %v645
    %934 = vmatpush1.bf16.msra.mxu0 %v644
    %935 = vmatprep.subr.bf16.mxu0 %v638
    %936 = vmatpush1.bf16.msra.mxu0 %v637
    %937 = vmatprep.subr.bf16.mxu0 %v631
    %938 = vmatpush1.bf16.msra.mxu0 %v630
    %939 = vmatprep.subr.bf16.mxu0 %v624
    %940 = vmatpush1.bf16.msra.mxu0 %v623
    %941 = vmatprep.subr.bf16.mxu0 %v729
    %942 = vmatpush2.bf16.msra.mxu0 %v728
    %943 = vmatprep.subr.bf16.mxu0 %v722
    %944 = vmatpush2.bf16.msra.mxu0 %v721
    %945 = vmatprep.subr.bf16.mxu0 %v715
    %946 = vmatpush2.bf16.msra.mxu0 %v714
    %947 = vmatprep.subr.bf16.mxu0 %v708
    %948 = vmatpush2.bf16.msra.mxu0 %v707
    %949 = vmatprep.subr.bf16.mxu0 %v701
    %950 = vmatpush2.bf16.msra.mxu0 %v700
    %951 = vmatprep.subr.bf16.mxu0 %v694
    %952 = vmatpush2.bf16.msra.mxu0 %v693
    %953 = vmatprep.subr.bf16.mxu0 %v687
    %954 = vmatpush2.bf16.msra.mxu0 %v686
    %955 = vmatprep.subr.bf16.mxu0 %v680
    %956 = vmatpush2.bf16.msra.mxu0 %v679
    %957 = vmatprep.mubr.bf16.mxu0 %v264
    %958 = vmatmul.mubr.bf16.gmra.mxu0 %v263
    %v959 = vpop.f32.mrf.mxu0
    %v960 = vadd.f32 %v244, %v959
    %v961 = vpop.f32.mrf.mxu0
    %v962 = vadd.f32 %v248, %v961
    %v963 = vpop.f32.mrf.mxu0
    %v964 = vpop.f32.mrf.mxu0
    %965 = vdwg.mxu0
    %966 = vmatprep.subr.bf16.mxu0 0
    %967 = vmatpush1.bf16.msra.mxu0 %v674
    %968 = vmatprep.subr.bf16.mxu0 0
    %969 = vmatpush1.bf16.msra.mxu0 %v667
    %970 = vmatprep.subr.bf16.mxu0 0
    %971 = vmatpush1.bf16.msra.mxu0 %v660
    %972 = vmatprep.subr.bf16.mxu0 0
    %973 = vmatpush1.bf16.msra.mxu0 %v653
    %974 = vmatprep.subr.bf16.mxu0 0
    %975 = vmatpush1.bf16.msra.mxu0 %v646
    %976 = vmatprep.subr.bf16.mxu0 0
    %977 = vmatpush1.bf16.msra.mxu0 %v639
    %978 = vmatprep.subr.bf16.mxu0 0
    %979 = vmatpush1.bf16.msra.mxu0 %v632
    %980 = vmatprep.subr.bf16.mxu0 0
    %981 = vmatpush1.bf16.msra.mxu0 %v625
    %982 = vmatprep.subr.bf16.mxu0 0
    %983 = vmatpush2.bf16.msra.mxu0 %v730
    %984 = vmatprep.subr.bf16.mxu0 0
    %985 = vmatpush2.bf16.msra.mxu0 %v723
    %986 = vmatprep.subr.bf16.mxu0 0
    %987 = vmatpush2.bf16.msra.mxu0 %v716
    %988 = vmatprep.subr.bf16.mxu0 0
    %989 = vmatpush2.bf16.msra.mxu0 %v709
    %990 = vmatprep.subr.bf16.mxu0 0
    %991 = vmatpush2.bf16.msra.mxu0 %v702
    %992 = vmatprep.subr.bf16.mxu0 0
    %993 = vmatpush2.bf16.msra.mxu0 %v695
    %994 = vmatprep.subr.bf16.mxu0 0
    %995 = vmatpush2.bf16.msra.mxu0 %v688
    %996 = vmatprep.subr.bf16.mxu0 0
    %997 = vmatpush2.bf16.msra.mxu0 %v681
    %998 = vmatprep.mubr.bf16.mxu0 %v264
    %999 = vmatmul.mubr.bf16.gmra.mxu0 %v263
    %v1000 = vpop.f32.mrf.mxu0
    %v1001 = vadd.f32 %v252, %v1000
    %v1002 = vpop.f32.mrf.mxu0
    %v1003 = vpop.f32.mrf.mxu0
    %v1004 = vpop.f32.mrf.mxu0
    %1005 = vdwg.mxu0
    %v1006 = vmul.f32 %v878, 0.5
    %v1007 = vmul.f32 %v880, 0.5
    %v1008 = vmul.f32 %v919, 0.5
    %v1009 = vmul.f32 %v921, 0.5
    %v1010 = vmul.f32 %v960, 0.5
    %v1011 = vmul.f32 %v962, 0.5
    %v1012 = vmul.f32 %v1001, 0.5
    %v1013 = vtanh.pop %v1006
    %v1014 = vtanh.pop %v1007
    %v1015 = vtanh.pop %v1008
    %v1016 = vtanh.pop %v1009
    %v1017 = vtanh.pop %v1010
    %v1018 = vtanh.pop %v1011
    %v1019 = vtanh.pop %v1012
    %v1020 = vmul.f32 %v1013, 0.5
    %v1021 = vmul.f32 %v1014, 0.5
    %v1022 = vmul.f32 %v1015, 0.5
    %v1023 = vmul.f32 %v1016, 0.5
    %v1024 = vmul.f32 %v1017, 0.5
    %v1025 = vmul.f32 %v1018, 0.5
    %v1026 = vmul.f32 %v1019, 0.5
    %v1027 = vadd.f32 %v1020, 0.5
    %v1028 = vadd.f32 %v1021, 0.5
    %v1029 = vadd.f32 %v1022, 0.5
    %v1030 = vadd.f32 %v1023, 0.5
    %v1031 = vadd.f32 %v1024, 0.5
    %v1032 = vadd.f32 %v1025, 0.5
    %v1033 = vadd.f32 %v1026, 0.5
    %v1034 = vmul.f32 %v878, %v1027
    %v1035 = vmul.f32 %v880, %v1028
    %v1036 = vmul.f32 %v919, %v1029
    %v1037 = vmul.f32 %v921, %v1030
    %v1038 = vmul.f32 %v960, %v1031
    %v1039 = vmul.f32 %v962, %v1032
    %v1040 = vmul.f32 %v1001, %v1033
    %v1041 = vpack.c.bf16 %v1034, %v1034
    %v1042 = vpack.c.bf16 %v1035, %v1035
    %v1043 = vpack.c.bf16 %v1036, %v1036
    %v1044 = vpack.c.bf16 %v1037, %v1037
    %v1045 = vpack.c.bf16 %v1038, %v1038
    %v1046 = vpack.c.bf16 %v1039, %v1039
    %v1047 = vpack.c.bf16 %v1040, %v1040
    %v1048 = vld [vmem:[#allocation4] sm:$0xff]
    %v1049 = vld [vmem:[#allocation4 + $0x8] sm:$0xff]
    %v1050 = vld [vmem:[#allocation4 + $0x10] sm:$0xff]
    %v1051 = vld [vmem:[#allocation4 + $0x18] sm:$0xff]
    %v1052 = vld [vmem:[#allocation4 + $0x20] sm:$0xff]
    %v1053 = vld [vmem:[#allocation4 + $0x28] sm:$0xff]
    %v1054 = vld [vmem:[#allocation4 + $0x30] sm:$0xff]
    %v1055 = vld [vmem:[#allocation4 + $0x38] sm:$0xff]
    %v1056 = vld [vmem:[#allocation4 + $0x40] sm:$0xff]
    %v1057 = vld [vmem:[#allocation4 + $0x48] sm:$0xff]
    %v1058 = vld [vmem:[#allocation4 + $0x50] sm:$0xff]
    %v1059 = vld [vmem:[#allocation4 + $0x58] sm:$0xff]
    %v1060 = vld [vmem:[#allocation4 + $0x60] sm:$0xff]
    %v1061 = vld [vmem:[#allocation4 + $0x68] sm:$0xff]
    %v1062 = vld [vmem:[#allocation4 + $0x70] sm:$0xff]
    %v1063 = vld [vmem:[#allocation4 + $0x78] sm:$0xff]
    %v1064 = vld [vmem:[#allocation4 + $0x80] sm:$0xff]
    %v1065 = vld [vmem:[#allocation4 + $0x88] sm:$0xff]
    %v1066 = vld [vmem:[#allocation4 + $0x90] sm:$0xff]
    %v1067 = vld [vmem:[#allocation4 + $0x98] sm:$0xff]
    %v1068 = vld [vmem:[#allocation4 + $0xa0] sm:$0xff]
    %v1069 = vld [vmem:[#allocation4 + $0xa8] sm:$0xff]
    %v1070 = vld [vmem:[#allocation4 + $0xb0] sm:$0xff]
    %v1071 = vld [vmem:[#allocation4 + $0xb8] sm:$0xff]
    %v1072 = vld [vmem:[#allocation4 + $0xc0] sm:$0xff]
    %v1073 = vld [vmem:[#allocation4 + $0xc8] sm:$0xff]
    %v1074 = vld [vmem:[#allocation4 + $0xd0] sm:$0xff]
    %v1075 = vld [vmem:[#allocation4 + $0xd8] sm:$0xff]
    %v1076 = vld [vmem:[#allocation4 + $0xe0] sm:$0xff]
    %v1077 = vld [vmem:[#allocation4 + $0xe8] sm:$0xff]
    %v1078 = vld [vmem:[#allocation4 + $0xf0] sm:$0xff]
    %v1079 = vld [vmem:[#allocation4 + $0xf8] sm:$0xff]
    %v1080 = vld [vmem:[#allocation4 + $0x100] sm:$0xff]
    %v1081 = vld [vmem:[#allocation4 + $0x108] sm:$0xff]
    %v1082 = vld [vmem:[#allocation4 + $0x110] sm:$0xff]
    %v1083 = vld [vmem:[#allocation4 + $0x118] sm:$0xff]
    %v1084 = vld [vmem:[#allocation4 + $0x120] sm:$0xff]
    %v1085 = vld [vmem:[#allocation4 + $0x128] sm:$0xff]
    %v1086 = vld [vmem:[#allocation4 + $0x130] sm:$0xff]
    %v1087 = vld [vmem:[#allocation4 + $0x138] sm:$0xff]
    %v1088 = vld [vmem:[#allocation4 + $0x140] sm:$0xff]
    %v1089 = vld [vmem:[#allocation4 + $0x148] sm:$0xff]
    %v1090 = vld [vmem:[#allocation4 + $0x150] sm:$0xff]
    %v1091 = vld [vmem:[#allocation4 + $0x158] sm:$0xff]
    %v1092 = vld [vmem:[#allocation4 + $0x160] sm:$0xff]
    %v1093 = vld [vmem:[#allocation4 + $0x168] sm:$0xff]
    %v1094 = vld [vmem:[#allocation4 + $0x170] sm:$0xff]
    %v1095 = vld [vmem:[#allocation4 + $0x178] sm:$0xff]
    %v1096 = vld [vmem:[#allocation4 + $0x180] sm:$0xff]
    %v1097 = vld [vmem:[#allocation4 + $0x188] sm:$0xff]
    %v1098 = vld [vmem:[#allocation4 + $0x190] sm:$0xff]
    %v1099 = vld [vmem:[#allocation4 + $0x198] sm:$0xff]
    %v1100 = vld [vmem:[#allocation4 + $0x1a0] sm:$0xff]
    %v1101 = vld [vmem:[#allocation4 + $0x1a8] sm:$0xff]
    %v1102 = vld [vmem:[#allocation4 + $0x1b0] sm:$0xff]
    %v1103 = vld [vmem:[#allocation4 + $0x1b8] sm:$0xff]
    %v1104 = vld [vmem:[#allocation4 + $0x1c0] sm:$0xff]
    %v1105 = vld [vmem:[#allocation4 + $0x1c8] sm:$0xff]
    %v1106 = vld [vmem:[#allocation4 + $0x1d0] sm:$0xff]
    %v1107 = vld [vmem:[#allocation4 + $0x1d8] sm:$0xff]
    %v1108 = vld [vmem:[#allocation4 + $0x1e0] sm:$0xff]
    %v1109 = vld [vmem:[#allocation4 + $0x1e8] sm:$0xff]
    %v1110 = vld [vmem:[#allocation4 + $0x1f0] sm:$0xff]
    %v1111 = vld [vmem:[#allocation4 + $0x1f8] sm:$0xff]
    %v1112 = vld [vmem:[#allocation4 + $0x200] sm:$0xff]
    %v1113 = vld [vmem:[#allocation4 + $0x208] sm:$0xff]
    %v1114 = vld [vmem:[#allocation4 + $0x210] sm:$0xff]
    %v1115 = vld [vmem:[#allocation4 + $0x218] sm:$0xff]
    %v1116 = vld [vmem:[#allocation4 + $0x220] sm:$0xff]
    %v1117 = vld [vmem:[#allocation4 + $0x228] sm:$0xff]
    %v1118 = vld [vmem:[#allocation4 + $0x230] sm:$0xff]
    %v1119 = vld [vmem:[#allocation4 + $0x238] sm:$0xff]
    %v1120 = vld [vmem:[#allocation4 + $0x240] sm:$0xff]
    %v1121 = vld [vmem:[#allocation4 + $0x248] sm:$0xff]
    %v1122 = vld [vmem:[#allocation4 + $0x250] sm:$0xff]
    %v1123 = vld [vmem:[#allocation4 + $0x258] sm:$0xff]
    %v1124 = vld [vmem:[#allocation4 + $0x260] sm:$0xff]
    %v1125 = vld [vmem:[#allocation4 + $0x268] sm:$0xff]
    %v1126 = vld [vmem:[#allocation4 + $0x270] sm:$0xff]
    %v1127 = vld [vmem:[#allocation4 + $0x278] sm:$0xff]
    %v1128 = vld [vmem:[#allocation4 + $0x280] sm:$0xff]
    %v1129 = vld [vmem:[#allocation4 + $0x288] sm:$0xff]
    %v1130 = vld [vmem:[#allocation4 + $0x290] sm:$0xff]
    %v1131 = vld [vmem:[#allocation4 + $0x298] sm:$0xff]
    %v1132 = vld [vmem:[#allocation4 + $0x2a0] sm:$0xff]
    %v1133 = vld [vmem:[#allocation4 + $0x2a8] sm:$0xff]
    %v1134 = vld [vmem:[#allocation4 + $0x2b0] sm:$0xff]
    %v1135 = vld [vmem:[#allocation4 + $0x2b8] sm:$0xff]
    %v1136 = vld [vmem:[#allocation4 + $0x2c0] sm:$0xff]
    %v1137 = vld [vmem:[#allocation4 + $0x2c8] sm:$0xff]
    %v1138 = vld [vmem:[#allocation4 + $0x2d0] sm:$0xff]
    %v1139 = vld [vmem:[#allocation4 + $0x2d8] sm:$0xff]
    %v1140 = vld [vmem:[#allocation4 + $0x2e0] sm:$0xff]
    %v1141 = vld [vmem:[#allocation4 + $0x2e8] sm:$0xff]
    %v1142 = vld [vmem:[#allocation4 + $0x2f0] sm:$0xff]
    %v1143 = vld [vmem:[#allocation4 + $0x2f8] sm:$0xff]
    %v1144 = vld [vmem:[#allocation4 + $0x300] sm:$0xff]
    %v1145 = vld [vmem:[#allocation4 + $0x308] sm:$0xff]
    %v1146 = vld [vmem:[#allocation4 + $0x310] sm:$0xff]
    %v1147 = vld [vmem:[#allocation4 + $0x318] sm:$0xff]
    %v1148 = vld [vmem:[#allocation4 + $0x320] sm:$0xff]
    %v1149 = vld [vmem:[#allocation4 + $0x328] sm:$0xff]
    %v1150 = vld [vmem:[#allocation4 + $0x330] sm:$0xff]
    %v1151 = vld [vmem:[#allocation4 + $0x338] sm:$0xff]
    %v1152 = vld [vmem:[#allocation4 + $0x340] sm:$0xff]
    %v1153 = vld [vmem:[#allocation4 + $0x348] sm:$0xff]
    %v1154 = vld [vmem:[#allocation4 + $0x350] sm:$0xff]
    %v1155 = vld [vmem:[#allocation4 + $0x358] sm:$0xff]
    %v1156 = vld [vmem:[#allocation4 + $0x360] sm:$0xff]
    %v1157 = vld [vmem:[#allocation4 + $0x368] sm:$0xff]
    %v1158 = vld [vmem:[#allocation4 + $0x370] sm:$0xff]
    %v1159 = vld [vmem:[#allocation4 + $0x378] sm:$0xff]
    %v1160 = vld [vmem:[#allocation4 + $0x380] sm:$0xff]
    %v1161 = vld [vmem:[#allocation4 + $0x388] sm:$0xff]
    %v1162 = vld [vmem:[#allocation4 + $0x390] sm:$0xff]
    %v1163 = vld [vmem:[#allocation4 + $0x398] sm:$0xff]
    %v1164 = vld [vmem:[#allocation4 + $0x3a0] sm:$0xff]
    %v1165 = vld [vmem:[#allocation4 + $0x3a8] sm:$0xff]
    %v1166 = vld [vmem:[#allocation4 + $0x3b0] sm:$0xff]
    %v1167 = vld [vmem:[#allocation4 + $0x3b8] sm:$0xff]
    %v1168 = vld [vmem:[#allocation4 + $0x3c0] sm:$0xff]
    %v1169 = vld [vmem:[#allocation4 + $0x3c8] sm:$0xff]
    %v1170 = vld [vmem:[#allocation4 + $0x3d0] sm:$0xff]
    %v1171 = vld [vmem:[#allocation4 + $0x3d8] sm:$0xff]
    %v1172 = vld [vmem:[#allocation4 + $0x3e0] sm:$0xff]
    %v1173 = vld [vmem:[#allocation4 + $0x3e8] sm:$0xff]
    %v1174 = vld [vmem:[#allocation4 + $0x3f0] sm:$0xff]
    %v1175 = vld [vmem:[#allocation4 + $0x3f8] sm:$0xff]
    %v1176 = vld [vmem:[#allocation4 + $0x400] sm:$0xff]
    %v1177 = vld [vmem:[#allocation4 + $0x408] sm:$0xff]
    %v1178 = vld [vmem:[#allocation4 + $0x410] sm:$0xff]
    %v1179 = vld [vmem:[#allocation4 + $0x418] sm:$0xff]
    %v1180 = vld [vmem:[#allocation4 + $0x420] sm:$0xff]
    %v1181 = vld [vmem:[#allocation4 + $0x428] sm:$0xff]
    %v1182 = vld [vmem:[#allocation4 + $0x430] sm:$0xff]
    %v1183 = vld [vmem:[#allocation4 + $0x438] sm:$0xff]
    %v1184 = vld [vmem:[#allocation4 + $0x440] sm:$0xff]
    %v1185 = vld [vmem:[#allocation4 + $0x448] sm:$0xff]
    %v1186 = vld [vmem:[#allocation4 + $0x450] sm:$0xff]
    %v1187 = vld [vmem:[#allocation4 + $0x458] sm:$0xff]
    %v1188 = vld [vmem:[#allocation4 + $0x460] sm:$0xff]
    %v1189 = vld [vmem:[#allocation4 + $0x468] sm:$0xff]
    %v1190 = vld [vmem:[#allocation4 + $0x470] sm:$0xff]
    %v1191 = vld [vmem:[#allocation4 + $0x478] sm:$0xff]
    %v1192 = vld [vmem:[#allocation4 + $0x480] sm:$0xff]
    %v1193 = vld [vmem:[#allocation4 + $0x488] sm:$0xff]
    %v1194 = vld [vmem:[#allocation4 + $0x490] sm:$0xff]
    %v1195 = vld [vmem:[#allocation4 + $0x498] sm:$0xff]
    %v1196 = vld [vmem:[#allocation4 + $0x4a0] sm:$0xff]
    %v1197 = vld [vmem:[#allocation4 + $0x4a8] sm:$0xff]
    %v1198 = vld [vmem:[#allocation4 + $0x4b0] sm:$0xff]
    %v1199 = vld [vmem:[#allocation4 + $0x4b8] sm:$0xff]
    %v1200 = vld [vmem:[#allocation4 + $0x4c0] sm:$0xff]
    %v1201 = vld [vmem:[#allocation4 + $0x4c8] sm:$0xff]
    %v1202 = vld [vmem:[#allocation4 + $0x4d0] sm:$0xff]
    %v1203 = vld [vmem:[#allocation4 + $0x4d8] sm:$0xff]
    %v1204 = vld [vmem:[#allocation4 + $0x4e0] sm:$0xff]
    %v1205 = vld [vmem:[#allocation4 + $0x4e8] sm:$0xff]
    %v1206 = vld [vmem:[#allocation4 + $0x4f0] sm:$0xff]
    %v1207 = vld [vmem:[#allocation4 + $0x4f8] sm:$0xff]
    %v1208 = vld [vmem:[#allocation4 + $0x500] sm:$0xff]
    %v1209 = vld [vmem:[#allocation4 + $0x508] sm:$0xff]
    %v1210 = vld [vmem:[#allocation4 + $0x510] sm:$0xff]
    %v1211 = vld [vmem:[#allocation4 + $0x518] sm:$0xff]
    %v1212 = vld [vmem:[#allocation4 + $0x520] sm:$0xff]
    %v1213 = vld [vmem:[#allocation4 + $0x528] sm:$0xff]
    %v1214 = vld [vmem:[#allocation4 + $0x530] sm:$0xff]
    %v1215 = vld [vmem:[#allocation4 + $0x538] sm:$0xff]
    %v1216 = vld [vmem:[#allocation4 + $0x540] sm:$0xff]
    %v1217 = vld [vmem:[#allocation4 + $0x548] sm:$0xff]
    %v1218 = vld [vmem:[#allocation4 + $0x550] sm:$0xff]
    %v1219 = vld [vmem:[#allocation4 + $0x558] sm:$0xff]
    %v1220 = vld [vmem:[#allocation4 + $0x560] sm:$0xff]
    %v1221 = vld [vmem:[#allocation4 + $0x568] sm:$0xff]
    %v1222 = vld [vmem:[#allocation4 + $0x570] sm:$0xff]
    %v1223 = vld [vmem:[#allocation4 + $0x578] sm:$0xff]
    %v1224 = vld [vmem:[#allocation4 + $0x580] sm:$0xff]
    %v1225 = vld [vmem:[#allocation4 + $0x588] sm:$0xff]
    %v1226 = vld [vmem:[#allocation4 + $0x590] sm:$0xff]
    %v1227 = vld [vmem:[#allocation4 + $0x598] sm:$0xff]
    %v1228 = vld [vmem:[#allocation4 + $0x5a0] sm:$0xff]
    %v1229 = vld [vmem:[#allocation4 + $0x5a8] sm:$0xff]
    %v1230 = vld [vmem:[#allocation4 + $0x5b0] sm:$0xff]
    %v1231 = vld [vmem:[#allocation4 + $0x5b8] sm:$0xff]
    %v1232 = vld [vmem:[#allocation4 + $0x5c0] sm:$0xff]
    %v1233 = vld [vmem:[#allocation4 + $0x5c8] sm:$0xff]
    %v1234 = vld [vmem:[#allocation4 + $0x5d0] sm:$0xff]
    %v1235 = vld [vmem:[#allocation4 + $0x5d8] sm:$0xff]
    %v1236 = vld [vmem:[#allocation4 + $0x5e0] sm:$0xff]
    %v1237 = vld [vmem:[#allocation4 + $0x5e8] sm:$0xff]
    %v1238 = vld [vmem:[#allocation4 + $0x5f0] sm:$0xff]
    %v1239 = vld [vmem:[#allocation4 + $0x5f8] sm:$0xff]
    %v1240 = vld [vmem:[#allocation4 + $0x600] sm:$0xff]
    %v1241 = vld [vmem:[#allocation4 + $0x608] sm:$0xff]
    %v1242 = vld [vmem:[#allocation4 + $0x610] sm:$0xff]
    %v1243 = vld [vmem:[#allocation4 + $0x618] sm:$0xff]
    %v1244 = vld [vmem:[#allocation4 + $0x620] sm:$0xff]
    %v1245 = vld [vmem:[#allocation4 + $0x628] sm:$0xff]
    %v1246 = vld [vmem:[#allocation4 + $0x630] sm:$0xff]
    %v1247 = vld [vmem:[#allocation4 + $0x638] sm:$0xff]
    %v1248 = vld [vmem:[#allocation4 + $0x640] sm:$0xff]
    %v1249 = vld [vmem:[#allocation4 + $0x648] sm:$0xff]
    %v1250 = vld [vmem:[#allocation4 + $0x650] sm:$0xff]
    %v1251 = vld [vmem:[#allocation4 + $0x658] sm:$0xff]
    %v1252 = vld [vmem:[#allocation4 + $0x660] sm:$0xff]
    %v1253 = vld [vmem:[#allocation4 + $0x668] sm:$0xff]
    %v1254 = vld [vmem:[#allocation4 + $0x670] sm:$0xff]
    %v1255 = vld [vmem:[#allocation4 + $0x678] sm:$0xff]
    %v1256 = vld [vmem:[#allocation4 + $0x680] sm:$0xff]
    %v1257 = vld [vmem:[#allocation4 + $0x688] sm:$0xff]
    %v1258 = vld [vmem:[#allocation4 + $0x690] sm:$0xff]
    %v1259 = vld [vmem:[#allocation4 + $0x698] sm:$0xff]
    %v1260 = vld [vmem:[#allocation4 + $0x6a0] sm:$0xff]
    %v1261 = vld [vmem:[#allocation4 + $0x6a8] sm:$0xff]
    %v1262 = vld [vmem:[#allocation4 + $0x6b0] sm:$0xff]
    %v1263 = vld [vmem:[#allocation4 + $0x6b8] sm:$0xff]
    %v1264 = vld [vmem:[#allocation4 + $0x6c0] sm:$0xff]
    %v1265 = vld [vmem:[#allocation4 + $0x6c8] sm:$0xff]
    %v1266 = vld [vmem:[#allocation4 + $0x6d0] sm:$0xff]
    %v1267 = vld [vmem:[#allocation4 + $0x6d8] sm:$0xff]
    %v1268 = vld [vmem:[#allocation4 + $0x6e0] sm:$0xff]
    %v1269 = vld [vmem:[#allocation4 + $0x6e8] sm:$0xff]
    %v1270 = vld [vmem:[#allocation4 + $0x6f0] sm:$0xff]
    %v1271 = vld [vmem:[#allocation4 + $0x6f8] sm:$0xff]
    %v1272 = vld [vmem:[%s7] sm:$0xf]
    %v1274 = vlaneseq
    %v1275 = vshrl.u32 %v1274, 7
    %v1276 = vsub.s32 0, %v1275
    %v1277 = vrot.slane %v1272, %v1276
    %v1278 = vlaneseq
    %v1279 = vshrl.u32 %v1278, 7
    %v1280 = vsub.s32 1, %v1279
    %v1281 = vrot.slane %v1272, %v1280
    %v1282 = vlaneseq
    %v1283 = vshrl.u32 %v1282, 7
    %v1284 = vsub.s32 2, %v1283
    %v1285 = vrot.slane %v1272, %v1284
    %v1286 = vlaneseq
    %v1287 = vshrl.u32 %v1286, 7
    %v1288 = vsub.s32 3, %v1287
    %v1289 = vrot.slane %v1272, %v1288
    %v1518 = vunpack.c.l.b16 %v1048
    %v1519 = vunpack.c.h.b16 %v1048
    %v1520 = vunpack.c.l.b16 %v1049
    %v1521 = vunpack.c.h.b16 %v1049
    %v1522 = vunpack.c.l.b16 %v1050
    %v1523 = vunpack.c.h.b16 %v1050
    %v1524 = vunpack.c.l.b16 %v1051
    %v1525 = vunpack.c.h.b16 %v1051
    %v1526 = vunpack.c.l.b16 %v1052
    %v1527 = vunpack.c.h.b16 %v1052
    %v1528 = vunpack.c.l.b16 %v1053
    %v1529 = vunpack.c.h.b16 %v1053
    %v1530 = vunpack.c.l.b16 %v1054
    %v1531 = vunpack.c.h.b16 %v1054
    %v1532 = vunpack.c.l.b16 %v1055
    %v1533 = vunpack.c.h.b16 %v1055
    %v1534 = vunpack.c.l.b16 %v1056
    %v1535 = vunpack.c.h.b16 %v1056
    %v1536 = vunpack.c.l.b16 %v1057
    %v1537 = vunpack.c.h.b16 %v1057
    %v1538 = vunpack.c.l.b16 %v1058
    %v1539 = vunpack.c.h.b16 %v1058
    %v1540 = vunpack.c.l.b16 %v1059
    %v1541 = vunpack.c.h.b16 %v1059
    %v1542 = vunpack.c.l.b16 %v1060
    %v1543 = vunpack.c.h.b16 %v1060
    %v1544 = vunpack.c.l.b16 %v1061
    %v1545 = vunpack.c.h.b16 %v1061
    %v1546 = vunpack.c.l.b16 %v1062
    %v1547 = vunpack.c.h.b16 %v1062
    %v1548 = vunpack.c.l.b16 %v1063
    %v1549 = vunpack.c.h.b16 %v1063
    %v1550 = vunpack.c.l.b16 %v1064
    %v1551 = vunpack.c.h.b16 %v1064
    %v1552 = vunpack.c.l.b16 %v1065
    %v1553 = vunpack.c.h.b16 %v1065
    %v1554 = vunpack.c.l.b16 %v1066
    %v1555 = vunpack.c.h.b16 %v1066
    %v1556 = vunpack.c.l.b16 %v1067
    %v1557 = vunpack.c.h.b16 %v1067
    %v1558 = vunpack.c.l.b16 %v1068
    %v1559 = vunpack.c.h.b16 %v1068
    %v1560 = vunpack.c.l.b16 %v1069
    %v1561 = vunpack.c.h.b16 %v1069
    %v1562 = vunpack.c.l.b16 %v1070
    %v1563 = vunpack.c.h.b16 %v1070
    %v1564 = vunpack.c.l.b16 %v1071
    %v1565 = vunpack.c.h.b16 %v1071
    %v1566 = vunpack.c.l.b16 %v1072
    %v1567 = vunpack.c.h.b16 %v1072
    %v1568 = vunpack.c.l.b16 %v1073
    %v1569 = vunpack.c.h.b16 %v1073
    %v1570 = vunpack.c.l.b16 %v1074
    %v1571 = vunpack.c.h.b16 %v1074
    %v1572 = vunpack.c.l.b16 %v1075
    %v1573 = vunpack.c.h.b16 %v1075
    %v1574 = vunpack.c.l.b16 %v1076
    %v1575 = vunpack.c.h.b16 %v1076
    %v1576 = vunpack.c.l.b16 %v1077
    %v1577 = vunpack.c.h.b16 %v1077
    %v1578 = vunpack.c.l.b16 %v1078
    %v1579 = vunpack.c.h.b16 %v1078
    %v1580 = vunpack.c.l.b16 %v1079
    %v1581 = vunpack.c.h.b16 %v1079
    %v1582 = vunpack.c.l.b16 %v1080
    %v1583 = vunpack.c.h.b16 %v1080
    %v1584 = vunpack.c.l.b16 %v1081
    %v1585 = vunpack.c.h.b16 %v1081
    %v1586 = vunpack.c.l.b16 %v1082
    %v1587 = vunpack.c.h.b16 %v1082
    %v1588 = vunpack.c.l.b16 %v1083
    %v1589 = vunpack.c.h.b16 %v1083
    %v1590 = vunpack.c.l.b16 %v1084
    %v1591 = vunpack.c.h.b16 %v1084
    %v1592 = vunpack.c.l.b16 %v1085
    %v1593 = vunpack.c.h.b16 %v1085
    %v1594 = vunpack.c.l.b16 %v1086
    %v1595 = vunpack.c.h.b16 %v1086
    %v1596 = vunpack.c.l.b16 %v1087
    %v1597 = vunpack.c.h.b16 %v1087
    %v1598 = vunpack.c.l.b16 %v1088
    %v1599 = vunpack.c.h.b16 %v1088
    %v1600 = vunpack.c.l.b16 %v1089
    %v1601 = vunpack.c.h.b16 %v1089
    %v1602 = vunpack.c.l.b16 %v1090
    %v1603 = vunpack.c.h.b16 %v1090
    %v1604 = vunpack.c.l.b16 %v1091
    %v1605 = vunpack.c.h.b16 %v1091
    %v1606 = vunpack.c.l.b16 %v1092
    %v1607 = vunpack.c.h.b16 %v1092
    %v1608 = vunpack.c.l.b16 %v1093
    %v1609 = vunpack.c.h.b16 %v1093
    %v1610 = vunpack.c.l.b16 %v1094
    %v1611 = vunpack.c.h.b16 %v1094
    %v1612 = vunpack.c.l.b16 %v1095
    %v1613 = vunpack.c.h.b16 %v1095
    %v1614 = vunpack.c.l.b16 %v1096
    %v1615 = vunpack.c.h.b16 %v1096
    %v1616 = vunpack.c.l.b16 %v1097
    %v1617 = vunpack.c.h.b16 %v1097
    %v1618 = vunpack.c.l.b16 %v1098
    %v1619 = vunpack.c.h.b16 %v1098
    %v1620 = vunpack.c.l.b16 %v1099
    %v1621 = vunpack.c.h.b16 %v1099
    %v1622 = vunpack.c.l.b16 %v1100
    %v1623 = vunpack.c.h.b16 %v1100
    %v1624 = vunpack.c.l.b16 %v1101
    %v1625 = vunpack.c.h.b16 %v1101
    %v1626 = vunpack.c.l.b16 %v1102
    %v1627 = vunpack.c.h.b16 %v1102
    %v1628 = vunpack.c.l.b16 %v1103
    %v1629 = vunpack.c.h.b16 %v1103
    %v1630 = vunpack.c.l.b16 %v1104
    %v1631 = vunpack.c.h.b16 %v1104
    %v1632 = vunpack.c.l.b16 %v1105
    %v1633 = vunpack.c.h.b16 %v1105
    %v1634 = vunpack.c.l.b16 %v1106
    %v1635 = vunpack.c.h.b16 %v1106
    %v1636 = vunpack.c.l.b16 %v1107
    %v1637 = vunpack.c.h.b16 %v1107
    %v1638 = vunpack.c.l.b16 %v1108
    %v1639 = vunpack.c.h.b16 %v1108
    %v1640 = vunpack.c.l.b16 %v1109
    %v1641 = vunpack.c.h.b16 %v1109
    %v1642 = vunpack.c.l.b16 %v1110
    %v1643 = vunpack.c.h.b16 %v1110
    %v1644 = vunpack.c.l.b16 %v1111
    %v1645 = vunpack.c.h.b16 %v1111
    %v1646 = vunpack.c.l.b16 %v1112
    %v1647 = vunpack.c.h.b16 %v1112
    %v1648 = vunpack.c.l.b16 %v1113
    %v1649 = vunpack.c.h.b16 %v1113
    %v1650 = vunpack.c.l.b16 %v1114
    %v1651 = vunpack.c.h.b16 %v1114
    %v1652 = vunpack.c.l.b16 %v1115
    %v1653 = vunpack.c.h.b16 %v1115
    %v1654 = vunpack.c.l.b16 %v1116
    %v1655 = vunpack.c.h.b16 %v1116
    %v1656 = vunpack.c.l.b16 %v1117
    %v1657 = vunpack.c.h.b16 %v1117
    %v1658 = vunpack.c.l.b16 %v1118
    %v1659 = vunpack.c.h.b16 %v1118
    %v1660 = vunpack.c.l.b16 %v1119
    %v1661 = vunpack.c.h.b16 %v1119
    %v1662 = vunpack.c.l.b16 %v1120
    %v1663 = vunpack.c.h.b16 %v1120
    %v1664 = vunpack.c.l.b16 %v1121
    %v1665 = vunpack.c.h.b16 %v1121
    %v1666 = vunpack.c.l.b16 %v1122
    %v1667 = vunpack.c.h.b16 %v1122
    %v1668 = vunpack.c.l.b16 %v1123
    %v1669 = vunpack.c.h.b16 %v1123
    %v1670 = vunpack.c.l.b16 %v1124
    %v1671 = vunpack.c.h.b16 %v1124
    %v1672 = vunpack.c.l.b16 %v1125
    %v1673 = vunpack.c.h.b16 %v1125
    %v1674 = vunpack.c.l.b16 %v1126
    %v1675 = vunpack.c.h.b16 %v1126
    %v1676 = vunpack.c.l.b16 %v1127
    %v1677 = vunpack.c.h.b16 %v1127
    %v1678 = vunpack.c.l.b16 %v1128
    %v1679 = vunpack.c.h.b16 %v1128
    %v1680 = vunpack.c.l.b16 %v1129
    %v1681 = vunpack.c.h.b16 %v1129
    %v1682 = vunpack.c.l.b16 %v1130
    %v1683 = vunpack.c.h.b16 %v1130
    %v1684 = vunpack.c.l.b16 %v1131
    %v1685 = vunpack.c.h.b16 %v1131
    %v1686 = vunpack.c.l.b16 %v1132
    %v1687 = vunpack.c.h.b16 %v1132
    %v1688 = vunpack.c.l.b16 %v1133
    %v1689 = vunpack.c.h.b16 %v1133
    %v1690 = vunpack.c.l.b16 %v1134
    %v1691 = vunpack.c.h.b16 %v1134
    %v1692 = vunpack.c.l.b16 %v1135
    %v1693 = vunpack.c.h.b16 %v1135
    %v1694 = vunpack.c.l.b16 %v1136
    %v1695 = vunpack.c.h.b16 %v1136
    %v1696 = vunpack.c.l.b16 %v1137
    %v1697 = vunpack.c.h.b16 %v1137
    %v1698 = vunpack.c.l.b16 %v1138
    %v1699 = vunpack.c.h.b16 %v1138
    %v1700 = vunpack.c.l.b16 %v1139
    %v1701 = vunpack.c.h.b16 %v1139
    %v1702 = vunpack.c.l.b16 %v1140
    %v1703 = vunpack.c.h.b16 %v1140
    %v1704 = vunpack.c.l.b16 %v1141
    %v1705 = vunpack.c.h.b16 %v1141
    %v1706 = vunpack.c.l.b16 %v1142
    %v1707 = vunpack.c.h.b16 %v1142
    %v1708 = vunpack.c.l.b16 %v1143
    %v1709 = vunpack.c.h.b16 %v1143
    %v1710 = vunpack.c.l.b16 %v1144
    %v1711 = vunpack.c.h.b16 %v1144
    %v1712 = vunpack.c.l.b16 %v1145
    %v1713 = vunpack.c.h.b16 %v1145
    %v1714 = vunpack.c.l.b16 %v1146
    %v1715 = vunpack.c.h.b16 %v1146
    %v1716 = vunpack.c.l.b16 %v1147
    %v1717 = vunpack.c.h.b16 %v1147
    %v1718 = vunpack.c.l.b16 %v1148
    %v1719 = vunpack.c.h.b16 %v1148
    %v1720 = vunpack.c.l.b16 %v1149
    %v1721 = vunpack.c.h.b16 %v1149
    %v1722 = vunpack.c.l.b16 %v1150
    %v1723 = vunpack.c.h.b16 %v1150
    %v1724 = vunpack.c.l.b16 %v1151
    %v1725 = vunpack.c.h.b16 %v1151
    %v1726 = vunpack.c.l.b16 %v1152
    %v1727 = vunpack.c.h.b16 %v1152
    %v1728 = vunpack.c.l.b16 %v1153
    %v1729 = vunpack.c.h.b16 %v1153
    %v1730 = vunpack.c.l.b16 %v1154
    %v1731 = vunpack.c.h.b16 %v1154
    %v1732 = vunpack.c.l.b16 %v1155
    %v1733 = vunpack.c.h.b16 %v1155
    %v1734 = vunpack.c.l.b16 %v1156
    %v1735 = vunpack.c.h.b16 %v1156
    %v1736 = vunpack.c.l.b16 %v1157
    %v1737 = vunpack.c.h.b16 %v1157
    %v1738 = vunpack.c.l.b16 %v1158
    %v1739 = vunpack.c.h.b16 %v1158
    %v1740 = vunpack.c.l.b16 %v1159
    %v1741 = vunpack.c.h.b16 %v1159
    %v1742 = vunpack.c.l.b16 %v1160
    %v1743 = vunpack.c.h.b16 %v1160
    %v1744 = vunpack.c.l.b16 %v1161
    %v1745 = vunpack.c.h.b16 %v1161
    %v1746 = vunpack.c.l.b16 %v1162
    %v1747 = vunpack.c.h.b16 %v1162
    %v1748 = vunpack.c.l.b16 %v1163
    %v1749 = vunpack.c.h.b16 %v1163
    %v1750 = vunpack.c.l.b16 %v1164
    %v1751 = vunpack.c.h.b16 %v1164
    %v1752 = vunpack.c.l.b16 %v1165
    %v1753 = vunpack.c.h.b16 %v1165
    %v1754 = vunpack.c.l.b16 %v1166
    %v1755 = vunpack.c.h.b16 %v1166
    %v1756 = vunpack.c.l.b16 %v1167
    %v1757 = vunpack.c.h.b16 %v1167
    %v1758 = vunpack.c.l.b16 %v1168
    %v1759 = vunpack.c.h.b16 %v1168
    %v1760 = vunpack.c.l.b16 %v1169
    %v1761 = vunpack.c.h.b16 %v1169
    %v1762 = vunpack.c.l.b16 %v1170
    %v1763 = vunpack.c.h.b16 %v1170
    %v1764 = vunpack.c.l.b16 %v1171
    %v1765 = vunpack.c.h.b16 %v1171
    %v1766 = vunpack.c.l.b16 %v1172
    %v1767 = vunpack.c.h.b16 %v1172
    %v1768 = vunpack.c.l.b16 %v1173
    %v1769 = vunpack.c.h.b16 %v1173
    %v1770 = vunpack.c.l.b16 %v1174
    %v1771 = vunpack.c.h.b16 %v1174
    %v1772 = vunpack.c.l.b16 %v1175
    %v1773 = vunpack.c.h.b16 %v1175
    %v1774 = vunpack.c.l.b16 %v1176
    %v1775 = vunpack.c.h.b16 %v1176
    %v1776 = vunpack.c.l.b16 %v1177
    %v1777 = vunpack.c.h.b16 %v1177
    %v1778 = vunpack.c.l.b16 %v1178
    %v1779 = vunpack.c.h.b16 %v1178
    %v1780 = vunpack.c.l.b16 %v1179
    %v1781 = vunpack.c.h.b16 %v1179
    %v1782 = vunpack.c.l.b16 %v1180
    %v1783 = vunpack.c.h.b16 %v1180
    %v1784 = vunpack.c.l.b16 %v1181
    %v1785 = vunpack.c.h.b16 %v1181
    %v1786 = vunpack.c.l.b16 %v1182
    %v1787 = vunpack.c.h.b16 %v1182
    %v1788 = vunpack.c.l.b16 %v1183
    %v1789 = vunpack.c.h.b16 %v1183
    %v1790 = vunpack.c.l.b16 %v1184
    %v1791 = vunpack.c.h.b16 %v1184
    %v1792 = vunpack.c.l.b16 %v1185
    %v1793 = vunpack.c.h.b16 %v1185
    %v1794 = vunpack.c.l.b16 %v1186
    %v1795 = vunpack.c.h.b16 %v1186
    %v1796 = vunpack.c.l.b16 %v1187
    %v1797 = vunpack.c.h.b16 %v1187
    %v1798 = vunpack.c.l.b16 %v1188
    %v1799 = vunpack.c.h.b16 %v1188
    %v1800 = vunpack.c.l.b16 %v1189
    %v1801 = vunpack.c.h.b16 %v1189
    %v1802 = vunpack.c.l.b16 %v1190
    %v1803 = vunpack.c.h.b16 %v1190
    %v1804 = vunpack.c.l.b16 %v1191
    %v1805 = vunpack.c.h.b16 %v1191
    %v1806 = vunpack.c.l.b16 %v1192
    %v1807 = vunpack.c.h.b16 %v1192
    %v1808 = vunpack.c.l.b16 %v1193
    %v1809 = vunpack.c.h.b16 %v1193
    %v1810 = vunpack.c.l.b16 %v1194
    %v1811 = vunpack.c.h.b16 %v1194
    %v1812 = vunpack.c.l.b16 %v1195
    %v1813 = vunpack.c.h.b16 %v1195
    %v1814 = vunpack.c.l.b16 %v1196
    %v1815 = vunpack.c.h.b16 %v1196
    %v1816 = vunpack.c.l.b16 %v1197
    %v1817 = vunpack.c.h.b16 %v1197
    %v1818 = vunpack.c.l.b16 %v1198
    %v1819 = vunpack.c.h.b16 %v1198
    %v1820 = vunpack.c.l.b16 %v1199
    %v1821 = vunpack.c.h.b16 %v1199
    %v1822 = vunpack.c.l.b16 %v1200
    %v1823 = vunpack.c.h.b16 %v1200
    %v1824 = vunpack.c.l.b16 %v1201
    %v1825 = vunpack.c.h.b16 %v1201
    %v1826 = vunpack.c.l.b16 %v1202
    %v1827 = vunpack.c.h.b16 %v1202
    %v1828 = vunpack.c.l.b16 %v1203
    %v1829 = vunpack.c.h.b16 %v1203
    %v1830 = vunpack.c.l.b16 %v1204
    %v1831 = vunpack.c.h.b16 %v1204
    %v1832 = vunpack.c.l.b16 %v1205
    %v1833 = vunpack.c.h.b16 %v1205
    %v1834 = vunpack.c.l.b16 %v1206
    %v1835 = vunpack.c.h.b16 %v1206
    %v1836 = vunpack.c.l.b16 %v1207
    %v1837 = vunpack.c.h.b16 %v1207
    %v1838 = vunpack.c.l.b16 %v1208
    %v1839 = vunpack.c.h.b16 %v1208
    %v1840 = vunpack.c.l.b16 %v1209
    %v1841 = vunpack.c.h.b16 %v1209
    %v1842 = vunpack.c.l.b16 %v1210
    %v1843 = vunpack.c.h.b16 %v1210
    %v1844 = vunpack.c.l.b16 %v1211
    %v1845 = vunpack.c.h.b16 %v1211
    %v1846 = vunpack.c.l.b16 %v1212
    %v1847 = vunpack.c.h.b16 %v1212
    %v1848 = vunpack.c.l.b16 %v1213
    %v1849 = vunpack.c.h.b16 %v1213
    %v1850 = vunpack.c.l.b16 %v1214
    %v1851 = vunpack.c.h.b16 %v1214
    %v1852 = vunpack.c.l.b16 %v1215
    %v1853 = vunpack.c.h.b16 %v1215
    %v1854 = vunpack.c.l.b16 %v1216
    %v1855 = vunpack.c.h.b16 %v1216
    %v1856 = vunpack.c.l.b16 %v1217
    %v1857 = vunpack.c.h.b16 %v1217
    %v1858 = vunpack.c.l.b16 %v1218
    %v1859 = vunpack.c.h.b16 %v1218
    %v1860 = vunpack.c.l.b16 %v1219
    %v1861 = vunpack.c.h.b16 %v1219
    %v1862 = vunpack.c.l.b16 %v1220
    %v1863 = vunpack.c.h.b16 %v1220
    %v1864 = vunpack.c.l.b16 %v1221
    %v1865 = vunpack.c.h.b16 %v1221
    %v1866 = vunpack.c.l.b16 %v1222
    %v1867 = vunpack.c.h.b16 %v1222
    %v1868 = vunpack.c.l.b16 %v1223
    %v1869 = vunpack.c.h.b16 %v1223
    %v1870 = vunpack.c.l.b16 %v1224
    %v1871 = vunpack.c.h.b16 %v1224
    %v1872 = vunpack.c.l.b16 %v1225
    %v1873 = vunpack.c.h.b16 %v1225
    %v1874 = vunpack.c.l.b16 %v1226
    %v1875 = vunpack.c.h.b16 %v1226
    %v1876 = vunpack.c.l.b16 %v1227
    %v1877 = vunpack.c.h.b16 %v1227
    %v1878 = vunpack.c.l.b16 %v1228
    %v1879 = vunpack.c.h.b16 %v1228
    %v1880 = vunpack.c.l.b16 %v1229
    %v1881 = vunpack.c.h.b16 %v1229
    %v1882 = vunpack.c.l.b16 %v1230
    %v1883 = vunpack.c.h.b16 %v1230
    %v1884 = vunpack.c.l.b16 %v1231
    %v1885 = vunpack.c.h.b16 %v1231
    %v1886 = vunpack.c.l.b16 %v1232
    %v1887 = vunpack.c.h.b16 %v1232
    %v1888 = vunpack.c.l.b16 %v1233
    %v1889 = vunpack.c.h.b16 %v1233
    %v1890 = vunpack.c.l.b16 %v1234
    %v1891 = vunpack.c.h.b16 %v1234
    %v1892 = vunpack.c.l.b16 %v1235
    %v1893 = vunpack.c.h.b16 %v1235
    %v1894 = vunpack.c.l.b16 %v1236
    %v1895 = vunpack.c.h.b16 %v1236
    %v1896 = vunpack.c.l.b16 %v1237
    %v1897 = vunpack.c.h.b16 %v1237
    %v1898 = vunpack.c.l.b16 %v1238
    %v1899 = vunpack.c.h.b16 %v1238
    %v1900 = vunpack.c.l.b16 %v1239
    %v1901 = vunpack.c.h.b16 %v1239
    %v1902 = vunpack.c.l.b16 %v1240
    %v1903 = vunpack.c.h.b16 %v1240
    %v1904 = vunpack.c.l.b16 %v1241
    %v1905 = vunpack.c.h.b16 %v1241
    %v1906 = vunpack.c.l.b16 %v1242
    %v1907 = vunpack.c.h.b16 %v1242
    %v1908 = vunpack.c.l.b16 %v1243
    %v1909 = vunpack.c.h.b16 %v1243
    %v1910 = vunpack.c.l.b16 %v1244
    %v1911 = vunpack.c.h.b16 %v1244
    %v1912 = vunpack.c.l.b16 %v1245
    %v1913 = vunpack.c.h.b16 %v1245
    %v1914 = vunpack.c.l.b16 %v1246
    %v1915 = vunpack.c.h.b16 %v1246
    %v1916 = vunpack.c.l.b16 %v1247
    %v1917 = vunpack.c.h.b16 %v1247
    %v1918 = vunpack.c.l.b16 %v1248
    %v1919 = vunpack.c.h.b16 %v1248
    %v1920 = vunpack.c.l.b16 %v1249
    %v1921 = vunpack.c.h.b16 %v1249
    %v1922 = vunpack.c.l.b16 %v1250
    %v1923 = vunpack.c.h.b16 %v1250
    %v1924 = vunpack.c.l.b16 %v1251
    %v1925 = vunpack.c.h.b16 %v1251
    %v1926 = vunpack.c.l.b16 %v1252
    %v1927 = vunpack.c.h.b16 %v1252
    %v1928 = vunpack.c.l.b16 %v1253
    %v1929 = vunpack.c.h.b16 %v1253
    %v1930 = vunpack.c.l.b16 %v1254
    %v1931 = vunpack.c.h.b16 %v1254
    %v1932 = vunpack.c.l.b16 %v1255
    %v1933 = vunpack.c.h.b16 %v1255
    %v1934 = vunpack.c.l.b16 %v1256
    %v1935 = vunpack.c.h.b16 %v1256
    %v1936 = vunpack.c.l.b16 %v1257
    %v1937 = vunpack.c.h.b16 %v1257
    %v1938 = vunpack.c.l.b16 %v1258
    %v1939 = vunpack.c.h.b16 %v1258
    %v1940 = vunpack.c.l.b16 %v1259
    %v1941 = vunpack.c.h.b16 %v1259
    %v1942 = vunpack.c.l.b16 %v1260
    %v1943 = vunpack.c.h.b16 %v1260
    %v1944 = vunpack.c.l.b16 %v1261
    %v1945 = vunpack.c.h.b16 %v1261
    %v1946 = vunpack.c.l.b16 %v1262
    %v1947 = vunpack.c.h.b16 %v1262
    %v1948 = vunpack.c.l.b16 %v1263
    %v1949 = vunpack.c.h.b16 %v1263
    %v1950 = vunpack.c.l.b16 %v1264
    %v1951 = vunpack.c.h.b16 %v1264
    %v1952 = vunpack.c.l.b16 %v1265
    %v1953 = vunpack.c.h.b16 %v1265
    %v1954 = vunpack.c.l.b16 %v1266
    %v1955 = vunpack.c.h.b16 %v1266
    %v1956 = vunpack.c.l.b16 %v1267
    %v1957 = vunpack.c.h.b16 %v1267
    %v1958 = vunpack.c.l.b16 %v1268
    %v1959 = vunpack.c.h.b16 %v1268
    %v1960 = vunpack.c.l.b16 %v1269
    %v1961 = vunpack.c.h.b16 %v1269
    %v1962 = vunpack.c.l.b16 %v1270
    %v1963 = vunpack.c.h.b16 %v1270
    %v1964 = vunpack.c.l.b16 %v1271
    %v1965 = vunpack.c.h.b16 %v1271
    %v1966 = vpack.c.b16 %v1522, %v1518
    %v1967 = vpack.c.b16 %v1523, %v1519
    %v1968 = vpack.c.b16 %v1524, %v1520
    %v1969 = vpack.c.b16 %v1525, %v1521
    %v1970 = vpack.c.b16 %v1530, %v1526
    %v1971 = vpack.c.b16 %v1531, %v1527
    %v1972 = vpack.c.b16 %v1532, %v1528
    %v1973 = vpack.c.b16 %v1533, %v1529
    %v1974 = vpack.c.b16 %v1538, %v1534
    %v1975 = vpack.c.b16 %v1539, %v1535
    %v1976 = vpack.c.b16 %v1540, %v1536
    %v1977 = vpack.c.b16 %v1541, %v1537
    %v1978 = vpack.c.b16 %v1546, %v1542
    %v1979 = vpack.c.b16 %v1547, %v1543
    %v1980 = vpack.c.b16 %v1548, %v1544
    %v1981 = vpack.c.b16 %v1549, %v1545
    %v1982 = vpack.c.b16 %v1554, %v1550
    %v1983 = vpack.c.b16 %v1555, %v1551
    %v1984 = vpack.c.b16 %v1556, %v1552
    %v1985 = vpack.c.b16 %v1557, %v1553
    %v1986 = vpack.c.b16 %v1562, %v1558
    %v1987 = vpack.c.b16 %v1563, %v1559
    %v1988 = vpack.c.b16 %v1564, %v1560
    %v1989 = vpack.c.b16 %v1565, %v1561
    %v1990 = vpack.c.b16 %v1570, %v1566
    %v1991 = vpack.c.b16 %v1571, %v1567
    %v1992 = vpack.c.b16 %v1572, %v1568
    %v1993 = vpack.c.b16 %v1573, %v1569
    %v1994 = vpack.c.b16 %v1578, %v1574
    %v1995 = vpack.c.b16 %v1579, %v1575
    %v1996 = vpack.c.b16 %v1580, %v1576
    %v1997 = vpack.c.b16 %v1581, %v1577
    %v1998 = vpack.c.b16 %v1586, %v1582
    %v1999 = vpack.c.b16 %v1587, %v1583
    %v2000 = vpack.c.b16 %v1588, %v1584
    %v2001 = vpack.c.b16 %v1589, %v1585
    %v2002 = vpack.c.b16 %v1594, %v1590
    %v2003 = vpack.c.b16 %v1595, %v1591
    %v2004 = vpack.c.b16 %v1596, %v1592
    %v2005 = vpack.c.b16 %v1597, %v1593
    %v2006 = vpack.c.b16 %v1602, %v1598
    %v2007 = vpack.c.b16 %v1603, %v1599
    %v2008 = vpack.c.b16 %v1604, %v1600
    %v2009 = vpack.c.b16 %v1605, %v1601
    %v2010 = vpack.c.b16 %v1610, %v1606
    %v2011 = vpack.c.b16 %v1611, %v1607
    %v2012 = vpack.c.b16 %v1612, %v1608
    %v2013 = vpack.c.b16 %v1613, %v1609
    %v2014 = vpack.c.b16 %v1618, %v1614
    %v2015 = vpack.c.b16 %v1619, %v1615
    %v2016 = vpack.c.b16 %v1620, %v1616
    %v2017 = vpack.c.b16 %v1621, %v1617
    %v2018 = vpack.c.b16 %v1626, %v1622
    %v2019 = vpack.c.b16 %v1627, %v1623
    %v2020 = vpack.c.b16 %v1628, %v1624
    %v2021 = vpack.c.b16 %v1629, %v1625
    %v2022 = vpack.c.b16 %v1634, %v1630
    %v2023 = vpack.c.b16 %v1635, %v1631
    %v2024 = vpack.c.b16 %v1636, %v1632
    %v2025 = vpack.c.b16 %v1637, %v1633
    %v2026 = vpack.c.b16 %v1642, %v1638
    %v2027 = vpack.c.b16 %v1643, %v1639
    %v2028 = vpack.c.b16 %v1644, %v1640
    %v2029 = vpack.c.b16 %v1645, %v1641
    %v2030 = vpack.c.b16 %v1650, %v1646
    %v2031 = vpack.c.b16 %v1651, %v1647
    %v2032 = vpack.c.b16 %v1652, %v1648
    %v2033 = vpack.c.b16 %v1653, %v1649
    %v2034 = vpack.c.b16 %v1658, %v1654
    %v2035 = vpack.c.b16 %v1659, %v1655
    %v2036 = vpack.c.b16 %v1660, %v1656
    %v2037 = vpack.c.b16 %v1661, %v1657
    %v2038 = vpack.c.b16 %v1666, %v1662
    %v2039 = vpack.c.b16 %v1667, %v1663
    %v2040 = vpack.c.b16 %v1668, %v1664
    %v2041 = vpack.c.b16 %v1669, %v1665
    %v2042 = vpack.c.b16 %v1674, %v1670
    %v2043 = vpack.c.b16 %v1675, %v1671
    %v2044 = vpack.c.b16 %v1676, %v1672
    %v2045 = vpack.c.b16 %v1677, %v1673
    %v2046 = vpack.c.b16 %v1682, %v1678
    %v2047 = vpack.c.b16 %v1683, %v1679
    %v2048 = vpack.c.b16 %v1684, %v1680
    %v2049 = vpack.c.b16 %v1685, %v1681
    %v2050 = vpack.c.b16 %v1690, %v1686
    %v2051 = vpack.c.b16 %v1691, %v1687
    %v2052 = vpack.c.b16 %v1692, %v1688
    %v2053 = vpack.c.b16 %v1693, %v1689
    %v2054 = vpack.c.b16 %v1698, %v1694
    %v2055 = vpack.c.b16 %v1699, %v1695
    %v2056 = vpack.c.b16 %v1700, %v1696
    %v2057 = vpack.c.b16 %v1701, %v1697
    %v2058 = vpack.c.b16 %v1706, %v1702
    %v2059 = vpack.c.b16 %v1707, %v1703
    %v2060 = vpack.c.b16 %v1708, %v1704
    %v2061 = vpack.c.b16 %v1709, %v1705
    %v2062 = vpack.c.b16 %v1714, %v1710
    %v2063 = vpack.c.b16 %v1715, %v1711
    %v2064 = vpack.c.b16 %v1716, %v1712
    %v2065 = vpack.c.b16 %v1717, %v1713
    %v2066 = vpack.c.b16 %v1722, %v1718
    %v2067 = vpack.c.b16 %v1723, %v1719
    %v2068 = vpack.c.b16 %v1724, %v1720
    %v2069 = vpack.c.b16 %v1725, %v1721
    %v2070 = vpack.c.b16 %v1730, %v1726
    %v2071 = vpack.c.b16 %v1731, %v1727
    %v2072 = vpack.c.b16 %v1732, %v1728
    %v2073 = vpack.c.b16 %v1733, %v1729
    %v2074 = vpack.c.b16 %v1738, %v1734
    %v2075 = vpack.c.b16 %v1739, %v1735
    %v2076 = vpack.c.b16 %v1740, %v1736
    %v2077 = vpack.c.b16 %v1741, %v1737
    %v2078 = vpack.c.b16 %v1746, %v1742
    %v2079 = vpack.c.b16 %v1747, %v1743
    %v2080 = vpack.c.b16 %v1748, %v1744
    %v2081 = vpack.c.b16 %v1749, %v1745
    %v2082 = vpack.c.b16 %v1754, %v1750
    %v2083 = vpack.c.b16 %v1755, %v1751
    %v2084 = vpack.c.b16 %v1756, %v1752
    %v2085 = vpack.c.b16 %v1757, %v1753
    %v2086 = vpack.c.b16 %v1762, %v1758
    %v2087 = vpack.c.b16 %v1763, %v1759
    %v2088 = vpack.c.b16 %v1764, %v1760
    %v2089 = vpack.c.b16 %v1765, %v1761
    %v2090 = vpack.c.b16 %v1770, %v1766
    %v2091 = vpack.c.b16 %v1771, %v1767
    %v2092 = vpack.c.b16 %v1772, %v1768
    %v2093 = vpack.c.b16 %v1773, %v1769
    %v2094 = vpack.c.b16 %v1778, %v1774
    %v2095 = vpack.c.b16 %v1779, %v1775
    %v2096 = vpack.c.b16 %v1780, %v1776
    %v2097 = vpack.c.b16 %v1781, %v1777
    %v2098 = vpack.c.b16 %v1786, %v1782
    %v2099 = vpack.c.b16 %v1787, %v1783
    %v2100 = vpack.c.b16 %v1788, %v1784
    %v2101 = vpack.c.b16 %v1789, %v1785
    %v2102 = vpack.c.b16 %v1794, %v1790
    %v2103 = vpack.c.b16 %v1795, %v1791
    %v2104 = vpack.c.b16 %v1796, %v1792
    %v2105 = vpack.c.b16 %v1797, %v1793
    %v2106 = vpack.c.b16 %v1802, %v1798
    %v2107 = vpack.c.b16 %v1803, %v1799
    %v2108 = vpack.c.b16 %v1804, %v1800
    %v2109 = vpack.c.b16 %v1805, %v1801
    %v2110 = vpack.c.b16 %v1810, %v1806
    %v2111 = vpack.c.b16 %v1811, %v1807
    %v2112 = vpack.c.b16 %v1812, %v1808
    %v2113 = vpack.c.b16 %v1813, %v1809
    %v2114 = vpack.c.b16 %v1818, %v1814
    %v2115 = vpack.c.b16 %v1819, %v1815
    %v2116 = vpack.c.b16 %v1820, %v1816
    %v2117 = vpack.c.b16 %v1821, %v1817
    %v2118 = vpack.c.b16 %v1826, %v1822
    %v2119 = vpack.c.b16 %v1827, %v1823
    %v2120 = vpack.c.b16 %v1828, %v1824
    %v2121 = vpack.c.b16 %v1829, %v1825
    %v2122 = vpack.c.b16 %v1834, %v1830
    %v2123 = vpack.c.b16 %v1835, %v1831
    %v2124 = vpack.c.b16 %v1836, %v1832
    %v2125 = vpack.c.b16 %v1837, %v1833
    %v2126 = vpack.c.b16 %v1842, %v1838
    %v2127 = vpack.c.b16 %v1843, %v1839
    %v2128 = vpack.c.b16 %v1844, %v1840
    %v2129 = vpack.c.b16 %v1845, %v1841
    %v2130 = vpack.c.b16 %v1850, %v1846
    %v2131 = vpack.c.b16 %v1851, %v1847
    %v2132 = vpack.c.b16 %v1852, %v1848
    %v2133 = vpack.c.b16 %v1853, %v1849
    %v2134 = vpack.c.b16 %v1858, %v1854
    %v2135 = vpack.c.b16 %v1859, %v1855
    %v2136 = vpack.c.b16 %v1860, %v1856
    %v2137 = vpack.c.b16 %v1861, %v1857
    %v2138 = vpack.c.b16 %v1866, %v1862
    %v2139 = vpack.c.b16 %v1867, %v1863
    %v2140 = vpack.c.b16 %v1868, %v1864
    %v2141 = vpack.c.b16 %v1869, %v1865
    %v2142 = vpack.c.b16 %v1874, %v1870
    %v2143 = vpack.c.b16 %v1875, %v1871
    %v2144 = vpack.c.b16 %v1876, %v1872
    %v2145 = vpack.c.b16 %v1877, %v1873
    %v2146 = vpack.c.b16 %v1882, %v1878
    %v2147 = vpack.c.b16 %v1883, %v1879
    %v2148 = vpack.c.b16 %v1884, %v1880
    %v2149 = vpack.c.b16 %v1885, %v1881
    %v2150 = vpack.c.b16 %v1890, %v1886
    %v2151 = vpack.c.b16 %v1891, %v1887
    %v2152 = vpack.c.b16 %v1892, %v1888
    %v2153 = vpack.c.b16 %v1893, %v1889
    %v2154 = vpack.c.b16 %v1898, %v1894
    %v2155 = vpack.c.b16 %v1899, %v1895
    %v2156 = vpack.c.b16 %v1900, %v1896
    %v2157 = vpack.c.b16 %v1901, %v1897
    %v2158 = vpack.c.b16 %v1906, %v1902
    %v2159 = vpack.c.b16 %v1907, %v1903
    %v2160 = vpack.c.b16 %v1908, %v1904
    %v2161 = vpack.c.b16 %v1909, %v1905
    %v2162 = vpack.c.b16 %v1914, %v1910
    %v2163 = vpack.c.b16 %v1915, %v1911
    %v2164 = vpack.c.b16 %v1916, %v1912
    %v2165 = vpack.c.b16 %v1917, %v1913
    %v2166 = vpack.c.b16 %v1922, %v1918
    %v2167 = vpack.c.b16 %v1923, %v1919
    %v2168 = vpack.c.b16 %v1924, %v1920
    %v2169 = vpack.c.b16 %v1925, %v1921
    %v2170 = vpack.c.b16 %v1930, %v1926
    %v2171 = vpack.c.b16 %v1931, %v1927
    %v2172 = vpack.c.b16 %v1932, %v1928
    %v2173 = vpack.c.b16 %v1933, %v1929
    %v2174 = vpack.c.b16 %v1938, %v1934
    %v2175 = vpack.c.b16 %v1939, %v1935
    %v2176 = vpack.c.b16 %v1940, %v1936
    %v2177 = vpack.c.b16 %v1941, %v1937
    %v2178 = vpack.c.b16 %v1946, %v1942
    %v2179 = vpack.c.b16 %v1947, %v1943
    %v2180 = vpack.c.b16 %v1948, %v1944
    %v2181 = vpack.c.b16 %v1949, %v1945
    %v2182 = vpack.c.b16 %v1954, %v1950
    %v2183 = vpack.c.b16 %v1955, %v1951
    %v2184 = vpack.c.b16 %v1956, %v1952
    %v2185 = vpack.c.b16 %v1957, %v1953
    %v2186 = vpack.c.b16 %v1962, %v1958
    %v2187 = vpack.c.b16 %v1963, %v1959
    %v2188 = vpack.c.b16 %v1964, %v1960
    %v2189 = vpack.c.b16 %v1965, %v1961
    %2414 = vmatprep.subr.bf16.mxu0 %v1995
    %2415 = vmatpush1.bf16.msra.mxu0 %v1994
    %2416 = vmatprep.subr.bf16.mxu0 %v1991
    %2417 = vmatpush1.bf16.msra.mxu0 %v1990
    %2418 = vmatprep.subr.bf16.mxu0 %v1987
    %2419 = vmatpush1.bf16.msra.mxu0 %v1986
    %2420 = vmatprep.subr.bf16.mxu0 %v1983
    %2421 = vmatpush1.bf16.msra.mxu0 %v1982
    %2422 = vmatprep.subr.bf16.mxu0 %v1979
    %2423 = vmatpush1.bf16.msra.mxu0 %v1978
    %2424 = vmatprep.subr.bf16.mxu0 %v1975
    %2425 = vmatpush1.bf16.msra.mxu0 %v1974
    %2426 = vmatprep.subr.bf16.mxu0 %v1971
    %2427 = vmatpush1.bf16.msra.mxu0 %v1970
    %2428 = vmatprep.subr.bf16.mxu0 %v1967
    %2429 = vmatpush1.bf16.msra.mxu0 %v1966
    %2430 = vmatprep.subr.bf16.mxu0 %v2027
    %2431 = vmatpush2.bf16.msra.mxu0 %v2026
    %2432 = vmatprep.subr.bf16.mxu0 %v2023
    %2433 = vmatpush2.bf16.msra.mxu0 %v2022
    %2434 = vmatprep.subr.bf16.mxu0 %v2019
    %2435 = vmatpush2.bf16.msra.mxu0 %v2018
    %2436 = vmatprep.subr.bf16.mxu0 %v2015
    %2437 = vmatpush2.bf16.msra.mxu0 %v2014
    %2438 = vmatprep.subr.bf16.mxu0 %v2011
    %2439 = vmatpush2.bf16.msra.mxu0 %v2010
    %2440 = vmatprep.subr.bf16.mxu0 %v2007
    %2441 = vmatpush2.bf16.msra.mxu0 %v2006
    %2442 = vmatprep.subr.bf16.mxu0 %v2003
    %2443 = vmatpush2.bf16.msra.mxu0 %v2002
    %2444 = vmatprep.subr.bf16.mxu0 %v1999
    %2445 = vmatpush2.bf16.msra.mxu0 %v1998
    %2446 = vmatprep.mubr.bf16.mxu0 %v1042
    %2447 = vmatmul.mubr.bf16.gmra.mxu0 %v1041
    %v2448 = vpop.f32.mrf.mxu0
    %v2449 = vadd.f32 %v1277, %v2448
    %v2450 = vpop.f32.mrf.mxu0
    %v2451 = vadd.f32 %v1281, %v2450
    %v2452 = vpop.f32.mrf.mxu0
    %v2453 = vpop.f32.mrf.mxu0
    %2454 = vdwg.mxu0
    %2455 = vmatprep.subr.bf16.mxu0 %v2059
    %2456 = vmatpush1.bf16.msra.mxu0 %v2058
    %2457 = vmatprep.subr.bf16.mxu0 %v2055
    %2458 = vmatpush1.bf16.msra.mxu0 %v2054
    %2459 = vmatprep.subr.bf16.mxu0 %v2051
    %2460 = vmatpush1.bf16.msra.mxu0 %v2050
    %2461 = vmatprep.subr.bf16.mxu0 %v2047
    %2462 = vmatpush1.bf16.msra.mxu0 %v2046
    %2463 = vmatprep.subr.bf16.mxu0 %v2043
    %2464 = vmatpush1.bf16.msra.mxu0 %v2042
    %2465 = vmatprep.subr.bf16.mxu0 %v2039
    %2466 = vmatpush1.bf16.msra.mxu0 %v2038
    %2467 = vmatprep.subr.bf16.mxu0 %v2035
    %2468 = vmatpush1.bf16.msra.mxu0 %v2034
    %2469 = vmatprep.subr.bf16.mxu0 %v2031
    %2470 = vmatpush1.bf16.msra.mxu0 %v2030
    %2471 = vmatprep.subr.bf16.mxu0 %v2091
    %2472 = vmatpush2.bf16.msra.mxu0 %v2090
    %2473 = vmatprep.subr.bf16.mxu0 %v2087
    %2474 = vmatpush2.bf16.msra.mxu0 %v2086
    %2475 = vmatprep.subr.bf16.mxu0 %v2083
    %2476 = vmatpush2.bf16.msra.mxu0 %v2082
    %2477 = vmatprep.subr.bf16.mxu0 %v2079
    %2478 = vmatpush2.bf16.msra.mxu0 %v2078
    %2479 = vmatprep.subr.bf16.mxu0 %v2075
    %2480 = vmatpush2.bf16.msra.mxu0 %v2074
    %2481 = vmatprep.subr.bf16.mxu0 %v2071
    %2482 = vmatpush2.bf16.msra.mxu0 %v2070
    %2483 = vmatprep.subr.bf16.mxu0 %v2067
    %2484 = vmatpush2.bf16.msra.mxu0 %v2066
    %2485 = vmatprep.subr.bf16.mxu0 %v2063
    %2486 = vmatpush2.bf16.msra.mxu0 %v2062
    %2487 = vmatprep.mubr.bf16.mxu0 %v1044
    %2488 = vmatmul.mubr.bf16.gmra.mxu0 %v1043
    %v2489 = vpop.f32.mrf.mxu0
    %v2490 = vadd.f32 %v2449, %v2489
    %v2491 = vpop.f32.mrf.mxu0
    %v2492 = vadd.f32 %v2451, %v2491
    %v2493 = vpop.f32.mrf.mxu0
    %v2494 = vpop.f32.mrf.mxu0
    %2495 = vdwg.mxu0
    %2496 = vmatprep.subr.bf16.mxu0 %v2123
    %2497 = vmatpush1.bf16.msra.mxu0 %v2122
    %2498 = vmatprep.subr.bf16.mxu0 %v2119
    %2499 = vmatpush1.bf16.msra.mxu0 %v2118
    %2500 = vmatprep.subr.bf16.mxu0 %v2115
    %2501 = vmatpush1.bf16.msra.mxu0 %v2114
    %2502 = vmatprep.subr.bf16.mxu0 %v2111
    %2503 = vmatpush1.bf16.msra.mxu0 %v2110
    %2504 = vmatprep.subr.bf16.mxu0 %v2107
    %2505 = vmatpush1.bf16.msra.mxu0 %v2106
    %2506 = vmatprep.subr.bf16.mxu0 %v2103
    %2507 = vmatpush1.bf16.msra.mxu0 %v2102
    %2508 = vmatprep.subr.bf16.mxu0 %v2099
    %2509 = vmatpush1.bf16.msra.mxu0 %v2098
    %2510 = vmatprep.subr.bf16.mxu0 %v2095
    %2511 = vmatpush1.bf16.msra.mxu0 %v2094
    %2512 = vmatprep.subr.bf16.mxu0 %v2155
    %2513 = vmatpush2.bf16.msra.mxu0 %v2154
    %2514 = vmatprep.subr.bf16.mxu0 %v2151
    %2515 = vmatpush2.bf16.msra.mxu0 %v2150
    %2516 = vmatprep.subr.bf16.mxu0 %v2147
    %2517 = vmatpush2.bf16.msra.mxu0 %v2146
    %2518 = vmatprep.subr.bf16.mxu0 %v2143
    %2519 = vmatpush2.bf16.msra.mxu0 %v2142
    %2520 = vmatprep.subr.bf16.mxu0 %v2139
    %2521 = vmatpush2.bf16.msra.mxu0 %v2138
    %2522 = vmatprep.subr.bf16.mxu0 %v2135
    %2523 = vmatpush2.bf16.msra.mxu0 %v2134
    %2524 = vmatprep.subr.bf16.mxu0 %v2131
    %2525 = vmatpush2.bf16.msra.mxu0 %v2130
    %2526 = vmatprep.subr.bf16.mxu0 %v2127
    %2527 = vmatpush2.bf16.msra.mxu0 %v2126
    %2528 = vmatprep.mubr.bf16.mxu0 %v1046
    %2529 = vmatmul.mubr.bf16.gmra.mxu0 %v1045
    %v2530 = vpop.f32.mrf.mxu0
    %v2531 = vadd.f32 %v2490, %v2530
    %v2532 = vpop.f32.mrf.mxu0
    %v2533 = vadd.f32 %v2492, %v2532
    %v2534 = vpop.f32.mrf.mxu0
    %v2535 = vpop.f32.mrf.mxu0
    %2536 = vdwg.mxu0
    %2537 = vmatprep.subr.bf16.mxu0 %v2187
    %2538 = vmatpush1.bf16.msra.mxu0 %v2186
    %2539 = vmatprep.subr.bf16.mxu0 %v2183
    %2540 = vmatpush1.bf16.msra.mxu0 %v2182
    %2541 = vmatprep.subr.bf16.mxu0 %v2179
    %2542 = vmatpush1.bf16.msra.mxu0 %v2178
    %2543 = vmatprep.subr.bf16.mxu0 %v2175
    %2544 = vmatpush1.bf16.msra.mxu0 %v2174
    %2545 = vmatprep.subr.bf16.mxu0 %v2171
    %2546 = vmatpush1.bf16.msra.mxu0 %v2170
    %2547 = vmatprep.subr.bf16.mxu0 %v2167
    %2548 = vmatpush1.bf16.msra.mxu0 %v2166
    %2549 = vmatprep.subr.bf16.mxu0 %v2163
    %2550 = vmatpush1.bf16.msra.mxu0 %v2162
    %2551 = vmatprep.subr.bf16.mxu0 %v2159
    %2552 = vmatpush1.bf16.msra.mxu0 %v2158
    %2553 = vmatprep.subr.bf16.mxu0 0
    %2554 = vmatpush2.bf16.msra.mxu0 0
    %2555 = vmatprep.subr.bf16.mxu0 0
    %2556 = vmatpush2.bf16.msra.mxu0 0
    %2557 = vmatprep.subr.bf16.mxu0 0
    %2558 = vmatpush2.bf16.msra.mxu0 0
    %2559 = vmatprep.subr.bf16.mxu0 0
    %2560 = vmatpush2.bf16.msra.mxu0 0
    %2561 = vmatprep.subr.bf16.mxu0 0
    %2562 = vmatpush2.bf16.msra.mxu0 0
    %2563 = vmatprep.subr.bf16.mxu0 0
    %2564 = vmatpush2.bf16.msra.mxu0 0
    %2565 = vmatprep.subr.bf16.mxu0 0
    %2566 = vmatpush2.bf16.msra.mxu0 0
    %2567 = vmatprep.subr.bf16.mxu0 0
    %2568 = vmatpush2.bf16.msra.mxu0 0
    %2569 = vmatprep.mubr.bf16.mxu0 0
    %2570 = vmatmul.mubr.bf16.gmra.mxu0 %v1047
    %v2571 = vpop.f32.mrf.mxu0
    %v2572 = vadd.f32 %v2531, %v2571
    %v2573 = vpop.f32.mrf.mxu0
    %v2574 = vadd.f32 %v2533, %v2573
    %v2575 = vpop.f32.mrf.mxu0
    %v2576 = vpop.f32.mrf.mxu0
    %2577 = vdwg.mxu0
    %2578 = vmatprep.subr.bf16.mxu0 %v1997
    %2579 = vmatpush1.bf16.msra.mxu0 %v1996
    %2580 = vmatprep.subr.bf16.mxu0 %v1993
    %2581 = vmatpush1.bf16.msra.mxu0 %v1992
    %2582 = vmatprep.subr.bf16.mxu0 %v1989
    %2583 = vmatpush1.bf16.msra.mxu0 %v1988
    %2584 = vmatprep.subr.bf16.mxu0 %v1985
    %2585 = vmatpush1.bf16.msra.mxu0 %v1984
    %2586 = vmatprep.subr.bf16.mxu0 %v1981
    %2587 = vmatpush1.bf16.msra.mxu0 %v1980
    %2588 = vmatprep.subr.bf16.mxu0 %v1977
    %2589 = vmatpush1.bf16.msra.mxu0 %v1976
    %2590 = vmatprep.subr.bf16.mxu0 %v1973
    %2591 = vmatpush1.bf16.msra.mxu0 %v1972
    %2592 = vmatprep.subr.bf16.mxu0 %v1969
    %2593 = vmatpush1.bf16.msra.mxu0 %v1968
    %2594 = vmatprep.subr.bf16.mxu0 %v2029
    %2595 = vmatpush2.bf16.msra.mxu0 %v2028
    %2596 = vmatprep.subr.bf16.mxu0 %v2025
    %2597 = vmatpush2.bf16.msra.mxu0 %v2024
    %2598 = vmatprep.subr.bf16.mxu0 %v2021
    %2599 = vmatpush2.bf16.msra.mxu0 %v2020
    %2600 = vmatprep.subr.bf16.mxu0 %v2017
    %2601 = vmatpush2.bf16.msra.mxu0 %v2016
    %2602 = vmatprep.subr.bf16.mxu0 %v2013
    %2603 = vmatpush2.bf16.msra.mxu0 %v2012
    %2604 = vmatprep.subr.bf16.mxu0 %v2009
    %2605 = vmatpush2.bf16.msra.mxu0 %v2008
    %2606 = vmatprep.subr.bf16.mxu0 %v2005
    %2607 = vmatpush2.bf16.msra.mxu0 %v2004
    %2608 = vmatprep.subr.bf16.mxu0 %v2001
    %2609 = vmatpush2.bf16.msra.mxu0 %v2000
    %2610 = vmatprep.mubr.bf16.mxu0 %v1042
    %2611 = vmatmul.mubr.bf16.gmra.mxu0 %v1041
    %v2612 = vpop.f32.mrf.mxu0
    %v2613 = vadd.f32 %v1285, %v2612
    %v2614 = vpop.f32.mrf.mxu0
    %v2615 = vadd.f32 %v1289, %v2614
    %v2616 = vpop.f32.mrf.mxu0
    %v2617 = vpop.f32.mrf.mxu0
    %2618 = vdwg.mxu0
    %2619 = vmatprep.subr.bf16.mxu0 %v2061
    %2620 = vmatpush1.bf16.msra.mxu0 %v2060
    %2621 = vmatprep.subr.bf16.mxu0 %v2057
    %2622 = vmatpush1.bf16.msra.mxu0 %v2056
    %2623 = vmatprep.subr.bf16.mxu0 %v2053
    %2624 = vmatpush1.bf16.msra.mxu0 %v2052
    %2625 = vmatprep.subr.bf16.mxu0 %v2049
    %2626 = vmatpush1.bf16.msra.mxu0 %v2048
    %2627 = vmatprep.subr.bf16.mxu0 %v2045
    %2628 = vmatpush1.bf16.msra.mxu0 %v2044
    %2629 = vmatprep.subr.bf16.mxu0 %v2041
    %2630 = vmatpush1.bf16.msra.mxu0 %v2040
    %2631 = vmatprep.subr.bf16.mxu0 %v2037
    %2632 = vmatpush1.bf16.msra.mxu0 %v2036
    %2633 = vmatprep.subr.bf16.mxu0 %v2033
    %2634 = vmatpush1.bf16.msra.mxu0 %v2032
    %2635 = vmatprep.subr.bf16.mxu0 %v2093
    %2636 = vmatpush2.bf16.msra.mxu0 %v2092
    %2637 = vmatprep.subr.bf16.mxu0 %v2089
    %2638 = vmatpush2.bf16.msra.mxu0 %v2088
    %2639 = vmatprep.subr.bf16.mxu0 %v2085
    %2640 = vmatpush2.bf16.msra.mxu0 %v2084
    %2641 = vmatprep.subr.bf16.mxu0 %v2081
    %2642 = vmatpush2.bf16.msra.mxu0 %v2080
    %2643 = vmatprep.subr.bf16.mxu0 %v2077
    %2644 = vmatpush2.bf16.msra.mxu0 %v2076
    %2645 = vmatprep.subr.bf16.mxu0 %v2073
    %2646 = vmatpush2.bf16.msra.mxu0 %v2072
    %2647 = vmatprep.subr.bf16.mxu0 %v2069
    %2648 = vmatpush2.bf16.msra.mxu0 %v2068
    %2649 = vmatprep.subr.bf16.mxu0 %v2065
    %2650 = vmatpush2.bf16.msra.mxu0 %v2064
    %2651 = vmatprep.mubr.bf16.mxu0 %v1044
    %2652 = vmatmul.mubr.bf16.gmra.mxu0 %v1043
    %v2653 = vpop.f32.mrf.mxu0
    %v2654 = vadd.f32 %v2613, %v2653
    %v2655 = vpop.f32.mrf.mxu0
    %v2656 = vadd.f32 %v2615, %v2655
    %v2657 = vpop.f32.mrf.mxu0
    %v2658 = vpop.f32.mrf.mxu0
    %2659 = vdwg.mxu0
    %2660 = vmatprep.subr.bf16.mxu0 %v2125
    %2661 = vmatpush1.bf16.msra.mxu0 %v2124
    %2662 = vmatprep.subr.bf16.mxu0 %v2121
    %2663 = vmatpush1.bf16.msra.mxu0 %v2120
    %2664 = vmatprep.subr.bf16.mxu0 %v2117
    %2665 = vmatpush1.bf16.msra.mxu0 %v2116
    %2666 = vmatprep.subr.bf16.mxu0 %v2113
    %2667 = vmatpush1.bf16.msra.mxu0 %v2112
    %2668 = vmatprep.subr.bf16.mxu0 %v2109
    %2669 = vmatpush1.bf16.msra.mxu0 %v2108
    %2670 = vmatprep.subr.bf16.mxu0 %v2105
    %2671 = vmatpush1.bf16.msra.mxu0 %v2104
    %2672 = vmatprep.subr.bf16.mxu0 %v2101
    %2673 = vmatpush1.bf16.msra.mxu0 %v2100
    %2674 = vmatprep.subr.bf16.mxu0 %v2097
    %2675 = vmatpush1.bf16.msra.mxu0 %v2096
    %2676 = vmatprep.subr.bf16.mxu0 %v2157
    %2677 = vmatpush2.bf16.msra.mxu0 %v2156
    %2678 = vmatprep.subr.bf16.mxu0 %v2153
    %2679 = vmatpush2.bf16.msra.mxu0 %v2152
    %2680 = vmatprep.subr.bf16.mxu0 %v2149
    %2681 = vmatpush2.bf16.msra.mxu0 %v2148
    %2682 = vmatprep.subr.bf16.mxu0 %v2145
    %2683 = vmatpush2.bf16.msra.mxu0 %v2144
    %2684 = vmatprep.subr.bf16.mxu0 %v2141
    %2685 = vmatpush2.bf16.msra.mxu0 %v2140
    %2686 = vmatprep.subr.bf16.mxu0 %v2137
    %2687 = vmatpush2.bf16.msra.mxu0 %v2136
    %2688 = vmatprep.subr.bf16.mxu0 %v2133
    %2689 = vmatpush2.bf16.msra.mxu0 %v2132
    %2690 = vmatprep.subr.bf16.mxu0 %v2129
    %2691 = vmatpush2.bf16.msra.mxu0 %v2128
    %2692 = vmatprep.mubr.bf16.mxu0 %v1046
    %2693 = vmatmul.mubr.bf16.gmra.mxu0 %v1045
    %v2694 = vpop.f32.mrf.mxu0
    %v2695 = vadd.f32 %v2654, %v2694
    %v2696 = vpop.f32.mrf.mxu0
    %v2697 = vadd.f32 %v2656, %v2696
    %v2698 = vpop.f32.mrf.mxu0
    %v2699 = vpop.f32.mrf.mxu0
    %2700 = vdwg.mxu0
    %2701 = vmatprep.subr.bf16.mxu0 %v2189
    %2702 = vmatpush1.bf16.msra.mxu0 %v2188
    %2703 = vmatprep.subr.bf16.mxu0 %v2185
    %2704 = vmatpush1.bf16.msra.mxu0 %v2184
    %2705 = vmatprep.subr.bf16.mxu0 %v2181
    %2706 = vmatpush1.bf16.msra.mxu0 %v2180
    %2707 = vmatprep.subr.bf16.mxu0 %v2177
    %2708 = vmatpush1.bf16.msra.mxu0 %v2176
    %2709 = vmatprep.subr.bf16.mxu0 %v2173
    %2710 = vmatpush1.bf16.msra.mxu0 %v2172
    %2711 = vmatprep.subr.bf16.mxu0 %v2169
    %2712 = vmatpush1.bf16.msra.mxu0 %v2168
    %2713 = vmatprep.subr.bf16.mxu0 %v2165
    %2714 = vmatpush1.bf16.msra.mxu0 %v2164
    %2715 = vmatprep.subr.bf16.mxu0 %v2161
    %2716 = vmatpush1.bf16.msra.mxu0 %v2160
    %2717 = vmatprep.subr.bf16.mxu0 0
    %2718 = vmatpush2.bf16.msra.mxu0 0
    %2719 = vmatprep.subr.bf16.mxu0 0
    %2720 = vmatpush2.bf16.msra.mxu0 0
    %2721 = vmatprep.subr.bf16.mxu0 0
    %2722 = vmatpush2.bf16.msra.mxu0 0
    %2723 = vmatprep.subr.bf16.mxu0 0
    %2724 = vmatpush2.bf16.msra.mxu0 0
    %2725 = vmatprep.subr.bf16.mxu0 0
    %2726 = vmatpush2.bf16.msra.mxu0 0
    %2727 = vmatprep.subr.bf16.mxu0 0
    %2728 = vmatpush2.bf16.msra.mxu0 0
    %2729 = vmatprep.subr.bf16.mxu0 0
    %2730 = vmatpush2.bf16.msra.mxu0 0
    %2731 = vmatprep.subr.bf16.mxu0 0
    %2732 = vmatpush2.bf16.msra.mxu0 0
    %2733 = vmatprep.mubr.bf16.mxu0 0
    %2734 = vmatmul.mubr.bf16.gmra.mxu0 %v1047
    %v2735 = vpop.f32.mrf.mxu0
    %v2736 = vadd.f32 %v2695, %v2735
    %v2737 = vpop.f32.mrf.mxu0
    %v2738 = vadd.f32 %v2697, %v2737
    %v2739 = vpop.f32.mrf.mxu0
    %v2740 = vpop.f32.mrf.mxu0
    %2741 = vdwg.mxu0
    %v2742 = vmul.f32 %v2572, 0.5
    %v2743 = vmul.f32 %v2574, 0.5
    %v2744 = vmul.f32 %v2736, 0.5
    %v2745 = vmul.f32 %v2738, 0.5
    %v2746 = vtanh.pop %v2742
    %v2747 = vtanh.pop %v2743
    %v2748 = vtanh.pop %v2744
    %v2749 = vtanh.pop %v2745
    %v2750 = vmul.f32 %v2746, 0.5
    %v2751 = vmul.f32 %v2747, 0.5
    %v2752 = vmul.f32 %v2748, 0.5
    %v2753 = vmul.f32 %v2749, 0.5
    %v2754 = vadd.f32 %v2750, 0.5
    %v2755 = vadd.f32 %v2751, 0.5
    %v2756 = vadd.f32 %v2752, 0.5
    %v2757 = vadd.f32 %v2753, 0.5
    %v2758 = vmul.f32 %v2572, %v2754
    %v2759 = vmul.f32 %v2574, %v2755
    %v2760 = vmul.f32 %v2736, %v2756
    %v2761 = vmul.f32 %v2738, %v2757
    %v2762 = vpack.c.bf16 %v2758, %v2758
    %v2763 = vpack.c.bf16 %v2759, %v2759
    %v2764 = vpack.c.bf16 %v2760, %v2760
    %v2765 = vpack.c.bf16 %v2761, %v2761
    %v2766 = vld [vmem:[#allocation6] sm:$0xff]
    %v2767 = vld [vmem:[#allocation6 + $0x8] sm:$0xf]
    %v2768 = vld [vmem:[#allocation6 + $0xc] sm:$0xff]
    %v2769 = vld [vmem:[#allocation6 + $0x14] sm:$0xf]
    %v2770 = vld [vmem:[#allocation6 + $0x18] sm:$0xff]
    %v2771 = vld [vmem:[#allocation6 + $0x20] sm:$0xf]
    %v2772 = vld [vmem:[#allocation6 + $0x24] sm:$0xff]
    %v2773 = vld [vmem:[#allocation6 + $0x2c] sm:$0xf]
    %v2774 = vld [vmem:[#allocation6 + $0x30] sm:$0xff]
    %v2775 = vld [vmem:[#allocation6 + $0x38] sm:$0xf]
    %v2776 = vld [vmem:[#allocation6 + $0x3c] sm:$0xff]
    %v2777 = vld [vmem:[#allocation6 + $0x44] sm:$0xf]
    %v2778 = vld [vmem:[#allocation6 + $0x48] sm:$0xff]
    %v2779 = vld [vmem:[#allocation6 + $0x50] sm:$0xf]
    %v2780 = vld [vmem:[#allocation6 + $0x54] sm:$0xff]
    %v2781 = vld [vmem:[#allocation6 + $0x5c] sm:$0xf]
    %v2782 = vld [vmem:[#allocation6 + $0x60] sm:$0xff]
    %v2783 = vld [vmem:[#allocation6 + $0x68] sm:$0xf]
    %v2784 = vld [vmem:[#allocation6 + $0x6c] sm:$0xff]
    %v2785 = vld [vmem:[#allocation6 + $0x74] sm:$0xf]
    %v2786 = vld [vmem:[#allocation6 + $0x78] sm:$0xff]
    %v2787 = vld [vmem:[#allocation6 + $0x80] sm:$0xf]
    %v2788 = vld [vmem:[#allocation6 + $0x84] sm:$0xff]
    %v2789 = vld [vmem:[#allocation6 + $0x8c] sm:$0xf]
    %v2790 = vld [vmem:[#allocation6 + $0x90] sm:$0xff]
    %v2791 = vld [vmem:[#allocation6 + $0x98] sm:$0xf]
    %v2792 = vld [vmem:[#allocation6 + $0x9c] sm:$0xff]
    %v2793 = vld [vmem:[#allocation6 + $0xa4] sm:$0xf]
    %v2794 = vld [vmem:[#allocation6 + $0xa8] sm:$0xff]
    %v2795 = vld [vmem:[#allocation6 + $0xb0] sm:$0xf]
    %v2796 = vld [vmem:[#allocation6 + $0xb4] sm:$0xff]
    %v2797 = vld [vmem:[#allocation6 + $0xbc] sm:$0xf]
    %v2798 = vld [vmem:[#allocation6 + $0xc0] sm:$0xff]
    %v2799 = vld [vmem:[#allocation6 + $0xc8] sm:$0xf]
    %v2800 = vld [vmem:[#allocation6 + $0xcc] sm:$0xff]
    %v2801 = vld [vmem:[#allocation6 + $0xd4] sm:$0xf]
    %v2802 = vld [vmem:[#allocation6 + $0xd8] sm:$0xff]
    %v2803 = vld [vmem:[#allocation6 + $0xe0] sm:$0xf]
    %v2804 = vld [vmem:[#allocation6 + $0xe4] sm:$0xff]
    %v2805 = vld [vmem:[#allocation6 + $0xec] sm:$0xf]
    %v2806 = vld [vmem:[#allocation6 + $0xf0] sm:$0xff]
    %v2807 = vld [vmem:[#allocation6 + $0xf8] sm:$0xf]
    %v2808 = vld [vmem:[#allocation6 + $0xfc] sm:$0xff]
    %v2809 = vld [vmem:[#allocation6 + $0x104] sm:$0xf]
    %v2810 = vld [vmem:[#allocation6 + $0x108] sm:$0xff]
    %v2811 = vld [vmem:[#allocation6 + $0x110] sm:$0xf]
    %v2812 = vld [vmem:[#allocation6 + $0x114] sm:$0xff]
    %v2813 = vld [vmem:[#allocation6 + $0x11c] sm:$0xf]
    %v2814 = vld [vmem:[#allocation6 + $0x120] sm:$0xff]
    %v2815 = vld [vmem:[#allocation6 + $0x128] sm:$0xf]
    %v2816 = vld [vmem:[#allocation6 + $0x12c] sm:$0xff]
    %v2817 = vld [vmem:[#allocation6 + $0x134] sm:$0xf]
    %v2818 = vld [vmem:[#allocation6 + $0x138] sm:$0xff]
    %v2819 = vld [vmem:[#allocation6 + $0x140] sm:$0xf]
    %v2820 = vld [vmem:[#allocation6 + $0x144] sm:$0xff]
    %v2821 = vld [vmem:[#allocation6 + $0x14c] sm:$0xf]
    %v2822 = vld [vmem:[#allocation6 + $0x150] sm:$0xff]
    %v2823 = vld [vmem:[#allocation6 + $0x158] sm:$0xf]
    %v2824 = vld [vmem:[#allocation6 + $0x15c] sm:$0xff]
    %v2825 = vld [vmem:[#allocation6 + $0x164] sm:$0xf]
    %v2826 = vld [vmem:[#allocation6 + $0x168] sm:$0xff]
    %v2827 = vld [vmem:[#allocation6 + $0x170] sm:$0xf]
    %v2828 = vld [vmem:[#allocation6 + $0x174] sm:$0xff]
    %v2829 = vld [vmem:[#allocation6 + $0x17c] sm:$0xf]
    %v2830 = vld [vmem:[#allocation6 + $0x180] sm:$0xff]
    %v2831 = vld [vmem:[#allocation6 + $0x188] sm:$0xf]
    %v2832 = vld [vmem:[#allocation6 + $0x18c] sm:$0xff]
    %v2833 = vld [vmem:[#allocation6 + $0x194] sm:$0xf]
    %v2834 = vld [vmem:[#allocation6 + $0x198] sm:$0xff]
    %v2835 = vld [vmem:[#allocation6 + $0x1a0] sm:$0xf]
    %v2836 = vld [vmem:[#allocation6 + $0x1a4] sm:$0xff]
    %v2837 = vld [vmem:[#allocation6 + $0x1ac] sm:$0xf]
    %v2838 = vld [vmem:[#allocation6 + $0x1b0] sm:$0xff]
    %v2839 = vld [vmem:[#allocation6 + $0x1b8] sm:$0xf]
    %v2840 = vld [vmem:[#allocation6 + $0x1bc] sm:$0xff]
    %v2841 = vld [vmem:[#allocation6 + $0x1c4] sm:$0xf]
    %v2842 = vld [vmem:[#allocation6 + $0x1c8] sm:$0xff]
    %v2843 = vld [vmem:[#allocation6 + $0x1d0] sm:$0xf]
    %v2844 = vld [vmem:[#allocation6 + $0x1d4] sm:$0xff]
    %v2845 = vld [vmem:[#allocation6 + $0x1dc] sm:$0xf]
    %v2846 = vld [vmem:[#allocation6 + $0x1e0] sm:$0xff]
    %v2847 = vld [vmem:[#allocation6 + $0x1e8] sm:$0xf]
    %v2848 = vld [vmem:[#allocation6 + $0x1ec] sm:$0xff]
    %v2849 = vld [vmem:[#allocation6 + $0x1f4] sm:$0xf]
    %v2850 = vld [vmem:[#allocation6 + $0x1f8] sm:$0xff]
    %v2851 = vld [vmem:[#allocation6 + $0x200] sm:$0xf]
    %v2852 = vld [vmem:[#allocation6 + $0x204] sm:$0xff]
    %v2853 = vld [vmem:[#allocation6 + $0x20c] sm:$0xf]
    %v2854 = vld [vmem:[#allocation6 + $0x210] sm:$0xff]
    %v2855 = vld [vmem:[#allocation6 + $0x218] sm:$0xf]
    %v2856 = vld [vmem:[#allocation6 + $0x21c] sm:$0xff]
    %v2857 = vld [vmem:[#allocation6 + $0x224] sm:$0xf]
    %v2858 = vld [vmem:[#allocation6 + $0x228] sm:$0xff]
    %v2859 = vld [vmem:[#allocation6 + $0x230] sm:$0xf]
    %v2860 = vld [vmem:[#allocation6 + $0x234] sm:$0xff]
    %v2861 = vld [vmem:[#allocation6 + $0x23c] sm:$0xf]
    %v2862 = vld [vmem:[#allocation6 + $0x240] sm:$0xff]
    %v2863 = vld [vmem:[#allocation6 + $0x248] sm:$0xf]
    %v2864 = vld [vmem:[#allocation6 + $0x24c] sm:$0xff]
    %v2865 = vld [vmem:[#allocation6 + $0x254] sm:$0xf]
    %v2866 = vld [vmem:[#allocation6 + $0x258] sm:$0xff]
    %v2867 = vld [vmem:[#allocation6 + $0x260] sm:$0xf]
    %v2868 = vld [vmem:[#allocation6 + $0x264] sm:$0xff]
    %v2869 = vld [vmem:[#allocation6 + $0x26c] sm:$0xf]
    %v2870 = vld [vmem:[#allocation6 + $0x270] sm:$0xff]
    %v2871 = vld [vmem:[#allocation6 + $0x278] sm:$0xf]
    %v2872 = vld [vmem:[#allocation6 + $0x27c] sm:$0xff]
    %v2873 = vld [vmem:[#allocation6 + $0x284] sm:$0xf]
    %v2874 = vld [vmem:[#allocation6 + $0x288] sm:$0xff]
    %v2875 = vld [vmem:[#allocation6 + $0x290] sm:$0xf]
    %v2876 = vld [vmem:[#allocation6 + $0x294] sm:$0xff]
    %v2877 = vld [vmem:[#allocation6 + $0x29c] sm:$0xf]
    %v2878 = vld [vmem:[#allocation6 + $0x2a0] sm:$0xff]
    %v2879 = vld [vmem:[#allocation6 + $0x2a8] sm:$0xf]
    %v2880 = vld [vmem:[#allocation6 + $0x2ac] sm:$0xff]
    %v2881 = vld [vmem:[#allocation6 + $0x2b4] sm:$0xf]
    %v2882 = vld [vmem:[#allocation6 + $0x2b8] sm:$0xff]
    %v2883 = vld [vmem:[#allocation6 + $0x2c0] sm:$0xf]
    %v2884 = vld [vmem:[#allocation6 + $0x2c4] sm:$0xff]
    %v2885 = vld [vmem:[#allocation6 + $0x2cc] sm:$0xf]
    %v2886 = vld [vmem:[#allocation6 + $0x2d0] sm:$0xff]
    %v2887 = vld [vmem:[#allocation6 + $0x2d8] sm:$0xf]
    %v2888 = vld [vmem:[#allocation6 + $0x2dc] sm:$0xff]
    %v2889 = vld [vmem:[#allocation6 + $0x2e4] sm:$0xf]
    %v2890 = vld [vmem:[#allocation6 + $0x2e8] sm:$0xff]
    %v2891 = vld [vmem:[#allocation6 + $0x2f0] sm:$0xf]
    %v2892 = vld [vmem:[#allocation6 + $0x2f4] sm:$0xff]
    %v2893 = vld [vmem:[#allocation6 + $0x2fc] sm:$0xf]
    %v2894 = vld [vmem:[%s8] sm:$0x7]
    %v2896 = vlaneseq
    %v2897 = vshrl.u32 %v2896, 7
    %v2898 = vsub.s32 0, %v2897
    %v2899 = vrot.slane %v2894, %v2898
    %v2900 = vlaneseq
    %v2901 = vshrl.u32 %v2900, 7
    %v2902 = vsub.s32 1, %v2901
    %v2903 = vrot.slane %v2894, %v2902
    %v2904 = vlaneseq
    %v2905 = vshrl.u32 %v2904, 7
    %v2906 = vsub.s32 2, %v2905
    %v2907 = vrot.slane %v2894, %v2906
    %v3039 = vunpack.c.l.b16 %v2766
    %v3040 = vunpack.c.h.b16 %v2766
    %v3041 = vunpack.c.l.b16 %v2767
    %v3042 = vunpack.c.l.b16 %v2768
    %v3043 = vunpack.c.h.b16 %v2768
    %v3044 = vunpack.c.l.b16 %v2769
    %v3045 = vunpack.c.l.b16 %v2770
    %v3046 = vunpack.c.h.b16 %v2770
    %v3047 = vunpack.c.l.b16 %v2771
    %v3048 = vunpack.c.l.b16 %v2772
    %v3049 = vunpack.c.h.b16 %v2772
    %v3050 = vunpack.c.l.b16 %v2773
    %v3051 = vunpack.c.l.b16 %v2774
    %v3052 = vunpack.c.h.b16 %v2774
    %v3053 = vunpack.c.l.b16 %v2775
    %v3054 = vunpack.c.l.b16 %v2776
    %v3055 = vunpack.c.h.b16 %v2776
    %v3056 = vunpack.c.l.b16 %v2777
    %v3057 = vunpack.c.l.b16 %v2778
    %v3058 = vunpack.c.h.b16 %v2778
    %v3059 = vunpack.c.l.b16 %v2779
    %v3060 = vunpack.c.l.b16 %v2780
    %v3061 = vunpack.c.h.b16 %v2780
    %v3062 = vunpack.c.l.b16 %v2781
    %v3063 = vunpack.c.l.b16 %v2782
    %v3064 = vunpack.c.h.b16 %v2782
    %v3065 = vunpack.c.l.b16 %v2783
    %v3066 = vunpack.c.l.b16 %v2784
    %v3067 = vunpack.c.h.b16 %v2784
    %v3068 = vunpack.c.l.b16 %v2785
    %v3069 = vunpack.c.l.b16 %v2786
    %v3070 = vunpack.c.h.b16 %v2786
    %v3071 = vunpack.c.l.b16 %v2787
    %v3072 = vunpack.c.l.b16 %v2788
    %v3073 = vunpack.c.h.b16 %v2788
    %v3074 = vunpack.c.l.b16 %v2789
    %v3075 = vunpack.c.l.b16 %v2790
    %v3076 = vunpack.c.h.b16 %v2790
    %v3077 = vunpack.c.l.b16 %v2791
    %v3078 = vunpack.c.l.b16 %v2792
    %v3079 = vunpack.c.h.b16 %v2792
    %v3080 = vunpack.c.l.b16 %v2793
    %v3081 = vunpack.c.l.b16 %v2794
    %v3082 = vunpack.c.h.b16 %v2794
    %v3083 = vunpack.c.l.b16 %v2795
    %v3084 = vunpack.c.l.b16 %v2796
    %v3085 = vunpack.c.h.b16 %v2796
    %v3086 = vunpack.c.l.b16 %v2797
    %v3087 = vunpack.c.l.b16 %v2798
    %v3088 = vunpack.c.h.b16 %v2798
    %v3089 = vunpack.c.l.b16 %v2799
    %v3090 = vunpack.c.l.b16 %v2800
    %v3091 = vunpack.c.h.b16 %v2800
    %v3092 = vunpack.c.l.b16 %v2801
    %v3093 = vunpack.c.l.b16 %v2802
    %v3094 = vunpack.c.h.b16 %v2802
    %v3095 = vunpack.c.l.b16 %v2803
    %v3096 = vunpack.c.l.b16 %v2804
    %v3097 = vunpack.c.h.b16 %v2804
    %v3098 = vunpack.c.l.b16 %v2805
    %v3099 = vunpack.c.l.b16 %v2806
    %v3100 = vunpack.c.h.b16 %v2806
    %v3101 = vunpack.c.l.b16 %v2807
    %v3102 = vunpack.c.l.b16 %v2808
    %v3103 = vunpack.c.h.b16 %v2808
    %v3104 = vunpack.c.l.b16 %v2809
    %v3105 = vunpack.c.l.b16 %v2810
    %v3106 = vunpack.c.h.b16 %v2810
    %v3107 = vunpack.c.l.b16 %v2811
    %v3108 = vunpack.c.l.b16 %v2812
    %v3109 = vunpack.c.h.b16 %v2812
    %v3110 = vunpack.c.l.b16 %v2813
    %v3111 = vunpack.c.l.b16 %v2814
    %v3112 = vunpack.c.h.b16 %v2814
    %v3113 = vunpack.c.l.b16 %v2815
    %v3114 = vunpack.c.l.b16 %v2816
    %v3115 = vunpack.c.h.b16 %v2816
    %v3116 = vunpack.c.l.b16 %v2817
    %v3117 = vunpack.c.l.b16 %v2818
    %v3118 = vunpack.c.h.b16 %v2818
    %v3119 = vunpack.c.l.b16 %v2819
    %v3120 = vunpack.c.l.b16 %v2820
    %v3121 = vunpack.c.h.b16 %v2820
    %v3122 = vunpack.c.l.b16 %v2821
    %v3123 = vunpack.c.l.b16 %v2822
    %v3124 = vunpack.c.h.b16 %v2822
    %v3125 = vunpack.c.l.b16 %v2823
    %v3126 = vunpack.c.l.b16 %v2824
    %v3127 = vunpack.c.h.b16 %v2824
    %v3128 = vunpack.c.l.b16 %v2825
    %v3129 = vunpack.c.l.b16 %v2826
    %v3130 = vunpack.c.h.b16 %v2826
    %v3131 = vunpack.c.l.b16 %v2827
    %v3132 = vunpack.c.l.b16 %v2828
    %v3133 = vunpack.c.h.b16 %v2828
    %v3134 = vunpack.c.l.b16 %v2829
    %v3135 = vunpack.c.l.b16 %v2830
    %v3136 = vunpack.c.h.b16 %v2830
    %v3137 = vunpack.c.l.b16 %v2831
    %v3138 = vunpack.c.l.b16 %v2832
    %v3139 = vunpack.c.h.b16 %v2832
    %v3140 = vunpack.c.l.b16 %v2833
    %v3141 = vunpack.c.l.b16 %v2834
    %v3142 = vunpack.c.h.b16 %v2834
    %v3143 = vunpack.c.l.b16 %v2835
    %v3144 = vunpack.c.l.b16 %v2836
    %v3145 = vunpack.c.h.b16 %v2836
    %v3146 = vunpack.c.l.b16 %v2837
    %v3147 = vunpack.c.l.b16 %v2838
    %v3148 = vunpack.c.h.b16 %v2838
    %v3149 = vunpack.c.l.b16 %v2839
    %v3150 = vunpack.c.l.b16 %v2840
    %v3151 = vunpack.c.h.b16 %v2840
    %v3152 = vunpack.c.l.b16 %v2841
    %v3153 = vunpack.c.l.b16 %v2842
    %v3154 = vunpack.c.h.b16 %v2842
    %v3155 = vunpack.c.l.b16 %v2843
    %v3156 = vunpack.c.l.b16 %v2844
    %v3157 = vunpack.c.h.b16 %v2844
    %v3158 = vunpack.c.l.b16 %v2845
    %v3159 = vunpack.c.l.b16 %v2846
    %v3160 = vunpack.c.h.b16 %v2846
    %v3161 = vunpack.c.l.b16 %v2847
    %v3162 = vunpack.c.l.b16 %v2848
    %v3163 = vunpack.c.h.b16 %v2848
    %v3164 = vunpack.c.l.b16 %v2849
    %v3165 = vunpack.c.l.b16 %v2850
    %v3166 = vunpack.c.h.b16 %v2850
    %v3167 = vunpack.c.l.b16 %v2851
    %v3168 = vunpack.c.l.b16 %v2852
    %v3169 = vunpack.c.h.b16 %v2852
    %v3170 = vunpack.c.l.b16 %v2853
    %v3171 = vunpack.c.l.b16 %v2854
    %v3172 = vunpack.c.h.b16 %v2854
    %v3173 = vunpack.c.l.b16 %v2855
    %v3174 = vunpack.c.l.b16 %v2856
    %v3175 = vunpack.c.h.b16 %v2856
    %v3176 = vunpack.c.l.b16 %v2857
    %v3177 = vunpack.c.l.b16 %v2858
    %v3178 = vunpack.c.h.b16 %v2858
    %v3179 = vunpack.c.l.b16 %v2859
    %v3180 = vunpack.c.l.b16 %v2860
    %v3181 = vunpack.c.h.b16 %v2860
    %v3182 = vunpack.c.l.b16 %v2861
    %v3183 = vunpack.c.l.b16 %v2862
    %v3184 = vunpack.c.h.b16 %v2862
    %v3185 = vunpack.c.l.b16 %v2863
    %v3186 = vunpack.c.l.b16 %v2864
    %v3187 = vunpack.c.h.b16 %v2864
    %v3188 = vunpack.c.l.b16 %v2865
    %v3189 = vunpack.c.l.b16 %v2866
    %v3190 = vunpack.c.h.b16 %v2866
    %v3191 = vunpack.c.l.b16 %v2867
    %v3192 = vunpack.c.l.b16 %v2868
    %v3193 = vunpack.c.h.b16 %v2868
    %v3194 = vunpack.c.l.b16 %v2869
    %v3195 = vunpack.c.l.b16 %v2870
    %v3196 = vunpack.c.h.b16 %v2870
    %v3197 = vunpack.c.l.b16 %v2871
    %v3198 = vunpack.c.l.b16 %v2872
    %v3199 = vunpack.c.h.b16 %v2872
    %v3200 = vunpack.c.l.b16 %v2873
    %v3201 = vunpack.c.l.b16 %v2874
    %v3202 = vunpack.c.h.b16 %v2874
    %v3203 = vunpack.c.l.b16 %v2875
    %v3204 = vunpack.c.l.b16 %v2876
    %v3205 = vunpack.c.h.b16 %v2876
    %v3206 = vunpack.c.l.b16 %v2877
    %v3207 = vunpack.c.l.b16 %v2878
    %v3208 = vunpack.c.h.b16 %v2878
    %v3209 = vunpack.c.l.b16 %v2879
    %v3210 = vunpack.c.l.b16 %v2880
    %v3211 = vunpack.c.h.b16 %v2880
    %v3212 = vunpack.c.l.b16 %v2881
    %v3213 = vunpack.c.l.b16 %v2882
    %v3214 = vunpack.c.h.b16 %v2882
    %v3215 = vunpack.c.l.b16 %v2883
    %v3216 = vunpack.c.l.b16 %v2884
    %v3217 = vunpack.c.h.b16 %v2884
    %v3218 = vunpack.c.l.b16 %v2885
    %v3219 = vunpack.c.l.b16 %v2886
    %v3220 = vunpack.c.h.b16 %v2886
    %v3221 = vunpack.c.l.b16 %v2887
    %v3222 = vunpack.c.l.b16 %v2888
    %v3223 = vunpack.c.h.b16 %v2888
    %v3224 = vunpack.c.l.b16 %v2889
    %v3225 = vunpack.c.l.b16 %v2890
    %v3226 = vunpack.c.h.b16 %v2890
    %v3227 = vunpack.c.l.b16 %v2891
    %v3228 = vunpack.c.l.b16 %v2892
    %v3229 = vunpack.c.h.b16 %v2892
    %v3230 = vunpack.c.l.b16 %v2893
    %v3231 = vpack.c.b16 %v3042, %v3039
    %v3232 = vpack.c.b16 %v3043, %v3040
    %v3233 = vpack.c.b16 %v3044, %v3041
    %v3234 = vpack.c.b16 %v3048, %v3045
    %v3235 = vpack.c.b16 %v3049, %v3046
    %v3236 = vpack.c.b16 %v3050, %v3047
    %v3237 = vpack.c.b16 %v3054, %v3051
    %v3238 = vpack.c.b16 %v3055, %v3052
    %v3239 = vpack.c.b16 %v3056, %v3053
    %v3240 = vpack.c.b16 %v3060, %v3057
    %v3241 = vpack.c.b16 %v3061, %v3058
    %v3242 = vpack.c.b16 %v3062, %v3059
    %v3243 = vpack.c.b16 %v3066, %v3063
    %v3244 = vpack.c.b16 %v3067, %v3064
    %v3245 = vpack.c.b16 %v3068, %v3065
    %v3246 = vpack.c.b16 %v3072, %v3069
    %v3247 = vpack.c.b16 %v3073, %v3070
    %v3248 = vpack.c.b16 %v3074, %v3071
    %v3249 = vpack.c.b16 %v3078, %v3075
    %v3250 = vpack.c.b16 %v3079, %v3076
    %v3251 = vpack.c.b16 %v3080, %v3077
    %v3252 = vpack.c.b16 %v3084, %v3081
    %v3253 = vpack.c.b16 %v3085, %v3082
    %v3254 = vpack.c.b16 %v3086, %v3083
    %v3255 = vpack.c.b16 %v3090, %v3087
    %v3256 = vpack.c.b16 %v3091, %v3088
    %v3257 = vpack.c.b16 %v3092, %v3089
    %v3258 = vpack.c.b16 %v3096, %v3093
    %v3259 = vpack.c.b16 %v3097, %v3094
    %v3260 = vpack.c.b16 %v3098, %v3095
    %v3261 = vpack.c.b16 %v3102, %v3099
    %v3262 = vpack.c.b16 %v3103, %v3100
    %v3263 = vpack.c.b16 %v3104, %v3101
    %v3264 = vpack.c.b16 %v3108, %v3105
    %v3265 = vpack.c.b16 %v3109, %v3106
    %v3266 = vpack.c.b16 %v3110, %v3107
    %v3267 = vpack.c.b16 %v3114, %v3111
    %v3268 = vpack.c.b16 %v3115, %v3112
    %v3269 = vpack.c.b16 %v3116, %v3113
    %v3270 = vpack.c.b16 %v3120, %v3117
    %v3271 = vpack.c.b16 %v3121, %v3118
    %v3272 = vpack.c.b16 %v3122, %v3119
    %v3273 = vpack.c.b16 %v3126, %v3123
    %v3274 = vpack.c.b16 %v3127, %v3124
    %v3275 = vpack.c.b16 %v3128, %v3125
    %v3276 = vpack.c.b16 %v3132, %v3129
    %v3277 = vpack.c.b16 %v3133, %v3130
    %v3278 = vpack.c.b16 %v3134, %v3131
    %v3279 = vpack.c.b16 %v3138, %v3135
    %v3280 = vpack.c.b16 %v3139, %v3136
    %v3281 = vpack.c.b16 %v3140, %v3137
    %v3282 = vpack.c.b16 %v3144, %v3141
    %v3283 = vpack.c.b16 %v3145, %v3142
    %v3284 = vpack.c.b16 %v3146, %v3143
    %v3285 = vpack.c.b16 %v3150, %v3147
    %v3286 = vpack.c.b16 %v3151, %v3148
    %v3287 = vpack.c.b16 %v3152, %v3149
    %v3288 = vpack.c.b16 %v3156, %v3153
    %v3289 = vpack.c.b16 %v3157, %v3154
    %v3290 = vpack.c.b16 %v3158, %v3155
    %v3291 = vpack.c.b16 %v3162, %v3159
    %v3292 = vpack.c.b16 %v3163, %v3160
    %v3293 = vpack.c.b16 %v3164, %v3161
    %v3294 = vpack.c.b16 %v3168, %v3165
    %v3295 = vpack.c.b16 %v3169, %v3166
    %v3296 = vpack.c.b16 %v3170, %v3167
    %v3297 = vpack.c.b16 %v3174, %v3171
    %v3298 = vpack.c.b16 %v3175, %v3172
    %v3299 = vpack.c.b16 %v3176, %v3173
    %v3300 = vpack.c.b16 %v3180, %v3177
    %v3301 = vpack.c.b16 %v3181, %v3178
    %v3302 = vpack.c.b16 %v3182, %v3179
    %v3303 = vpack.c.b16 %v3186, %v3183
    %v3304 = vpack.c.b16 %v3187, %v3184
    %v3305 = vpack.c.b16 %v3188, %v3185
    %v3306 = vpack.c.b16 %v3192, %v3189
    %v3307 = vpack.c.b16 %v3193, %v3190
    %v3308 = vpack.c.b16 %v3194, %v3191
    %v3309 = vpack.c.b16 %v3198, %v3195
    %v3310 = vpack.c.b16 %v3199, %v3196
    %v3311 = vpack.c.b16 %v3200, %v3197
    %v3312 = vpack.c.b16 %v3204, %v3201
    %v3313 = vpack.c.b16 %v3205, %v3202
    %v3314 = vpack.c.b16 %v3206, %v3203
    %v3315 = vpack.c.b16 %v3210, %v3207
    %v3316 = vpack.c.b16 %v3211, %v3208
    %v3317 = vpack.c.b16 %v3212, %v3209
    %v3318 = vpack.c.b16 %v3216, %v3213
    %v3319 = vpack.c.b16 %v3217, %v3214
    %v3320 = vpack.c.b16 %v3218, %v3215
    %v3321 = vpack.c.b16 %v3222, %v3219
    %v3322 = vpack.c.b16 %v3223, %v3220
    %v3323 = vpack.c.b16 %v3224, %v3221
    %v3324 = vpack.c.b16 %v3228, %v3225
    %v3325 = vpack.c.b16 %v3229, %v3226
    %v3326 = vpack.c.b16 %v3230, %v3227
    %3423 = vmatprep.subr.bf16.mxu0 %v3253
    %3424 = vmatpush1.bf16.msra.mxu0 %v3252
    %3425 = vmatprep.subr.bf16.mxu0 %v3250
    %3426 = vmatpush1.bf16.msra.mxu0 %v3249
    %3427 = vmatprep.subr.bf16.mxu0 %v3247
    %3428 = vmatpush1.bf16.msra.mxu0 %v3246
    %3429 = vmatprep.subr.bf16.mxu0 %v3244
    %3430 = vmatpush1.bf16.msra.mxu0 %v3243
    %3431 = vmatprep.subr.bf16.mxu0 %v3241
    %3432 = vmatpush1.bf16.msra.mxu0 %v3240
    %3433 = vmatprep.subr.bf16.mxu0 %v3238
    %3434 = vmatpush1.bf16.msra.mxu0 %v3237
    %3435 = vmatprep.subr.bf16.mxu0 %v3235
    %3436 = vmatpush1.bf16.msra.mxu0 %v3234
    %3437 = vmatprep.subr.bf16.mxu0 %v3232
    %3438 = vmatpush1.bf16.msra.mxu0 %v3231
    %3439 = vmatprep.subr.bf16.mxu0 %v3277
    %3440 = vmatpush2.bf16.msra.mxu0 %v3276
    %3441 = vmatprep.subr.bf16.mxu0 %v3274
    %3442 = vmatpush2.bf16.msra.mxu0 %v3273
    %3443 = vmatprep.subr.bf16.mxu0 %v3271
    %3444 = vmatpush2.bf16.msra.mxu0 %v3270
    %3445 = vmatprep.subr.bf16.mxu0 %v3268
    %3446 = vmatpush2.bf16.msra.mxu0 %v3267
    %3447 = vmatprep.subr.bf16.mxu0 %v3265
    %3448 = vmatpush2.bf16.msra.mxu0 %v3264
    %3449 = vmatprep.subr.bf16.mxu0 %v3262
    %3450 = vmatpush2.bf16.msra.mxu0 %v3261
    %3451 = vmatprep.subr.bf16.mxu0 %v3259
    %3452 = vmatpush2.bf16.msra.mxu0 %v3258
    %3453 = vmatprep.subr.bf16.mxu0 %v3256
    %3454 = vmatpush2.bf16.msra.mxu0 %v3255
    %3455 = vmatprep.mubr.bf16.mxu0 %v2763
    %3456 = vmatmul.mubr.bf16.gmra.mxu0 %v2762
    %v3457 = vpop.f32.mrf.mxu0
    %v3458 = vadd.f32 %v2899, %v3457
    %v3459 = vpop.f32.mrf.mxu0
    %v3460 = vadd.f32 %v2903, %v3459
    %v3461 = vpop.f32.mrf.mxu0
    %v3462 = vpop.f32.mrf.mxu0
    %3463 = vdwg.mxu0
    %3464 = vmatprep.subr.bf16.mxu0 %v3301
    %3465 = vmatpush1.bf16.msra.mxu0 %v3300
    %3466 = vmatprep.subr.bf16.mxu0 %v3298
    %3467 = vmatpush1.bf16.msra.mxu0 %v3297
    %3468 = vmatprep.subr.bf16.mxu0 %v3295
    %3469 = vmatpush1.bf16.msra.mxu0 %v3294
    %3470 = vmatprep.subr.bf16.mxu0 %v3292
    %3471 = vmatpush1.bf16.msra.mxu0 %v3291
    %3472 = vmatprep.subr.bf16.mxu0 %v3289
    %3473 = vmatpush1.bf16.msra.mxu0 %v3288
    %3474 = vmatprep.subr.bf16.mxu0 %v3286
    %3475 = vmatpush1.bf16.msra.mxu0 %v3285
    %3476 = vmatprep.subr.bf16.mxu0 %v3283
    %3477 = vmatpush1.bf16.msra.mxu0 %v3282
    %3478 = vmatprep.subr.bf16.mxu0 %v3280
    %3479 = vmatpush1.bf16.msra.mxu0 %v3279
    %3480 = vmatprep.subr.bf16.mxu0 %v3325
    %3481 = vmatpush2.bf16.msra.mxu0 %v3324
    %3482 = vmatprep.subr.bf16.mxu0 %v3322
    %3483 = vmatpush2.bf16.msra.mxu0 %v3321
    %3484 = vmatprep.subr.bf16.mxu0 %v3319
    %3485 = vmatpush2.bf16.msra.mxu0 %v3318
    %3486 = vmatprep.subr.bf16.mxu0 %v3316
    %3487 = vmatpush2.bf16.msra.mxu0 %v3315
    %3488 = vmatprep.subr.bf16.mxu0 %v3313
    %3489 = vmatpush2.bf16.msra.mxu0 %v3312
    %3490 = vmatprep.subr.bf16.mxu0 %v3310
    %3491 = vmatpush2.bf16.msra.mxu0 %v3309
    %3492 = vmatprep.subr.bf16.mxu0 %v3307
    %3493 = vmatpush2.bf16.msra.mxu0 %v3306
    %3494 = vmatprep.subr.bf16.mxu0 %v3304
    %3495 = vmatpush2.bf16.msra.mxu0 %v3303
    %3496 = vmatprep.mubr.bf16.mxu0 %v2765
    %3497 = vmatmul.mubr.bf16.gmra.mxu0 %v2764
    %v3498 = vpop.f32.mrf.mxu0
    %v3499 = vadd.f32 %v3458, %v3498
    %v3500 = vpop.f32.mrf.mxu0
    %v3501 = vadd.f32 %v3460, %v3500
    %v3502 = vpop.f32.mrf.mxu0
    %v3503 = vpop.f32.mrf.mxu0
    %3504 = vdwg.mxu0
    %3505 = vmatprep.subr.bf16.mxu0 0
    %3506 = vmatpush1.bf16.msra.mxu0 %v3254
    %3507 = vmatprep.subr.bf16.mxu0 0
    %3508 = vmatpush1.bf16.msra.mxu0 %v3251
    %3509 = vmatprep.subr.bf16.mxu0 0
    %3510 = vmatpush1.bf16.msra.mxu0 %v3248
    %3511 = vmatprep.subr.bf16.mxu0 0
    %3512 = vmatpush1.bf16.msra.mxu0 %v3245
    %3513 = vmatprep.subr.bf16.mxu0 0
    %3514 = vmatpush1.bf16.msra.mxu0 %v3242
    %3515 = vmatprep.subr.bf16.mxu0 0
    %3516 = vmatpush1.bf16.msra.mxu0 %v3239
    %3517 = vmatprep.subr.bf16.mxu0 0
    %3518 = vmatpush1.bf16.msra.mxu0 %v3236
    %3519 = vmatprep.subr.bf16.mxu0 0
    %3520 = vmatpush1.bf16.msra.mxu0 %v3233
    %3521 = vmatprep.subr.bf16.mxu0 0
    %3522 = vmatpush2.bf16.msra.mxu0 %v3278
    %3523 = vmatprep.subr.bf16.mxu0 0
    %3524 = vmatpush2.bf16.msra.mxu0 %v3275
    %3525 = vmatprep.subr.bf16.mxu0 0
    %3526 = vmatpush2.bf16.msra.mxu0 %v3272
    %3527 = vmatprep.subr.bf16.mxu0 0
    %3528 = vmatpush2.bf16.msra.mxu0 %v3269
    %3529 = vmatprep.subr.bf16.mxu0 0
    %3530 = vmatpush2.bf16.msra.mxu0 %v3266
    %3531 = vmatprep.subr.bf16.mxu0 0
    %3532 = vmatpush2.bf16.msra.mxu0 %v3263
    %3533 = vmatprep.subr.bf16.mxu0 0
    %3534 = vmatpush2.bf16.msra.mxu0 %v3260
    %3535 = vmatprep.subr.bf16.mxu0 0
    %3536 = vmatpush2.bf16.msra.mxu0 %v3257
    %3537 = vmatprep.mubr.bf16.mxu0 %v2763
    %3538 = vmatmul.mubr.bf16.gmra.mxu0 %v2762
    %v3539 = vpop.f32.mrf.mxu0
    %v3540 = vadd.f32 %v2907, %v3539
    %v3541 = vpop.f32.mrf.mxu0
    %v3542 = vpop.f32.mrf.mxu0
    %v3543 = vpop.f32.mrf.mxu0
    %3544 = vdwg.mxu0
    %3545 = vmatprep.subr.bf16.mxu0 0
    %3546 = vmatpush1.bf16.msra.mxu0 %v3302
    %3547 = vmatprep.subr.bf16.mxu0 0
    %3548 = vmatpush1.bf16.msra.mxu0 %v3299
    %3549 = vmatprep.subr.bf16.mxu0 0
    %3550 = vmatpush1.bf16.msra.mxu0 %v3296
    %3551 = vmatprep.subr.bf16.mxu0 0
    %3552 = vmatpush1.bf16.msra.mxu0 %v3293
    %3553 = vmatprep.subr.bf16.mxu0 0
    %3554 = vmatpush1.bf16.msra.mxu0 %v3290
    %3555 = vmatprep.subr.bf16.mxu0 0
    %3556 = vmatpush1.bf16.msra.mxu0 %v3287
    %3557 = vmatprep.subr.bf16.mxu0 0
    %3558 = vmatpush1.bf16.msra.mxu0 %v3284
    %3559 = vmatprep.subr.bf16.mxu0 0
    %3560 = vmatpush1.bf16.msra.mxu0 %v3281
    %3561 = vmatprep.subr.bf16.mxu0 0
    %3562 = vmatpush2.bf16.msra.mxu0 %v3326
    %3563 = vmatprep.subr.bf16.mxu0 0
    %3564 = vmatpush2.bf16.msra.mxu0 %v3323
    %3565 = vmatprep.subr.bf16.mxu0 0
    %3566 = vmatpush2.bf16.msra.mxu0 %v3320
    %3567 = vmatprep.subr.bf16.mxu0 0
    %3568 = vmatpush2.bf16.msra.mxu0 %v3317
    %3569 = vmatprep.subr.bf16.mxu0 0
    %3570 = vmatpush2.bf16.msra.mxu0 %v3314
    %3571 = vmatprep.subr.bf16.mxu0 0
    %3572 = vmatpush2.bf16.msra.mxu0 %v3311
    %3573 = vmatprep.subr.bf16.mxu0 0
    %3574 = vmatpush2.bf16.msra.mxu0 %v3308
    %3575 = vmatprep.subr.bf16.mxu0 0
    %3576 = vmatpush2.bf16.msra.mxu0 %v3305
    %3577 = vmatprep.mubr.bf16.mxu0 %v2765
    %3578 = vmatmul.mubr.bf16.gmra.mxu0 %v2764
    %v3579 = vpop.f32.mrf.mxu0
    %v3580 = vadd.f32 %v3540, %v3579
    %v3581 = vpop.f32.mrf.mxu0
    %v3582 = vpop.f32.mrf.mxu0
    %v3583 = vpop.f32.mrf.mxu0
    %3584 = vdwg.mxu0
    %v3585 = vmul.f32 %v3499, 0.5
    %v3586 = vmul.f32 %v3501, 0.5
    %v3587 = vmul.f32 %v3580, 0.5
    %v3588 = vtanh.pop %v3585
    %v3589 = vtanh.pop %v3586
    %v3590 = vtanh.pop %v3587
    %v3591 = vmul.f32 %v3588, 0.5
    %v3592 = vmul.f32 %v3589, 0.5
    %v3593 = vmul.f32 %v3590, 0.5
    %v3594 = vadd.f32 %v3591, 0.5
    %v3595 = vadd.f32 %v3592, 0.5
    %v3596 = vadd.f32 %v3593, 0.5
    %v3597 = vmul.f32 %v3499, %v3594
    %v3598 = vmul.f32 %v3501, %v3595
    %v3599 = vmul.f32 %v3580, %v3596
    %v3600 = vpack.c.bf16 %v3597, %v3597
    %v3601 = vpack.c.bf16 %v3598, %v3598
    %v3602 = vpack.c.bf16 %v3599, %v3599
    %v3603 = vld [vmem:[#allocation7] sm:$0xf]
    %v3604 = vld [vmem:[#allocation7 + $0x4] sm:$0xf]
    %v3605 = vld [vmem:[#allocation7 + $0x8] sm:$0xf]
    %v3606 = vld [vmem:[#allocation7 + $0xc] sm:$0xf]
    %v3607 = vld [vmem:[#allocation7 + $0x10] sm:$0xf]
    %v3608 = vld [vmem:[#allocation7 + $0x14] sm:$0xf]
    %v3609 = vld [vmem:[#allocation7 + $0x18] sm:$0xf]
    %v3610 = vld [vmem:[#allocation7 + $0x1c] sm:$0xf]
    %v3611 = vld [vmem:[#allocation7 + $0x20] sm:$0xf]
    %v3612 = vld [vmem:[#allocation7 + $0x24] sm:$0xf]
    %v3613 = vld [vmem:[#allocation7 + $0x28] sm:$0xf]
    %v3614 = vld [vmem:[#allocation7 + $0x2c] sm:$0xf]
    %v3615 = vld [vmem:[#allocation7 + $0x30] sm:$0xf]
    %v3616 = vld [vmem:[#allocation7 + $0x34] sm:$0xf]
    %v3617 = vld [vmem:[#allocation7 + $0x38] sm:$0xf]
    %v3618 = vld [vmem:[#allocation7 + $0x3c] sm:$0xf]
    %v3619 = vld [vmem:[#allocation7 + $0x40] sm:$0xf]
    %v3620 = vld [vmem:[#allocation7 + $0x44] sm:$0xf]
    %v3621 = vld [vmem:[#allocation7 + $0x48] sm:$0xf]
    %v3622 = vld [vmem:[#allocation7 + $0x4c] sm:$0xf]
    %v3623 = vld [vmem:[#allocation7 + $0x50] sm:$0xf]
    %v3624 = vld [vmem:[#allocation7 + $0x54] sm:$0xf]
    %v3625 = vld [vmem:[#allocation7 + $0x58] sm:$0xf]
    %v3626 = vld [vmem:[#allocation7 + $0x5c] sm:$0xf]
    %v3627 = vld [vmem:[#allocation7 + $0x60] sm:$0xf]
    %v3628 = vld [vmem:[#allocation7 + $0x64] sm:$0xf]
    %v3629 = vld [vmem:[#allocation7 + $0x68] sm:$0xf]
    %v3630 = vld [vmem:[#allocation7 + $0x6c] sm:$0xf]
    %v3631 = vld [vmem:[#allocation7 + $0x70] sm:$0xf]
    %v3632 = vld [vmem:[#allocation7 + $0x74] sm:$0xf]
    %v3633 = vld [vmem:[#allocation7 + $0x78] sm:$0xf]
    %v3634 = vld [vmem:[#allocation7 + $0x7c] sm:$0xf]
    %v3635 = vld [vmem:[#allocation7 + $0x80] sm:$0xf]
    %v3636 = vld [vmem:[#allocation7 + $0x84] sm:$0xf]
    %v3637 = vld [vmem:[#allocation7 + $0x88] sm:$0xf]
    %v3638 = vld [vmem:[#allocation7 + $0x8c] sm:$0xf]
    %v3639 = vld [vmem:[#allocation7 + $0x90] sm:$0xf]
    %v3640 = vld [vmem:[#allocation7 + $0x94] sm:$0xf]
    %v3641 = vld [vmem:[#allocation7 + $0x98] sm:$0xf]
    %v3642 = vld [vmem:[#allocation7 + $0x9c] sm:$0xf]
    %v3643 = vld [vmem:[#allocation7 + $0xa0] sm:$0xf]
    %v3644 = vld [vmem:[#allocation7 + $0xa4] sm:$0xf]
    %v3645 = vld [vmem:[#allocation7 + $0xa8] sm:$0xf]
    %v3646 = vld [vmem:[#allocation7 + $0xac] sm:$0xf]
    %v3647 = vld [vmem:[#allocation7 + $0xb0] sm:$0xf]
    %v3648 = vld [vmem:[#allocation7 + $0xb4] sm:$0xf]
    %v3649 = vld [vmem:[#allocation7 + $0xb8] sm:$0xf]
    %v3650 = vld [vmem:[#allocation7 + $0xbc] sm:$0xf]
    %v3651 = vld [vmem:[%s9] sm:$0x1]
    %v3653 = vlaneseq
    %v3654 = vshrl.u32 %v3653, 7
    %v3655 = vsub.s32 0, %v3654
    %v3656 = vrot.slane %v3651, %v3655
    %v3706 = vunpack.c.l.b16 %v3603
    %v3707 = vunpack.c.l.b16 %v3604
    %v3708 = vunpack.c.l.b16 %v3605
    %v3709 = vunpack.c.l.b16 %v3606
    %v3710 = vunpack.c.l.b16 %v3607
    %v3711 = vunpack.c.l.b16 %v3608
    %v3712 = vunpack.c.l.b16 %v3609
    %v3713 = vunpack.c.l.b16 %v3610
    %v3714 = vunpack.c.l.b16 %v3611
    %v3715 = vunpack.c.l.b16 %v3612
    %v3716 = vunpack.c.l.b16 %v3613
    %v3717 = vunpack.c.l.b16 %v3614
    %v3718 = vunpack.c.l.b16 %v3615
    %v3719 = vunpack.c.l.b16 %v3616
    %v3720 = vunpack.c.l.b16 %v3617
    %v3721 = vunpack.c.l.b16 %v3618
    %v3722 = vunpack.c.l.b16 %v3619
    %v3723 = vunpack.c.l.b16 %v3620
    %v3724 = vunpack.c.l.b16 %v3621
    %v3725 = vunpack.c.l.b16 %v3622
    %v3726 = vunpack.c.l.b16 %v3623
    %v3727 = vunpack.c.l.b16 %v3624
    %v3728 = vunpack.c.l.b16 %v3625
    %v3729 = vunpack.c.l.b16 %v3626
    %v3730 = vunpack.c.l.b16 %v3627
    %v3731 = vunpack.c.l.b16 %v3628
    %v3732 = vunpack.c.l.b16 %v3629
    %v3733 = vunpack.c.l.b16 %v3630
    %v3734 = vunpack.c.l.b16 %v3631
    %v3735 = vunpack.c.l.b16 %v3632
    %v3736 = vunpack.c.l.b16 %v3633
    %v3737 = vunpack.c.l.b16 %v3634
    %v3738 = vunpack.c.l.b16 %v3635
    %v3739 = vunpack.c.l.b16 %v3636
    %v3740 = vunpack.c.l.b16 %v3637
    %v3741 = vunpack.c.l.b16 %v3638
    %v3742 = vunpack.c.l.b16 %v3639
    %v3743 = vunpack.c.l.b16 %v3640
    %v3744 = vunpack.c.l.b16 %v3641
    %v3745 = vunpack.c.l.b16 %v3642
    %v3746 = vunpack.c.l.b16 %v3643
    %v3747 = vunpack.c.l.b16 %v3644
    %v3748 = vunpack.c.l.b16 %v3645
    %v3749 = vunpack.c.l.b16 %v3646
    %v3750 = vunpack.c.l.b16 %v3647
    %v3751 = vunpack.c.l.b16 %v3648
    %v3752 = vunpack.c.l.b16 %v3649
    %v3753 = vunpack.c.l.b16 %v3650
    %v3754 = vpack.c.b16 %v3707, %v3706
    %v3755 = vpack.c.b16 %v3709, %v3708
    %v3756 = vpack.c.b16 %v3711, %v3710
    %v3757 = vpack.c.b16 %v3713, %v3712
    %v3758 = vpack.c.b16 %v3715, %v3714
    %v3759 = vpack.c.b16 %v3717, %v3716
    %v3760 = vpack.c.b16 %v3719, %v3718
    %v3761 = vpack.c.b16 %v3721, %v3720
    %v3762 = vpack.c.b16 %v3723, %v3722
    %v3763 = vpack.c.b16 %v3725, %v3724
    %v3764 = vpack.c.b16 %v3727, %v3726
    %v3765 = vpack.c.b16 %v3729, %v3728
    %v3766 = vpack.c.b16 %v3731, %v3730
    %v3767 = vpack.c.b16 %v3733, %v3732
    %v3768 = vpack.c.b16 %v3735, %v3734
    %v3769 = vpack.c.b16 %v3737, %v3736
    %v3770 = vpack.c.b16 %v3739, %v3738
    %v3771 = vpack.c.b16 %v3741, %v3740
    %v3772 = vpack.c.b16 %v3743, %v3742
    %v3773 = vpack.c.b16 %v3745, %v3744
    %v3774 = vpack.c.b16 %v3747, %v3746
    %v3775 = vpack.c.b16 %v3749, %v3748
    %v3776 = vpack.c.b16 %v3751, %v3750
    %v3777 = vpack.c.b16 %v3753, %v3752
    %3802 = vmatprep.subr.bf16.mxu0 0
    %3803 = vmatpush1.bf16.msra.mxu0 %v3761
    %3804 = vmatprep.subr.bf16.mxu0 0
    %3805 = vmatpush1.bf16.msra.mxu0 %v3760
    %3806 = vmatprep.subr.bf16.mxu0 0
    %3807 = vmatpush1.bf16.msra.mxu0 %v3759
    %3808 = vmatprep.subr.bf16.mxu0 0
    %3809 = vmatpush1.bf16.msra.mxu0 %v3758
    %3810 = vmatprep.subr.bf16.mxu0 0
    %3811 = vmatpush1.bf16.msra.mxu0 %v3757
    %3812 = vmatprep.subr.bf16.mxu0 0
    %3813 = vmatpush1.bf16.msra.mxu0 %v3756
    %3814 = vmatprep.subr.bf16.mxu0 0
    %3815 = vmatpush1.bf16.msra.mxu0 %v3755
    %3816 = vmatprep.subr.bf16.mxu0 0
    %3817 = vmatpush1.bf16.msra.mxu0 %v3754
    %3818 = vmatprep.subr.bf16.mxu0 0
    %3819 = vmatpush2.bf16.msra.mxu0 %v3769
    %3820 = vmatprep.subr.bf16.mxu0 0
    %3821 = vmatpush2.bf16.msra.mxu0 %v3768
    %3822 = vmatprep.subr.bf16.mxu0 0
    %3823 = vmatpush2.bf16.msra.mxu0 %v3767
    %3824 = vmatprep.subr.bf16.mxu0 0
    %3825 = vmatpush2.bf16.msra.mxu0 %v3766
    %3826 = vmatprep.subr.bf16.mxu0 0
    %3827 = vmatpush2.bf16.msra.mxu0 %v3765
    %3828 = vmatprep.subr.bf16.mxu0 0
    %3829 = vmatpush2.bf16.msra.mxu0 %v3764
    %3830 = vmatprep.subr.bf16.mxu0 0
    %3831 = vmatpush2.bf16.msra.mxu0 %v3763
    %3832 = vmatprep.subr.bf16.mxu0 0
    %3833 = vmatpush2.bf16.msra.mxu0 %v3762
    %3834 = vmatprep.mubr.bf16.mxu0 %v3601
    %3835 = vmatmul.mubr.bf16.gmra.mxu0 %v3600
    %v3836 = vpop.f32.mrf.mxu0
    %v3837 = vadd.f32 %v3656, %v3836
    %v3838 = vpop.f32.mrf.mxu0
    %v3839 = vpop.f32.mrf.mxu0
    %v3840 = vpop.f32.mrf.mxu0
    %3841 = vdwg.mxu0
    %3842 = vmatprep.subr.bf16.mxu0 0
    %3843 = vmatpush1.bf16.msra.mxu0 %v3777
    %3844 = vmatprep.subr.bf16.mxu0 0
    %3845 = vmatpush1.bf16.msra.mxu0 %v3776
    %3846 = vmatprep.subr.bf16.mxu0 0
    %3847 = vmatpush1.bf16.msra.mxu0 %v3775
    %3848 = vmatprep.subr.bf16.mxu0 0
    %3849 = vmatpush1.bf16.msra.mxu0 %v3774
    %3850 = vmatprep.subr.bf16.mxu0 0
    %3851 = vmatpush1.bf16.msra.mxu0 %v3773
    %3852 = vmatprep.subr.bf16.mxu0 0
    %3853 = vmatpush1.bf16.msra.mxu0 %v3772
    %3854 = vmatprep.subr.bf16.mxu0 0
    %3855 = vmatpush1.bf16.msra.mxu0 %v3771
    %3856 = vmatprep.subr.bf16.mxu0 0
    %3857 = vmatpush1.bf16.msra.mxu0 %v3770
    %3858 = vmatprep.subr.bf16.mxu0 0
    %3859 = vmatpush2.bf16.msra.mxu0 0
    %3860 = vmatprep.subr.bf16.mxu0 0
    %3861 = vmatpush2.bf16.msra.mxu0 0
    %3862 = vmatprep.subr.bf16.mxu0 0
    %3863 = vmatpush2.bf16.msra.mxu0 0
    %3864 = vmatprep.subr.bf16.mxu0 0
    %3865 = vmatpush2.bf16.msra.mxu0 0
    %3866 = vmatprep.subr.bf16.mxu0 0
    %3867 = vmatpush2.bf16.msra.mxu0 0
    %3868 = vmatprep.subr.bf16.mxu0 0
    %3869 = vmatpush2.bf16.msra.mxu0 0
    %3870 = vmatprep.subr.bf16.mxu0 0
    %3871 = vmatpush2.bf16.msra.mxu0 0
    %3872 = vmatprep.subr.bf16.mxu0 0
    %3873 = vmatpush2.bf16.msra.mxu0 0
    %3874 = vmatprep.mubr.bf16.mxu0 0
    %3875 = vmatmul.mubr.bf16.gmra.mxu0 %v3602
    %v3876 = vpop.f32.mrf.mxu0
    %v3877 = vadd.f32 %v3837, %v3876
    %v3878 = vpop.f32.mrf.mxu0
    %v3879 = vpop.f32.mrf.mxu0
    %v3880 = vpop.f32.mrf.mxu0
    %3881 = vdwg.mxu0
    %v3882 = vmul.f32 %v3877, 0.5
    %v3883 = vtanh.pop %v3882
    %v3884 = vmul.f32 %v3883, 0.5
    %v3885 = vadd.f32 %v3884, 0.5
    %v3886 = vmul.f32 %v3877, %v3885
    %v3887 = vpack.c.bf16 %v3886, %v3886
    %v3888 = vld [vmem:[%s5] sm:$0xf]
    %v3889 = vld [vmem:[%s5 + $0x4] sm:$0xf]
    %v3890 = vld [vmem:[%s5 + $0x8] sm:$0xf]
    %v3891 = vld [vmem:[%s5 + $0xc] sm:$0xf]
    %v3892 = vld [vmem:[%s5 + $0x10] sm:$0xf]
    %v3893 = vld [vmem:[%s5 + $0x14] sm:$0xf]
    %v3894 = vld [vmem:[%s5 + $0x18] sm:$0xf]
    %v3895 = vld [vmem:[%s5 + $0x1c] sm:$0xf]
    %v3896 = vld [vmem:[%s5 + $0x20] sm:$0xf]
    %v3897 = vld [vmem:[%s5 + $0x24] sm:$0xf]
    %v3898 = vld [vmem:[%s5 + $0x28] sm:$0xf]
    %v3899 = vld [vmem:[%s5 + $0x2c] sm:$0xf]
    %v3900 = vld [vmem:[%s5 + $0x30] sm:$0xf]
    %v3901 = vld [vmem:[%s5 + $0x34] sm:$0xf]
    %v3902 = vld [vmem:[%s5 + $0x38] sm:$0xf]
    %v3903 = vld [vmem:[%s5 + $0x3c] sm:$0xf]
    %v3904 = vld [vmem:[%s10] sm:$0x1]
    %v3906 = vlaneseq
    %v3907 = vshrl.u32 %v3906, 7
    %v3908 = vsub.s32 0, %v3907
    %v3909 = vrot.slane %v3904, %v3908
    %v3927 = vunpack.c.l.b16 %v3888
    %v3928 = vunpack.c.l.b16 %v3889
    %v3929 = vunpack.c.l.b16 %v3890
    %v3930 = vunpack.c.l.b16 %v3891
    %v3931 = vunpack.c.l.b16 %v3892
    %v3932 = vunpack.c.l.b16 %v3893
    %v3933 = vunpack.c.l.b16 %v3894
    %v3934 = vunpack.c.l.b16 %v3895
    %v3935 = vunpack.c.l.b16 %v3896
    %v3936 = vunpack.c.l.b16 %v3897
    %v3937 = vunpack.c.l.b16 %v3898
    %v3938 = vunpack.c.l.b16 %v3899
    %v3939 = vunpack.c.l.b16 %v3900
    %v3940 = vunpack.c.l.b16 %v3901
    %v3941 = vunpack.c.l.b16 %v3902
    %v3942 = vunpack.c.l.b16 %v3903
    %v3943 = vpack.c.b16 %v3928, %v3927
    %v3944 = vpack.c.b16 %v3930, %v3929
    %v3945 = vpack.c.b16 %v3932, %v3931
    %v3946 = vpack.c.b16 %v3934, %v3933
    %v3947 = vpack.c.b16 %v3936, %v3935
    %v3948 = vpack.c.b16 %v3938, %v3937
    %v3949 = vpack.c.b16 %v3940, %v3939
    %v3950 = vpack.c.b16 %v3942, %v3941
    %3959 = vmatprep.subr.bf16.mxu0 0
    %3960 = vmatpush1.bf16.msra.mxu0 %v3950
    %3961 = vmatprep.subr.bf16.mxu0 0
    %3962 = vmatpush1.bf16.msra.mxu0 %v3949
    %3963 = vmatprep.subr.bf16.mxu0 0
    %3964 = vmatpush1.bf16.msra.mxu0 %v3948
    %3965 = vmatprep.subr.bf16.mxu0 0
    %3966 = vmatpush1.bf16.msra.mxu0 %v3947
    %3967 = vmatprep.subr.bf16.mxu0 0
    %3968 = vmatpush1.bf16.msra.mxu0 %v3946
    %3969 = vmatprep.subr.bf16.mxu0 0
    %3970 = vmatpush1.bf16.msra.mxu0 %v3945
    %3971 = vmatprep.subr.bf16.mxu0 0
    %3972 = vmatpush1.bf16.msra.mxu0 %v3944
    %3973 = vmatprep.subr.bf16.mxu0 0
    %3974 = vmatpush1.bf16.msra.mxu0 %v3943
    %3975 = vmatprep.subr.bf16.mxu0 0
    %3976 = vmatpush2.bf16.msra.mxu0 0
    %3977 = vmatprep.subr.bf16.mxu0 0
    %3978 = vmatpush2.bf16.msra.mxu0 0
    %3979 = vmatprep.subr.bf16.mxu0 0
    %3980 = vmatpush2.bf16.msra.mxu0 0
    %3981 = vmatprep.subr.bf16.mxu0 0
    %3982 = vmatpush2.bf16.msra.mxu0 0
    %3983 = vmatprep.subr.bf16.mxu0 0
    %3984 = vmatpush2.bf16.msra.mxu0 0
    %3985 = vmatprep.subr.bf16.mxu0 0
    %3986 = vmatpush2.bf16.msra.mxu0 0
    %3987 = vmatprep.subr.bf16.mxu0 0
    %3988 = vmatpush2.bf16.msra.mxu0 0
    %3989 = vmatprep.subr.bf16.mxu0 0
    %3990 = vmatpush2.bf16.msra.mxu0 0
    %3991 = vmatprep.mubr.bf16.mxu0 0
    %3992 = vmatmul.mubr.bf16.gmra.mxu0 %v3887
    %v3993 = vpop.f32.mrf.mxu0
    %v3994 = vadd.f32 %v3909, %v3993
    %v3995 = vpop.f32.mrf.mxu0
    %v3996 = vpop.f32.mrf.mxu0
    %v3997 = vpop.f32.mrf.mxu0
    %3998 = vdwg.mxu0
    %v3999 = vmul.f32 %v3994, 0.5
    %v4000 = vtanh.pop %v3999
    %v4001 = vmul.f32 %v4000, 0.5
    %v4002 = vadd.f32 %v4001, 0.5
    %v4003 = vmul.f32 %v3994, %v4002
    %v4004 = vpack.c.bf16 %v4003, %v4003
    %4005 = vst [vmem:[%s11] sm:$0xf] %v4004
    // Predicated region
    $region62: #{_fused_forward.1} parent=1 // pred_check
      _
    $region63: #{_fused_forward.1} parent=1 // pred_check_branch
      %4007 = sbr.rel (0) target = $region65
    $region64: #{_fused_forward.1} parent=1 // pred_region
      _
    $region65: #{_fused_forward.1} parent=1 // pred_fallthru
      _
    // Predicated region
    $region66: #{_fused_forward.1} parent=1 // pred_check
      _
    $region67: #{_fused_forward.1} parent=1 // pred_check_branch
      %4009 = sbr.rel (0) target = $region69
    $region68: #{_fused_forward.1} parent=1 // pred_region
      _
    $region69: #{_fused_forward.1} parent=1 // pred_fallthru
      _
    %4010 = vsyncpa [#allocation3], 1
    %4011 = vsyncpa [#allocation5], 1
    %4012 = vsyncpa [#allocation8], 1

// kernel: _fused_forward.1
$region0: #{_fused_forward.1}
  #allocation0 [shape = 'u32[]', space=smem, size = 0x4, offset = 0x4, fixed_abs, tag = 'smem constant byte address 0x4 - core index']
  #allocation1 [shape = 'u32[144,128]{1,0:T(1,128)}', space=vmem, size = 0x12000, scoped, tag = 'internal scratch']
  %s0 = inlined_call_operand.vmem [shape: bf16[8,256], index: 0, kind: input, shape index: {}]
  %s1 = inlined_call_operand.hbm [shape: bf16[256,896], index: 1, kind: input, shape index: {}]
  %s2 = inlined_call_operand.hbm [shape: bf16[896,512], index: 2, kind: input, shape index: {}]
  %s3 = inlined_call_operand.hbm [shape: bf16[512,384], index: 3, kind: input, shape index: {}]
  %s4 = inlined_call_operand.hbm [shape: bf16[384,128], index: 4, kind: input, shape index: {}]
  %s5 = inlined_call_operand.vmem [shape: bf16[128,128], index: 5, kind: input, shape index: {}]
  %s6 = inlined_call_operand.vmem [shape: f32[1,896], index: 6, kind: input, shape index: {}]
  %s7 = inlined_call_operand.vmem [shape: f32[1,512], index: 7, kind: input, shape index: {}]
  %s8 = inlined_call_operand.vmem [shape: f32[1,384], index: 8, kind: input, shape index: {}]
  %s9 = inlined_call_operand.vmem [shape: f32[1,128], index: 9, kind: input, shape index: {}]
  %s10 = inlined_call_operand.vmem [shape: f32[1,128], index: 10, kind: input, shape index: {}]
  %s11 = inlined_call_operand.vmem [shape: bf16[8,128], index: 11, kind: output, shape index: {}]
  %s12 = sld [smem:[#allocation0]]
  $region70: #{_fused_forward.1} parent=0
    _
  %s14 = ssub.s32 1, %s12
  %s15 = scalar_select 0, %s14, %s12
  $region1: #{_fused_forward.1} parent=0
    #allocation2 [shape = 'u8[458752]{0}', space=vmem, size = 0x70000, scoped, tag = 'input window, operand 1, single buffered']
    #allocation3 [shape = 's32[1]{0}', space=sflag, size = 0x4, scoped, tag = 'scoped memory for _fused_forward.1']
    #allocation4 [shape = 'u8[917504]{0}', space=vmem, size = 0xe0000, scoped, tag = 'input window, operand 2, single buffered']
    #allocation5 [shape = 's32[1]{0}', space=sflag, size = 0x4, scoped, tag = 'scoped memory for _fused_forward.1']
    #allocation6 [shape = 'u8[393216]{0}', space=vmem, size = 0x60000, scoped, tag = 'input window, operand 3, single buffered']
    #allocation7 [shape = 'u8[98304]{0}', space=vmem, size = 0x18000, scoped, tag = 'input window, operand 4, single buffered']
    #allocation8 [shape = 's32[1]{0}', space=sflag, size = 0x4, scoped, tag = 'scoped memory for _fused_forward.1']
    %16 = vsyncpa [#allocation3], 0
    %17 = vsyncpa [#allocation5], 0
    %18 = vsyncpa [#allocation8], 0
    // Predicated region
    $region2: #{_fused_forward.1} parent=1 // pred_check
      _
    $region3: #{_fused_forward.1} parent=1 // pred_check_branch
      %20 = sbr.rel (0) target = $region5
    $region4: #{_fused_forward.1} parent=1 // pred_region
      _
    $region5: #{_fused_forward.1} parent=1 // pred_fallthru
      _
    // Predicated region
    $region6: #{_fused_forward.1} parent=1 // pred_check
      _
    $region7: #{_fused_forward.1} parent=1 // pred_check_branch
      %22 = sbr.rel (0) target = $region9
    $region8: #{_fused_forward.1} parent=1 // pred_region
      %s24 = ssub.s32 14336, 14336
      %25 = vsyncadd [#allocation3], %s24
      %s26 = sshll.u32 [#allocation2], 4
      %s27 = int_to_ptr.vmem [resolvable:$true] %s26
      %32 = dma.hbm_to_vmem [thread:$0]  %s1, 14336, %s27, [#allocation3], 448, 448, 28
    $region9: #{_fused_forward.1} parent=1 // pred_fallthru
      _
    // Predicated region
    $region10: #{_fused_forward.1} parent=1 // pred_check
      _
    $region11: #{_fused_forward.1} parent=1 // pred_check_branch
      %34 = sbr.rel (0) target = $region13
    $region12: #{_fused_forward.1} parent=1 // pred_region
      %s36 = ssub.s32 28672, 28672
      %37 = vsyncadd [#allocation5], %s36
      %s38 = sshll.u32 [#allocation4], 4
      %s39 = int_to_ptr.vmem [resolvable:$true] %s38
      %44 = dma.hbm_to_vmem [thread:$0]  %s2, 28672, %s39, [#allocation5], 256, 256, 16
    $region13: #{_fused_forward.1} parent=1 // pred_fallthru
      _
    // Predicated region
    $region14: #{_fused_forward.1} parent=1 // pred_check
      _
    $region15: #{_fused_forward.1} parent=1 // pred_check_branch
      %46 = sbr.rel (0) target = $region17
    $region16: #{_fused_forward.1} parent=1 // pred_region
      %s48 = ssub.s32 12288, 12288
      %49 = vsyncadd [#allocation5], %s48
      %s50 = sshll.u32 [#allocation6], 4
      %s51 = int_to_ptr.vmem [resolvable:$true] %s50
      %56 = dma.hbm_to_vmem [thread:$0]  %s3, 12288, %s51, [#allocation5], 192, 192, 12
    $region17: #{_fused_forward.1} parent=1 // pred_fallthru
      _
    // Predicated region
    $region18: #{_fused_forward.1} parent=1 // pred_check
      _
    $region19: #{_fused_forward.1} parent=1 // pred_check_branch
      %58 = sbr.rel (0) target = $region21
    $region20: #{_fused_forward.1} parent=1 // pred_region
      %s60 = ssub.s32 3072, 3072
      %61 = vsyncadd [#allocation8], %s60
      %s62 = sshll.u32 [#allocation7], 4
      %s63 = int_to_ptr.vmem [resolvable:$true] %s62
      %68 = dma.hbm_to_vmem [thread:$0]  %s4, 3072, %s63, [#allocation8], 64, 64, 4
    $region21: #{_fused_forward.1} parent=1 // pred_fallthru
      _
    // Predicated region
    $region22: #{_fused_forward.1} parent=1 // pred_check
      _
    $region23: #{_fused_forward.1} parent=1 // pred_check_branch
      %70 = sbr.rel (0) target = $region25
    $region24: #{_fused_forward.1} parent=1 // pred_region
      _
    $region25: #{_fused_forward.1} parent=1 // pred_fallthru
      _
    // Predicated region
    $region26: #{_fused_forward.1} parent=1 // pred_check
      _
    $region27: #{_fused_forward.1} parent=1 // pred_check_branch
      %72 = sbr.rel (0) target = $region29
    $region28: #{_fused_forward.1} parent=1 // pred_region
      _
    $region29: #{_fused_forward.1} parent=1 // pred_fallthru
      _
    // Predicated region
    $region30: #{_fused_forward.1} parent=1 // pred_check
      _
    $region31: #{_fused_forward.1} parent=1 // pred_check_branch
      %74 = sbr.rel (0) target = $region33
    $region32: #{_fused_forward.1} parent=1 // pred_region
      _
    $region33: #{_fused_forward.1} parent=1 // pred_fallthru
      _
    // Predicated region
    $region34: #{_fused_forward.1} parent=1 // pred_check
      _
    $region35: #{_fused_forward.1} parent=1 // pred_check_branch
      %76 = sbr.rel (0) target = $region37
    $region36: #{_fused_forward.1} parent=1 // pred_region
      _
    $region37: #{_fused_forward.1} parent=1 // pred_fallthru
      _
    // Predicated region
    $region38: #{_fused_forward.1} parent=1 // pred_check
      _
    $region39: #{_fused_forward.1} parent=1 // pred_check_branch
      %78 = sbr.rel (0) target = $region41
    $region40: #{_fused_forward.1} parent=1 // pred_region
      _
    $region41: #{_fused_forward.1} parent=1 // pred_fallthru
      _
    // Predicated region
    $region42: #{_fused_forward.1} parent=1 // pred_check
      _
    $region43: #{_fused_forward.1} parent=1 // pred_check_branch
      %80 = sbr.rel (0) target = $region45
    $region44: #{_fused_forward.1} parent=1 // pred_region
      _
    $region45: #{_fused_forward.1} parent=1 // pred_fallthru
      _
    // Predicated region
    $region46: #{_fused_forward.1} parent=1 // pred_check
      _
    $region47: #{_fused_forward.1} parent=1 // pred_check_branch
      %82 = sbr.rel (0) target = $region49
    $region48: #{_fused_forward.1} parent=1 // pred_region
      %83 = dma.done [#allocation3], 14336
    $region49: #{_fused_forward.1} parent=1 // pred_fallthru
      _
    // Predicated region
    $region50: #{_fused_forward.1} parent=1 // pred_check
      _
    $region51: #{_fused_forward.1} parent=1 // pred_check_branch
      %85 = sbr.rel (0) target = $region53
    $region52: #{_fused_forward.1} parent=1 // pred_region
      %86 = dma.done [#allocation5], 28672
    $region53: #{_fused_forward.1} parent=1 // pred_fallthru
      _
    // Predicated region
    $region54: #{_fused_forward.1} parent=1 // pred_check
      _
    $region55: #{_fused_forward.1} parent=1 // pred_check_branch
      %88 = sbr.rel (0) target = $region57
    $region56: #{_fused_forward.1} parent=1 // pred_region
      %89 = dma.done [#allocation5], 12288
    $region57: #{_fused_forward.1} parent=1 // pred_fallthru
      _
    // Predicated region
    $region58: #{_fused_forward.1} parent=1 // pred_check
      _
    $region59: #{_fused_forward.1} parent=1 // pred_check_branch
      %91 = sbr.rel (0) target = $region61
    $region60: #{_fused_forward.1} parent=1 // pred_region
      %92 = dma.done [#allocation8], 3072
    $region61: #{_fused_forward.1} parent=1 // pred_fallthru
      _
    %v94 = vld [vmem:[%s0] sm:$0xff]
    %v95 = vld [vmem:[#allocation2] sm:$0xff]
    %v96 = vld [vmem:[#allocation2 + $0x8] sm:$0xff]
    %v97 = vld [vmem:[#allocation2 + $0x10] sm:$0xff]
    %v98 = vld [vmem:[#allocation2 + $0x18] sm:$0xf]
    %v99 = vld [vmem:[#allocation2 + $0x1c] sm:$0xff]
    %v100 = vld [vmem:[#allocation2 + $0x24] sm:$0xff]
    %v101 = vld [vmem:[#allocation2 + $0x2c] sm:$0xff]
    %v102 = vld [vmem:[#allocation2 + $0x34] sm:$0xf]
    %v103 = vld [vmem:[#allocation2 + $0x38] sm:$0xff]
    %v104 = vld [vmem:[#allocation2 + $0x40] sm:$0xff]
    %v105 = vld [vmem:[#allocation2 + $0x48] sm:$0xff]
    %v106 = vld [vmem:[#allocation2 + $0x50] sm:$0xf]
    %v107 = vld [vmem:[#allocation2 + $0x54] sm:$0xff]
    %v108 = vld [vmem:[#allocation2 + $0x5c] sm:$0xff]
    %v109 = vld [vmem:[#allocation2 + $0x64] sm:$0xff]
    %v110 = vld [vmem:[#allocation2 + $0x6c] sm:$0xf]
    %v111 = vld [vmem:[#allocation2 + $0x70] sm:$0xff]
    %v112 = vld [vmem:[#allocation2 + $0x78] sm:$0xff]
    %v113 = vld [vmem:[#allocation2 + $0x80] sm:$0xff]
    %v114 = vld [vmem:[#allocation2 + $0x88] sm:$0xf]
    %v115 = vld [vmem:[#allocation2 + $0x8c] sm:$0xff]
    %v116 = vld [vmem:[#allocation2 + $0x94] sm:$0xff]
    %v117 = vld [vmem:[#allocation2 + $0x9c] sm:$0xff]
    %v118 = vld [vmem:[#allocation2 + $0xa4] sm:$0xf]
    %v119 = vld [vmem:[#allocation2 + $0xa8] sm:$0xff]
    %v120 = vld [vmem:[#allocation2 + $0xb0] sm:$0xff]
    %v121 = vld [vmem:[#allocation2 + $0xb8] sm:$0xff]
    %v122 = vld [vmem:[#allocation2 + $0xc0] sm:$0xf]
    %v123 = vld [vmem:[#allocation2 + $0xc4] sm:$0xff]
    %v124 = vld [vmem:[#allocation2 + $0xcc] sm:$0xff]
    %v125 = vld [vmem:[#allocation2 + $0xd4] sm:$0xff]
    %v126 = vld [vmem:[#allocation2 + $0xdc] sm:$0xf]
    %v127 = vld [vmem:[#allocation2 + $0xe0] sm:$0xff]
    %v128 = vld [vmem:[#allocation2 + $0xe8] sm:$0xff]
    %v129 = vld [vmem:[#allocation2 + $0xf0] sm:$0xff]
    %v130 = vld [vmem:[#allocation2 + $0xf8] sm:$0xf]
    %v131 = vld [vmem:[#allocation2 + $0xfc] sm:$0xff]
    %v132 = vld [vmem:[#allocation2 + $0x104] sm:$0xff]
    %v133 = vld [vmem:[#allocation2 + $0x10c] sm:$0xff]
    %v134 = vld [vmem:[#allocation2 + $0x114] sm:$0xf]
    %v135 = vld [vmem:[#allocation2 + $0x118] sm:$0xff]
    %v136 = vld [vmem:[#allocation2 + $0x120] sm:$0xff]
    %v137 = vld [vmem:[#allocation2 + $0x128] sm:$0xff]
    %v138 = vld [vmem:[#allocation2 + $0x130] sm:$0xf]
    %v139 = vld [vmem:[#allocation2 + $0x134] sm:$0xff]
    %v140 = vld [vmem:[#allocation2 + $0x13c] sm:$0xff]
    %v141 = vld [vmem:[#allocation2 + $0x144] sm:$0xff]
    %v142 = vld [vmem:[#allocation2 + $0x14c] sm:$0xf]
    %v143 = vld [vmem:[#allocation2 + $0x150] sm:$0xff]
    %v144 = vld [vmem:[#allocation2 + $0x158] sm:$0xff]
    %v145 = vld [vmem:[#allocation2 + $0x160] sm:$0xff]
    %v146 = vld [vmem:[#allocation2 + $0x168] sm:$0xf]
    %v147 = vld [vmem:[#allocation2 + $0x16c] sm:$0xff]
    %v148 = vld [vmem:[#allocation2 + $0x174] sm:$0xff]
    %v149 = vld [vmem:[#allocation2 + $0x17c] sm:$0xff]
    %v150 = vld [vmem:[#allocation2 + $0x184] sm:$0xf]
    %v151 = vld [vmem:[#allocation2 + $0x188] sm:$0xff]
    %v152 = vld [vmem:[#allocation2 + $0x190] sm:$0xff]
    %v153 = vld [vmem:[#allocation2 + $0x198] sm:$0xff]
    %v154 = vld [vmem:[#allocation2 + $0x1a0] sm:$0xf]
    %v155 = vld [vmem:[#allocation2 + $0x1a4] sm:$0xff]
    %v156 = vld [vmem:[#allocation2 + $0x1ac] sm:$0xff]
    %v157 = vld [vmem:[#allocation2 + $0x1b4] sm:$0xff]
    %v158 = vld [vmem:[#allocation2 + $0x1bc] sm:$0xf]
    %v159 = vld [vmem:[#allocation2 + $0x1c0] sm:$0xff]
    %v160 = vld [vmem:[#allocation2 + $0x1c8] sm:$0xff]
    %v161 = vld [vmem:[#allocation2 + $0x1d0] sm:$0xff]
    %v162 = vld [vmem:[#allocation2 + $0x1d8] sm:$0xf]
    %v163 = vld [vmem:[#allocation2 + $0x1dc] sm:$0xff]
    %v164 = vld [vmem:[#allocation2 + $0x1e4] sm:$0xff]
    %v165 = vld [vmem:[#allocation2 + $0x1ec] sm:$0xff]
    %v166 = vld [vmem:[#allocation2 + $0x1f4] sm:$0xf]
    %v167 = vld [vmem:[#allocation2 + $0x1f8] sm:$0xff]
    %v168 = vld [vmem:[#allocation2 + $0x200] sm:$0xff]
    %v169 = vld [vmem:[#allocation2 + $0x208] sm:$0xff]
    %v170 = vld [vmem:[#allocation2 + $0x210] sm:$0xf]
    %v171 = vld [vmem:[#allocation2 + $0x214] sm:$0xff]
    %v172 = vld [vmem:[#allocation2 + $0x21c] sm:$0xff]
    %v173 = vld [vmem:[#allocation2 + $0x224] sm:$0xff]
    %v174 = vld [vmem:[#allocation2 + $0x22c] sm:$0xf]
    %v175 = vld [vmem:[#allocation2 + $0x230] sm:$0xff]
    %v176 = vld [vmem:[#allocation2 + $0x238] sm:$0xff]
    %v177 = vld [vmem:[#allocation2 + $0x240] sm:$0xff]
    %v178 = vld [vmem:[#allocation2 + $0x248] sm:$0xf]
    %v179 = vld [vmem:[#allocation2 + $0x24c] sm:$0xff]
    %v180 = vld [vmem:[#allocation2 + $0x254] sm:$0xff]
    %v181 = vld [vmem:[#allocation2 + $0x25c] sm:$0xff]
    %v182 = vld [vmem:[#allocation2 + $0x264] sm:$0xf]
    %v183 = vld [vmem:[#allocation2 + $0x268] sm:$0xff]
    %v184 = vld [vmem:[#allocation2 + $0x270] sm:$0xff]
    %v185 = vld [vmem:[#allocation2 + $0x278] sm:$0xff]
    %v186 = vld [vmem:[#allocation2 + $0x280] sm:$0xf]
    %v187 = vld [vmem:[#allocation2 + $0x284] sm:$0xff]
    %v188 = vld [vmem:[#allocation2 + $0x28c] sm:$0xff]
    %v189 = vld [vmem:[#allocation2 + $0x294] sm:$0xff]
    %v190 = vld [vmem:[#allocation2 + $0x29c] sm:$0xf]
    %v191 = vld [vmem:[#allocation2 + $0x2a0] sm:$0xff]
    %v192 = vld [vmem:[#allocation2 + $0x2a8] sm:$0xff]
    %v193 = vld [vmem:[#allocation2 + $0x2b0] sm:$0xff]
    %v194 = vld [vmem:[#allocation2 + $0x2b8] sm:$0xf]
    %v195 = vld [vmem:[#allocation2 + $0x2bc] sm:$0xff]
    %v196 = vld [vmem:[#allocation2 + $0x2c4] sm:$0xff]
    %v197 = vld [vmem:[#allocation2 + $0x2cc] sm:$0xff]
    %v198 = vld [vmem:[#allocation2 + $0x2d4] sm:$0xf]
    %v199 = vld [vmem:[#allocation2 + $0x2d8] sm:$0xff]
    %v200 = vld [vmem:[#allocation2 + $0x2e0] sm:$0xff]
    %v201 = vld [vmem:[#allocation2 + $0x2e8] sm:$0xff]
    %v202 = vld [vmem:[#allocation2 + $0x2f0] sm:$0xf]
    %v203 = vld [vmem:[#allocation2 + $0x2f4] sm:$0xff]
    %v204 = vld [vmem:[#allocation2 + $0x2fc] sm:$0xff]
    %v205 = vld [vmem:[#allocation2 + $0x304] sm:$0xff]
    %v206 = vld [vmem:[#allocation2 + $0x30c] sm:$0xf]
    %v207 = vld [vmem:[#allocation2 + $0x310] sm:$0xff]
    %v208 = vld [vmem:[#allocation2 + $0x318] sm:$0xff]
    %v209 = vld [vmem:[#allocation2 + $0x320] sm:$0xff]
    %v210 = vld [vmem:[#allocation2 + $0x328] sm:$0xf]
    %v211 = vld [vmem:[#allocation2 + $0x32c] sm:$0xff]
    %v212 = vld [vmem:[#allocation2 + $0x334] sm:$0xff]
    %v213 = vld [vmem:[#allocation2 + $0x33c] sm:$0xff]
    %v214 = vld [vmem:[#allocation2 + $0x344] sm:$0xf]
    %v215 = vld [vmem:[#allocation2 + $0x348] sm:$0xff]
    %v216 = vld [vmem:[#allocation2 + $0x350] sm:$0xff]
    %v217 = vld [vmem:[#allocation2 + $0x358] sm:$0xff]
    %v218 = vld [vmem:[#allocation2 + $0x360] sm:$0xf]
    %v219 = vld [vmem:[#allocation2 + $0x364] sm:$0xff]
    %v220 = vld [vmem:[#allocation2 + $0x36c] sm:$0xff]
    %v221 = vld [vmem:[#allocation2 + $0x374] sm:$0xff]
    %v222 = vld [vmem:[#allocation2 + $0x37c] sm:$0xf]
    %v223 = vld [vmem:[%s6] sm:$0xff]
    %v225 = vlaneseq
    %v226 = vshrl.u32 %v225, 7
    %v227 = vsub.s32 0, %v226
    %v228 = vrot.slane %v223, %v227
    %v229 = vlaneseq
    %v230 = vshrl.u32 %v229, 7
    %v231 = vsub.s32 1, %v230
    %v232 = vrot.slane %v223, %v231
    %v233 = vlaneseq
    %v234 = vshrl.u32 %v233, 7
    %v235 = vsub.s32 2, %v234
    %v236 = vrot.slane %v223, %v235
    %v237 = vlaneseq
    %v238 = vshrl.u32 %v237, 7
    %v239 = vsub.s32 3, %v238
    %v240 = vrot.slane %v223, %v239
    %v241 = vlaneseq
    %v242 = vshrl.u32 %v241, 7
    %v243 = vsub.s32 4, %v242
    %v244 = vrot.slane %v223, %v243
    %v245 = vlaneseq
    %v246 = vshrl.u32 %v245, 7
    %v247 = vsub.s32 5, %v246
    %v248 = vrot.slane %v223, %v247
    %v249 = vlaneseq
    %v250 = vshrl.u32 %v249, 7
    %v251 = vsub.s32 6, %v250
    %v252 = vrot.slane %v223, %v251
    %v261 = vunpack.c.l.b16 %v94
    %v262 = vunpack.c.h.b16 %v94
    %v263 = vpack.c.b16 %v261, %v261
    %v264 = vpack.c.b16 %v262, %v262
    %v395 = vunpack.c.l.b16 %v95
    %v396 = vunpack.c.h.b16 %v95
    %v397 = vunpack.c.l.b16 %v96
    %v398 = vunpack.c.h.b16 %v96
    %v399 = vunpack.c.l.b16 %v97
    %v400 = vunpack.c.h.b16 %v97
    %v401 = vunpack.c.l.b16 %v98
    %v402 = vunpack.c.l.b16 %v99
    %v403 = vunpack.c.h.b16 %v99
    %v404 = vunpack.c.l.b16 %v100
    %v405 = vunpack.c.h.b16 %v100
    %v406 = vunpack.c.l.b16 %v101
    %v407 = vunpack.c.h.b16 %v101
    %v408 = vunpack.c.l.b16 %v102
    %v409 = vunpack.c.l.b16 %v103
    %v410 = vunpack.c.h.b16 %v103
    %v411 = vunpack.c.l.b16 %v104
    %v412 = vunpack.c.h.b16 %v104
    %v413 = vunpack.c.l.b16 %v105
    %v414 = vunpack.c.h.b16 %v105
    %v415 = vunpack.c.l.b16 %v106
    %v416 = vunpack.c.l.b16 %v107
    %v417 = vunpack.c.h.b16 %v107
    %v418 = vunpack.c.l.b16 %v108
    %v419 = vunpack.c.h.b16 %v108
    %v420 = vunpack.c.l.b16 %v109
    %v421 = vunpack.c.h.b16 %v109
    %v422 = vunpack.c.l.b16 %v110
    %v423 = vunpack.c.l.b16 %v111
    %v424 = vunpack.c.h.b16 %v111
    %v425 = vunpack.c.l.b16 %v112
    %v426 = vunpack.c.h.b16 %v112
    %v427 = vunpack.c.l.b16 %v113
    %v428 = vunpack.c.h.b16 %v113
    %v429 = vunpack.c.l.b16 %v114
    %v430 = vunpack.c.l.b16 %v115
    %v431 = vunpack.c.h.b16 %v115
    %v432 = vunpack.c.l.b16 %v116
    %v433 = vunpack.c.h.b16 %v116
    %v434 = vunpack.c.l.b16 %v117
    %v435 = vunpack.c.h.b16 %v117
    %v436 = vunpack.c.l.b16 %v118
    %v437 = vunpack.c.l.b16 %v119
    %v438 = vunpack.c.h.b16 %v119
    %v439 = vunpack.c.l.b16 %v120
    %v440 = vunpack.c.h.b16 %v120
    %v441 = vunpack.c.l.b16 %v121
    %v442 = vunpack.c.h.b16 %v121
    %v443 = vunpack.c.l.b16 %v122
    %v444 = vunpack.c.l.b16 %v123
    %v445 = vunpack.c.h.b16 %v123
    %v446 = vunpack.c.l.b16 %v124
    %v447 = vunpack.c.h.b16 %v124
    %v448 = vunpack.c.l.b16 %v125
    %v449 = vunpack.c.h.b16 %v125
    %v450 = vunpack.c.l.b16 %v126
    %v451 = vunpack.c.l.b16 %v127
    %v452 = vunpack.c.h.b16 %v127
    %v453 = vunpack.c.l.b16 %v128
    %v454 = vunpack.c.h.b16 %v128
    %v455 = vunpack.c.l.b16 %v129
    %v456 = vunpack.c.h.b16 %v129
    %v457 = vunpack.c.l.b16 %v130
    %v458 = vunpack.c.l.b16 %v131
    %v459 = vunpack.c.h.b16 %v131
    %v460 = vunpack.c.l.b16 %v132
    %v461 = vunpack.c.h.b16 %v132
    %v462 = vunpack.c.l.b16 %v133
    %v463 = vunpack.c.h.b16 %v133
    %v464 = vunpack.c.l.b16 %v134
    %v465 = vunpack.c.l.b16 %v135
    %v466 = vunpack.c.h.b16 %v135
    %v467 = vunpack.c.l.b16 %v136
    %v468 = vunpack.c.h.b16 %v136
    %v469 = vunpack.c.l.b16 %v137
    %v470 = vunpack.c.h.b16 %v137
    %v471 = vunpack.c.l.b16 %v138
    %v472 = vunpack.c.l.b16 %v139
    %v473 = vunpack.c.h.b16 %v139
    %v474 = vunpack.c.l.b16 %v140
    %v475 = vunpack.c.h.b16 %v140
    %v476 = vunpack.c.l.b16 %v141
    %v477 = vunpack.c.h.b16 %v141
    %v478 = vunpack.c.l.b16 %v142
    %v479 = vunpack.c.l.b16 %v143
    %v480 = vunpack.c.h.b16 %v143
    %v481 = vunpack.c.l.b16 %v144
    %v482 = vunpack.c.h.b16 %v144
    %v483 = vunpack.c.l.b16 %v145
    %v484 = vunpack.c.h.b16 %v145
    %v485 = vunpack.c.l.b16 %v146
    %v486 = vunpack.c.l.b16 %v147
    %v487 = vunpack.c.h.b16 %v147
    %v488 = vunpack.c.l.b16 %v148
    %v489 = vunpack.c.h.b16 %v148
    %v490 = vunpack.c.l.b16 %v149
    %v491 = vunpack.c.h.b16 %v149
    %v492 = vunpack.c.l.b16 %v150
    %v493 = vunpack.c.l.b16 %v151
    %v494 = vunpack.c.h.b16 %v151
    %v495 = vunpack.c.l.b16 %v152
    %v496 = vunpack.c.h.b16 %v152
    %v497 = vunpack.c.l.b16 %v153
    %v498 = vunpack.c.h.b16 %v153
    %v499 = vunpack.c.l.b16 %v154
    %v500 = vunpack.c.l.b16 %v155
    %v501 = vunpack.c.h.b16 %v155
    %v502 = vunpack.c.l.b16 %v156
    %v503 = vunpack.c.h.b16 %v156
    %v504 = vunpack.c.l.b16 %v157
    %v505 = vunpack.c.h.b16 %v157
    %v506 = vunpack.c.l.b16 %v158
    %v507 = vunpack.c.l.b16 %v159
    %v508 = vunpack.c.h.b16 %v159
    %v509 = vunpack.c.l.b16 %v160
    %v510 = vunpack.c.h.b16 %v160
    %v511 = vunpack.c.l.b16 %v161
    %v512 = vunpack.c.h.b16 %v161
    %v513 = vunpack.c.l.b16 %v162
    %v514 = vunpack.c.l.b16 %v163
    %v515 = vunpack.c.h.b16 %v163
    %v516 = vunpack.c.l.b16 %v164
    %v517 = vunpack.c.h.b16 %v164
    %v518 = vunpack.c.l.b16 %v165
    %v519 = vunpack.c.h.b16 %v165
    %v520 = vunpack.c.l.b16 %v166
    %v521 = vunpack.c.l.b16 %v167
    %v522 = vunpack.c.h.b16 %v167
    %v523 = vunpack.c.l.b16 %v168
    %v524 = vunpack.c.h.b16 %v168
    %v525 = vunpack.c.l.b16 %v169
    %v526 = vunpack.c.h.b16 %v169
    %v527 = vunpack.c.l.b16 %v170
    %v528 = vunpack.c.l.b16 %v171
    %v529 = vunpack.c.h.b16 %v171
    %v530 = vunpack.c.l.b16 %v172
    %v531 = vunpack.c.h.b16 %v172
    %v532 = vunpack.c.l.b16 %v173
    %v533 = vunpack.c.h.b16 %v173
    %v534 = vunpack.c.l.b16 %v174
    %v535 = vunpack.c.l.b16 %v175
    %v536 = vunpack.c.h.b16 %v175
    %v537 = vunpack.c.l.b16 %v176
    %v538 = vunpack.c.h.b16 %v176
    %v539 = vunpack.c.l.b16 %v177
    %v540 = vunpack.c.h.b16 %v177
    %v541 = vunpack.c.l.b16 %v178
    %v542 = vunpack.c.l.b16 %v179
    %v543 = vunpack.c.h.b16 %v179
    %v544 = vunpack.c.l.b16 %v180
    %v545 = vunpack.c.h.b16 %v180
    %v546 = vunpack.c.l.b16 %v181
    %v547 = vunpack.c.h.b16 %v181
    %v548 = vunpack.c.l.b16 %v182
    %v549 = vunpack.c.l.b16 %v183
    %v550 = vunpack.c.h.b16 %v183
    %v551 = vunpack.c.l.b16 %v184
    %v552 = vunpack.c.h.b16 %v184
    %v553 = vunpack.c.l.b16 %v185
    %v554 = vunpack.c.h.b16 %v185
    %v555 = vunpack.c.l.b16 %v186
    %v556 = vunpack.c.l.b16 %v187
    %v557 = vunpack.c.h.b16 %v187
    %v558 = vunpack.c.l.b16 %v188
    %v559 = vunpack.c.h.b16 %v188
    %v560 = vunpack.c.l.b16 %v189
    %v561 = vunpack.c.h.b16 %v189
    %v562 = vunpack.c.l.b16 %v190
    %v563 = vunpack.c.l.b16 %v191
    %v564 = vunpack.c.h.b16 %v191
    %v565 = vunpack.c.l.b16 %v192
    %v566 = vunpack.c.h.b16 %v192
    %v567 = vunpack.c.l.b16 %v193
    %v568 = vunpack.c.h.b16 %v193
    %v569 = vunpack.c.l.b16 %v194
    %v570 = vunpack.c.l.b16 %v195
    %v571 = vunpack.c.h.b16 %v195
    %v572 = vunpack.c.l.b16 %v196
    %v573 = vunpack.c.h.b16 %v196
    %v574 = vunpack.c.l.b16 %v197
    %v575 = vunpack.c.h.b16 %v197
    %v576 = vunpack.c.l.b16 %v198
    %v577 = vunpack.c.l.b16 %v199
    %v578 = vunpack.c.h.b16 %v199
    %v579 = vunpack.c.l.b16 %v200
    %v580 = vunpack.c.h.b16 %v200
    %v581 = vunpack.c.l.b16 %v201
    %v582 = vunpack.c.h.b16 %v201
    %v583 = vunpack.c.l.b16 %v202
    %v584 = vunpack.c.l.b16 %v203
    %v585 = vunpack.c.h.b16 %v203
    %v586 = vunpack.c.l.b16 %v204
    %v587 = vunpack.c.h.b16 %v204
    %v588 = vunpack.c.l.b16 %v205
    %v589 = vunpack.c.h.b16 %v205
    %v590 = vunpack.c.l.b16 %v206
    %v591 = vunpack.c.l.b16 %v207
    %v592 = vunpack.c.h.b16 %v207
    %v593 = vunpack.c.l.b16 %v208
    %v594 = vunpack.c.h.b16 %v208
    %v595 = vunpack.c.l.b16 %v209
    %v596 = vunpack.c.h.b16 %v209
    %v597 = vunpack.c.l.b16 %v210
    %v598 = vunpack.c.l.b16 %v211
    %v599 = vunpack.c.h.b16 %v211
    %v600 = vunpack.c.l.b16 %v212
    %v601 = vunpack.c.h.b16 %v212
    %v602 = vunpack.c.l.b16 %v213
    %v603 = vunpack.c.h.b16 %v213
    %v604 = vunpack.c.l.b16 %v214
    %v605 = vunpack.c.l.b16 %v215
    %v606 = vunpack.c.h.b16 %v215
    %v607 = vunpack.c.l.b16 %v216
    %v608 = vunpack.c.h.b16 %v216
    %v609 = vunpack.c.l.b16 %v217
    %v610 = vunpack.c.h.b16 %v217
    %v611 = vunpack.c.l.b16 %v218
    %v612 = vunpack.c.l.b16 %v219
    %v613 = vunpack.c.h.b16 %v219
    %v614 = vunpack.c.l.b16 %v220
    %v615 = vunpack.c.h.b16 %v220
    %v616 = vunpack.c.l.b16 %v221
    %v617 = vunpack.c.h.b16 %v221
    %v618 = vunpack.c.l.b16 %v222
    %v619 = vpack.c.b16 %v402, %v395
    %v620 = vpack.c.b16 %v403, %v396
    %v621 = vpack.c.b16 %v404, %v397
    %v622 = vpack.c.b16 %v405, %v398
    %v623 = vpack.c.b16 %v406, %v399
    %v624 = vpack.c.b16 %v407, %v400
    %v625 = vpack.c.b16 %v408, %v401
    %v626 = vpack.c.b16 %v416, %v409
    %v627 = vpack.c.b16 %v417, %v410
    %v628 = vpack.c.b16 %v418, %v411
    %v629 = vpack.c.b16 %v419, %v412
    %v630 = vpack.c.b16 %v420, %v413
    %v631 = vpack.c.b16 %v421, %v414
    %v632 = vpack.c.b16 %v422, %v415
    %v633 = vpack.c.b16 %v430, %v423
    %v634 = vpack.c.b16 %v431, %v424
    %v635 = vpack.c.b16 %v432, %v425
    %v636 = vpack.c.b16 %v433, %v426
    %v637 = vpack.c.b16 %v434, %v427
    %v638 = vpack.c.b16 %v435, %v428
    %v639 = vpack.c.b16 %v436, %v429
    %v640 = vpack.c.b16 %v444, %v437
    %v641 = vpack.c.b16 %v445, %v438
    %v642 = vpack.c.b16 %v446, %v439
    %v643 = vpack.c.b16 %v447, %v440
    %v644 = vpack.c.b16 %v448, %v441
    %v645 = vpack.c.b16 %v449, %v442
    %v646 = vpack.c.b16 %v450, %v443
    %v647 = vpack.c.b16 %v458, %v451
    %v648 = vpack.c.b16 %v459, %v452
    %v649 = vpack.c.b16 %v460, %v453
    %v650 = vpack.c.b16 %v461, %v454
    %v651 = vpack.c.b16 %v462, %v455
    %v652 = vpack.c.b16 %v463, %v456
    %v653 = vpack.c.b16 %v464, %v457
    %v654 = vpack.c.b16 %v472, %v465
    %v655 = vpack.c.b16 %v473, %v466
    %v656 = vpack.c.b16 %v474, %v467
    %v657 = vpack.c.b16 %v475, %v468
    %v658 = vpack.c.b16 %v476, %v469
    %v659 = vpack.c.b16 %v477, %v470
    %v660 = vpack.c.b16 %v478, %v471
    %v661 = vpack.c.b16 %v486, %v479
    %v662 = vpack.c.b16 %v487, %v480
    %v663 = vpack.c.b16 %v488, %v481
    %v664 = vpack.c.b16 %v489, %v482
    %v665 = vpack.c.b16 %v490, %v483
    %v666 = vpack.c.b16 %v491, %v484
    %v667 = vpack.c.b16 %v492, %v485
    %v668 = vpack.c.b16 %v500, %v493
    %v669 = vpack.c.b16 %v501, %v494
    %v670 = vpack.c.b16 %v502, %v495
    %v671 = vpack.c.b16 %v503, %v496
    %v672 = vpack.c.b16 %v504, %v497
    %v673 = vpack.c.b16 %v505, %v498
    %v674 = vpack.c.b16 %v506, %v499
    %v675 = vpack.c.b16 %v514, %v507
    %v676 = vpack.c.b16 %v515, %v508
    %v677 = vpack.c.b16 %v516, %v509
    %v678 = vpack.c.b16 %v517, %v510
    %v679 = vpack.c.b16 %v518, %v511
    %v680 = vpack.c.b16 %v519, %v512
    %v681 = vpack.c.b16 %v520, %v513
    %v682 = vpack.c.b16 %v528, %v521
    %v683 = vpack.c.b16 %v529, %v522
    %v684 = vpack.c.b16 %v530, %v523
    %v685 = vpack.c.b16 %v531, %v524
    %v686 = vpack.c.b16 %v532, %v525
    %v687 = vpack.c.b16 %v533, %v526
    %v688 = vpack.c.b16 %v534, %v527
    %v689 = vpack.c.b16 %v542, %v535
    %v690 = vpack.c.b16 %v543, %v536
    %v691 = vpack.c.b16 %v544, %v537
    %v692 = vpack.c.b16 %v545, %v538
    %v693 = vpack.c.b16 %v546, %v539
    %v694 = vpack.c.b16 %v547, %v540
    %v695 = vpack.c.b16 %v548, %v541
    %v696 = vpack.c.b16 %v556, %v549
    %v697 = vpack.c.b16 %v557, %v550
    %v698 = vpack.c.b16 %v558, %v551
    %v699 = vpack.c.b16 %v559, %v552
    %v700 = vpack.c.b16 %v560, %v553
    %v701 = vpack.c.b16 %v561, %v554
    %v702 = vpack.c.b16 %v562, %v555
    %v703 = vpack.c.b16 %v570, %v563
    %v704 = vpack.c.b16 %v571, %v564
    %v705 = vpack.c.b16 %v572, %v565
    %v706 = vpack.c.b16 %v573, %v566
    %v707 = vpack.c.b16 %v574, %v567
    %v708 = vpack.c.b16 %v575, %v568
    %v709 = vpack.c.b16 %v576, %v569
    %v710 = vpack.c.b16 %v584, %v577
    %v711 = vpack.c.b16 %v585, %v578
    %v712 = vpack.c.b16 %v586, %v579
    %v713 = vpack.c.b16 %v587, %v580
    %v714 = vpack.c.b16 %v588, %v581
    %v715 = vpack.c.b16 %v589, %v582
    %v716 = vpack.c.b16 %v590, %v583
    %v717 = vpack.c.b16 %v598, %v591
    %v718 = vpack.c.b16 %v599, %v592
    %v719 = vpack.c.b16 %v600, %v593
    %v720 = vpack.c.b16 %v601, %v594
    %v721 = vpack.c.b16 %v602, %v595
    %v722 = vpack.c.b16 %v603, %v596
    %v723 = vpack.c.b16 %v604, %v597
    %v724 = vpack.c.b16 %v612, %v605
    %v725 = vpack.c.b16 %v613, %v606
    %v726 = vpack.c.b16 %v614, %v607
    %v727 = vpack.c.b16 %v615, %v608
    %v728 = vpack.c.b16 %v616, %v609
    %v729 = vpack.c.b16 %v617, %v610
    %v730 = vpack.c.b16 %v618, %v611
    %843 = vmatprep.subr.bf16.mxu0 %v669
    %844 = vmatpush1.bf16.msra.mxu0 %v668
    %845 = vmatprep.subr.bf16.mxu0 %v662
    %846 = vmatpush1.bf16.msra.mxu0 %v661
    %847 = vmatprep.subr.bf16.mxu0 %v655
    %848 = vmatpush1.bf16.msra.mxu0 %v654
    %849 = vmatprep.subr.bf16.mxu0 %v648
    %850 = vmatpush1.bf16.msra.mxu0 %v647
    %851 = vmatprep.subr.bf16.mxu0 %v641
    %852 = vmatpush1.bf16.msra.mxu0 %v640
    %853 = vmatprep.subr.bf16.mxu0 %v634
    %854 = vmatpush1.bf16.msra.mxu0 %v633
    %855 = vmatprep.subr.bf16.mxu0 %v627
    %856 = vmatpush1.bf16.msra.mxu0 %v626
    %857 = vmatprep.subr.bf16.mxu0 %v620
    %858 = vmatpush1.bf16.msra.mxu0 %v619
    %859 = vmatprep.subr.bf16.mxu0 %v725
    %860 = vmatpush2.bf16.msra.mxu0 %v724
    %861 = vmatprep.subr.bf16.mxu0 %v718
    %862 = vmatpush2.bf16.msra.mxu0 %v717
    %863 = vmatprep.subr.bf16.mxu0 %v711
    %864 = vmatpush2.bf16.msra.mxu0 %v710
    %865 = vmatprep.subr.bf16.mxu0 %v704
    %866 = vmatpush2.bf16.msra.mxu0 %v703
    %867 = vmatprep.subr.bf16.mxu0 %v697
    %868 = vmatpush2.bf16.msra.mxu0 %v696
    %869 = vmatprep.subr.bf16.mxu0 %v690
    %870 = vmatpush2.bf16.msra.mxu0 %v689
    %871 = vmatprep.subr.bf16.mxu0 %v683
    %872 = vmatpush2.bf16.msra.mxu0 %v682
    %873 = vmatprep.subr.bf16.mxu0 %v676
    %874 = vmatpush2.bf16.msra.mxu0 %v675
    %875 = vmatprep.mubr.bf16.mxu0 %v264
    %876 = vmatmul.mubr.bf16.gmra.mxu0 %v263
    %v877 = vpop.f32.mrf.mxu0
    %v878 = vadd.f32 %v228, %v877
    %v879 = vpop.f32.mrf.mxu0
    %v880 = vadd.f32 %v232, %v879
    %v881 = vpop.f32.mrf.mxu0
    %v882 = vpop.f32.mrf.mxu0
    %883 = vdwg.mxu0
    %884 = vmatprep.subr.bf16.mxu0 %v671
    %885 = vmatpush1.bf16.msra.mxu0 %v670
    %886 = vmatprep.subr.bf16.mxu0 %v664
    %887 = vmatpush1.bf16.msra.mxu0 %v663
    %888 = vmatprep.subr.bf16.mxu0 %v657
    %889 = vmatpush1.bf16.msra.mxu0 %v656
    %890 = vmatprep.subr.bf16.mxu0 %v650
    %891 = vmatpush1.bf16.msra.mxu0 %v649
    %892 = vmatprep.subr.bf16.mxu0 %v643
    %893 = vmatpush1.bf16.msra.mxu0 %v642
    %894 = vmatprep.subr.bf16.mxu0 %v636
    %895 = vmatpush1.bf16.msra.mxu0 %v635
    %896 = vmatprep.subr.bf16.mxu0 %v629
    %897 = vmatpush1.bf16.msra.mxu0 %v628
    %898 = vmatprep.subr.bf16.mxu0 %v622
    %899 = vmatpush1.bf16.msra.mxu0 %v621
    %900 = vmatprep.subr.bf16.mxu0 %v727
    %901 = vmatpush2.bf16.msra.mxu0 %v726
    %902 = vmatprep.subr.bf16.mxu0 %v720
    %903 = vmatpush2.bf16.msra.mxu0 %v719
    %904 = vmatprep.subr.bf16.mxu0 %v713
    %905 = vmatpush2.bf16.msra.mxu0 %v712
    %906 = vmatprep.subr.bf16.mxu0 %v706
    %907 = vmatpush2.bf16.msra.mxu0 %v705
    %908 = vmatprep.subr.bf16.mxu0 %v699
    %909 = vmatpush2.bf16.msra.mxu0 %v698
    %910 = vmatprep.subr.bf16.mxu0 %v692
    %911 = vmatpush2.bf16.msra.mxu0 %v691
    %912 = vmatprep.subr.bf16.mxu0 %v685
    %913 = vmatpush2.bf16.msra.mxu0 %v684
    %914 = vmatprep.subr.bf16.mxu0 %v678
    %915 = vmatpush2.bf16.msra.mxu0 %v677
    %916 = vmatprep.mubr.bf16.mxu0 %v264
    %917 = vmatmul.mubr.bf16.gmra.mxu0 %v263
    %v918 = vpop.f32.mrf.mxu0
    %v919 = vadd.f32 %v236, %v918
    %v920 = vpop.f32.mrf.mxu0
    %v921 = vadd.f32 %v240, %v920
    %v922 = vpop.f32.mrf.mxu0
    %v923 = vpop.f32.mrf.mxu0
    %924 = vdwg.mxu0
    %925 = vmatprep.subr.bf16.mxu0 %v673
    %926 = vmatpush1.bf16.msra.mxu0 %v672
    %927 = vmatprep.subr.bf16.mxu0 %v666
    %928 = vmatpush1.bf16.msra.mxu0 %v665
    %929 = vmatprep.subr.bf16.mxu0 %v659
    %930 = vmatpush1.bf16.msra.mxu0 %v658
    %931 = vmatprep.subr.bf16.mxu0 %v652
    %932 = vmatpush1.bf16.msra.mxu0 %v651
    %933 = vmatprep.subr.bf16.mxu0 %v645
    %934 = vmatpush1.bf16.msra.mxu0 %v644
    %935 = vmatprep.subr.bf16.mxu0 %v638
    %936 = vmatpush1.bf16.msra.mxu0 %v637
    %937 = vmatprep.subr.bf16.mxu0 %v631
    %938 = vmatpush1.bf16.msra.mxu0 %v630
    %939 = vmatprep.subr.bf16.mxu0 %v624
    %940 = vmatpush1.bf16.msra.mxu0 %v623
    %941 = vmatprep.subr.bf16.mxu0 %v729
    %942 = vmatpush2.bf16.msra.mxu0 %v728
    %943 = vmatprep.subr.bf16.mxu0 %v722
    %944 = vmatpush2.bf16.msra.mxu0 %v721
    %945 = vmatprep.subr.bf16.mxu0 %v715
    %946 = vmatpush2.bf16.msra.mxu0 %v714
    %947 = vmatprep.subr.bf16.mxu0 %v708
    %948 = vmatpush2.bf16.msra.mxu0 %v707
    %949 = vmatprep.subr.bf16.mxu0 %v701
    %950 = vmatpush2.bf16.msra.mxu0 %v700
    %951 = vmatprep.subr.bf16.mxu0 %v694
    %952 = vmatpush2.bf16.msra.mxu0 %v693
    %953 = vmatprep.subr.bf16.mxu0 %v687
    %954 = vmatpush2.bf16.msra.mxu0 %v686
    %955 = vmatprep.subr.bf16.mxu0 %v680
    %956 = vmatpush2.bf16.msra.mxu0 %v679
    %957 = vmatprep.mubr.bf16.mxu0 %v264
    %958 = vmatmul.mubr.bf16.gmra.mxu0 %v263
    %v959 = vpop.f32.mrf.mxu0
    %v960 = vadd.f32 %v244, %v959
    %v961 = vpop.f32.mrf.mxu0
    %v962 = vadd.f32 %v248, %v961
    %v963 = vpop.f32.mrf.mxu0
    %v964 = vpop.f32.mrf.mxu0
    %965 = vdwg.mxu0
    %966 = vmatprep.subr.bf16.mxu0 0
    %967 = vmatpush1.bf16.msra.mxu0 %v674
    %968 = vmatprep.subr.bf16.mxu0 0
    %969 = vmatpush1.bf16.msra.mxu0 %v667
    %970 = vmatprep.subr.bf16.mxu0 0
    %971 = vmatpush1.bf16.msra.mxu0 %v660
    %972 = vmatprep.subr.bf16.mxu0 0
    %973 = vmatpush1.bf16.msra.mxu0 %v653
    %974 = vmatprep.subr.bf16.mxu0 0
    %975 = vmatpush1.bf16.msra.mxu0 %v646
    %976 = vmatprep.subr.bf16.mxu0 0
    %977 = vmatpush1.bf16.msra.mxu0 %v639
    %978 = vmatprep.subr.bf16.mxu0 0
    %979 = vmatpush1.bf16.msra.mxu0 %v632
    %980 = vmatprep.subr.bf16.mxu0 0
    %981 = vmatpush1.bf16.msra.mxu0 %v625
    %982 = vmatprep.subr.bf16.mxu0 0
    %983 = vmatpush2.bf16.msra.mxu0 %v730
    %984 = vmatprep.subr.bf16.mxu0 0
    %985 = vmatpush2.bf16.msra.mxu0 %v723
    %986 = vmatprep.subr.bf16.mxu0 0
    %987 = vmatpush2.bf16.msra.mxu0 %v716
    %988 = vmatprep.subr.bf16.mxu0 0
    %989 = vmatpush2.bf16.msra.mxu0 %v709
    %990 = vmatprep.subr.bf16.mxu0 0
    %991 = vmatpush2.bf16.msra.mxu0 %v702
    %992 = vmatprep.subr.bf16.mxu0 0
    %993 = vmatpush2.bf16.msra.mxu0 %v695
    %994 = vmatprep.subr.bf16.mxu0 0
    %995 = vmatpush2.bf16.msra.mxu0 %v688
    %996 = vmatprep.subr.bf16.mxu0 0
    %997 = vmatpush2.bf16.msra.mxu0 %v681
    %998 = vmatprep.mubr.bf16.mxu0 %v264
    %999 = vmatmul.mubr.bf16.gmra.mxu0 %v263
    %v1000 = vpop.f32.mrf.mxu0
    %v1001 = vadd.f32 %v252, %v1000
    %v1002 = vpop.f32.mrf.mxu0
    %v1003 = vpop.f32.mrf.mxu0
    %v1004 = vpop.f32.mrf.mxu0
    %1005 = vdwg.mxu0
    %v1006 = vmul.f32 %v878, 0.5
    %v1007 = vmul.f32 %v880, 0.5
    %v1008 = vmul.f32 %v919, 0.5
    %v1009 = vmul.f32 %v921, 0.5
    %v1010 = vmul.f32 %v960, 0.5
    %v1011 = vmul.f32 %v962, 0.5
    %v1012 = vmul.f32 %v1001, 0.5
    %v1013 = vtanh.pop %v1006
    %v1014 = vtanh.pop %v1007
    %v1015 = vtanh.pop %v1008
    %v1016 = vtanh.pop %v1009
    %v1017 = vtanh.pop %v1010
    %v1018 = vtanh.pop %v1011
    %v1019 = vtanh.pop %v1012
    %v1020 = vmul.f32 %v1013, 0.5
    %v1021 = vmul.f32 %v1014, 0.5
    %v1022 = vmul.f32 %v1015, 0.5
    %v1023 = vmul.f32 %v1016, 0.5
    %v1024 = vmul.f32 %v1017, 0.5
    %v1025 = vmul.f32 %v1018, 0.5
    %v1026 = vmul.f32 %v1019, 0.5
    %v1027 = vadd.f32 %v1020, 0.5
    %v1028 = vadd.f32 %v1021, 0.5
    %v1029 = vadd.f32 %v1022, 0.5
    %v1030 = vadd.f32 %v1023, 0.5
    %v1031 = vadd.f32 %v1024, 0.5
    %v1032 = vadd.f32 %v1025, 0.5
    %v1033 = vadd.f32 %v1026, 0.5
    %v1034 = vmul.f32 %v878, %v1027
    %v1035 = vmul.f32 %v880, %v1028
    %v1036 = vmul.f32 %v919, %v1029
    %v1037 = vmul.f32 %v921, %v1030
    %v1038 = vmul.f32 %v960, %v1031
    %v1039 = vmul.f32 %v962, %v1032
    %v1040 = vmul.f32 %v1001, %v1033
    %v1041 = vpack.c.bf16 %v1034, %v1034
    %v1042 = vpack.c.bf16 %v1035, %v1035
    %v1043 = vpack.c.bf16 %v1036, %v1036
    %v1044 = vpack.c.bf16 %v1037, %v1037
    %v1045 = vpack.c.bf16 %v1038, %v1038
    %v1046 = vpack.c.bf16 %v1039, %v1039
    %v1047 = vpack.c.bf16 %v1040, %v1040
    %v1048 = vld [vmem:[#allocation4] sm:$0xff]
    %v1049 = vld [vmem:[#allocation4 + $0x8] sm:$0xff]
    %v1050 = vld [vmem:[#allocation4 + $0x10] sm:$0xff]
    %v1051 = vld [vmem:[#allocation4 + $0x18] sm:$0xff]
    %v1052 = vld [vmem:[#allocation4 + $0x20] sm:$0xff]
    %v1053 = vld [vmem:[#allocation4 + $0x28] sm:$0xff]
    %v1054 = vld [vmem:[#allocation4 + $0x30] sm:$0xff]
    %v1055 = vld [vmem:[#allocation4 + $0x38] sm:$0xff]
    %v1056 = vld [vmem:[#allocation4 + $0x40] sm:$0xff]
    %v1057 = vld [vmem:[#allocation4 + $0x48] sm:$0xff]
    %v1058 = vld [vmem:[#allocation4 + $0x50] sm:$0xff]
    %v1059 = vld [vmem:[#allocation4 + $0x58] sm:$0xff]
    %v1060 = vld [vmem:[#allocation4 + $0x60] sm:$0xff]
    %v1061 = vld [vmem:[#allocation4 + $0x68] sm:$0xff]
    %v1062 = vld [vmem:[#allocation4 + $0x70] sm:$0xff]
    %v1063 = vld [vmem:[#allocation4 + $0x78] sm:$0xff]
    %v1064 = vld [vmem:[#allocation4 + $0x80] sm:$0xff]
    %v1065 = vld [vmem:[#allocation4 + $0x88] sm:$0xff]
    %v1066 = vld [vmem:[#allocation4 + $0x90] sm:$0xff]
    %v1067 = vld [vmem:[#allocation4 + $0x98] sm:$0xff]
    %v1068 = vld [vmem:[#allocation4 + $0xa0] sm:$0xff]
    %v1069 = vld [vmem:[#allocation4 + $0xa8] sm:$0xff]
    %v1070 = vld [vmem:[#allocation4 + $0xb0] sm:$0xff]
    %v1071 = vld [vmem:[#allocation4 + $0xb8] sm:$0xff]
    %v1072 = vld [vmem:[#allocation4 + $0xc0] sm:$0xff]
    %v1073 = vld [vmem:[#allocation4 + $0xc8] sm:$0xff]
    %v1074 = vld [vmem:[#allocation4 + $0xd0] sm:$0xff]
    %v1075 = vld [vmem:[#allocation4 + $0xd8] sm:$0xff]
    %v1076 = vld [vmem:[#allocation4 + $0xe0] sm:$0xff]
    %v1077 = vld [vmem:[#allocation4 + $0xe8] sm:$0xff]
    %v1078 = vld [vmem:[#allocation4 + $0xf0] sm:$0xff]
    %v1079 = vld [vmem:[#allocation4 + $0xf8] sm:$0xff]
    %v1080 = vld [vmem:[#allocation4 + $0x100] sm:$0xff]
    %v1081 = vld [vmem:[#allocation4 + $0x108] sm:$0xff]
    %v1082 = vld [vmem:[#allocation4 + $0x110] sm:$0xff]
    %v1083 = vld [vmem:[#allocation4 + $0x118] sm:$0xff]
    %v1084 = vld [vmem:[#allocation4 + $0x120] sm:$0xff]
    %v1085 = vld [vmem:[#allocation4 + $0x128] sm:$0xff]
    %v1086 = vld [vmem:[#allocation4 + $0x130] sm:$0xff]
    %v1087 = vld [vmem:[#allocation4 + $0x138] sm:$0xff]
    %v1088 = vld [vmem:[#allocation4 + $0x140] sm:$0xff]
    %v1089 = vld [vmem:[#allocation4 + $0x148] sm:$0xff]
    %v1090 = vld [vmem:[#allocation4 + $0x150] sm:$0xff]
    %v1091 = vld [vmem:[#allocation4 + $0x158] sm:$0xff]
    %v1092 = vld [vmem:[#allocation4 + $0x160] sm:$0xff]
    %v1093 = vld [vmem:[#allocation4 + $0x168] sm:$0xff]
    %v1094 = vld [vmem:[#allocation4 + $0x170] sm:$0xff]
    %v1095 = vld [vmem:[#allocation4 + $0x178] sm:$0xff]
    %v1096 = vld [vmem:[#allocation4 + $0x180] sm:$0xff]
    %v1097 = vld [vmem:[#allocation4 + $0x188] sm:$0xff]
    %v1098 = vld [vmem:[#allocation4 + $0x190] sm:$0xff]
    %v1099 = vld [vmem:[#allocation4 + $0x198] sm:$0xff]
    %v1100 = vld [vmem:[#allocation4 + $0x1a0] sm:$0xff]
    %v1101 = vld [vmem:[#allocation4 + $0x1a8] sm:$0xff]
    %v1102 = vld [vmem:[#allocation4 + $0x1b0] sm:$0xff]
    %v1103 = vld [vmem:[#allocation4 + $0x1b8] sm:$0xff]
    %v1104 = vld [vmem:[#allocation4 + $0x1c0] sm:$0xff]
    %v1105 = vld [vmem:[#allocation4 + $0x1c8] sm:$0xff]
    %v1106 = vld [vmem:[#allocation4 + $0x1d0] sm:$0xff]
    %v1107 = vld [vmem:[#allocation4 + $0x1d8] sm:$0xff]
    %v1108 = vld [vmem:[#allocation4 + $0x1e0] sm:$0xff]
    %v1109 = vld [vmem:[#allocation4 + $0x1e8] sm:$0xff]
    %v1110 = vld [vmem:[#allocation4 + $0x1f0] sm:$0xff]
    %v1111 = vld [vmem:[#allocation4 + $0x1f8] sm:$0xff]
    %v1112 = vld [vmem:[#allocation4 + $0x200] sm:$0xff]
    %v1113 = vld [vmem:[#allocation4 + $0x208] sm:$0xff]
    %v1114 = vld [vmem:[#allocation4 + $0x210] sm:$0xff]
    %v1115 = vld [vmem:[#allocation4 + $0x218] sm:$0xff]
    %v1116 = vld [vmem:[#allocation4 + $0x220] sm:$0xff]
    %v1117 = vld [vmem:[#allocation4 + $0x228] sm:$0xff]
    %v1118 = vld [vmem:[#allocation4 + $0x230] sm:$0xff]
    %v1119 = vld [vmem:[#allocation4 + $0x238] sm:$0xff]
    %v1120 = vld [vmem:[#allocation4 + $0x240] sm:$0xff]
    %v1121 = vld [vmem:[#allocation4 + $0x248] sm:$0xff]
    %v1122 = vld [vmem:[#allocation4 + $0x250] sm:$0xff]
    %v1123 = vld [vmem:[#allocation4 + $0x258] sm:$0xff]
    %v1124 = vld [vmem:[#allocation4 + $0x260] sm:$0xff]
    %v1125 = vld [vmem:[#allocation4 + $0x268] sm:$0xff]
    %v1126 = vld [vmem:[#allocation4 + $0x270] sm:$0xff]
    %v1127 = vld [vmem:[#allocation4 + $0x278] sm:$0xff]
    %v1128 = vld [vmem:[#allocation4 + $0x280] sm:$0xff]
    %v1129 = vld [vmem:[#allocation4 + $0x288] sm:$0xff]
    %v1130 = vld [vmem:[#allocation4 + $0x290] sm:$0xff]
    %v1131 = vld [vmem:[#allocation4 + $0x298] sm:$0xff]
    %v1132 = vld [vmem:[#allocation4 + $0x2a0] sm:$0xff]
    %v1133 = vld [vmem:[#allocation4 + $0x2a8] sm:$0xff]
    %v1134 = vld [vmem:[#allocation4 + $0x2b0] sm:$0xff]
    %v1135 = vld [vmem:[#allocation4 + $0x2b8] sm:$0xff]
    %v1136 = vld [vmem:[#allocation4 + $0x2c0] sm:$0xff]
    %v1137 = vld [vmem:[#allocation4 + $0x2c8] sm:$0xff]
    %v1138 = vld [vmem:[#allocation4 + $0x2d0] sm:$0xff]
    %v1139 = vld [vmem:[#allocation4 + $0x2d8] sm:$0xff]
    %v1140 = vld [vmem:[#allocation4 + $0x2e0] sm:$0xff]
    %v1141 = vld [vmem:[#allocation4 + $0x2e8] sm:$0xff]
    %v1142 = vld [vmem:[#allocation4 + $0x2f0] sm:$0xff]
    %v1143 = vld [vmem:[#allocation4 + $0x2f8] sm:$0xff]
    %v1144 = vld [vmem:[#allocation4 + $0x300] sm:$0xff]
    %v1145 = vld [vmem:[#allocation4 + $0x308] sm:$0xff]
    %v1146 = vld [vmem:[#allocation4 + $0x310] sm:$0xff]
    %v1147 = vld [vmem:[#allocation4 + $0x318] sm:$0xff]
    %v1148 = vld [vmem:[#allocation4 + $0x320] sm:$0xff]
    %v1149 = vld [vmem:[#allocation4 + $0x328] sm:$0xff]
    %v1150 = vld [vmem:[#allocation4 + $0x330] sm:$0xff]
    %v1151 = vld [vmem:[#allocation4 + $0x338] sm:$0xff]
    %v1152 = vld [vmem:[#allocation4 + $0x340] sm:$0xff]
    %v1153 = vld [vmem:[#allocation4 + $0x348] sm:$0xff]
    %v1154 = vld [vmem:[#allocation4 + $0x350] sm:$0xff]
    %v1155 = vld [vmem:[#allocation4 + $0x358] sm:$0xff]
    %v1156 = vld [vmem:[#allocation4 + $0x360] sm:$0xff]
    %v1157 = vld [vmem:[#allocation4 + $0x368] sm:$0xff]
    %v1158 = vld [vmem:[#allocation4 + $0x370] sm:$0xff]
    %v1159 = vld [vmem:[#allocation4 + $0x378] sm:$0xff]
    %v1160 = vld [vmem:[#allocation4 + $0x380] sm:$0xff]
    %v1161 = vld [vmem:[#allocation4 + $0x388] sm:$0xff]
    %v1162 = vld [vmem:[#allocation4 + $0x390] sm:$0xff]
    %v1163 = vld [vmem:[#allocation4 + $0x398] sm:$0xff]
    %v1164 = vld [vmem:[#allocation4 + $0x3a0] sm:$0xff]
    %v1165 = vld [vmem:[#allocation4 + $0x3a8] sm:$0xff]
    %v1166 = vld [vmem:[#allocation4 + $0x3b0] sm:$0xff]
    %v1167 = vld [vmem:[#allocation4 + $0x3b8] sm:$0xff]
    %v1168 = vld [vmem:[#allocation4 + $0x3c0] sm:$0xff]
    %v1169 = vld [vmem:[#allocation4 + $0x3c8] sm:$0xff]
    %v1170 = vld [vmem:[#allocation4 + $0x3d0] sm:$0xff]
    %v1171 = vld [vmem:[#allocation4 + $0x3d8] sm:$0xff]
    %v1172 = vld [vmem:[#allocation4 + $0x3e0] sm:$0xff]
    %v1173 = vld [vmem:[#allocation4 + $0x3e8] sm:$0xff]
    %v1174 = vld [vmem:[#allocation4 + $0x3f0] sm:$0xff]
    %v1175 = vld [vmem:[#allocation4 + $0x3f8] sm:$0xff]
    %v1176 = vld [vmem:[#allocation4 + $0x400] sm:$0xff]
    %v1177 = vld [vmem:[#allocation4 + $0x408] sm:$0xff]
    %v1178 = vld [vmem:[#allocation4 + $0x410] sm:$0xff]
    %v1179 = vld [vmem:[#allocation4 + $0x418] sm:$0xff]
    %v1180 = vld [vmem:[#allocation4 + $0x420] sm:$0xff]
    %v1181 = vld [vmem:[#allocation4 + $0x428] sm:$0xff]
    %v1182 = vld [vmem:[#allocation4 + $0x430] sm:$0xff]
    %v1183 = vld [vmem:[#allocation4 + $0x438] sm:$0xff]
    %v1184 = vld [vmem:[#allocation4 + $0x440] sm:$0xff]
    %v1185 = vld [vmem:[#allocation4 + $0x448] sm:$0xff]
    %v1186 = vld [vmem:[#allocation4 + $0x450] sm:$0xff]
    %v1187 = vld [vmem:[#allocation4 + $0x458] sm:$0xff]
    %v1188 = vld [vmem:[#allocation4 + $0x460] sm:$0xff]
    %v1189 = vld [vmem:[#allocation4 + $0x468] sm:$0xff]
    %v1190 = vld [vmem:[#allocation4 + $0x470] sm:$0xff]
    %v1191 = vld [vmem:[#allocation4 + $0x478] sm:$0xff]
    %v1192 = vld [vmem:[#allocation4 + $0x480] sm:$0xff]
    %v1193 = vld [vmem:[#allocation4 + $0x488] sm:$0xff]
    %v1194 = vld [vmem:[#allocation4 + $0x490] sm:$0xff]
    %v1195 = vld [vmem:[#allocation4 + $0x498] sm:$0xff]
    %v1196 = vld [vmem:[#allocation4 + $0x4a0] sm:$0xff]
    %v1197 = vld [vmem:[#allocation4 + $0x4a8] sm:$0xff]
    %v1198 = vld [vmem:[#allocation4 + $0x4b0] sm:$0xff]
    %v1199 = vld [vmem:[#allocation4 + $0x4b8] sm:$0xff]
    %v1200 = vld [vmem:[#allocation4 + $0x4c0] sm:$0xff]
    %v1201 = vld [vmem:[#allocation4 + $0x4c8] sm:$0xff]
    %v1202 = vld [vmem:[#allocation4 + $0x4d0] sm:$0xff]
    %v1203 = vld [vmem:[#allocation4 + $0x4d8] sm:$0xff]
    %v1204 = vld [vmem:[#allocation4 + $0x4e0] sm:$0xff]
    %v1205 = vld [vmem:[#allocation4 + $0x4e8] sm:$0xff]
    %v1206 = vld [vmem:[#allocation4 + $0x4f0] sm:$0xff]
    %v1207 = vld [vmem:[#allocation4 + $0x4f8] sm:$0xff]
    %v1208 = vld [vmem:[#allocation4 + $0x500] sm:$0xff]
    %v1209 = vld [vmem:[#allocation4 + $0x508] sm:$0xff]
    %v1210 = vld [vmem:[#allocation4 + $0x510] sm:$0xff]
    %v1211 = vld [vmem:[#allocation4 + $0x518] sm:$0xff]
    %v1212 = vld [vmem:[#allocation4 + $0x520] sm:$0xff]
    %v1213 = vld [vmem:[#allocation4 + $0x528] sm:$0xff]
    %v1214 = vld [vmem:[#allocation4 + $0x530] sm:$0xff]
    %v1215 = vld [vmem:[#allocation4 + $0x538] sm:$0xff]
    %v1216 = vld [vmem:[#allocation4 + $0x540] sm:$0xff]
    %v1217 = vld [vmem:[#allocation4 + $0x548] sm:$0xff]
    %v1218 = vld [vmem:[#allocation4 + $0x550] sm:$0xff]
    %v1219 = vld [vmem:[#allocation4 + $0x558] sm:$0xff]
    %v1220 = vld [vmem:[#allocation4 + $0x560] sm:$0xff]
    %v1221 = vld [vmem:[#allocation4 + $0x568] sm:$0xff]
    %v1222 = vld [vmem:[#allocation4 + $0x570] sm:$0xff]
    %v1223 = vld [vmem:[#allocation4 + $0x578] sm:$0xff]
    %v1224 = vld [vmem:[#allocation4 + $0x580] sm:$0xff]
    %v1225 = vld [vmem:[#allocation4 + $0x588] sm:$0xff]
    %v1226 = vld [vmem:[#allocation4 + $0x590] sm:$0xff]
    %v1227 = vld [vmem:[#allocation4 + $0x598] sm:$0xff]
    %v1228 = vld [vmem:[#allocation4 + $0x5a0] sm:$0xff]
    %v1229 = vld [vmem:[#allocation4 + $0x5a8] sm:$0xff]
    %v1230 = vld [vmem:[#allocation4 + $0x5b0] sm:$0xff]
    %v1231 = vld [vmem:[#allocation4 + $0x5b8] sm:$0xff]
    %v1232 = vld [vmem:[#allocation4 + $0x5c0] sm:$0xff]
    %v1233 = vld [vmem:[#allocation4 + $0x5c8] sm:$0xff]
    %v1234 = vld [vmem:[#allocation4 + $0x5d0] sm:$0xff]
    %v1235 = vld [vmem:[#allocation4 + $0x5d8] sm:$0xff]
    %v1236 = vld [vmem:[#allocation4 + $0x5e0] sm:$0xff]
    %v1237 = vld [vmem:[#allocation4 + $0x5e8] sm:$0xff]
    %v1238 = vld [vmem:[#allocation4 + $0x5f0] sm:$0xff]
    %v1239 = vld [vmem:[#allocation4 + $0x5f8] sm:$0xff]
    %v1240 = vld [vmem:[#allocation4 + $0x600] sm:$0xff]
    %v1241 = vld [vmem:[#allocation4 + $0x608] sm:$0xff]
    %v1242 = vld [vmem:[#allocation4 + $0x610] sm:$0xff]
    %v1243 = vld [vmem:[#allocation4 + $0x618] sm:$0xff]
    %v1244 = vld [vmem:[#allocation4 + $0x620] sm:$0xff]
    %v1245 = vld [vmem:[#allocation4 + $0x628] sm:$0xff]
    %v1246 = vld [vmem:[#allocation4 + $0x630] sm:$0xff]
    %v1247 = vld [vmem:[#allocation4 + $0x638] sm:$0xff]
    %v1248 = vld [vmem:[#allocation4 + $0x640] sm:$0xff]
    %v1249 = vld [vmem:[#allocation4 + $0x648] sm:$0xff]
    %v1250 = vld [vmem:[#allocation4 + $0x650] sm:$0xff]
    %v1251 = vld [vmem:[#allocation4 + $0x658] sm:$0xff]
    %v1252 = vld [vmem:[#allocation4 + $0x660] sm:$0xff]
    %v1253 = vld [vmem:[#allocation4 + $0x668] sm:$0xff]
    %v1254 = vld [vmem:[#allocation4 + $0x670] sm:$0xff]
    %v1255 = vld [vmem:[#allocation4 + $0x678] sm:$0xff]
    %v1256 = vld [vmem:[#allocation4 + $0x680] sm:$0xff]
    %v1257 = vld [vmem:[#allocation4 + $0x688] sm:$0xff]
    %v1258 = vld [vmem:[#allocation4 + $0x690] sm:$0xff]
    %v1259 = vld [vmem:[#allocation4 + $0x698] sm:$0xff]
    %v1260 = vld [vmem:[#allocation4 + $0x6a0] sm:$0xff]
    %v1261 = vld [vmem:[#allocation4 + $0x6a8] sm:$0xff]
    %v1262 = vld [vmem:[#allocation4 + $0x6b0] sm:$0xff]
    %v1263 = vld [vmem:[#allocation4 + $0x6b8] sm:$0xff]
    %v1264 = vld [vmem:[#allocation4 + $0x6c0] sm:$0xff]
    %v1265 = vld [vmem:[#allocation4 + $0x6c8] sm:$0xff]
    %v1266 = vld [vmem:[#allocation4 + $0x6d0] sm:$0xff]
    %v1267 = vld [vmem:[#allocation4 + $0x6d8] sm:$0xff]
    %v1268 = vld [vmem:[#allocation4 + $0x6e0] sm:$0xff]
    %v1269 = vld [vmem:[#allocation4 + $0x6e8] sm:$0xff]
    %v1270 = vld [vmem:[#allocation4 + $0x6f0] sm:$0xff]
    %v1271 = vld [vmem:[#allocation4 + $0x6f8] sm:$0xff]
    %v1272 = vld [vmem:[%s7] sm:$0xf]
    %v1274 = vlaneseq
    %v1275 = vshrl.u32 %v1274, 7
    %v1276 = vsub.s32 0, %v1275
    %v1277 = vrot.slane %v1272, %v1276
    %v1278 = vlaneseq
    %v1279 = vshrl.u32 %v1278, 7
    %v1280 = vsub.s32 1, %v1279
    %v1281 = vrot.slane %v1272, %v1280
    %v1282 = vlaneseq
    %v1283 = vshrl.u32 %v1282, 7
    %v1284 = vsub.s32 2, %v1283
    %v1285 = vrot.slane %v1272, %v1284
    %v1286 = vlaneseq
    %v1287 = vshrl.u32 %v1286, 7
    %v1288 = vsub.s32 3, %v1287
    %v1289 = vrot.slane %v1272, %v1288
    %v1518 = vunpack.c.l.b16 %v1048
    %v1519 = vunpack.c.h.b16 %v1048
    %v1520 = vunpack.c.l.b16 %v1049
    %v1521 = vunpack.c.h.b16 %v1049
    %v1522 = vunpack.c.l.b16 %v1050
    %v1523 = vunpack.c.h.b16 %v1050
    %v1524 = vunpack.c.l.b16 %v1051
    %v1525 = vunpack.c.h.b16 %v1051
    %v1526 = vunpack.c.l.b16 %v1052
    %v1527 = vunpack.c.h.b16 %v1052
    %v1528 = vunpack.c.l.b16 %v1053
    %v1529 = vunpack.c.h.b16 %v1053
    %v1530 = vunpack.c.l.b16 %v1054
    %v1531 = vunpack.c.h.b16 %v1054
    %v1532 = vunpack.c.l.b16 %v1055
    %v1533 = vunpack.c.h.b16 %v1055
    %v1534 = vunpack.c.l.b16 %v1056
    %v1535 = vunpack.c.h.b16 %v1056
    %v1536 = vunpack.c.l.b16 %v1057
    %v1537 = vunpack.c.h.b16 %v1057
    %v1538 = vunpack.c.l.b16 %v1058
    %v1539 = vunpack.c.h.b16 %v1058
    %v1540 = vunpack.c.l.b16 %v1059
    %v1541 = vunpack.c.h.b16 %v1059
    %v1542 = vunpack.c.l.b16 %v1060
    %v1543 = vunpack.c.h.b16 %v1060
    %v1544 = vunpack.c.l.b16 %v1061
    %v1545 = vunpack.c.h.b16 %v1061
    %v1546 = vunpack.c.l.b16 %v1062
    %v1547 = vunpack.c.h.b16 %v1062
    %v1548 = vunpack.c.l.b16 %v1063
    %v1549 = vunpack.c.h.b16 %v1063
    %v1550 = vunpack.c.l.b16 %v1064
    %v1551 = vunpack.c.h.b16 %v1064
    %v1552 = vunpack.c.l.b16 %v1065
    %v1553 = vunpack.c.h.b16 %v1065
    %v1554 = vunpack.c.l.b16 %v1066
    %v1555 = vunpack.c.h.b16 %v1066
    %v1556 = vunpack.c.l.b16 %v1067
    %v1557 = vunpack.c.h.b16 %v1067
    %v1558 = vunpack.c.l.b16 %v1068
    %v1559 = vunpack.c.h.b16 %v1068
    %v1560 = vunpack.c.l.b16 %v1069
    %v1561 = vunpack.c.h.b16 %v1069
    %v1562 = vunpack.c.l.b16 %v1070
    %v1563 = vunpack.c.h.b16 %v1070
    %v1564 = vunpack.c.l.b16 %v1071
    %v1565 = vunpack.c.h.b16 %v1071
    %v1566 = vunpack.c.l.b16 %v1072
    %v1567 = vunpack.c.h.b16 %v1072
    %v1568 = vunpack.c.l.b16 %v1073
    %v1569 = vunpack.c.h.b16 %v1073
    %v1570 = vunpack.c.l.b16 %v1074
    %v1571 = vunpack.c.h.b16 %v1074
    %v1572 = vunpack.c.l.b16 %v1075
    %v1573 = vunpack.c.h.b16 %v1075
    %v1574 = vunpack.c.l.b16 %v1076
    %v1575 = vunpack.c.h.b16 %v1076
    %v1576 = vunpack.c.l.b16 %v1077
    %v1577 = vunpack.c.h.b16 %v1077
    %v1578 = vunpack.c.l.b16 %v1078
    %v1579 = vunpack.c.h.b16 %v1078
    %v1580 = vunpack.c.l.b16 %v1079
    %v1581 = vunpack.c.h.b16 %v1079
    %v1582 = vunpack.c.l.b16 %v1080
    %v1583 = vunpack.c.h.b16 %v1080
    %v1584 = vunpack.c.l.b16 %v1081
    %v1585 = vunpack.c.h.b16 %v1081
    %v1586 = vunpack.c.l.b16 %v1082
    %v1587 = vunpack.c.h.b16 %v1082
    %v1588 = vunpack.c.l.b16 %v1083
    %v1589 = vunpack.c.h.b16 %v1083
    %v1590 = vunpack.c.l.b16 %v1084
    %v1591 = vunpack.c.h.b16 %v1084
    %v1592 = vunpack.c.l.b16 %v1085
    %v1593 = vunpack.c.h.b16 %v1085
    %v1594 = vunpack.c.l.b16 %v1086
    %v1595 = vunpack.c.h.b16 %v1086
    %v1596 = vunpack.c.l.b16 %v1087
    %v1597 = vunpack.c.h.b16 %v1087
    %v1598 = vunpack.c.l.b16 %v1088
    %v1599 = vunpack.c.h.b16 %v1088
    %v1600 = vunpack.c.l.b16 %v1089
    %v1601 = vunpack.c.h.b16 %v1089
    %v1602 = vunpack.c.l.b16 %v1090
    %v1603 = vunpack.c.h.b16 %v1090
    %v1604 = vunpack.c.l.b16 %v1091
    %v1605 = vunpack.c.h.b16 %v1091
    %v1606 = vunpack.c.l.b16 %v1092
    %v1607 = vunpack.c.h.b16 %v1092
    %v1608 = vunpack.c.l.b16 %v1093
    %v1609 = vunpack.c.h.b16 %v1093
    %v1610 = vunpack.c.l.b16 %v1094
    %v1611 = vunpack.c.h.b16 %v1094
    %v1612 = vunpack.c.l.b16 %v1095
    %v1613 = vunpack.c.h.b16 %v1095
    %v1614 = vunpack.c.l.b16 %v1096
    %v1615 = vunpack.c.h.b16 %v1096
    %v1616 = vunpack.c.l.b16 %v1097
    %v1617 = vunpack.c.h.b16 %v1097
    %v1618 = vunpack.c.l.b16 %v1098
    %v1619 = vunpack.c.h.b16 %v1098
    %v1620 = vunpack.c.l.b16 %v1099
    %v1621 = vunpack.c.h.b16 %v1099
    %v1622 = vunpack.c.l.b16 %v1100
    %v1623 = vunpack.c.h.b16 %v1100
    %v1624 = vunpack.c.l.b16 %v1101
    %v1625 = vunpack.c.h.b16 %v1101
    %v1626 = vunpack.c.l.b16 %v1102
    %v1627 = vunpack.c.h.b16 %v1102
    %v1628 = vunpack.c.l.b16 %v1103
    %v1629 = vunpack.c.h.b16 %v1103
    %v1630 = vunpack.c.l.b16 %v1104
    %v1631 = vunpack.c.h.b16 %v1104
    %v1632 = vunpack.c.l.b16 %v1105
    %v1633 = vunpack.c.h.b16 %v1105
    %v1634 = vunpack.c.l.b16 %v1106
    %v1635 = vunpack.c.h.b16 %v1106
    %v1636 = vunpack.c.l.b16 %v1107
    %v1637 = vunpack.c.h.b16 %v1107
    %v1638 = vunpack.c.l.b16 %v1108
    %v1639 = vunpack.c.h.b16 %v1108
    %v1640 = vunpack.c.l.b16 %v1109
    %v1641 = vunpack.c.h.b16 %v1109
    %v1642 = vunpack.c.l.b16 %v1110
    %v1643 = vunpack.c.h.b16 %v1110
    %v1644 = vunpack.c.l.b16 %v1111
    %v1645 = vunpack.c.h.b16 %v1111
    %v1646 = vunpack.c.l.b16 %v1112
    %v1647 = vunpack.c.h.b16 %v1112
    %v1648 = vunpack.c.l.b16 %v1113
    %v1649 = vunpack.c.h.b16 %v1113
    %v1650 = vunpack.c.l.b16 %v1114
    %v1651 = vunpack.c.h.b16 %v1114
    %v1652 = vunpack.c.l.b16 %v1115
    %v1653 = vunpack.c.h.b16 %v1115
    %v1654 = vunpack.c.l.b16 %v1116
    %v1655 = vunpack.c.h.b16 %v1116
    %v1656 = vunpack.c.l.b16 %v1117
    %v1657 = vunpack.c.h.b16 %v1117
    %v1658 = vunpack.c.l.b16 %v1118
    %v1659 = vunpack.c.h.b16 %v1118
    %v1660 = vunpack.c.l.b16 %v1119
    %v1661 = vunpack.c.h.b16 %v1119
    %v1662 = vunpack.c.l.b16 %v1120
    %v1663 = vunpack.c.h.b16 %v1120
    %v1664 = vunpack.c.l.b16 %v1121
    %v1665 = vunpack.c.h.b16 %v1121
    %v1666 = vunpack.c.l.b16 %v1122
    %v1667 = vunpack.c.h.b16 %v1122
    %v1668 = vunpack.c.l.b16 %v1123
    %v1669 = vunpack.c.h.b16 %v1123
    %v1670 = vunpack.c.l.b16 %v1124
    %v1671 = vunpack.c.h.b16 %v1124
    %v1672 = vunpack.c.l.b16 %v1125
    %v1673 = vunpack.c.h.b16 %v1125
    %v1674 = vunpack.c.l.b16 %v1126
    %v1675 = vunpack.c.h.b16 %v1126
    %v1676 = vunpack.c.l.b16 %v1127
    %v1677 = vunpack.c.h.b16 %v1127
    %v1678 = vunpack.c.l.b16 %v1128
    %v1679 = vunpack.c.h.b16 %v1128
    %v1680 = vunpack.c.l.b16 %v1129
    %v1681 = vunpack.c.h.b16 %v1129
    %v1682 = vunpack.c.l.b16 %v1130
    %v1683 = vunpack.c.h.b16 %v1130
    %v1684 = vunpack.c.l.b16 %v1131
    %v1685 = vunpack.c.h.b16 %v1131
    %v1686 = vunpack.c.l.b16 %v1132
    %v1687 = vunpack.c.h.b16 %v1132
    %v1688 = vunpack.c.l.b16 %v1133
    %v1689 = vunpack.c.h.b16 %v1133
    %v1690 = vunpack.c.l.b16 %v1134
    %v1691 = vunpack.c.h.b16 %v1134
    %v1692 = vunpack.c.l.b16 %v1135
    %v1693 = vunpack.c.h.b16 %v1135
    %v1694 = vunpack.c.l.b16 %v1136
    %v1695 = vunpack.c.h.b16 %v1136
    %v1696 = vunpack.c.l.b16 %v1137
    %v1697 = vunpack.c.h.b16 %v1137
    %v1698 = vunpack.c.l.b16 %v1138
    %v1699 = vunpack.c.h.b16 %v1138
    %v1700 = vunpack.c.l.b16 %v1139
    %v1701 = vunpack.c.h.b16 %v1139
    %v1702 = vunpack.c.l.b16 %v1140
    %v1703 = vunpack.c.h.b16 %v1140
    %v1704 = vunpack.c.l.b16 %v1141
    %v1705 = vunpack.c.h.b16 %v1141
    %v1706 = vunpack.c.l.b16 %v1142
    %v1707 = vunpack.c.h.b16 %v1142
    %v1708 = vunpack.c.l.b16 %v1143
    %v1709 = vunpack.c.h.b16 %v1143
    %v1710 = vunpack.c.l.b16 %v1144
    %v1711 = vunpack.c.h.b16 %v1144
    %v1712 = vunpack.c.l.b16 %v1145
    %v1713 = vunpack.c.h.b16 %v1145
    %v1714 = vunpack.c.l.b16 %v1146
    %v1715 = vunpack.c.h.b16 %v1146
    %v1716 = vunpack.c.l.b16 %v1147
    %v1717 = vunpack.c.h.b16 %v1147
    %v1718 = vunpack.c.l.b16 %v1148
    %v1719 = vunpack.c.h.b16 %v1148
    %v1720 = vunpack.c.l.b16 %v1149
    %v1721 = vunpack.c.h.b16 %v1149
    %v1722 = vunpack.c.l.b16 %v1150
    %v1723 = vunpack.c.h.b16 %v1150
    %v1724 = vunpack.c.l.b16 %v1151
    %v1725 = vunpack.c.h.b16 %v1151
    %v1726 = vunpack.c.l.b16 %v1152
    %v1727 = vunpack.c.h.b16 %v1152
    %v1728 = vunpack.c.l.b16 %v1153
    %v1729 = vunpack.c.h.b16 %v1153
    %v1730 = vunpack.c.l.b16 %v1154
    %v1731 = vunpack.c.h.b16 %v1154
    %v1732 = vunpack.c.l.b16 %v1155
    %v1733 = vunpack.c.h.b16 %v1155
    %v1734 = vunpack.c.l.b16 %v1156
    %v1735 = vunpack.c.h.b16 %v1156
    %v1736 = vunpack.c.l.b16 %v1157
    %v1737 = vunpack.c.h.b16 %v1157
    %v1738 = vunpack.c.l.b16 %v1158
    %v1739 = vunpack.c.h.b16 %v1158
    %v1740 = vunpack.c.l.b16 %v1159
    %v1741 = vunpack.c.h.b16 %v1159
    %v1742 = vunpack.c.l.b16 %v1160
    %v1743 = vunpack.c.h.b16 %v1160
    %v1744 = vunpack.c.l.b16 %v1161
    %v1745 = vunpack.c.h.b16 %v1161
    %v1746 = vunpack.c.l.b16 %v1162
    %v1747 = vunpack.c.h.b16 %v1162
    %v1748 = vunpack.c.l.b16 %v1163
    %v1749 = vunpack.c.h.b16 %v1163
    %v1750 = vunpack.c.l.b16 %v1164
    %v1751 = vunpack.c.h.b16 %v1164
    %v1752 = vunpack.c.l.b16 %v1165
    %v1753 = vunpack.c.h.b16 %v1165
    %v1754 = vunpack.c.l.b16 %v1166
    %v1755 = vunpack.c.h.b16 %v1166
    %v1756 = vunpack.c.l.b16 %v1167
    %v1757 = vunpack.c.h.b16 %v1167
    %v1758 = vunpack.c.l.b16 %v1168
    %v1759 = vunpack.c.h.b16 %v1168
    %v1760 = vunpack.c.l.b16 %v1169
    %v1761 = vunpack.c.h.b16 %v1169
    %v1762 = vunpack.c.l.b16 %v1170
    %v1763 = vunpack.c.h.b16 %v1170
    %v1764 = vunpack.c.l.b16 %v1171
    %v1765 = vunpack.c.h.b16 %v1171
    %v1766 = vunpack.c.l.b16 %v1172
    %v1767 = vunpack.c.h.b16 %v1172
    %v1768 = vunpack.c.l.b16 %v1173
    %v1769 = vunpack.c.h.b16 %v1173
    %v1770 = vunpack.c.l.b16 %v1174
    %v1771 = vunpack.c.h.b16 %v1174
    %v1772 = vunpack.c.l.b16 %v1175
    %v1773 = vunpack.c.h.b16 %v1175
    %v1774 = vunpack.c.l.b16 %v1176
    %v1775 = vunpack.c.h.b16 %v1176
    %v1776 = vunpack.c.l.b16 %v1177
    %v1777 = vunpack.c.h.b16 %v1177
    %v1778 = vunpack.c.l.b16 %v1178
    %v1779 = vunpack.c.h.b16 %v1178
    %v1780 = vunpack.c.l.b16 %v1179
    %v1781 = vunpack.c.h.b16 %v1179
    %v1782 = vunpack.c.l.b16 %v1180
    %v1783 = vunpack.c.h.b16 %v1180
    %v1784 = vunpack.c.l.b16 %v1181
    %v1785 = vunpack.c.h.b16 %v1181
    %v1786 = vunpack.c.l.b16 %v1182
    %v1787 = vunpack.c.h.b16 %v1182
    %v1788 = vunpack.c.l.b16 %v1183
    %v1789 = vunpack.c.h.b16 %v1183
    %v1790 = vunpack.c.l.b16 %v1184
    %v1791 = vunpack.c.h.b16 %v1184
    %v1792 = vunpack.c.l.b16 %v1185
    %v1793 = vunpack.c.h.b16 %v1185
    %v1794 = vunpack.c.l.b16 %v1186
    %v1795 = vunpack.c.h.b16 %v1186
    %v1796 = vunpack.c.l.b16 %v1187
    %v1797 = vunpack.c.h.b16 %v1187
    %v1798 = vunpack.c.l.b16 %v1188
    %v1799 = vunpack.c.h.b16 %v1188
    %v1800 = vunpack.c.l.b16 %v1189
    %v1801 = vunpack.c.h.b16 %v1189
    %v1802 = vunpack.c.l.b16 %v1190
    %v1803 = vunpack.c.h.b16 %v1190
    %v1804 = vunpack.c.l.b16 %v1191
    %v1805 = vunpack.c.h.b16 %v1191
    %v1806 = vunpack.c.l.b16 %v1192
    %v1807 = vunpack.c.h.b16 %v1192
    %v1808 = vunpack.c.l.b16 %v1193
    %v1809 = vunpack.c.h.b16 %v1193
    %v1810 = vunpack.c.l.b16 %v1194
    %v1811 = vunpack.c.h.b16 %v1194
    %v1812 = vunpack.c.l.b16 %v1195
    %v1813 = vunpack.c.h.b16 %v1195
    %v1814 = vunpack.c.l.b16 %v1196
    %v1815 = vunpack.c.h.b16 %v1196
    %v1816 = vunpack.c.l.b16 %v1197
    %v1817 = vunpack.c.h.b16 %v1197
    %v1818 = vunpack.c.l.b16 %v1198
    %v1819 = vunpack.c.h.b16 %v1198
    %v1820 = vunpack.c.l.b16 %v1199
    %v1821 = vunpack.c.h.b16 %v1199
    %v1822 = vunpack.c.l.b16 %v1200
    %v1823 = vunpack.c.h.b16 %v1200
    %v1824 = vunpack.c.l.b16 %v1201
    %v1825 = vunpack.c.h.b16 %v1201
    %v1826 = vunpack.c.l.b16 %v1202
    %v1827 = vunpack.c.h.b16 %v1202
    %v1828 = vunpack.c.l.b16 %v1203
    %v1829 = vunpack.c.h.b16 %v1203
    %v1830 = vunpack.c.l.b16 %v1204
    %v1831 = vunpack.c.h.b16 %v1204
    %v1832 = vunpack.c.l.b16 %v1205
    %v1833 = vunpack.c.h.b16 %v1205
    %v1834 = vunpack.c.l.b16 %v1206
    %v1835 = vunpack.c.h.b16 %v1206
    %v1836 = vunpack.c.l.b16 %v1207
    %v1837 = vunpack.c.h.b16 %v1207
    %v1838 = vunpack.c.l.b16 %v1208
    %v1839 = vunpack.c.h.b16 %v1208
    %v1840 = vunpack.c.l.b16 %v1209
    %v1841 = vunpack.c.h.b16 %v1209
    %v1842 = vunpack.c.l.b16 %v1210
    %v1843 = vunpack.c.h.b16 %v1210
    %v1844 = vunpack.c.l.b16 %v1211
    %v1845 = vunpack.c.h.b16 %v1211
    %v1846 = vunpack.c.l.b16 %v1212
    %v1847 = vunpack.c.h.b16 %v1212
    %v1848 = vunpack.c.l.b16 %v1213
    %v1849 = vunpack.c.h.b16 %v1213
    %v1850 = vunpack.c.l.b16 %v1214
    %v1851 = vunpack.c.h.b16 %v1214
    %v1852 = vunpack.c.l.b16 %v1215
    %v1853 = vunpack.c.h.b16 %v1215
    %v1854 = vunpack.c.l.b16 %v1216
    %v1855 = vunpack.c.h.b16 %v1216
    %v1856 = vunpack.c.l.b16 %v1217
    %v1857 = vunpack.c.h.b16 %v1217
    %v1858 = vunpack.c.l.b16 %v1218
    %v1859 = vunpack.c.h.b16 %v1218
    %v1860 = vunpack.c.l.b16 %v1219
    %v1861 = vunpack.c.h.b16 %v1219
    %v1862 = vunpack.c.l.b16 %v1220
    %v1863 = vunpack.c.h.b16 %v1220
    %v1864 = vunpack.c.l.b16 %v1221
    %v1865 = vunpack.c.h.b16 %v1221
    %v1866 = vunpack.c.l.b16 %v1222
    %v1867 = vunpack.c.h.b16 %v1222
    %v1868 = vunpack.c.l.b16 %v1223
    %v1869 = vunpack.c.h.b16 %v1223
    %v1870 = vunpack.c.l.b16 %v1224
    %v1871 = vunpack.c.h.b16 %v1224
    %v1872 = vunpack.c.l.b16 %v1225
    %v1873 = vunpack.c.h.b16 %v1225
    %v1874 = vunpack.c.l.b16 %v1226
    %v1875 = vunpack.c.h.b16 %v1226
    %v1876 = vunpack.c.l.b16 %v1227
    %v1877 = vunpack.c.h.b16 %v1227
    %v1878 = vunpack.c.l.b16 %v1228
    %v1879 = vunpack.c.h.b16 %v1228
    %v1880 = vunpack.c.l.b16 %v1229
    %v1881 = vunpack.c.h.b16 %v1229
    %v1882 = vunpack.c.l.b16 %v1230
    %v1883 = vunpack.c.h.b16 %v1230
    %v1884 = vunpack.c.l.b16 %v1231
    %v1885 = vunpack.c.h.b16 %v1231
    %v1886 = vunpack.c.l.b16 %v1232
    %v1887 = vunpack.c.h.b16 %v1232
    %v1888 = vunpack.c.l.b16 %v1233
    %v1889 = vunpack.c.h.b16 %v1233
    %v1890 = vunpack.c.l.b16 %v1234
    %v1891 = vunpack.c.h.b16 %v1234
    %v1892 = vunpack.c.l.b16 %v1235
    %v1893 = vunpack.c.h.b16 %v1235
    %v1894 = vunpack.c.l.b16 %v1236
    %v1895 = vunpack.c.h.b16 %v1236
    %v1896 = vunpack.c.l.b16 %v1237
    %v1897 = vunpack.c.h.b16 %v1237
    %v1898 = vunpack.c.l.b16 %v1238
    %v1899 = vunpack.c.h.b16 %v1238
    %v1900 = vunpack.c.l.b16 %v1239
    %v1901 = vunpack.c.h.b16 %v1239
    %v1902 = vunpack.c.l.b16 %v1240
    %v1903 = vunpack.c.h.b16 %v1240
    %v1904 = vunpack.c.l.b16 %v1241
    %v1905 = vunpack.c.h.b16 %v1241
    %v1906 = vunpack.c.l.b16 %v1242
    %v1907 = vunpack.c.h.b16 %v1242
    %v1908 = vunpack.c.l.b16 %v1243
    %v1909 = vunpack.c.h.b16 %v1243
    %v1910 = vunpack.c.l.b16 %v1244
    %v1911 = vunpack.c.h.b16 %v1244
    %v1912 = vunpack.c.l.b16 %v1245
    %v1913 = vunpack.c.h.b16 %v1245
    %v1914 = vunpack.c.l.b16 %v1246
    %v1915 = vunpack.c.h.b16 %v1246
    %v1916 = vunpack.c.l.b16 %v1247
    %v1917 = vunpack.c.h.b16 %v1247
    %v1918 = vunpack.c.l.b16 %v1248
    %v1919 = vunpack.c.h.b16 %v1248
    %v1920 = vunpack.c.l.b16 %v1249
    %v1921 = vunpack.c.h.b16 %v1249
    %v1922 = vunpack.c.l.b16 %v1250
    %v1923 = vunpack.c.h.b16 %v1250
    %v1924 = vunpack.c.l.b16 %v1251
    %v1925 = vunpack.c.h.b16 %v1251
    %v1926 = vunpack.c.l.b16 %v1252
    %v1927 = vunpack.c.h.b16 %v1252
    %v1928 = vunpack.c.l.b16 %v1253
    %v1929 = vunpack.c.h.b16 %v1253
    %v1930 = vunpack.c.l.b16 %v1254
    %v1931 = vunpack.c.h.b16 %v1254
    %v1932 = vunpack.c.l.b16 %v1255
    %v1933 = vunpack.c.h.b16 %v1255
    %v1934 = vunpack.c.l.b16 %v1256
    %v1935 = vunpack.c.h.b16 %v1256
    %v1936 = vunpack.c.l.b16 %v1257
    %v1937 = vunpack.c.h.b16 %v1257
    %v1938 = vunpack.c.l.b16 %v1258
    %v1939 = vunpack.c.h.b16 %v1258
    %v1940 = vunpack.c.l.b16 %v1259
    %v1941 = vunpack.c.h.b16 %v1259
    %v1942 = vunpack.c.l.b16 %v1260
    %v1943 = vunpack.c.h.b16 %v1260
    %v1944 = vunpack.c.l.b16 %v1261
    %v1945 = vunpack.c.h.b16 %v1261
    %v1946 = vunpack.c.l.b16 %v1262
    %v1947 = vunpack.c.h.b16 %v1262
    %v1948 = vunpack.c.l.b16 %v1263
    %v1949 = vunpack.c.h.b16 %v1263
    %v1950 = vunpack.c.l.b16 %v1264
    %v1951 = vunpack.c.h.b16 %v1264
    %v1952 = vunpack.c.l.b16 %v1265
    %v1953 = vunpack.c.h.b16 %v1265
    %v1954 = vunpack.c.l.b16 %v1266
    %v1955 = vunpack.c.h.b16 %v1266
    %v1956 = vunpack.c.l.b16 %v1267
    %v1957 = vunpack.c.h.b16 %v1267
    %v1958 = vunpack.c.l.b16 %v1268
    %v1959 = vunpack.c.h.b16 %v1268
    %v1960 = vunpack.c.l.b16 %v1269
    %v1961 = vunpack.c.h.b16 %v1269
    %v1962 = vunpack.c.l.b16 %v1270
    %v1963 = vunpack.c.h.b16 %v1270
    %v1964 = vunpack.c.l.b16 %v1271
    %v1965 = vunpack.c.h.b16 %v1271
    %v1966 = vpack.c.b16 %v1522, %v1518
    %v1967 = vpack.c.b16 %v1523, %v1519
    %v1968 = vpack.c.b16 %v1524, %v1520
    %v1969 = vpack.c.b16 %v1525, %v1521
    %v1970 = vpack.c.b16 %v1530, %v1526
    %v1971 = vpack.c.b16 %v1531, %v1527
    %v1972 = vpack.c.b16 %v1532, %v1528
    %v1973 = vpack.c.b16 %v1533, %v1529
    %v1974 = vpack.c.b16 %v1538, %v1534
    %v1975 = vpack.c.b16 %v1539, %v1535
    %v1976 = vpack.c.b16 %v1540, %v1536
    %v1977 = vpack.c.b16 %v1541, %v1537
    %v1978 = vpack.c.b16 %v1546, %v1542
    %v1979 = vpack.c.b16 %v1547, %v1543
    %v1980 = vpack.c.b16 %v1548, %v1544
    %v1981 = vpack.c.b16 %v1549, %v1545
    %v1982 = vpack.c.b16 %v1554, %v1550
    %v1983 = vpack.c.b16 %v1555, %v1551
    %v1984 = vpack.c.b16 %v1556, %v1552
    %v1985 = vpack.c.b16 %v1557, %v1553
    %v1986 = vpack.c.b16 %v1562, %v1558
    %v1987 = vpack.c.b16 %v1563, %v1559
    %v1988 = vpack.c.b16 %v1564, %v1560
    %v1989 = vpack.c.b16 %v1565, %v1561
    %v1990 = vpack.c.b16 %v1570, %v1566
    %v1991 = vpack.c.b16 %v1571, %v1567
    %v1992 = vpack.c.b16 %v1572, %v1568
    %v1993 = vpack.c.b16 %v1573, %v1569
    %v1994 = vpack.c.b16 %v1578, %v1574
    %v1995 = vpack.c.b16 %v1579, %v1575
    %v1996 = vpack.c.b16 %v1580, %v1576
    %v1997 = vpack.c.b16 %v1581, %v1577
    %v1998 = vpack.c.b16 %v1586, %v1582
    %v1999 = vpack.c.b16 %v1587, %v1583
    %v2000 = vpack.c.b16 %v1588, %v1584
    %v2001 = vpack.c.b16 %v1589, %v1585
    %v2002 = vpack.c.b16 %v1594, %v1590
    %v2003 = vpack.c.b16 %v1595, %v1591
    %v2004 = vpack.c.b16 %v1596, %v1592
    %v2005 = vpack.c.b16 %v1597, %v1593
    %v2006 = vpack.c.b16 %v1602, %v1598
    %v2007 = vpack.c.b16 %v1603, %v1599
    %v2008 = vpack.c.b16 %v1604, %v1600
    %v2009 = vpack.c.b16 %v1605, %v1601
    %v2010 = vpack.c.b16 %v1610, %v1606
    %v2011 = vpack.c.b16 %v1611, %v1607
    %v2012 = vpack.c.b16 %v1612, %v1608
    %v2013 = vpack.c.b16 %v1613, %v1609
    %v2014 = vpack.c.b16 %v1618, %v1614
    %v2015 = vpack.c.b16 %v1619, %v1615
    %v2016 = vpack.c.b16 %v1620, %v1616
    %v2017 = vpack.c.b16 %v1621, %v1617
    %v2018 = vpack.c.b16 %v1626, %v1622
    %v2019 = vpack.c.b16 %v1627, %v1623
    %v2020 = vpack.c.b16 %v1628, %v1624
    %v2021 = vpack.c.b16 %v1629, %v1625
    %v2022 = vpack.c.b16 %v1634, %v1630
    %v2023 = vpack.c.b16 %v1635, %v1631
    %v2024 = vpack.c.b16 %v1636, %v1632
    %v2025 = vpack.c.b16 %v1637, %v1633
    %v2026 = vpack.c.b16 %v1642, %v1638
    %v2027 = vpack.c.b16 %v1643, %v1639
    %v2028 = vpack.c.b16 %v1644, %v1640
    %v2029 = vpack.c.b16 %v1645, %v1641
    %v2030 = vpack.c.b16 %v1650, %v1646
    %v2031 = vpack.c.b16 %v1651, %v1647
    %v2032 = vpack.c.b16 %v1652, %v1648
    %v2033 = vpack.c.b16 %v1653, %v1649
    %v2034 = vpack.c.b16 %v1658, %v1654
    %v2035 = vpack.c.b16 %v1659, %v1655
    %v2036 = vpack.c.b16 %v1660, %v1656
    %v2037 = vpack.c.b16 %v1661, %v1657
    %v2038 = vpack.c.b16 %v1666, %v1662
    %v2039 = vpack.c.b16 %v1667, %v1663
    %v2040 = vpack.c.b16 %v1668, %v1664
    %v2041 = vpack.c.b16 %v1669, %v1665
    %v2042 = vpack.c.b16 %v1674, %v1670
    %v2043 = vpack.c.b16 %v1675, %v1671
    %v2044 = vpack.c.b16 %v1676, %v1672
    %v2045 = vpack.c.b16 %v1677, %v1673
    %v2046 = vpack.c.b16 %v1682, %v1678
    %v2047 = vpack.c.b16 %v1683, %v1679
    %v2048 = vpack.c.b16 %v1684, %v1680
    %v2049 = vpack.c.b16 %v1685, %v1681
    %v2050 = vpack.c.b16 %v1690, %v1686
    %v2051 = vpack.c.b16 %v1691, %v1687
    %v2052 = vpack.c.b16 %v1692, %v1688
    %v2053 = vpack.c.b16 %v1693, %v1689
    %v2054 = vpack.c.b16 %v1698, %v1694
    %v2055 = vpack.c.b16 %v1699, %v1695
    %v2056 = vpack.c.b16 %v1700, %v1696
    %v2057 = vpack.c.b16 %v1701, %v1697
    %v2058 = vpack.c.b16 %v1706, %v1702
    %v2059 = vpack.c.b16 %v1707, %v1703
    %v2060 = vpack.c.b16 %v1708, %v1704
    %v2061 = vpack.c.b16 %v1709, %v1705
    %v2062 = vpack.c.b16 %v1714, %v1710
    %v2063 = vpack.c.b16 %v1715, %v1711
    %v2064 = vpack.c.b16 %v1716, %v1712
    %v2065 = vpack.c.b16 %v1717, %v1713
    %v2066 = vpack.c.b16 %v1722, %v1718
    %v2067 = vpack.c.b16 %v1723, %v1719
    %v2068 = vpack.c.b16 %v1724, %v1720
    %v2069 = vpack.c.b16 %v1725, %v1721
    %v2070 = vpack.c.b16 %v1730, %v1726
    %v2071 = vpack.c.b16 %v1731, %v1727
    %v2072 = vpack.c.b16 %v1732, %v1728
    %v2073 = vpack.c.b16 %v1733, %v1729
    %v2074 = vpack.c.b16 %v1738, %v1734
    %v2075 = vpack.c.b16 %v1739, %v1735
    %v2076 = vpack.c.b16 %v1740, %v1736
    %v2077 = vpack.c.b16 %v1741, %v1737
    %v2078 = vpack.c.b16 %v1746, %v1742
    %v2079 = vpack.c.b16 %v1747, %v1743
    %v2080 = vpack.c.b16 %v1748, %v1744
    %v2081 = vpack.c.b16 %v1749, %v1745
    %v2082 = vpack.c.b16 %v1754, %v1750
    %v2083 = vpack.c.b16 %v1755, %v1751
    %v2084 = vpack.c.b16 %v1756, %v1752
    %v2085 = vpack.c.b16 %v1757, %v1753
    %v2086 = vpack.c.b16 %v1762, %v1758
    %v2087 = vpack.c.b16 %v1763, %v1759
    %v2088 = vpack.c.b16 %v1764, %v1760
    %v2089 = vpack.c.b16 %v1765, %v1761
    %v2090 = vpack.c.b16 %v1770, %v1766
    %v2091 = vpack.c.b16 %v1771, %v1767
    %v2092 = vpack.c.b16 %v1772, %v1768
    %v2093 = vpack.c.b16 %v1773, %v1769
    %v2094 = vpack.c.b16 %v1778, %v1774
    %v2095 = vpack.c.b16 %v1779, %v1775
    %v2096 = vpack.c.b16 %v1780, %v1776
    %v2097 = vpack.c.b16 %v1781, %v1777
    %v2098 = vpack.c.b16 %v1786, %v1782
    %v2099 = vpack.c.b16 %v1787, %v1783
    %v2100 = vpack.c.b16 %v1788, %v1784
    %v2101 = vpack.c.b16 %v1789, %v1785
    %v2102 = vpack.c.b16 %v1794, %v1790
    %v2103 = vpack.c.b16 %v1795, %v1791
    %v2104 = vpack.c.b16 %v1796, %v1792
    %v2105 = vpack.c.b16 %v1797, %v1793
    %v2106 = vpack.c.b16 %v1802, %v1798
    %v2107 = vpack.c.b16 %v1803, %v1799
    %v2108 = vpack.c.b16 %v1804, %v1800
    %v2109 = vpack.c.b16 %v1805, %v1801
    %v2110 = vpack.c.b16 %v1810, %v1806
    %v2111 = vpack.c.b16 %v1811, %v1807
    %v2112 = vpack.c.b16 %v1812, %v1808
    %v2113 = vpack.c.b16 %v1813, %v1809
    %v2114 = vpack.c.b16 %v1818, %v1814
    %v2115 = vpack.c.b16 %v1819, %v1815
    %v2116 = vpack.c.b16 %v1820, %v1816
    %v2117 = vpack.c.b16 %v1821, %v1817
    %v2118 = vpack.c.b16 %v1826, %v1822
    %v2119 = vpack.c.b16 %v1827, %v1823
    %v2120 = vpack.c.b16 %v1828, %v1824
    %v2121 = vpack.c.b16 %v1829, %v1825
    %v2122 = vpack.c.b16 %v1834, %v1830
    %v2123 = vpack.c.b16 %v1835, %v1831
    %v2124 = vpack.c.b16 %v1836, %v1832
    %v2125 = vpack.c.b16 %v1837, %v1833
    %v2126 = vpack.c.b16 %v1842, %v1838
    %v2127 = vpack.c.b16 %v1843, %v1839
    %v2128 = vpack.c.b16 %v1844, %v1840
    %v2129 = vpack.c.b16 %v1845, %v1841
    %v2130 = vpack.c.b16 %v1850, %v1846
    %v2131 = vpack.c.b16 %v1851, %v1847
    %v2132 = vpack.c.b16 %v1852, %v1848
    %v2133 = vpack.c.b16 %v1853, %v1849
    %v2134 = vpack.c.b16 %v1858, %v1854
    %v2135 = vpack.c.b16 %v1859, %v1855
    %v2136 = vpack.c.b16 %v1860, %v1856
    %v2137 = vpack.c.b16 %v1861, %v1857
    %v2138 = vpack.c.b16 %v1866, %v1862
    %v2139 = vpack.c.b16 %v1867, %v1863
    %v2140 = vpack.c.b16 %v1868, %v1864
    %v2141 = vpack.c.b16 %v1869, %v1865
    %v2142 = vpack.c.b16 %v1874, %v1870
    %v2143 = vpack.c.b16 %v1875, %v1871
    %v2144 = vpack.c.b16 %v1876, %v1872
    %v2145 = vpack.c.b16 %v1877, %v1873
    %v2146 = vpack.c.b16 %v1882, %v1878
    %v2147 = vpack.c.b16 %v1883, %v1879
    %v2148 = vpack.c.b16 %v1884, %v1880
    %v2149 = vpack.c.b16 %v1885, %v1881
    %v2150 = vpack.c.b16 %v1890, %v1886
    %v2151 = vpack.c.b16 %v1891, %v1887
    %v2152 = vpack.c.b16 %v1892, %v1888
    %v2153 = vpack.c.b16 %v1893, %v1889
    %v2154 = vpack.c.b16 %v1898, %v1894
    %v2155 = vpack.c.b16 %v1899, %v1895
    %v2156 = vpack.c.b16 %v1900, %v1896
    %v2157 = vpack.c.b16 %v1901, %v1897
    %v2158 = vpack.c.b16 %v1906, %v1902
    %v2159 = vpack.c.b16 %v1907, %v1903
    %v2160 = vpack.c.b16 %v1908, %v1904
    %v2161 = vpack.c.b16 %v1909, %v1905
    %v2162 = vpack.c.b16 %v1914, %v1910
    %v2163 = vpack.c.b16 %v1915, %v1911
    %v2164 = vpack.c.b16 %v1916, %v1912
    %v2165 = vpack.c.b16 %v1917, %v1913
    %v2166 = vpack.c.b16 %v1922, %v1918
    %v2167 = vpack.c.b16 %v1923, %v1919
    %v2168 = vpack.c.b16 %v1924, %v1920
    %v2169 = vpack.c.b16 %v1925, %v1921
    %v2170 = vpack.c.b16 %v1930, %v1926
    %v2171 = vpack.c.b16 %v1931, %v1927
    %v2172 = vpack.c.b16 %v1932, %v1928
    %v2173 = vpack.c.b16 %v1933, %v1929
    %v2174 = vpack.c.b16 %v1938, %v1934
    %v2175 = vpack.c.b16 %v1939, %v1935
    %v2176 = vpack.c.b16 %v1940, %v1936
    %v2177 = vpack.c.b16 %v1941, %v1937
    %v2178 = vpack.c.b16 %v1946, %v1942
    %v2179 = vpack.c.b16 %v1947, %v1943
    %v2180 = vpack.c.b16 %v1948, %v1944
    %v2181 = vpack.c.b16 %v1949, %v1945
    %v2182 = vpack.c.b16 %v1954, %v1950
    %v2183 = vpack.c.b16 %v1955, %v1951
    %v2184 = vpack.c.b16 %v1956, %v1952
    %v2185 = vpack.c.b16 %v1957, %v1953
    %v2186 = vpack.c.b16 %v1962, %v1958
    %v2187 = vpack.c.b16 %v1963, %v1959
    %v2188 = vpack.c.b16 %v1964, %v1960
    %v2189 = vpack.c.b16 %v1965, %v1961
    %2414 = vmatprep.subr.bf16.mxu0 %v1995
    %2415 = vmatpush1.bf16.msra.mxu0 %v1994
    %2416 = vmatprep.subr.bf16.mxu0 %v1991
    %2417 = vmatpush1.bf16.msra.mxu0 %v1990
    %2418 = vmatprep.subr.bf16.mxu0 %v1987
    %2419 = vmatpush1.bf16.msra.mxu0 %v1986
    %2420 = vmatprep.subr.bf16.mxu0 %v1983
    %2421 = vmatpush1.bf16.msra.mxu0 %v1982
    %2422 = vmatprep.subr.bf16.mxu0 %v1979
    %2423 = vmatpush1.bf16.msra.mxu0 %v1978
    %2424 = vmatprep.subr.bf16.mxu0 %v1975
    %2425 = vmatpush1.bf16.msra.mxu0 %v1974
    %2426 = vmatprep.subr.bf16.mxu0 %v1971
    %2427 = vmatpush1.bf16.msra.mxu0 %v1970
    %2428 = vmatprep.subr.bf16.mxu0 %v1967
    %2429 = vmatpush1.bf16.msra.mxu0 %v1966
    %2430 = vmatprep.subr.bf16.mxu0 %v2027
    %2431 = vmatpush2.bf16.msra.mxu0 %v2026
    %2432 = vmatprep.subr.bf16.mxu0 %v2023
    %2433 = vmatpush2.bf16.msra.mxu0 %v2022
    %2434 = vmatprep.subr.bf16.mxu0 %v2019
    %2435 = vmatpush2.bf16.msra.mxu0 %v2018
    %2436 = vmatprep.subr.bf16.mxu0 %v2015
    %2437 = vmatpush2.bf16.msra.mxu0 %v2014
    %2438 = vmatprep.subr.bf16.mxu0 %v2011
    %2439 = vmatpush2.bf16.msra.mxu0 %v2010
    %2440 = vmatprep.subr.bf16.mxu0 %v2007
    %2441 = vmatpush2.bf16.msra.mxu0 %v2006
    %2442 = vmatprep.subr.bf16.mxu0 %v2003
    %2443 = vmatpush2.bf16.msra.mxu0 %v2002
    %2444 = vmatprep.subr.bf16.mxu0 %v1999
    %2445 = vmatpush2.bf16.msra.mxu0 %v1998
    %2446 = vmatprep.mubr.bf16.mxu0 %v1042
    %2447 = vmatmul.mubr.bf16.gmra.mxu0 %v1041
    %v2448 = vpop.f32.mrf.mxu0
    %v2449 = vadd.f32 %v1277, %v2448
    %v2450 = vpop.f32.mrf.mxu0
    %v2451 = vadd.f32 %v1281, %v2450
    %v2452 = vpop.f32.mrf.mxu0
    %v2453 = vpop.f32.mrf.mxu0
    %2454 = vdwg.mxu0
    %2455 = vmatprep.subr.bf16.mxu0 %v2059
    %2456 = vmatpush1.bf16.msra.mxu0 %v2058
    %2457 = vmatprep.subr.bf16.mxu0 %v2055
    %2458 = vmatpush1.bf16.msra.mxu0 %v2054
    %2459 = vmatprep.subr.bf16.mxu0 %v2051
    %2460 = vmatpush1.bf16.msra.mxu0 %v2050
    %2461 = vmatprep.subr.bf16.mxu0 %v2047
    %2462 = vmatpush1.bf16.msra.mxu0 %v2046
    %2463 = vmatprep.subr.bf16.mxu0 %v2043
    %2464 = vmatpush1.bf16.msra.mxu0 %v2042
    %2465 = vmatprep.subr.bf16.mxu0 %v2039
    %2466 = vmatpush1.bf16.msra.mxu0 %v2038
    %2467 = vmatprep.subr.bf16.mxu0 %v2035
    %2468 = vmatpush1.bf16.msra.mxu0 %v2034
    %2469 = vmatprep.subr.bf16.mxu0 %v2031
    %2470 = vmatpush1.bf16.msra.mxu0 %v2030
    %2471 = vmatprep.subr.bf16.mxu0 %v2091
    %2472 = vmatpush2.bf16.msra.mxu0 %v2090
    %2473 = vmatprep.subr.bf16.mxu0 %v2087
    %2474 = vmatpush2.bf16.msra.mxu0 %v2086
    %2475 = vmatprep.subr.bf16.mxu0 %v2083
    %2476 = vmatpush2.bf16.msra.mxu0 %v2082
    %2477 = vmatprep.subr.bf16.mxu0 %v2079
    %2478 = vmatpush2.bf16.msra.mxu0 %v2078
    %2479 = vmatprep.subr.bf16.mxu0 %v2075
    %2480 = vmatpush2.bf16.msra.mxu0 %v2074
    %2481 = vmatprep.subr.bf16.mxu0 %v2071
    %2482 = vmatpush2.bf16.msra.mxu0 %v2070
    %2483 = vmatprep.subr.bf16.mxu0 %v2067
    %2484 = vmatpush2.bf16.msra.mxu0 %v2066
    %2485 = vmatprep.subr.bf16.mxu0 %v2063
    %2486 = vmatpush2.bf16.msra.mxu0 %v2062
    %2487 = vmatprep.mubr.bf16.mxu0 %v1044
    %2488 = vmatmul.mubr.bf16.gmra.mxu0 %v1043
    %v2489 = vpop.f32.mrf.mxu0
    %v2490 = vadd.f32 %v2449, %v2489
    %v2491 = vpop.f32.mrf.mxu0
    %v2492 = vadd.f32 %v2451, %v2491
    %v2493 = vpop.f32.mrf.mxu0
    %v2494 = vpop.f32.mrf.mxu0
    %2495 = vdwg.mxu0
    %2496 = vmatprep.subr.bf16.mxu0 %v2123
    %2497 = vmatpush1.bf16.msra.mxu0 %v2122
    %2498 = vmatprep.subr.bf16.mxu0 %v2119
    %2499 = vmatpush1.bf16.msra.mxu0 %v2118
    %2500 = vmatprep.subr.bf16.mxu0 %v2115
    %2501 = vmatpush1.bf16.msra.mxu0 %v2114
    %2502 = vmatprep.subr.bf16.mxu0 %v2111
    %2503 = vmatpush1.bf16.msra.mxu0 %v2110
    %2504 = vmatprep.subr.bf16.mxu0 %v2107
    %2505 = vmatpush1.bf16.msra.mxu0 %v2106
    %2506 = vmatprep.subr.bf16.mxu0 %v2103
    %2507 = vmatpush1.bf16.msra.mxu0 %v2102
    %2508 = vmatprep.subr.bf16.mxu0 %v2099
    %2509 = vmatpush1.bf16.msra.mxu0 %v2098
    %2510 = vmatprep.subr.bf16.mxu0 %v2095
    %2511 = vmatpush1.bf16.msra.mxu0 %v2094
    %2512 = vmatprep.subr.bf16.mxu0 %v2155
    %2513 = vmatpush2.bf16.msra.mxu0 %v2154
    %2514 = vmatprep.subr.bf16.mxu0 %v2151
    %2515 = vmatpush2.bf16.msra.mxu0 %v2150
    %2516 = vmatprep.subr.bf16.mxu0 %v2147
    %2517 = vmatpush2.bf16.msra.mxu0 %v2146
    %2518 = vmatprep.subr.bf16.mxu0 %v2143
    %2519 = vmatpush2.bf16.msra.mxu0 %v2142
    %2520 = vmatprep.subr.bf16.mxu0 %v2139
    %2521 = vmatpush2.bf16.msra.mxu0 %v2138
    %2522 = vmatprep.subr.bf16.mxu0 %v2135
    %2523 = vmatpush2.bf16.msra.mxu0 %v2134
    %2524 = vmatprep.subr.bf16.mxu0 %v2131
    %2525 = vmatpush2.bf16.msra.mxu0 %v2130
    %2526 = vmatprep.subr.bf16.mxu0 %v2127
    %2527 = vmatpush2.bf16.msra.mxu0 %v2126
    %2528 = vmatprep.mubr.bf16.mxu0 %v1046
    %2529 = vmatmul.mubr.bf16.gmra.mxu0 %v1045
    %v2530 = vpop.f32.mrf.mxu0
    %v2531 = vadd.f32 %v2490, %v2530
    %v2532 = vpop.f32.mrf.mxu0
    %v2533 = vadd.f32 %v2492, %v2532
    %v2534 = vpop.f32.mrf.mxu0
    %v2535 = vpop.f32.mrf.mxu0
    %2536 = vdwg.mxu0
    %2537 = vmatprep.subr.bf16.mxu0 %v2187
    %2538 = vmatpush1.bf16.msra.mxu0 %v2186
    %2539 = vmatprep.subr.bf16.mxu0 %v2183
    %2540 = vmatpush1.bf16.msra.mxu0 %v2182
    %2541 = vmatprep.subr.bf16.mxu0 %v2179
    %2542 = vmatpush1.bf16.msra.mxu0 %v2178
    %2543 = vmatprep.subr.bf16.mxu0 %v2175
    %2544 = vmatpush1.bf16.msra.mxu0 %v2174
    %2545 = vmatprep.subr.bf16.mxu0 %v2171
    %2546 = vmatpush1.bf16.msra.mxu0 %v2170
    %2547 = vmatprep.subr.bf16.mxu0 %v2167
    %2548 = vmatpush1.bf16.msra.mxu0 %v2166
    %2549 = vmatprep.subr.bf16.mxu0 %v2163
    %2550 = vmatpush1.bf16.msra.mxu0 %v2162
    %2551 = vmatprep.subr.bf16.mxu0 %v2159
    %2552 = vmatpush1.bf16.msra.mxu0 %v2158
    %2553 = vmatprep.subr.bf16.mxu0 0
    %2554 = vmatpush2.bf16.msra.mxu0 0
    %2555 = vmatprep.subr.bf16.mxu0 0
    %2556 = vmatpush2.bf16.msra.mxu0 0
    %2557 = vmatprep.subr.bf16.mxu0 0
    %2558 = vmatpush2.bf16.msra.mxu0 0
    %2559 = vmatprep.subr.bf16.mxu0 0
    %2560 = vmatpush2.bf16.msra.mxu0 0
    %2561 = vmatprep.subr.bf16.mxu0 0
    %2562 = vmatpush2.bf16.msra.mxu0 0
    %2563 = vmatprep.subr.bf16.mxu0 0
    %2564 = vmatpush2.bf16.msra.mxu0 0
    %2565 = vmatprep.subr.bf16.mxu0 0
    %2566 = vmatpush2.bf16.msra.mxu0 0
    %2567 = vmatprep.subr.bf16.mxu0 0
    %2568 = vmatpush2.bf16.msra.mxu0 0
    %2569 = vmatprep.mubr.bf16.mxu0 0
    %2570 = vmatmul.mubr.bf16.gmra.mxu0 %v1047
    %v2571 = vpop.f32.mrf.mxu0
    %v2572 = vadd.f32 %v2531, %v2571
    %v2573 = vpop.f32.mrf.mxu0
    %v2574 = vadd.f32 %v2533, %v2573
    %v2575 = vpop.f32.mrf.mxu0
    %v2576 = vpop.f32.mrf.mxu0
    %2577 = vdwg.mxu0
    %2578 = vmatprep.subr.bf16.mxu0 %v1997
    %2579 = vmatpush1.bf16.msra.mxu0 %v1996
    %2580 = vmatprep.subr.bf16.mxu0 %v1993
    %2581 = vmatpush1.bf16.msra.mxu0 %v1992
    %2582 = vmatprep.subr.bf16.mxu0 %v1989
    %2583 = vmatpush1.bf16.msra.mxu0 %v1988
    %2584 = vmatprep.subr.bf16.mxu0 %v1985
    %2585 = vmatpush1.bf16.msra.mxu0 %v1984
    %2586 = vmatprep.subr.bf16.mxu0 %v1981
    %2587 = vmatpush1.bf16.msra.mxu0 %v1980
    %2588 = vmatprep.subr.bf16.mxu0 %v1977
    %2589 = vmatpush1.bf16.msra.mxu0 %v1976
    %2590 = vmatprep.subr.bf16.mxu0 %v1973
    %2591 = vmatpush1.bf16.msra.mxu0 %v1972
    %2592 = vmatprep.subr.bf16.mxu0 %v1969
    %2593 = vmatpush1.bf16.msra.mxu0 %v1968
    %2594 = vmatprep.subr.bf16.mxu0 %v2029
    %2595 = vmatpush2.bf16.msra.mxu0 %v2028
    %2596 = vmatprep.subr.bf16.mxu0 %v2025
    %2597 = vmatpush2.bf16.msra.mxu0 %v2024
    %2598 = vmatprep.subr.bf16.mxu0 %v2021
    %2599 = vmatpush2.bf16.msra.mxu0 %v2020
    %2600 = vmatprep.subr.bf16.mxu0 %v2017
    %2601 = vmatpush2.bf16.msra.mxu0 %v2016
    %2602 = vmatprep.subr.bf16.mxu0 %v2013
    %2603 = vmatpush2.bf16.msra.mxu0 %v2012
    %2604 = vmatprep.subr.bf16.mxu0 %v2009
    %2605 = vmatpush2.bf16.msra.mxu0 %v2008
    %2606 = vmatprep.subr.bf16.mxu0 %v2005
    %2607 = vmatpush2.bf16.msra.mxu0 %v2004
    %2608 = vmatprep.subr.bf16.mxu0 %v2001
    %2609 = vmatpush2.bf16.msra.mxu0 %v2000
    %2610 = vmatprep.mubr.bf16.mxu0 %v1042
    %2611 = vmatmul.mubr.bf16.gmra.mxu0 %v1041
    %v2612 = vpop.f32.mrf.mxu0
    %v2613 = vadd.f32 %v1285, %v2612
    %v2614 = vpop.f32.mrf.mxu0
    %v2615 = vadd.f32 %v1289, %v2614
    %v2616 = vpop.f32.mrf.mxu0
    %v2617 = vpop.f32.mrf.mxu0
    %2618 = vdwg.mxu0
    %2619 = vmatprep.subr.bf16.mxu0 %v2061
    %2620 = vmatpush1.bf16.msra.mxu0 %v2060
    %2621 = vmatprep.subr.bf16.mxu0 %v2057
    %2622 = vmatpush1.bf16.msra.mxu0 %v2056
    %2623 = vmatprep.subr.bf16.mxu0 %v2053
    %2624 = vmatpush1.bf16.msra.mxu0 %v2052
    %2625 = vmatprep.subr.bf16.mxu0 %v2049
    %2626 = vmatpush1.bf16.msra.mxu0 %v2048
    %2627 = vmatprep.subr.bf16.mxu0 %v2045
    %2628 = vmatpush1.bf16.msra.mxu0 %v2044
    %2629 = vmatprep.subr.bf16.mxu0 %v2041
    %2630 = vmatpush1.bf16.msra.mxu0 %v2040
    %2631 = vmatprep.subr.bf16.mxu0 %v2037
    %2632 = vmatpush1.bf16.msra.mxu0 %v2036
    %2633 = vmatprep.subr.bf16.mxu0 %v2033
    %2634 = vmatpush1.bf16.msra.mxu0 %v2032
    %2635 = vmatprep.subr.bf16.mxu0 %v2093
    %2636 = vmatpush2.bf16.msra.mxu0 %v2092
    %2637 = vmatprep.subr.bf16.mxu0 %v2089
    %2638 = vmatpush2.bf16.msra.mxu0 %v2088
    %2639 = vmatprep.subr.bf16.mxu0 %v2085
    %2640 = vmatpush2.bf16.msra.mxu0 %v2084
    %2641 = vmatprep.subr.bf16.mxu0 %v2081
    %2642 = vmatpush2.bf16.msra.mxu0 %v2080
    %2643 = vmatprep.subr.bf16.mxu0 %v2077
    %2644 = vmatpush2.bf16.msra.mxu0 %v2076
    %2645 = vmatprep.subr.bf16.mxu0 %v2073
    %2646 = vmatpush2.bf16.msra.mxu0 %v2072
    %2647 = vmatprep.subr.bf16.mxu0 %v2069
    %2648 = vmatpush2.bf16.msra.mxu0 %v2068
    %2649 = vmatprep.subr.bf16.mxu0 %v2065
    %2650 = vmatpush2.bf16.msra.mxu0 %v2064
    %2651 = vmatprep.mubr.bf16.mxu0 %v1044
    %2652 = vmatmul.mubr.bf16.gmra.mxu0 %v1043
    %v2653 = vpop.f32.mrf.mxu0
    %v2654 = vadd.f32 %v2613, %v2653
    %v2655 = vpop.f32.mrf.mxu0
    %v2656 = vadd.f32 %v2615, %v2655
    %v2657 = vpop.f32.mrf.mxu0
    %v2658 = vpop.f32.mrf.mxu0
    %2659 = vdwg.mxu0
    %2660 = vmatprep.subr.bf16.mxu0 %v2125
    %2661 = vmatpush1.bf16.msra.mxu0 %v2124
    %2662 = vmatprep.subr.bf16.mxu0 %v2121
    %2663 = vmatpush1.bf16.msra.mxu0 %v2120
    %2664 = vmatprep.subr.bf16.mxu0 %v2117
    %2665 = vmatpush1.bf16.msra.mxu0 %v2116
    %2666 = vmatprep.subr.bf16.mxu0 %v2113
    %2667 = vmatpush1.bf16.msra.mxu0 %v2112
    %2668 = vmatprep.subr.bf16.mxu0 %v2109
    %2669 = vmatpush1.bf16.msra.mxu0 %v2108
    %2670 = vmatprep.subr.bf16.mxu0 %v2105
    %2671 = vmatpush1.bf16.msra.mxu0 %v2104
    %2672 = vmatprep.subr.bf16.mxu0 %v2101
    %2673 = vmatpush1.bf16.msra.mxu0 %v2100
    %2674 = vmatprep.subr.bf16.mxu0 %v2097
    %2675 = vmatpush1.bf16.msra.mxu0 %v2096
    %2676 = vmatprep.subr.bf16.mxu0 %v2157
    %2677 = vmatpush2.bf16.msra.mxu0 %v2156
    %2678 = vmatprep.subr.bf16.mxu0 %v2153
    %2679 = vmatpush2.bf16.msra.mxu0 %v2152
    %2680 = vmatprep.subr.bf16.mxu0 %v2149
    %2681 = vmatpush2.bf16.msra.mxu0 %v2148
    %2682 = vmatprep.subr.bf16.mxu0 %v2145
    %2683 = vmatpush2.bf16.msra.mxu0 %v2144
    %2684 = vmatprep.subr.bf16.mxu0 %v2141
    %2685 = vmatpush2.bf16.msra.mxu0 %v2140
    %2686 = vmatprep.subr.bf16.mxu0 %v2137
    %2687 = vmatpush2.bf16.msra.mxu0 %v2136
    %2688 = vmatprep.subr.bf16.mxu0 %v2133
    %2689 = vmatpush2.bf16.msra.mxu0 %v2132
    %2690 = vmatprep.subr.bf16.mxu0 %v2129
    %2691 = vmatpush2.bf16.msra.mxu0 %v2128
    %2692 = vmatprep.mubr.bf16.mxu0 %v1046
    %2693 = vmatmul.mubr.bf16.gmra.mxu0 %v1045
    %v2694 = vpop.f32.mrf.mxu0
    %v2695 = vadd.f32 %v2654, %v2694
    %v2696 = vpop.f32.mrf.mxu0
    %v2697 = vadd.f32 %v2656, %v2696
    %v2698 = vpop.f32.mrf.mxu0
    %v2699 = vpop.f32.mrf.mxu0
    %2700 = vdwg.mxu0
    %2701 = vmatprep.subr.bf16.mxu0 %v2189
    %2702 = vmatpush1.bf16.msra.mxu0 %v2188
    %2703 = vmatprep.subr.bf16.mxu0 %v2185
    %2704 = vmatpush1.bf16.msra.mxu0 %v2184
    %2705 = vmatprep.subr.bf16.mxu0 %v2181
    %2706 = vmatpush1.bf16.msra.mxu0 %v2180
    %2707 = vmatprep.subr.bf16.mxu0 %v2177
    %2708 = vmatpush1.bf16.msra.mxu0 %v2176
    %2709 = vmatprep.subr.bf16.mxu0 %v2173
    %2710 = vmatpush1.bf16.msra.mxu0 %v2172
    %2711 = vmatprep.subr.bf16.mxu0 %v2169
    %2712 = vmatpush1.bf16.msra.mxu0 %v2168
    %2713 = vmatprep.subr.bf16.mxu0 %v2165
    %2714 = vmatpush1.bf16.msra.mxu0 %v2164
    %2715 = vmatprep.subr.bf16.mxu0 %v2161
    %2716 = vmatpush1.bf16.msra.mxu0 %v2160
    %2717 = vmatprep.subr.bf16.mxu0 0
    %2718 = vmatpush2.bf16.msra.mxu0 0
    %2719 = vmatprep.subr.bf16.mxu0 0
    %2720 = vmatpush2.bf16.msra.mxu0 0
    %2721 = vmatprep.subr.bf16.mxu0 0
    %2722 = vmatpush2.bf16.msra.mxu0 0
    %2723 = vmatprep.subr.bf16.mxu0 0
    %2724 = vmatpush2.bf16.msra.mxu0 0
    %2725 = vmatprep.subr.bf16.mxu0 0
    %2726 = vmatpush2.bf16.msra.mxu0 0
    %2727 = vmatprep.subr.bf16.mxu0 0
    %2728 = vmatpush2.bf16.msra.mxu0 0
    %2729 = vmatprep.subr.bf16.mxu0 0
    %2730 = vmatpush2.bf16.msra.mxu0 0
    %2731 = vmatprep.subr.bf16.mxu0 0
    %2732 = vmatpush2.bf16.msra.mxu0 0
    %2733 = vmatprep.mubr.bf16.mxu0 0
    %2734 = vmatmul.mubr.bf16.gmra.mxu0 %v1047
    %v2735 = vpop.f32.mrf.mxu0
    %v2736 = vadd.f32 %v2695, %v2735
    %v2737 = vpop.f32.mrf.mxu0
    %v2738 = vadd.f32 %v2697, %v2737
    %v2739 = vpop.f32.mrf.mxu0
    %v2740 = vpop.f32.mrf.mxu0
    %2741 = vdwg.mxu0
    %v2742 = vmul.f32 %v2572, 0.5
    %v2743 = vmul.f32 %v2574, 0.5
    %v2744 = vmul.f32 %v2736, 0.5
    %v2745 = vmul.f32 %v2738, 0.5
    %v2746 = vtanh.pop %v2742
    %v2747 = vtanh.pop %v2743
    %v2748 = vtanh.pop %v2744
    %v2749 = vtanh.pop %v2745
    %v2750 = vmul.f32 %v2746, 0.5
    %v2751 = vmul.f32 %v2747, 0.5
    %v2752 = vmul.f32 %v2748, 0.5
    %v2753 = vmul.f32 %v2749, 0.5
    %v2754 = vadd.f32 %v2750, 0.5
    %v2755 = vadd.f32 %v2751, 0.5
    %v2756 = vadd.f32 %v2752, 0.5
    %v2757 = vadd.f32 %v2753, 0.5
    %v2758 = vmul.f32 %v2572, %v2754
    %v2759 = vmul.f32 %v2574, %v2755
    %v2760 = vmul.f32 %v2736, %v2756
    %v2761 = vmul.f32 %v2738, %v2757
    %v2762 = vpack.c.bf16 %v2758, %v2758
    %v2763 = vpack.c.bf16 %v2759, %v2759
    %v2764 = vpack.c.bf16 %v2760, %v2760
    %v2765 = vpack.c.bf16 %v2761, %v2761
    %v2766 = vld [vmem:[#allocation6] sm:$0xff]
    %v2767 = vld [vmem:[#allocation6 + $0x8] sm:$0xf]
    %v2768 = vld [vmem:[#allocation6 + $0xc] sm:$0xff]
    %v2769 = vld [vmem:[#allocation6 + $0x14] sm:$0xf]
    %v2770 = vld [vmem:[#allocation6 + $0x18] sm:$0xff]
    %v2771 = vld [vmem:[#allocation6 + $0x20] sm:$0xf]
    %v2772 = vld [vmem:[#allocation6 + $0x24] sm:$0xff]
    %v2773 = vld [vmem:[#allocation6 + $0x2c] sm:$0xf]
    %v2774 = vld [vmem:[#allocation6 + $0x30] sm:$0xff]
    %v2775 = vld [vmem:[#allocation6 + $0x38] sm:$0xf]
    %v2776 = vld [vmem:[#allocation6 + $0x3c] sm:$0xff]
    %v2777 = vld [vmem:[#allocation6 + $0x44] sm:$0xf]
    %v2778 = vld [vmem:[#allocation6 + $0x48] sm:$0xff]
    %v2779 = vld [vmem:[#allocation6 + $0x50] sm:$0xf]
    %v2780 = vld [vmem:[#allocation6 + $0x54] sm:$0xff]
    %v2781 = vld [vmem:[#allocation6 + $0x5c] sm:$0xf]
    %v2782 = vld [vmem:[#allocation6 + $0x60] sm:$0xff]
    %v2783 = vld [vmem:[#allocation6 + $0x68] sm:$0xf]
    %v2784 = vld [vmem:[#allocation6 + $0x6c] sm:$0xff]
    %v2785 = vld [vmem:[#allocation6 + $0x74] sm:$0xf]
    %v2786 = vld [vmem:[#allocation6 + $0x78] sm:$0xff]
    %v2787 = vld [vmem:[#allocation6 + $0x80] sm:$0xf]
    %v2788 = vld [vmem:[#allocation6 + $0x84] sm:$0xff]
    %v2789 = vld [vmem:[#allocation6 + $0x8c] sm:$0xf]
    %v2790 = vld [vmem:[#allocation6 + $0x90] sm:$0xff]
    %v2791 = vld [vmem:[#allocation6 + $0x98] sm:$0xf]
    %v2792 = vld [vmem:[#allocation6 + $0x9c] sm:$0xff]
    %v2793 = vld [vmem:[#allocation6 + $0xa4] sm:$0xf]
    %v2794 = vld [vmem:[#allocation6 + $0xa8] sm:$0xff]
    %v2795 = vld [vmem:[#allocation6 + $0xb0] sm:$0xf]
    %v2796 = vld [vmem:[#allocation6 + $0xb4] sm:$0xff]
    %v2797 = vld [vmem:[#allocation6 + $0xbc] sm:$0xf]
    %v2798 = vld [vmem:[#allocation6 + $0xc0] sm:$0xff]
    %v2799 = vld [vmem:[#allocation6 + $0xc8] sm:$0xf]
    %v2800 = vld [vmem:[#allocation6 + $0xcc] sm:$0xff]
    %v2801 = vld [vmem:[#allocation6 + $0xd4] sm:$0xf]
    %v2802 = vld [vmem:[#allocation6 + $0xd8] sm:$0xff]
    %v2803 = vld [vmem:[#allocation6 + $0xe0] sm:$0xf]
    %v2804 = vld [vmem:[#allocation6 + $0xe4] sm:$0xff]
    %v2805 = vld [vmem:[#allocation6 + $0xec] sm:$0xf]
    %v2806 = vld [vmem:[#allocation6 + $0xf0] sm:$0xff]
    %v2807 = vld [vmem:[#allocation6 + $0xf8] sm:$0xf]
    %v2808 = vld [vmem:[#allocation6 + $0xfc] sm:$0xff]
    %v2809 = vld [vmem:[#allocation6 + $0x104] sm:$0xf]
    %v2810 = vld [vmem:[#allocation6 + $0x108] sm:$0xff]
    %v2811 = vld [vmem:[#allocation6 + $0x110] sm:$0xf]
    %v2812 = vld [vmem:[#allocation6 + $0x114] sm:$0xff]
    %v2813 = vld [vmem:[#allocation6 + $0x11c] sm:$0xf]
    %v2814 = vld [vmem:[#allocation6 + $0x120] sm:$0xff]
    %v2815 = vld [vmem:[#allocation6 + $0x128] sm:$0xf]
    %v2816 = vld [vmem:[#allocation6 + $0x12c] sm:$0xff]
    %v2817 = vld [vmem:[#allocation6 + $0x134] sm:$0xf]
    %v2818 = vld [vmem:[#allocation6 + $0x138] sm:$0xff]
    %v2819 = vld [vmem:[#allocation6 + $0x140] sm:$0xf]
    %v2820 = vld [vmem:[#allocation6 + $0x144] sm:$0xff]
    %v2821 = vld [vmem:[#allocation6 + $0x14c] sm:$0xf]
    %v2822 = vld [vmem:[#allocation6 + $0x150] sm:$0xff]
    %v2823 = vld [vmem:[#allocation6 + $0x158] sm:$0xf]
    %v2824 = vld [vmem:[#allocation6 + $0x15c] sm:$0xff]
    %v2825 = vld [vmem:[#allocation6 + $0x164] sm:$0xf]
    %v2826 = vld [vmem:[#allocation6 + $0x168] sm:$0xff]
    %v2827 = vld [vmem:[#allocation6 + $0x170] sm:$0xf]
    %v2828 = vld [vmem:[#allocation6 + $0x174] sm:$0xff]
    %v2829 = vld [vmem:[#allocation6 + $0x17c] sm:$0xf]
    %v2830 = vld [vmem:[#allocation6 + $0x180] sm:$0xff]
    %v2831 = vld [vmem:[#allocation6 + $0x188] sm:$0xf]
    %v2832 = vld [vmem:[#allocation6 + $0x18c] sm:$0xff]
    %v2833 = vld [vmem:[#allocation6 + $0x194] sm:$0xf]
    %v2834 = vld [vmem:[#allocation6 + $0x198] sm:$0xff]
    %v2835 = vld [vmem:[#allocation6 + $0x1a0] sm:$0xf]
    %v2836 = vld [vmem:[#allocation6 + $0x1a4] sm:$0xff]
    %v2837 = vld [vmem:[#allocation6 + $0x1ac] sm:$0xf]
    %v2838 = vld [vmem:[#allocation6 + $0x1b0] sm:$0xff]
    %v2839 = vld [vmem:[#allocation6 + $0x1b8] sm:$0xf]
    %v2840 = vld [vmem:[#allocation6 + $0x1bc] sm:$0xff]
    %v2841 = vld [vmem:[#allocation6 + $0x1c4] sm:$0xf]
    %v2842 = vld [vmem:[#allocation6 + $0x1c8] sm:$0xff]
    %v2843 = vld [vmem:[#allocation6 + $0x1d0] sm:$0xf]
    %v2844 = vld [vmem:[#allocation6 + $0x1d4] sm:$0xff]
    %v2845 = vld [vmem:[#allocation6 + $0x1dc] sm:$0xf]
    %v2846 = vld [vmem:[#allocation6 + $0x1e0] sm:$0xff]
    %v2847 = vld [vmem:[#allocation6 + $0x1e8] sm:$0xf]
    %v2848 = vld [vmem:[#allocation6 + $0x1ec] sm:$0xff]
    %v2849 = vld [vmem:[#allocation6 + $0x1f4] sm:$0xf]
    %v2850 = vld [vmem:[#allocation6 + $0x1f8] sm:$0xff]
    %v2851 = vld [vmem:[#allocation6 + $0x200] sm:$0xf]
    %v2852 = vld [vmem:[#allocation6 + $0x204] sm:$0xff]
    %v2853 = vld [vmem:[#allocation6 + $0x20c] sm:$0xf]
    %v2854 = vld [vmem:[#allocation6 + $0x210] sm:$0xff]
    %v2855 = vld [vmem:[#allocation6 + $0x218] sm:$0xf]
    %v2856 = vld [vmem:[#allocation6 + $0x21c] sm:$0xff]
    %v2857 = vld [vmem:[#allocation6 + $0x224] sm:$0xf]
    %v2858 = vld [vmem:[#allocation6 + $0x228] sm:$0xff]
    %v2859 = vld [vmem:[#allocation6 + $0x230] sm:$0xf]
    %v2860 = vld [vmem:[#allocation6 + $0x234] sm:$0xff]
    %v2861 = vld [vmem:[#allocation6 + $0x23c] sm:$0xf]
    %v2862 = vld [vmem:[#allocation6 + $0x240] sm:$0xff]
    %v2863 = vld [vmem:[#allocation6 + $0x248] sm:$0xf]
    %v2864 = vld [vmem:[#allocation6 + $0x24c] sm:$0xff]
    %v2865 = vld [vmem:[#allocation6 + $0x254] sm:$0xf]
    %v2866 = vld [vmem:[#allocation6 + $0x258] sm:$0xff]
    %v2867 = vld [vmem:[#allocation6 + $0x260] sm:$0xf]
    %v2868 = vld [vmem:[#allocation6 + $0x264] sm:$0xff]
    %v2869 = vld [vmem:[#allocation6 + $0x26c] sm:$0xf]
    %v2870 = vld [vmem:[#allocation6 + $0x270] sm:$0xff]
    %v2871 = vld [vmem:[#allocation6 + $0x278] sm:$0xf]
    %v2872 = vld [vmem:[#allocation6 + $0x27c] sm:$0xff]
    %v2873 = vld [vmem:[#allocation6 + $0x284] sm:$0xf]
    %v2874 = vld [vmem:[#allocation6 + $0x288] sm:$0xff]
    %v2875 = vld [vmem:[#allocation6 + $0x290] sm:$0xf]
    %v2876 = vld [vmem:[#allocation6 + $0x294] sm:$0xff]
    %v2877 = vld [vmem:[#allocation6 + $0x29c] sm:$0xf]
    %v2878 = vld [vmem:[#allocation6 + $0x2a0] sm:$0xff]
    %v2879 = vld [vmem:[#allocation6 + $0x2a8] sm:$0xf]
    %v2880 = vld [vmem:[#allocation6 + $0x2ac] sm:$0xff]
    %v2881 = vld [vmem:[#allocation6 + $0x2b4] sm:$0xf]
    %v2882 = vld [vmem:[#allocation6 + $0x2b8] sm:$0xff]
    %v2883 = vld [vmem:[#allocation6 + $0x2c0] sm:$0xf]
    %v2884 = vld [vmem:[#allocation6 + $0x2c4] sm:$0xff]
    %v2885 = vld [vmem:[#allocation6 + $0x2cc] sm:$0xf]
    %v2886 = vld [vmem:[#allocation6 + $0x2d0] sm:$0xff]
    %v2887 = vld [vmem:[#allocation6 + $0x2d8] sm:$0xf]
    %v2888 = vld [vmem:[#allocation6 + $0x2dc] sm:$0xff]
    %v2889 = vld [vmem:[#allocation6 + $0x2e4] sm:$0xf]
    %v2890 = vld [vmem:[#allocation6 + $0x2e8] sm:$0xff]
    %v2891 = vld [vmem:[#allocation6 + $0x2f0] sm:$0xf]
    %v2892 = vld [vmem:[#allocation6 + $0x2f4] sm:$0xff]
    %v2893 = vld [vmem:[#allocation6 + $0x2fc] sm:$0xf]
    %v2894 = vld [vmem:[%s8] sm:$0x7]
    %v2896 = vlaneseq
    %v2897 = vshrl.u32 %v2896, 7
    %v2898 = vsub.s32 0, %v2897
    %v2899 = vrot.slane %v2894, %v2898
    %v2900 = vlaneseq
    %v2901 = vshrl.u32 %v2900, 7
    %v2902 = vsub.s32 1, %v2901
    %v2903 = vrot.slane %v2894, %v2902
    %v2904 = vlaneseq
    %v2905 = vshrl.u32 %v2904, 7
    %v2906 = vsub.s32 2, %v2905
    %v2907 = vrot.slane %v2894, %v2906
    %v3039 = vunpack.c.l.b16 %v2766
    %v3040 = vunpack.c.h.b16 %v2766
    %v3041 = vunpack.c.l.b16 %v2767
    %v3042 = vunpack.c.l.b16 %v2768
    %v3043 = vunpack.c.h.b16 %v2768
    %v3044 = vunpack.c.l.b16 %v2769
    %v3045 = vunpack.c.l.b16 %v2770
    %v3046 = vunpack.c.h.b16 %v2770
    %v3047 = vunpack.c.l.b16 %v2771
    %v3048 = vunpack.c.l.b16 %v2772
    %v3049 = vunpack.c.h.b16 %v2772
    %v3050 = vunpack.c.l.b16 %v2773
    %v3051 = vunpack.c.l.b16 %v2774
    %v3052 = vunpack.c.h.b16 %v2774
    %v3053 = vunpack.c.l.b16 %v2775
    %v3054 = vunpack.c.l.b16 %v2776
    %v3055 = vunpack.c.h.b16 %v2776
    %v3056 = vunpack.c.l.b16 %v2777
    %v3057 = vunpack.c.l.b16 %v2778
    %v3058 = vunpack.c.h.b16 %v2778
    %v3059 = vunpack.c.l.b16 %v2779
    %v3060 = vunpack.c.l.b16 %v2780
    %v3061 = vunpack.c.h.b16 %v2780
    %v3062 = vunpack.c.l.b16 %v2781
    %v3063 = vunpack.c.l.b16 %v2782
    %v3064 = vunpack.c.h.b16 %v2782
    %v3065 = vunpack.c.l.b16 %v2783
    %v3066 = vunpack.c.l.b16 %v2784
    %v3067 = vunpack.c.h.b16 %v2784
    %v3068 = vunpack.c.l.b16 %v2785
    %v3069 = vunpack.c.l.b16 %v2786
    %v3070 = vunpack.c.h.b16 %v2786
    %v3071 = vunpack.c.l.b16 %v2787
    %v3072 = vunpack.c.l.b16 %v2788
    %v3073 = vunpack.c.h.b16 %v2788
    %v3074 = vunpack.c.l.b16 %v2789
    %v3075 = vunpack.c.l.b16 %v2790
    %v3076 = vunpack.c.h.b16 %v2790
    %v3077 = vunpack.c.l.b16 %v2791
    %v3078 = vunpack.c.l.b16 %v2792
    %v3079 = vunpack.c.h.b16 %v2792
    %v3080 = vunpack.c.l.b16 %v2793
    %v3081 = vunpack.c.l.b16 %v2794
    %v3082 = vunpack.c.h.b16 %v2794
    %v3083 = vunpack.c.l.b16 %v2795
    %v3084 = vunpack.c.l.b16 %v2796
    %v3085 = vunpack.c.h.b16 %v2796
    %v3086 = vunpack.c.l.b16 %v2797
    %v3087 = vunpack.c.l.b16 %v2798
    %v3088 = vunpack.c.h.b16 %v2798
    %v3089 = vunpack.c.l.b16 %v2799
    %v3090 = vunpack.c.l.b16 %v2800
    %v3091 = vunpack.c.h.b16 %v2800
    %v3092 = vunpack.c.l.b16 %v2801
    %v3093 = vunpack.c.l.b16 %v2802
    %v3094 = vunpack.c.h.b16 %v2802
    %v3095 = vunpack.c.l.b16 %v2803
    %v3096 = vunpack.c.l.b16 %v2804
    %v3097 = vunpack.c.h.b16 %v2804
    %v3098 = vunpack.c.l.b16 %v2805
    %v3099 = vunpack.c.l.b16 %v2806
    %v3100 = vunpack.c.h.b16 %v2806
    %v3101 = vunpack.c.l.b16 %v2807
    %v3102 = vunpack.c.l.b16 %v2808
    %v3103 = vunpack.c.h.b16 %v2808
    %v3104 = vunpack.c.l.b16 %v2809
    %v3105 = vunpack.c.l.b16 %v2810
    %v3106 = vunpack.c.h.b16 %v2810
    %v3107 = vunpack.c.l.b16 %v2811
    %v3108 = vunpack.c.l.b16 %v2812
    %v3109 = vunpack.c.h.b16 %v2812
    %v3110 = vunpack.c.l.b16 %v2813
    %v3111 = vunpack.c.l.b16 %v2814
    %v3112 = vunpack.c.h.b16 %v2814
    %v3113 = vunpack.c.l.b16 %v2815
    %v3114 = vunpack.c.l.b16 %v2816
    %v3115 = vunpack.c.h.b16 %v2816
    %v3116 = vunpack.c.l.b16 %v2817
    %v3117 = vunpack.c.l.b16 %v2818
    %v3118 = vunpack.c.h.b16 %v2818
    %v3119 = vunpack.c.l.b16 %v2819
    %v3120 = vunpack.c.l.b16 %v2820
    %v3121 = vunpack.c.h.b16 %v2820
    %v3122 = vunpack.c.l.b16 %v2821
    %v3123 = vunpack.c.l.b16 %v2822
    %v3124 = vunpack.c.h.b16 %v2822
    %v3125 = vunpack.c.l.b16 %v2823
    %v3126 = vunpack.c.l.b16 %v2824
    %v3127 = vunpack.c.h.b16 %v2824
    %v3128 = vunpack.c.l.b16 %v2825
    %v3129 = vunpack.c.l.b16 %v2826
    %v3130 = vunpack.c.h.b16 %v2826
    %v3131 = vunpack.c.l.b16 %v2827
    %v3132 = vunpack.c.l.b16 %v2828
    %v3133 = vunpack.c.h.b16 %v2828
    %v3134 = vunpack.c.l.b16 %v2829
    %v3135 = vunpack.c.l.b16 %v2830
    %v3136 = vunpack.c.h.b16 %v2830
    %v3137 = vunpack.c.l.b16 %v2831
    %v3138 = vunpack.c.l.b16 %v2832
    %v3139 = vunpack.c.h.b16 %v2832
    %v3140 = vunpack.c.l.b16 %v2833
    %v3141 = vunpack.c.l.b16 %v2834
    %v3142 = vunpack.c.h.b16 %v2834
    %v3143 = vunpack.c.l.b16 %v2835
    %v3144 = vunpack.c.l.b16 %v2836
    %v3145 = vunpack.c.h.b16 %v2836
    %v3146 = vunpack.c.l.b16 %v2837
    %v3147 = vunpack.c.l.b16 %v2838
    %v3148 = vunpack.c.h.b16 %v2838
    %v3149 = vunpack.c.l.b16 %v2839
    %v3150 = vunpack.c.l.b16 %v2840
    %v3151 = vunpack.c.h.b16 %v2840
    %v3152 = vunpack.c.l.b16 %v2841
    %v3153 = vunpack.c.l.b16 %v2842
    %v3154 = vunpack.c.h.b16 %v2842
    %v3155 = vunpack.c.l.b16 %v2843
    %v3156 = vunpack.c.l.b16 %v2844
    %v3157 = vunpack.c.h.b16 %v2844
    %v3158 = vunpack.c.l.b16 %v2845
    %v3159 = vunpack.c.l.b16 %v2846
    %v3160 = vunpack.c.h.b16 %v2846
    %v3161 = vunpack.c.l.b16 %v2847
    %v3162 = vunpack.c.l.b16 %v2848
    %v3163 = vunpack.c.h.b16 %v2848
    %v3164 = vunpack.c.l.b16 %v2849
    %v3165 = vunpack.c.l.b16 %v2850
    %v3166 = vunpack.c.h.b16 %v2850
    %v3167 = vunpack.c.l.b16 %v2851
    %v3168 = vunpack.c.l.b16 %v2852
    %v3169 = vunpack.c.h.b16 %v2852
    %v3170 = vunpack.c.l.b16 %v2853
    %v3171 = vunpack.c.l.b16 %v2854
    %v3172 = vunpack.c.h.b16 %v2854
    %v3173 = vunpack.c.l.b16 %v2855
    %v3174 = vunpack.c.l.b16 %v2856
    %v3175 = vunpack.c.h.b16 %v2856
    %v3176 = vunpack.c.l.b16 %v2857
    %v3177 = vunpack.c.l.b16 %v2858
    %v3178 = vunpack.c.h.b16 %v2858
    %v3179 = vunpack.c.l.b16 %v2859
    %v3180 = vunpack.c.l.b16 %v2860
    %v3181 = vunpack.c.h.b16 %v2860
    %v3182 = vunpack.c.l.b16 %v2861
    %v3183 = vunpack.c.l.b16 %v2862
    %v3184 = vunpack.c.h.b16 %v2862
    %v3185 = vunpack.c.l.b16 %v2863
    %v3186 = vunpack.c.l.b16 %v2864
    %v3187 = vunpack.c.h.b16 %v2864
    %v3188 = vunpack.c.l.b16 %v2865
    %v3189 = vunpack.c.l.b16 %v2866
    %v3190 = vunpack.c.h.b16 %v2866
    %v3191 = vunpack.c.l.b16 %v2867
    %v3192 = vunpack.c.l.b16 %v2868
    %v3193 = vunpack.c.h.b16 %v2868
    %v3194 = vunpack.c.l.b16 %v2869
    %v3195 = vunpack.c.l.b16 %v2870
    %v3196 = vunpack.c.h.b16 %v2870
    %v3197 = vunpack.c.l.b16 %v2871
    %v3198 = vunpack.c.l.b16 %v2872
    %v3199 = vunpack.c.h.b16 %v2872
    %v3200 = vunpack.c.l.b16 %v2873
    %v3201 = vunpack.c.l.b16 %v2874
    %v3202 = vunpack.c.h.b16 %v2874
    %v3203 = vunpack.c.l.b16 %v2875
    %v3204 = vunpack.c.l.b16 %v2876
    %v3205 = vunpack.c.h.b16 %v2876
    %v3206 = vunpack.c.l.b16 %v2877
    %v3207 = vunpack.c.l.b16 %v2878
    %v3208 = vunpack.c.h.b16 %v2878
    %v3209 = vunpack.c.l.b16 %v2879
    %v3210 = vunpack.c.l.b16 %v2880
    %v3211 = vunpack.c.h.b16 %v2880
    %v3212 = vunpack.c.l.b16 %v2881
    %v3213 = vunpack.c.l.b16 %v2882
    %v3214 = vunpack.c.h.b16 %v2882
    %v3215 = vunpack.c.l.b16 %v2883
    %v3216 = vunpack.c.l.b16 %v2884
    %v3217 = vunpack.c.h.b16 %v2884
    %v3218 = vunpack.c.l.b16 %v2885
    %v3219 = vunpack.c.l.b16 %v2886
    %v3220 = vunpack.c.h.b16 %v2886
    %v3221 = vunpack.c.l.b16 %v2887
    %v3222 = vunpack.c.l.b16 %v2888
    %v3223 = vunpack.c.h.b16 %v2888
    %v3224 = vunpack.c.l.b16 %v2889
    %v3225 = vunpack.c.l.b16 %v2890
    %v3226 = vunpack.c.h.b16 %v2890
    %v3227 = vunpack.c.l.b16 %v2891
    %v3228 = vunpack.c.l.b16 %v2892
    %v3229 = vunpack.c.h.b16 %v2892
    %v3230 = vunpack.c.l.b16 %v2893
    %v3231 = vpack.c.b16 %v3042, %v3039
    %v3232 = vpack.c.b16 %v3043, %v3040
    %v3233 = vpack.c.b16 %v3044, %v3041
    %v3234 = vpack.c.b16 %v3048, %v3045
    %v3235 = vpack.c.b16 %v3049, %v3046
    %v3236 = vpack.c.b16 %v3050, %v3047
    %v3237 = vpack.c.b16 %v3054, %v3051
    %v3238 = vpack.c.b16 %v3055, %v3052
    %v3239 = vpack.c.b16 %v3056, %v3053
    %v3240 = vpack.c.b16 %v3060, %v3057
    %v3241 = vpack.c.b16 %v3061, %v3058
    %v3242 = vpack.c.b16 %v3062, %v3059
    %v3243 = vpack.c.b16 %v3066, %v3063
    %v3244 = vpack.c.b16 %v3067, %v3064
    %v3245 = vpack.c.b16 %v3068, %v3065
    %v3246 = vpack.c.b16 %v3072, %v3069
    %v3247 = vpack.c.b16 %v3073, %v3070
    %v3248 = vpack.c.b16 %v3074, %v3071
    %v3249 = vpack.c.b16 %v3078, %v3075
    %v3250 = vpack.c.b16 %v3079, %v3076
    %v3251 = vpack.c.b16 %v3080, %v3077
    %v3252 = vpack.c.b16 %v3084, %v3081
    %v3253 = vpack.c.b16 %v3085, %v3082
    %v3254 = vpack.c.b16 %v3086, %v3083
    %v3255 = vpack.c.b16 %v3090, %v3087
    %v3256 = vpack.c.b16 %v3091, %v3088
    %v3257 = vpack.c.b16 %v3092, %v3089
    %v3258 = vpack.c.b16 %v3096, %v3093
    %v3259 = vpack.c.b16 %v3097, %v3094
    %v3260 = vpack.c.b16 %v3098, %v3095
    %v3261 = vpack.c.b16 %v3102, %v3099
    %v3262 = vpack.c.b16 %v3103, %v3100
    %v3263 = vpack.c.b16 %v3104, %v3101
    %v3264 = vpack.c.b16 %v3108, %v3105
    %v3265 = vpack.c.b16 %v3109, %v3106
    %v3266 = vpack.c.b16 %v3110, %v3107
    %v3267 = vpack.c.b16 %v3114, %v3111
    %v3268 = vpack.c.b16 %v3115, %v3112
    %v3269 = vpack.c.b16 %v3116, %v3113
    %v3270 = vpack.c.b16 %v3120, %v3117
    %v3271 = vpack.c.b16 %v3121, %v3118
    %v3272 = vpack.c.b16 %v3122, %v3119
    %v3273 = vpack.c.b16 %v3126, %v3123
    %v3274 = vpack.c.b16 %v3127, %v3124
    %v3275 = vpack.c.b16 %v3128, %v3125
    %v3276 = vpack.c.b16 %v3132, %v3129
    %v3277 = vpack.c.b16 %v3133, %v3130
    %v3278 = vpack.c.b16 %v3134, %v3131
    %v3279 = vpack.c.b16 %v3138, %v3135
    %v3280 = vpack.c.b16 %v3139, %v3136
    %v3281 = vpack.c.b16 %v3140, %v3137
    %v3282 = vpack.c.b16 %v3144, %v3141
    %v3283 = vpack.c.b16 %v3145, %v3142
    %v3284 = vpack.c.b16 %v3146, %v3143
    %v3285 = vpack.c.b16 %v3150, %v3147
    %v3286 = vpack.c.b16 %v3151, %v3148
    %v3287 = vpack.c.b16 %v3152, %v3149
    %v3288 = vpack.c.b16 %v3156, %v3153
    %v3289 = vpack.c.b16 %v3157, %v3154
    %v3290 = vpack.c.b16 %v3158, %v3155
    %v3291 = vpack.c.b16 %v3162, %v3159
    %v3292 = vpack.c.b16 %v3163, %v3160
    %v3293 = vpack.c.b16 %v3164, %v3161
    %v3294 = vpack.c.b16 %v3168, %v3165
    %v3295 = vpack.c.b16 %v3169, %v3166
    %v3296 = vpack.c.b16 %v3170, %v3167
    %v3297 = vpack.c.b16 %v3174, %v3171
    %v3298 = vpack.c.b16 %v3175, %v3172
    %v3299 = vpack.c.b16 %v3176, %v3173
    %v3300 = vpack.c.b16 %v3180, %v3177
    %v3301 = vpack.c.b16 %v3181, %v3178
    %v3302 = vpack.c.b16 %v3182, %v3179
    %v3303 = vpack.c.b16 %v3186, %v3183
    %v3304 = vpack.c.b16 %v3187, %v3184
    %v3305 = vpack.c.b16 %v3188, %v3185
    %v3306 = vpack.c.b16 %v3192, %v3189
    %v3307 = vpack.c.b16 %v3193, %v3190
    %v3308 = vpack.c.b16 %v3194, %v3191
    %v3309 = vpack.c.b16 %v3198, %v3195
    %v3310 = vpack.c.b16 %v3199, %v3196
    %v3311 = vpack.c.b16 %v3200, %v3197
    %v3312 = vpack.c.b16 %v3204, %v3201
    %v3313 = vpack.c.b16 %v3205, %v3202
    %v3314 = vpack.c.b16 %v3206, %v3203
    %v3315 = vpack.c.b16 %v3210, %v3207
    %v3316 = vpack.c.b16 %v3211, %v3208
    %v3317 = vpack.c.b16 %v3212, %v3209
    %v3318 = vpack.c.b16 %v3216, %v3213
    %v3319 = vpack.c.b16 %v3217, %v3214
    %v3320 = vpack.c.b16 %v3218, %v3215
    %v3321 = vpack.c.b16 %v3222, %v3219
    %v3322 = vpack.c.b16 %v3223, %v3220
    %v3323 = vpack.c.b16 %v3224, %v3221
    %v3324 = vpack.c.b16 %v3228, %v3225
    %v3325 = vpack.c.b16 %v3229, %v3226
    %v3326 = vpack.c.b16 %v3230, %v3227
    %3423 = vmatprep.subr.bf16.mxu0 %v3253
    %3424 = vmatpush1.bf16.msra.mxu0 %v3252
    %3425 = vmatprep.subr.bf16.mxu0 %v3250
    %3426 = vmatpush1.bf16.msra.mxu0 %v3249
    %3427 = vmatprep.subr.bf16.mxu0 %v3247
    %3428 = vmatpush1.bf16.msra.mxu0 %v3246
    %3429 = vmatprep.subr.bf16.mxu0 %v3244
    %3430 = vmatpush1.bf16.msra.mxu0 %v3243
    %3431 = vmatprep.subr.bf16.mxu0 %v3241
    %3432 = vmatpush1.bf16.msra.mxu0 %v3240
    %3433 = vmatprep.subr.bf16.mxu0 %v3238
    %3434 = vmatpush1.bf16.msra.mxu0 %v3237
    %3435 = vmatprep.subr.bf16.mxu0 %v3235
    %3436 = vmatpush1.bf16.msra.mxu0 %v3234
    %3437 = vmatprep.subr.bf16.mxu0 %v3232
    %3438 = vmatpush1.bf16.msra.mxu0 %v3231
    %3439 = vmatprep.subr.bf16.mxu0 %v3277
    %3440 = vmatpush2.bf16.msra.mxu0 %v3276
    %3441 = vmatprep.subr.bf16.mxu0 %v3274
    %3442 = vmatpush2.bf16.msra.mxu0 %v3273
    %3443 = vmatprep.subr.bf16.mxu0 %v3271
    %3444 = vmatpush2.bf16.msra.mxu0 %v3270
    %3445 = vmatprep.subr.bf16.mxu0 %v3268
    %3446 = vmatpush2.bf16.msra.mxu0 %v3267
    %3447 = vmatprep.subr.bf16.mxu0 %v3265
    %3448 = vmatpush2.bf16.msra.mxu0 %v3264
    %3449 = vmatprep.subr.bf16.mxu0 %v3262
    %3450 = vmatpush2.bf16.msra.mxu0 %v3261
    %3451 = vmatprep.subr.bf16.mxu0 %v3259
    %3452 = vmatpush2.bf16.msra.mxu0 %v3258
    %3453 = vmatprep.subr.bf16.mxu0 %v3256
    %3454 = vmatpush2.bf16.msra.mxu0 %v3255
    %3455 = vmatprep.mubr.bf16.mxu0 %v2763
    %3456 = vmatmul.mubr.bf16.gmra.mxu0 %v2762
    %v3457 = vpop.f32.mrf.mxu0
    %v3458 = vadd.f32 %v2899, %v3457
    %v3459 = vpop.f32.mrf.mxu0
    %v3460 = vadd.f32 %v2903, %v3459
    %v3461 = vpop.f32.mrf.mxu0
    %v3462 = vpop.f32.mrf.mxu0
    %3463 = vdwg.mxu0
    %3464 = vmatprep.subr.bf16.mxu0 %v3301
    %3465 = vmatpush1.bf16.msra.mxu0 %v3300
    %3466 = vmatprep.subr.bf16.mxu0 %v3298
    %3467 = vmatpush1.bf16.msra.mxu0 %v3297
    %3468 = vmatprep.subr.bf16.mxu0 %v3295
    %3469 = vmatpush1.bf16.msra.mxu0 %v3294
    %3470 = vmatprep.subr.bf16.mxu0 %v3292
    %3471 = vmatpush1.bf16.msra.mxu0 %v3291
    %3472 = vmatprep.subr.bf16.mxu0 %v3289
    %3473 = vmatpush1.bf16.msra.mxu0 %v3288
    %3474 = vmatprep.subr.bf16.mxu0 %v3286
    %3475 = vmatpush1.bf16.msra.mxu0 %v3285
    %3476 = vmatprep.subr.bf16.mxu0 %v3283
    %3477 = vmatpush1.bf16.msra.mxu0 %v3282
    %3478 = vmatprep.subr.bf16.mxu0 %v3280
    %3479 = vmatpush1.bf16.msra.mxu0 %v3279
    %3480 = vmatprep.subr.bf16.mxu0 %v3325
    %3481 = vmatpush2.bf16.msra.mxu0 %v3324
    %3482 = vmatprep.subr.bf16.mxu0 %v3322
    %3483 = vmatpush2.bf16.msra.mxu0 %v3321
    %3484 = vmatprep.subr.bf16.mxu0 %v3319
    %3485 = vmatpush2.bf16.msra.mxu0 %v3318
    %3486 = vmatprep.subr.bf16.mxu0 %v3316
    %3487 = vmatpush2.bf16.msra.mxu0 %v3315
    %3488 = vmatprep.subr.bf16.mxu0 %v3313
    %3489 = vmatpush2.bf16.msra.mxu0 %v3312
    %3490 = vmatprep.subr.bf16.mxu0 %v3310
    %3491 = vmatpush2.bf16.msra.mxu0 %v3309
    %3492 = vmatprep.subr.bf16.mxu0 %v3307
    %3493 = vmatpush2.bf16.msra.mxu0 %v3306
    %3494 = vmatprep.subr.bf16.mxu0 %v3304
    %3495 = vmatpush2.bf16.msra.mxu0 %v3303
    %3496 = vmatprep.mubr.bf16.mxu0 %v2765
    %3497 = vmatmul.mubr.bf16.gmra.mxu0 %v2764
    %v3498 = vpop.f32.mrf.mxu0
    %v3499 = vadd.f32 %v3458, %v3498
    %v3500 = vpop.f32.mrf.mxu0
    %v3501 = vadd.f32 %v3460, %v3500
    %v3502 = vpop.f32.mrf.mxu0
    %v3503 = vpop.f32.mrf.mxu0
    %3504 = vdwg.mxu0
    %3505 = vmatprep.subr.bf16.mxu0 0
    %3506 = vmatpush1.bf16.msra.mxu0 %v3254
    %3507 = vmatprep.subr.bf16.mxu0 0
    %3508 = vmatpush1.bf16.msra.mxu0 %v3251
    %3509 = vmatprep.subr.bf16.mxu0 0
    %3510 = vmatpush1.bf16.msra.mxu0 %v3248
    %3511 = vmatprep.subr.bf16.mxu0 0
    %3512 = vmatpush1.bf16.msra.mxu0 %v3245
    %3513 = vmatprep.subr.bf16.mxu0 0
    %3514 = vmatpush1.bf16.msra.mxu0 %v3242
    %3515 = vmatprep.subr.bf16.mxu0 0
    %3516 = vmatpush1.bf16.msra.mxu0 %v3239
    %3517 = vmatprep.subr.bf16.mxu0 0
    %3518 = vmatpush1.bf16.msra.mxu0 %v3236
    %3519 = vmatprep.subr.bf16.mxu0 0
    %3520 = vmatpush1.bf16.msra.mxu0 %v3233
    %3521 = vmatprep.subr.bf16.mxu0 0
    %3522 = vmatpush2.bf16.msra.mxu0 %v3278
    %3523 = vmatprep.subr.bf16.mxu0 0
    %3524 = vmatpush2.bf16.msra.mxu0 %v3275
    %3525 = vmatprep.subr.bf16.mxu0 0
    %3526 = vmatpush2.bf16.msra.mxu0 %v3272
    %3527 = vmatprep.subr.bf16.mxu0 0
    %3528 = vmatpush2.bf16.msra.mxu0 %v3269
    %3529 = vmatprep.subr.bf16.mxu0 0
    %3530 = vmatpush2.bf16.msra.mxu0 %v3266
    %3531 = vmatprep.subr.bf16.mxu0 0
    %3532 = vmatpush2.bf16.msra.mxu0 %v3263
    %3533 = vmatprep.subr.bf16.mxu0 0
    %3534 = vmatpush2.bf16.msra.mxu0 %v3260
    %3535 = vmatprep.subr.bf16.mxu0 0
    %3536 = vmatpush2.bf16.msra.mxu0 %v3257
    %3537 = vmatprep.mubr.bf16.mxu0 %v2763
    %3538 = vmatmul.mubr.bf16.gmra.mxu0 %v2762
    %v3539 = vpop.f32.mrf.mxu0
    %v3540 = vadd.f32 %v2907, %v3539
    %v3541 = vpop.f32.mrf.mxu0
    %v3542 = vpop.f32.mrf.mxu0
    %v3543 = vpop.f32.mrf.mxu0
    %3544 = vdwg.mxu0
    %3545 = vmatprep.subr.bf16.mxu0 0
    %3546 = vmatpush1.bf16.msra.mxu0 %v3302
    %3547 = vmatprep.subr.bf16.mxu0 0
    %3548 = vmatpush1.bf16.msra.mxu0 %v3299
    %3549 = vmatprep.subr.bf16.mxu0 0
    %3550 = vmatpush1.bf16.msra.mxu0 %v3296
    %3551 = vmatprep.subr.bf16.mxu0 0
    %3552 = vmatpush1.bf16.msra.mxu0 %v3293
    %3553 = vmatprep.subr.bf16.mxu0 0
    %3554 = vmatpush1.bf16.msra.mxu0 %v3290
    %3555 = vmatprep.subr.bf16.mxu0 0
    %3556 = vmatpush1.bf16.msra.mxu0 %v3287
    %3557 = vmatprep.subr.bf16.mxu0 0
    %3558 = vmatpush1.bf16.msra.mxu0 %v3284
    %3559 = vmatprep.subr.bf16.mxu0 0
    %3560 = vmatpush1.bf16.msra.mxu0 %v3281
    %3561 = vmatprep.subr.bf16.mxu0 0
    %3562 = vmatpush2.bf16.msra.mxu0 %v3326
    %3563 = vmatprep.subr.bf16.mxu0 0
    %3564 = vmatpush2.bf16.msra.mxu0 %v3323
    %3565 = vmatprep.subr.bf16.mxu0 0
    %3566 = vmatpush2.bf16.msra.mxu0 %v3320
    %3567 = vmatprep.subr.bf16.mxu0 0
    %3568 = vmatpush2.bf16.msra.mxu0 %v3317
    %3569 = vmatprep.subr.bf16.mxu0 0
    %3570 = vmatpush2.bf16.msra.mxu0 %v3314
    %3571 = vmatprep.subr.bf16.mxu0 0
    %3572 = vmatpush2.bf16.msra.mxu0 %v3311
    %3573 = vmatprep.subr.bf16.mxu0 0
    %3574 = vmatpush2.bf16.msra.mxu0 %v3308
    %3575 = vmatprep.subr.bf16.mxu0 0
    %3576 = vmatpush2.bf16.msra.mxu0 %v3305
    %3577 = vmatprep.mubr.bf16.mxu0 %v2765
    %3578 = vmatmul.mubr.bf16.gmra.mxu0 %v2764
    %v3579 = vpop.f32.mrf.mxu0
    %v3580 = vadd.f32 %v3540, %v3579
    %v3581 = vpop.f32.mrf.mxu0
    %v3582 = vpop.f32.mrf.mxu0
    %v3583 = vpop.f32.mrf.mxu0
    %3584 = vdwg.mxu0
    %v3585 = vmul.f32 %v3499, 0.5
    %v3586 = vmul.f32 %v3501, 0.5
    %v3587 = vmul.f32 %v3580, 0.5
    %v3588 = vtanh.pop %v3585
    %v3589 = vtanh.pop %v3586
    %v3590 = vtanh.pop %v3587
    %v3591 = vmul.f32 %v3588, 0.5
    %v3592 = vmul.f32 %v3589, 0.5
    %v3593 = vmul.f32 %v3590, 0.5
    %v3594 = vadd.f32 %v3591, 0.5
    %v3595 = vadd.f32 %v3592, 0.5
    %v3596 = vadd.f32 %v3593, 0.5
    %v3597 = vmul.f32 %v3499, %v3594
    %v3598 = vmul.f32 %v3501, %v3595
    %v3599 = vmul.f32 %v3580, %v3596
    %v3600 = vpack.c.bf16 %v3597, %v3597
    %v3601 = vpack.c.bf16 %v3598, %v3598
    %v3602 = vpack.c.bf16 %v3599, %v3599
    %v3603 = vld [vmem:[#allocation7] sm:$0xf]
    %v3604 = vld [vmem:[#allocation7 + $0x4] sm:$0xf]
    %v3605 = vld [vmem:[#allocation7 + $0x8] sm:$0xf]
    %v3606 = vld [vmem:[#allocation7 + $0xc] sm:$0xf]
    %v3607 = vld [vmem:[#allocation7 + $0x10] sm:$0xf]
    %v3608 = vld [vmem:[#allocation7 + $0x14] sm:$0xf]
    %v3609 = vld [vmem:[#allocation7 + $0x18] sm:$0xf]
    %v3610 = vld [vmem:[#allocation7 + $0x1c] sm:$0xf]
    %v3611 = vld [vmem:[#allocation7 + $0x20] sm:$0xf]
    %v3612 = vld [vmem:[#allocation7 + $0x24] sm:$0xf]
    %v3613 = vld [vmem:[#allocation7 + $0x28] sm:$0xf]
    %v3614 = vld [vmem:[#allocation7 + $0x2c] sm:$0xf]
    %v3615 = vld [vmem:[#allocation7 + $0x30] sm:$0xf]
    %v3616 = vld [vmem:[#allocation7 + $0x34] sm:$0xf]
    %v3617 = vld [vmem:[#allocation7 + $0x38] sm:$0xf]
    %v3618 = vld [vmem:[#allocation7 + $0x3c] sm:$0xf]
    %v3619 = vld [vmem:[#allocation7 + $0x40] sm:$0xf]
    %v3620 = vld [vmem:[#allocation7 + $0x44] sm:$0xf]
    %v3621 = vld [vmem:[#allocation7 + $0x48] sm:$0xf]
    %v3622 = vld [vmem:[#allocation7 + $0x4c] sm:$0xf]
    %v3623 = vld [vmem:[#allocation7 + $0x50] sm:$0xf]
    %v3624 = vld [vmem:[#allocation7 + $0x54] sm:$0xf]
    %v3625 = vld [vmem:[#allocation7 + $0x58] sm:$0xf]
    %v3626 = vld [vmem:[#allocation7 + $0x5c] sm:$0xf]
    %v3627 = vld [vmem:[#allocation7 + $0x60] sm:$0xf]
    %v3628 = vld [vmem:[#allocation7 + $0x64] sm:$0xf]
    %v3629 = vld [vmem:[#allocation7 + $0x68] sm:$0xf]
    %v3630 = vld [vmem:[#allocation7 + $0x6c] sm:$0xf]
    %v3631 = vld [vmem:[#allocation7 + $0x70] sm:$0xf]
    %v3632 = vld [vmem:[#allocation7 + $0x74] sm:$0xf]
    %v3633 = vld [vmem:[#allocation7 + $0x78] sm:$0xf]
    %v3634 = vld [vmem:[#allocation7 + $0x7c] sm:$0xf]
    %v3635 = vld [vmem:[#allocation7 + $0x80] sm:$0xf]
    %v3636 = vld [vmem:[#allocation7 + $0x84] sm:$0xf]
    %v3637 = vld [vmem:[#allocation7 + $0x88] sm:$0xf]
    %v3638 = vld [vmem:[#allocation7 + $0x8c] sm:$0xf]
    %v3639 = vld [vmem:[#allocation7 + $0x90] sm:$0xf]
    %v3640 = vld [vmem:[#allocation7 + $0x94] sm:$0xf]
    %v3641 = vld [vmem:[#allocation7 + $0x98] sm:$0xf]
    %v3642 = vld [vmem:[#allocation7 + $0x9c] sm:$0xf]
    %v3643 = vld [vmem:[#allocation7 + $0xa0] sm:$0xf]
    %v3644 = vld [vmem:[#allocation7 + $0xa4] sm:$0xf]
    %v3645 = vld [vmem:[#allocation7 + $0xa8] sm:$0xf]
    %v3646 = vld [vmem:[#allocation7 + $0xac] sm:$0xf]
    %v3647 = vld [vmem:[#allocation7 + $0xb0] sm:$0xf]
    %v3648 = vld [vmem:[#allocation7 + $0xb4] sm:$0xf]
    %v3649 = vld [vmem:[#allocation7 + $0xb8] sm:$0xf]
    %v3650 = vld [vmem:[#allocation7 + $0xbc] sm:$0xf]
    %v3651 = vld [vmem:[%s9] sm:$0x1]
    %v3653 = vlaneseq
    %v3654 = vshrl.u32 %v3653, 7
    %v3655 = vsub.s32 0, %v3654
    %v3656 = vrot.slane %v3651, %v3655
    %v3706 = vunpack.c.l.b16 %v3603
    %v3707 = vunpack.c.l.b16 %v3604
    %v3708 = vunpack.c.l.b16 %v3605
    %v3709 = vunpack.c.l.b16 %v3606
    %v3710 = vunpack.c.l.b16 %v3607
    %v3711 = vunpack.c.l.b16 %v3608
    %v3712 = vunpack.c.l.b16 %v3609
    %v3713 = vunpack.c.l.b16 %v3610
    %v3714 = vunpack.c.l.b16 %v3611
    %v3715 = vunpack.c.l.b16 %v3612
    %v3716 = vunpack.c.l.b16 %v3613
    %v3717 = vunpack.c.l.b16 %v3614
    %v3718 = vunpack.c.l.b16 %v3615
    %v3719 = vunpack.c.l.b16 %v3616
    %v3720 = vunpack.c.l.b16 %v3617
    %v3721 = vunpack.c.l.b16 %v3618
    %v3722 = vunpack.c.l.b16 %v3619
    %v3723 = vunpack.c.l.b16 %v3620
    %v3724 = vunpack.c.l.b16 %v3621
    %v3725 = vunpack.c.l.b16 %v3622
    %v3726 = vunpack.c.l.b16 %v3623
    %v3727 = vunpack.c.l.b16 %v3624
    %v3728 = vunpack.c.l.b16 %v3625
    %v3729 = vunpack.c.l.b16 %v3626
    %v3730 = vunpack.c.l.b16 %v3627
    %v3731 = vunpack.c.l.b16 %v3628
    %v3732 = vunpack.c.l.b16 %v3629
    %v3733 = vunpack.c.l.b16 %v3630
    %v3734 = vunpack.c.l.b16 %v3631
    %v3735 = vunpack.c.l.b16 %v3632
    %v3736 = vunpack.c.l.b16 %v3633
    %v3737 = vunpack.c.l.b16 %v3634
    %v3738 = vunpack.c.l.b16 %v3635
    %v3739 = vunpack.c.l.b16 %v3636
    %v3740 = vunpack.c.l.b16 %v3637
    %v3741 = vunpack.c.l.b16 %v3638
    %v3742 = vunpack.c.l.b16 %v3639
    %v3743 = vunpack.c.l.b16 %v3640
    %v3744 = vunpack.c.l.b16 %v3641
    %v3745 = vunpack.c.l.b16 %v3642
    %v3746 = vunpack.c.l.b16 %v3643
    %v3747 = vunpack.c.l.b16 %v3644
    %v3748 = vunpack.c.l.b16 %v3645
    %v3749 = vunpack.c.l.b16 %v3646
    %v3750 = vunpack.c.l.b16 %v3647
    %v3751 = vunpack.c.l.b16 %v3648
    %v3752 = vunpack.c.l.b16 %v3649
    %v3753 = vunpack.c.l.b16 %v3650
    %v3754 = vpack.c.b16 %v3707, %v3706
    %v3755 = vpack.c.b16 %v3709, %v3708
    %v3756 = vpack.c.b16 %v3711, %v3710
    %v3757 = vpack.c.b16 %v3713, %v3712
    %v3758 = vpack.c.b16 %v3715, %v3714
    %v3759 = vpack.c.b16 %v3717, %v3716
    %v3760 = vpack.c.b16 %v3719, %v3718
    %v3761 = vpack.c.b16 %v3721, %v3720
    %v3762 = vpack.c.b16 %v3723, %v3722
    %v3763 = vpack.c.b16 %v3725, %v3724
    %v3764 = vpack.c.b16 %v3727, %v3726
    %v3765 = vpack.c.b16 %v3729, %v3728
    %v3766 = vpack.c.b16 %v3731, %v3730
    %v3767 = vpack.c.b16 %v3733, %v3732
    %v3768 = vpack.c.b16 %v3735, %v3734
    %v3769 = vpack.c.b16 %v3737, %v3736
    %v3770 = vpack.c.b16 %v3739, %v3738
    %v3771 = vpack.c.b16 %v3741, %v3740
    %v3772 = vpack.c.b16 %v3743, %v3742
    %v3773 = vpack.c.b16 %v3745, %v3744
    %v3774 = vpack.c.b16 %v3747, %v3746
    %v3775 = vpack.c.b16 %v3749, %v3748
    %v3776 = vpack.c.b16 %v3751, %v3750
    %v3777 = vpack.c.b16 %v3753, %v3752
    %3802 = vmatprep.subr.bf16.mxu0 0
    %3803 = vmatpush1.bf16.msra.mxu0 %v3761
    %3804 = vmatprep.subr.bf16.mxu0 0
    %3805 = vmatpush1.bf16.msra.mxu0 %v3760
    %3806 = vmatprep.subr.bf16.mxu0 0
    %3807 = vmatpush1.bf16.msra.mxu0 %v3759
    %3808 = vmatprep.subr.bf16.mxu0 0
    %3809 = vmatpush1.bf16.msra.mxu0 %v3758
    %3810 = vmatprep.subr.bf16.mxu0 0
    %3811 = vmatpush1.bf16.msra.mxu0 %v3757
    %3812 = vmatprep.subr.bf16.mxu0 0
    %3813 = vmatpush1.bf16.msra.mxu0 %v3756
    %3814 = vmatprep.subr.bf16.mxu0 0
    %3815 = vmatpush1.bf16.msra.mxu0 %v3755
    %3816 = vmatprep.subr.bf16.mxu0 0
    %3817 = vmatpush1.bf16.msra.mxu0 %v3754
    %3818 = vmatprep.subr.bf16.mxu0 0
    %3819 = vmatpush2.bf16.msra.mxu0 %v3769
    %3820 = vmatprep.subr.bf16.mxu0 0
    %3821 = vmatpush2.bf16.msra.mxu0 %v3768
    %3822 = vmatprep.subr.bf16.mxu0 0
    %3823 = vmatpush2.bf16.msra.mxu0 %v3767
    %3824 = vmatprep.subr.bf16.mxu0 0
    %3825 = vmatpush2.bf16.msra.mxu0 %v3766
    %3826 = vmatprep.subr.bf16.mxu0 0
    %3827 = vmatpush2.bf16.msra.mxu0 %v3765
    %3828 = vmatprep.subr.bf16.mxu0 0
    %3829 = vmatpush2.bf16.msra.mxu0 %v3764
    %3830 = vmatprep.subr.bf16.mxu0 0
    %3831 = vmatpush2.bf16.msra.mxu0 %v3763
    %3832 = vmatprep.subr.bf16.mxu0 0
    %3833 = vmatpush2.bf16.msra.mxu0 %v3762
    %3834 = vmatprep.mubr.bf16.mxu0 %v3601
    %3835 = vmatmul.mubr.bf16.gmra.mxu0 %v3600
    %v3836 = vpop.f32.mrf.mxu0
    %v3837 = vadd.f32 %v3656, %v3836
    %v3838 = vpop.f32.mrf.mxu0
    %v3839 = vpop.f32.mrf.mxu0
    %v3840 = vpop.f32.mrf.mxu0
    %3841 = vdwg.mxu0
    %3842 = vmatprep.subr.bf16.mxu0 0
    %3843 = vmatpush1.bf16.msra.mxu0 %v3777
    %3844 = vmatprep.subr.bf16.mxu0 0
    %3845 = vmatpush1.bf16.msra.mxu0 %v3776
    %3846 = vmatprep.subr.bf16.mxu0 0
    %3847 = vmatpush1.bf16.msra.mxu0 %v3775
    %3848 = vmatprep.subr.bf16.mxu0 0
    %3849 = vmatpush1.bf16.msra.mxu0 %v3774
    %3850 = vmatprep.subr.bf16.mxu0 0
    %3851 = vmatpush1.bf16.msra.mxu0 %v3773
    %3852 = vmatprep.subr.bf16.mxu0 0
    %3853 = vmatpush1.bf16.msra.mxu0 %v3772
    %3854 = vmatprep.subr.bf16.mxu0 0
    %3855 = vmatpush1.bf16.msra.mxu0 %v3771
    %3856 = vmatprep.subr.bf16.mxu0 0
    %3857 = vmatpush1.bf16.msra.mxu0 %v3770
    %3858 = vmatprep.subr.bf16.mxu0 0
    %3859 = vmatpush2.bf16.msra.mxu0 0
    %3860 = vmatprep.subr.bf16.mxu0 0
    %3861 = vmatpush2.bf16.msra.mxu0 0
    %3862 = vmatprep.subr.bf16.mxu0 0
    %3863 = vmatpush2.bf16.msra.mxu0 0
    %3864 = vmatprep.subr.bf16.mxu0 0
    %3865 = vmatpush2.bf16.msra.mxu0 0
    %3866 = vmatprep.subr.bf16.mxu0 0
    %3867 = vmatpush2.bf16.msra.mxu0 0
    %3868 = vmatprep.subr.bf16.mxu0 0
    %3869 = vmatpush2.bf16.msra.mxu0 0
    %3870 = vmatprep.subr.bf16.mxu0 0
    %3871 = vmatpush2.bf16.msra.mxu0 0
    %3872 = vmatprep.subr.bf16.mxu0 0
    %3873 = vmatpush2.bf16.msra.mxu0 0
    %3874 = vmatprep.mubr.bf16.mxu0 0
    %3875 = vmatmul.mubr.bf16.gmra.mxu0 %v3602
    %v3876 = vpop.f32.mrf.mxu0
    %v3877 = vadd.f32 %v3837, %v3876
    %v3878 = vpop.f32.mrf.mxu0
    %v3879 = vpop.f32.mrf.mxu0
    %v3880 = vpop.f32.mrf.mxu0
    %3881 = vdwg.mxu0
    %v3882 = vmul.f32 %v3877, 0.5
    %v3883 = vtanh.pop %v3882
    %v3884 = vmul.f32 %v3883, 0.5
    %v3885 = vadd.f32 %v3884, 0.5
    %v3886 = vmul.f32 %v3877, %v3885
    %v3887 = vpack.c.bf16 %v3886, %v3886
    %v3888 = vld [vmem:[%s5] sm:$0xf]
    %v3889 = vld [vmem:[%s5 + $0x4] sm:$0xf]
    %v3890 = vld [vmem:[%s5 + $0x8] sm:$0xf]
    %v3891 = vld [vmem:[%s5 + $0xc] sm:$0xf]
    %v3892 = vld [vmem:[%s5 + $0x10] sm:$0xf]
    %v3893 = vld [vmem:[%s5 + $0x14] sm:$0xf]
    %v3894 = vld [vmem:[%s5 + $0x18] sm:$0xf]
    %v3895 = vld [vmem:[%s5 + $0x1c] sm:$0xf]
    %v3896 = vld [vmem:[%s5 + $0x20] sm:$0xf]
    %v3897 = vld [vmem:[%s5 + $0x24] sm:$0xf]
    %v3898 = vld [vmem:[%s5 + $0x28] sm:$0xf]
    %v3899 = vld [vmem:[%s5 + $0x2c] sm:$0xf]
    %v3900 = vld [vmem:[%s5 + $0x30] sm:$0xf]
    %v3901 = vld [vmem:[%s5 + $0x34] sm:$0xf]
    %v3902 = vld [vmem:[%s5 + $0x38] sm:$0xf]
    %v3903 = vld [vmem:[%s5 + $0x3c] sm:$0xf]
    %v3904 = vld [vmem:[%s10] sm:$0x1]
    %v3906 = vlaneseq
    %v3907 = vshrl.u32 %v3906, 7
    %v3908 = vsub.s32 0, %v3907
    %v3909 = vrot.slane %v3904, %v3908
    %v3927 = vunpack.c.l.b16 %v3888
    %v3928 = vunpack.c.l.b16 %v3889
    %v3929 = vunpack.c.l.b16 %v3890
    %v3930 = vunpack.c.l.b16 %v3891
    %v3931 = vunpack.c.l.b16 %v3892
    %v3932 = vunpack.c.l.b16 %v3893
    %v3933 = vunpack.c.l.b16 %v3894
    %v3934 = vunpack.c.l.b16 %v3895
    %v3935 = vunpack.c.l.b16 %v3896
    %v3936 = vunpack.c.l.b16 %v3897
    %v3937 = vunpack.c.l.b16 %v3898
    %v3938 = vunpack.c.l.b16 %v3899
    %v3939 = vunpack.c.l.b16 %v3900
    %v3940 = vunpack.c.l.b16 %v3901
    %v3941 = vunpack.c.l.b16 %v3902
    %v3942 = vunpack.c.l.b16 %v3903
    %v3943 = vpack.c.b16 %v3928, %v3927
    %v3944 = vpack.c.b16 %v3930, %v3929
    %v3945 = vpack.c.b16 %v3932, %v3931
    %v3946 = vpack.c.b16 %v3934, %v3933
    %v3947 = vpack.c.b16 %v3936, %v3935
    %v3948 = vpack.c.b16 %v3938, %v3937
    %v3949 = vpack.c.b16 %v3940, %v3939
    %v3950 = vpack.c.b16 %v3942, %v3941
    %3959 = vmatprep.subr.bf16.mxu0 0
    %3960 = vmatpush1.bf16.msra.mxu0 %v3950
    %3961 = vmatprep.subr.bf16.mxu0 0
    %3962 = vmatpush1.bf16.msra.mxu0 %v3949
    %3963 = vmatprep.subr.bf16.mxu0 0
    %3964 = vmatpush1.bf16.msra.mxu0 %v3948
    %3965 = vmatprep.subr.bf16.mxu0 0
    %3966 = vmatpush1.bf16.msra.mxu0 %v3947
    %3967 = vmatprep.subr.bf16.mxu0 0
    %3968 = vmatpush1.bf16.msra.mxu0 %v3946
    %3969 = vmatprep.subr.bf16.mxu0 0
    %3970 = vmatpush1.bf16.msra.mxu0 %v3945
    %3971 = vmatprep.subr.bf16.mxu0 0
    %3972 = vmatpush1.bf16.msra.mxu0 %v3944
    %3973 = vmatprep.subr.bf16.mxu0 0
    %3974 = vmatpush1.bf16.msra.mxu0 %v3943
    %3975 = vmatprep.subr.bf16.mxu0 0
    %3976 = vmatpush2.bf16.msra.mxu0 0
    %3977 = vmatprep.subr.bf16.mxu0 0
    %3978 = vmatpush2.bf16.msra.mxu0 0
    %3979 = vmatprep.subr.bf16.mxu0 0
    %3980 = vmatpush2.bf16.msra.mxu0 0
    %3981 = vmatprep.subr.bf16.mxu0 0
    %3982 = vmatpush2.bf16.msra.mxu0 0
    %3983 = vmatprep.subr.bf16.mxu0 0
    %3984 = vmatpush2.bf16.msra.mxu0 0
    %3985 = vmatprep.subr.bf16.mxu0 0
    %3986 = vmatpush2.bf16.msra.mxu0 0
    %3987 = vmatprep.subr.bf16.mxu0 0
    %3988 = vmatpush2.bf16.msra.mxu0 0
    %3989 = vmatprep.subr.bf16.mxu0 0
    %3990 = vmatpush2.bf16.msra.mxu0 0
    %3991 = vmatprep.mubr.bf16.mxu0 0
    %3992 = vmatmul.mubr.bf16.gmra.mxu0 %v3887
    %v3993 = vpop.f32.mrf.mxu0
    %v3994 = vadd.f32 %v3909, %v3993
    %v3995 = vpop.f32.mrf.mxu0
    %v3996 = vpop.f32.mrf.mxu0
    %v3997 = vpop.f32.mrf.mxu0
    %3998 = vdwg.mxu0
    %v3999 = vmul.f32 %v3994, 0.5
    %v4000 = vtanh.pop %v3999
    %v4001 = vmul.f32 %v4000, 0.5
    %v4002 = vadd.f32 %v4001, 0.5
    %v4003 = vmul.f32 %v3994, %v4002
    %v4004 = vpack.c.bf16 %v4003, %v4003
    %4005 = vst [vmem:[%s11] sm:$0xf] %v4004
    // Predicated region
    $region62: #{_fused_forward.1} parent=1 // pred_check
      _
    $region63: #{_fused_forward.1} parent=1 // pred_check_branch
      %4007 = sbr.rel (0) target = $region65
    $region64: #{_fused_forward.1} parent=1 // pred_region
      _
    $region65: #{_fused_forward.1} parent=1 // pred_fallthru
      _
    // Predicated region
    $region66: #{_fused_forward.1} parent=1 // pred_check
      _
    $region67: #{_fused_forward.1} parent=1 // pred_check_branch
      %4009 = sbr.rel (0) target = $region69
    $region68: #{_fused_forward.1} parent=1 // pred_region
      _
    $region69: #{_fused_forward.1} parent=1 // pred_fallthru
      _
    %4010 = vsyncpa [#allocation3], 1
    %4011 = vsyncpa [#allocation5], 1
    %4012 = vsyncpa [#allocation8], 1

</llo_original>
